<compile_context>
chip_gen: v7x
topology: tpu7x:2x2x1
jax: 0.10.0
libtpu: 0.0.40
codegen_flags: <defaults>
</compile_context>

<pallas_src>
import functools

import jax
import jax.numpy as jnp
from jax import lax
from jax.experimental import pallas as pl
from jax.experimental.pallas import tpu as pltpu

BN_EPS = 1e-5
LANES = 128
ACT_DTYPE = jnp.bfloat16          # MXU input dtype (activations + weights)
CONV_ROW_CHUNK = 256              # conv rows accumulated in registers per pass
VMEM_LIMIT_BYTES = 48 * 1024 * 1024   # < v7x 64 MiB physical, > v5e/v6e scoped default

_PARAM_ORDER = ("wc1", "sc1", "sh1", "wc2", "sc2", "sh2", "wc3", "sc3", "sh3",
                "w1r", "b1", "w2", "b2", "w3", "b3", "wl", "bl")


def _round_up(v, m):
    return (v + m - 1) // m * m


def _geometry(tb, input_dim):
    """Static shapes of the 3 conv stages for a batch tile of `tb` images."""
    # TODO(synk): requires input_dim % 8 == 0 (PyTorch MaxPool would floor odd spatial dims).
    assert input_dim % 8 == 0, "input_dim must be divisible by 8"
    stages = []
    h = input_dim
    for _ in range(3):
        wp = h + 2                                   # spatially zero-padded extent
        blk = wp * wp                                # flat rows per image (padded grid)
        rows = tb * blk                              # conv rows computed per tile
        in_rows = _round_up(rows + 2 * wp + 2, 32)   # + zero tail so tap slices stay in range
        stages.append(dict(H=h, W=h, Wp=wp, blk=blk, rows=rows, in_rows=in_rows))
        h //= 2
    return stages, h * h                             # h*h = spatial positions after 3 pools


# --------------------------------- fused kernel ----------------------------------

def _fused_forward_kernel(
        x1_ref,                                      # [in_rows1, 128] bf16 padded flat input
        wc1_ref, sc1_ref, sh1_ref,                   # conv1: [9,128,128] bf16, [1,128] f32 x2
        wc2_ref, sc2_ref, sh2_ref,                   # conv2
        wc3_ref, sc3_ref, sh3_ref,                   # conv3
        w1r_ref, b1_ref,                             # fc1 (flatten folded): [P,128,128], [1,128]
        w2_ref, b2_ref, w3_ref, b3_ref, wl_ref, bl_ref,
        enc_ref, logit_ref,                          # outputs: [tb,128] f32 each (lane padded)
        y1_ref, x2_ref, y2_ref, x3_ref, y3_ref, p3_ref,   # VMEM scratch
        *, g):
    tb = g["TB"]
    num_pos = g["P"]
    st1, st2, st3 = g["stages"]

    def conv_bn_relu(x_ref, w_ref, s_ref, t_ref, y_ref, st):
        # 3x3 / stride 1 / pad 1 conv as 9 shifted matmuls on the flat padded activation.
        # Taps are accumulated in registers per <=CONV_ROW_CHUNK-row chunk; y_ref is
        # written exactly once per chunk with the folded BN + ReLU applied (f32 epilogue).
        wp, rows = st["Wp"], st["rows"]
        scale = s_ref[...]
        shift = t_ref[...]
        for start in range(0, rows, CONV_ROW_CHUNK):
            size = min(CONV_ROW_CHUNK, rows - start)
            acc = None
            for t in range(9):
                dy, dx = divmod(t, 3)
                lhs = x_ref[pl.ds(start + dy * wp + dx, size), :]
                d = jnp.dot(lhs, w_ref[t], preferred_element_type=jnp.float32)
                acc = d if acc is None else acc + d
            y_ref[pl.ds(start, size), :] = jnp.maximum(acc * scale + shift, 0.0)

    def pool_rows(y_ref, base, st):
        # 2x2 / stride 2 max-pool of one output row: 4 sublane-strided loads + VPU max
        # (no selection matmul).
        w_half = st["W"] // 2
        a = y_ref[pl.ds(base, w_half, stride=2), :]
        b = y_ref[pl.ds(base + 1, w_half, stride=2), :]
        c = y_ref[pl.ds(base + st["Wp"], w_half, stride=2), :]
        d = y_ref[pl.ds(base + st["Wp"] + 1, w_half, stride=2), :]
        return jnp.maximum(jnp.maximum(a, b), jnp.maximum(c, d))        # [W//2, 128] f32

    def zero_halo(o_ref, st_next):
        # Zero ONLY the rows the pool stores never touch: per image the top padding row
        # (+ left pad of first data row), the 2-row [right pad of row r | left pad of
        # row r+1] seams, the bottom padding row (+ right pad of last data row), and the
        # zero tail.  The interior is fully overwritten by the pool stores.
        wp, blk, hh = st_next["Wp"], st_next["blk"], st_next["H"]
        zcap = jnp.zeros((wp + 1, LANES), ACT_DTYPE)
        zseam = jnp.zeros((2, LANES), ACT_DTYPE)
        for n in range(tb):
            base = n * blk
            o_ref[pl.ds(base, wp + 1), :] = zcap                       # row 0 .. (1, 0)
            for rr in range(1, hh):
                o_ref[pl.ds(base + rr * wp + wp - 1, 2), :] = zseam    # (rr,Wp-1), (rr+1,0)
            o_ref[pl.ds(base + hh * wp + wp - 1, wp + 1), :] = zcap    # (hh,Wp-1) .. row Hp-1
        tail = st_next["in_rows"] - tb * blk
        o_ref[pl.ds(tb * blk, tail), :] = jnp.zeros((tail, LANES), ACT_DTYPE)

    def pool_into_padded(y_ref, o_ref, st, st_next):
        # Pooled rows land (as contiguous [W_next,128] bf16 stores) in the interior of the
        # next stage's zero-padded flat input buffer.
        zero_halo(o_ref, st_next)
        for n in range(tb):
            for r in range(st_next["H"]):
                pooled = pool_rows(y_ref, n * st["blk"] + 2 * r * st["Wp"], st)
                o_ref[pl.ds(n * st_next["blk"] + (r + 1) * st_next["Wp"] + 1,
                            st_next["W"]), :] = pooled.astype(ACT_DTYPE)

    # ---- conv stages 1..2: conv+BN+ReLU then pool straight into the next padded input ----
    conv_bn_relu(x1_ref, wc1_ref, sc1_ref, sh1_ref, y1_ref, st1)
    pool_into_padded(y1_ref, x2_ref, st1, st2)
    conv_bn_relu(x2_ref, wc2_ref, sc2_ref, sh2_ref, y2_ref, st2)
    pool_into_padded(y2_ref, x3_ref, st2, st3)

    # ---- conv stage 3; pooled rows stored batch-major: p3[n*P + r*(W3/2) + j] ----
    conv_bn_relu(x3_ref, wc3_ref, sc3_ref, sh3_ref, y3_ref, st3)
    w3_half = st3["W"] // 2
    for n in range(tb):
        for r in range(st3["H"] // 2):
            pooled = pool_rows(y3_ref, n * st3["blk"] + 2 * r * st3["Wp"], st3)
            p3_ref[pl.ds(n * num_pos + r * w3_half, w3_half), :] = pooled.astype(ACT_DTYPE)

    # ---- fused FC head: fc1 -> ReLU -> fc2 -> ReLU -> fc3 ; linear ----
    # The torch NCHW flatten is folded into w1r; batch rows for position p are gathered
    # with a strided slice over the batch-major p3 layout.
    # TODO(synk): nn.Dropout(0.5) training-mode masking not modeled (eval-mode identity).
    h = None
    for p in range(num_pos):
        idx = pl.ds(p, tb, stride=num_pos) if tb > 1 else pl.ds(p, 1)
        d = jnp.dot(p3_ref[idx, :], w1r_ref[p], preferred_element_type=jnp.float32)
        h = d if h is None else h + d
    h = jnp.maximum(h + b1_ref[...], 0.0)
    h = jnp.maximum(jnp.dot(h.astype(ACT_DTYPE), w2_ref[...],
                            preferred_element_type=jnp.float32) + b2_ref[...], 0.0)
    x_enc = jnp.dot(h.astype(ACT_DTYPE), w3_ref[...],
                    preferred_element_type=jnp.float32) + b3_ref[...]
    logits = jnp.dot(x_enc.astype(ACT_DTYPE), wl_ref[...],
                     preferred_element_type=jnp.float32) + bl_ref[...]
    enc_ref[...] = x_enc
    logit_ref[...] = logits


# ---------------------------------- parameters -----------------------------------

def init_params(key, input_dim):
    ks = iter(jax.random.split(key, 32))

    def wmat(shape, fan_in):
        return jax.random.normal(next(ks), shape, jnp.float32) / jnp.sqrt(fan_in)

    def bvec(n):
        return 0.01 * jax.random.normal(next(ks), (n,), jnp.float32)

    def bn(n):
        gamma = 1.0 + 0.1 * jax.random.normal(next(ks), (n,), jnp.float32)
        beta = 0.1 * jax.random.normal(next(ks), (n,), jnp.float32)
        mean = 0.1 * jax.random.normal(next(ks), (n,), jnp.float32)
        var = 1.0 + 0.1 * jnp.abs(jax.random.normal(next(ks), (n,), jnp.float32))
        return gamma, beta, mean, var

    fc_in = (input_dim ** 2) // 2
    p = {}
    # conv weights stored as [kh, kw, cin, cout]
    p["w1"], p["b1"], p["bn1"] = wmat((3, 3, 1, 6), 9.0), bvec(6), bn(6)
    p["w2"], p["b2"], p["bn2"] = wmat((3, 3, 6, 16), 54.0), bvec(16), bn(16)
    p["w3"], p["b3"], p["bn3"] = wmat((3, 3, 16, 32), 144.0), bvec(32), bn(32)
    p["fc1_w"], p["fc1_b"] = wmat((fc_in, 128), float(fc_in)), bvec(128)
    p["fc2_w"], p["fc2_b"] = wmat((128, 64), 128.0), bvec(64)
    p["fc3_w"], p["fc3_b"] = wmat((64, 16), 64.0), bvec(16)
    p["lin_w"], p["lin_b"] = wmat((16, 1), 16.0), bvec(1)
    return p


def prepare_params(params, input_dim):
    """Fold BatchNorm (eval mode), pad to 128 lanes, cast matmul weights to bf16, and
    rearrange fc1 for the fused kernel.  Runs once at setup time."""
    num_pos = (input_dim // 8) ** 2

    def conv_pack(w, b, bn_stats):
        kh, kw, cin, cout = w.shape
        gamma, beta, mu, var = bn_stats
        scale = gamma / jnp.sqrt(var + BN_EPS)
        shift = (b - mu) * scale + beta
        wp = jnp.zeros((9, LANES, LANES), jnp.float32)
        wp = wp.at[:, :cin, :cout].set(w.reshape(kh * kw, cin, cout))
        sp = jnp.zeros((1, LANES), jnp.float32).at[0, :cout].set(scale)
        tp = jnp.zeros((1, LANES), jnp.float32).at[0, :cout].set(shift)
        return wp.astype(ACT_DTYPE), sp, tp

    def fc_pack(w, b):
        kin, kout = w.shape
        wp = jnp.zeros((LANES, LANES), jnp.float32).at[:kin, :kout].set(w)
        bp = jnp.zeros((1, LANES), jnp.float32).at[0, :kout].set(b)
        return wp.astype(ACT_DTYPE), bp

    f = {}
    f["wc1"], f["sc1"], f["sh1"] = conv_pack(params["w1"], params["b1"], params["bn1"])
    f["wc2"], f["sc2"], f["sh2"] = conv_pack(params["w2"], params["b2"], params["bn2"])
    f["wc3"], f["sc3"], f["sh3"] = conv_pack(params["w3"], params["b3"], params["bn3"])
    # fc1 with the torch (C,H,W) flatten folded in: w1r[p, c, :] = fc1_w[c*P + p, :]
    w1 = params["fc1_w"].reshape(32, num_pos, 128).transpose(1, 0, 2)
    f["w1r"] = jnp.zeros((num_pos, LANES, LANES), jnp.float32).at[:, :32, :].set(w1)
    f["w1r"] = f["w1r"].astype(ACT_DTYPE)
    f["b1"] = params["fc1_b"].reshape(1, LANES)
    f["w2"], f["b2"] = fc_pack(params["fc2_w"], params["fc2_b"])
    f["w3"], f["b3"] = fc_pack(params["fc3_w"], params["fc3_b"])
    f["wl"], f["bl"] = fc_pack(params["lin_w"], params["lin_b"])
    return f


# ----------------------------------- forward -------------------------------------

def _const_spec(shape):
    zero = (0,) * len(shape)
    return pl.BlockSpec(shape, lambda i, _z=zero: _z)


def classifier_forward(fparams, x_nchw, *, batch_tile=1):
    n, c, h, w = x_nchw.shape
    assert c == 1 and h == w, "expected [N, 1, D, D] input"
    tb = int(batch_tile)
    assert n % tb == 0, "batch must be divisible by batch_tile"
    num_tiles = n // tb
    stages, num_pos = _geometry(tb, h)
    st1, st2, st3 = stages

    # Input prep: NCHW -> NHWC, zero-pad spatially, pad channel to 128 lanes, flatten per
    # batch tile to [in_rows, 128] bf16 (zero tail keeps every conv-tap slice in range).
    x = jnp.transpose(x_nchw, (0, 2, 3, 1)).astype(jnp.float32)
    x = jnp.pad(x, ((0, 0), (1, 1), (1, 1), (0, LANES - 1)))
    x = x.reshape(num_tiles, tb * st1["blk"], LANES)
    x = jnp.pad(x, ((0, 0), (0, st1["in_rows"] - tb * st1["blk"]), (0, 0)))
    x = x.astype(ACT_DTYPE)

    kernel = functools.partial(_fused_forward_kernel,
                               g=dict(TB=tb, P=num_pos, stages=stages))
    batched = lambda i: (i, 0, 0)
    enc_pad, logit_pad = pl.pallas_call(
        kernel,
        grid=(num_tiles,),
        out_shape=(jax.ShapeDtypeStruct((num_tiles, tb, LANES), jnp.float32),
                   jax.ShapeDtypeStruct((num_tiles, tb, LANES), jnp.float32)),
        in_specs=[pl.BlockSpec((None, st1["in_rows"], LANES), batched)]
                 + [_const_spec(fparams[k].shape) for k in _PARAM_ORDER],
        out_specs=(pl.BlockSpec((None, tb, LANES), batched),
                   pl.BlockSpec((None, tb, LANES), batched)),
        scratch_shapes=[
            pltpu.VMEM((st1["rows"], LANES), jnp.float32),       # y1: conv1 out (f32 epilogue)
            pltpu.VMEM((st2["in_rows"], LANES), ACT_DTYPE),      # x2: stage-2 padded flat input
            pltpu.VMEM((st2["rows"], LANES), jnp.float32),       # y2
            pltpu.VMEM((st3["in_rows"], LANES), ACT_DTYPE),      # x3
            pltpu.VMEM((st3["rows"], LANES), jnp.float32),       # y3
            pltpu.VMEM((tb * num_pos, LANES), ACT_DTYPE),        # p3: pooled conv3, batch-major
        ],
        compiler_params=pltpu.CompilerParams(
            dimension_semantics=("parallel",),       # shard batch tiles across v7x's 2 TCs
            vmem_limit_bytes=VMEM_LIMIT_BYTES),
    )(x, *[fparams[k] for k in _PARAM_ORDER])

    # only the final outputs are sliced back to their true channel widths
    enc = enc_pad.reshape(n, LANES)[:, :16]
    logits = logit_pad.reshape(n, LANES)[:, :1]
    return enc, logits


# ------------------------ pure-JAX reference (parity check) ----------------------

def reference_forward(params, x_nchw):
    def bnorm(y, stats):
        gamma, beta, mean, var = stats
        inv = gamma / jnp.sqrt(var + BN_EPS)
        return (y - mean[None, :, None, None]) * inv[None, :, None, None] \
            + beta[None, :, None, None]

    def conv(y, wkey, bkey):
        out = lax.conv_general_dilated(y, params[wkey], (1, 1), "SAME",
                                       dimension_numbers=("NCHW", "HWIO", "NCHW"))
        return out + params[bkey][None, :, None, None]

    def pool(y):
        return lax.reduce_window(y, -jnp.inf, lax.max, (1, 1, 2, 2), (1, 1, 2, 2), "VALID")

    y = x_nchw.astype(jnp.float32)
    for i in (1, 2, 3):
        y = pool(jax.nn.relu(bnorm(conv(y, f"w{i}", f"b{i}"), params[f"bn{i}"])))
    flat = y.reshape(y.shape[0], -1)                      # torch NCHW flatten
    h = jax.nn.relu(flat @ params["fc1_w"] + params["fc1_b"])
    h = jax.nn.relu(h @ params["fc2_w"] + params["fc2_b"])
    enc = h @ params["fc3_w"] + params["fc3_b"]
    logits = enc @ params["lin_w"] + params["lin_b"]
    return enc, logits


if __name__ == "__main__":
    input_dim = 16                        # image is [N, 1, input_dim, input_dim]
    batch = 2
    key = jax.random.PRNGKey(0)
    k_params, k_x = jax.random.split(key)
    params = init_params(k_params, input_dim)
    fparams = prepare_params(params, input_dim)    # fold/pad/bf16-cast/rearrange once
    x = jax.random.normal(k_x, (batch, 1, input_dim, input_dim), jnp.float32)

    enc_ref, logit_ref = reference_forward(params, x)
    enc_tol = 0.08 + 0.08 * float(jnp.max(jnp.abs(enc_ref)))       # bf16 MXU tolerance
    log_tol = 0.08 + 0.08 * float(jnp.max(jnp.abs(logit_ref)))

    # batch_tile=1 exercises the batch-parallel grid (2 steps); batch_tile=2 exercises the
    # multi-image-per-tile layout (batch>1 parity within one kernel invocation).
    for tb in (1, 2):
        fwd = jax.jit(functools.partial(classifier_forward, batch_tile=tb))
        x_enc, x_logits = fwd(fparams, x)
        jax.block_until_ready((x_enc, x_logits))
        assert x_enc.shape == (batch, 16) and x_enc.dtype == jnp.float32
        assert x_logits.shape == (batch, 1) and x_logits.dtype == jnp.float32
        assert float(jnp.max(jnp.abs(x_enc - enc_ref))) < enc_tol, "encoder parity failed"
        assert float(jnp.max(jnp.abs(x_logits - logit_ref))) < log_tol, "logit parity failed"

    print("KERNEL_OK")
</pallas_src>

<mosaic_0001>
module attributes {stable_mosaic.version = 11 : i64} {
  func.func @_fused_forward_kernel(%arg0: i32, %arg1: memref<1x384x128xbf16, #tpu.memory_space<vmem>>, %arg2: memref<9x128x128xbf16, #tpu.memory_space<vmem>>, %arg3: memref<1x128xf32, #tpu.memory_space<vmem>>, %arg4: memref<1x128xf32, #tpu.memory_space<vmem>>, %arg5: memref<9x128x128xbf16, #tpu.memory_space<vmem>>, %arg6: memref<1x128xf32, #tpu.memory_space<vmem>>, %arg7: memref<1x128xf32, #tpu.memory_space<vmem>>, %arg8: memref<9x128x128xbf16, #tpu.memory_space<vmem>>, %arg9: memref<1x128xf32, #tpu.memory_space<vmem>>, %arg10: memref<1x128xf32, #tpu.memory_space<vmem>>, %arg11: memref<4x128x128xbf16, #tpu.memory_space<vmem>>, %arg12: memref<1x128xf32, #tpu.memory_space<vmem>>, %arg13: memref<128x128xbf16, #tpu.memory_space<vmem>>, %arg14: memref<1x128xf32, #tpu.memory_space<vmem>>, %arg15: memref<128x128xbf16, #tpu.memory_space<vmem>>, %arg16: memref<1x128xf32, #tpu.memory_space<vmem>>, %arg17: memref<128x128xbf16, #tpu.memory_space<vmem>>, %arg18: memref<1x128xf32, #tpu.memory_space<vmem>>, %arg19: memref<1x1x128xf32, #tpu.memory_space<vmem>>, %arg20: memref<1x1x128xf32, #tpu.memory_space<vmem>>, %arg21: memref<324x128xf32, #tpu.memory_space<vmem>>, %arg22: memref<128x128xbf16, #tpu.memory_space<vmem>>, %arg23: memref<100x128xf32, #tpu.memory_space<vmem>>, %arg24: memref<64x128xbf16, #tpu.memory_space<vmem>>, %arg25: memref<36x128xf32, #tpu.memory_space<vmem>>, %arg26: memref<4x128xbf16, #tpu.memory_space<vmem>>) attributes {dimension_semantics = [#tpu.dimension_semantics<parallel>], iteration_bounds = array<i64: 2>, scalar_prefetch = 0 : i64, scratch_operands = 6 : i64, tpu.core_type = #tpu.core_type<tc>, window_params = [{transform_indices = @transform_0, window_bounds = array<i64: 1, 384, 128>}, {pipeline_mode = #tpu.pipeline_mode<synchronous>, transform_indices = @transform_1, window_bounds = array<i64: 9, 128, 128>}, {pipeline_mode = #tpu.pipeline_mode<synchronous>, transform_indices = @transform_2, window_bounds = array<i64: 1, 128>}, {pipeline_mode = #tpu.pipeline_mode<synchronous>, transform_indices = @transform_3, window_bounds = array<i64: 1, 128>}, {pipeline_mode = #tpu.pipeline_mode<synchronous>, transform_indices = @transform_4, window_bounds = array<i64: 9, 128, 128>}, {pipeline_mode = #tpu.pipeline_mode<synchronous>, transform_indices = @transform_5, window_bounds = array<i64: 1, 128>}, {pipeline_mode = #tpu.pipeline_mode<synchronous>, transform_indices = @transform_6, window_bounds = array<i64: 1, 128>}, {pipeline_mode = #tpu.pipeline_mode<synchronous>, transform_indices = @transform_7, window_bounds = array<i64: 9, 128, 128>}, {pipeline_mode = #tpu.pipeline_mode<synchronous>, transform_indices = @transform_8, window_bounds = array<i64: 1, 128>}, {pipeline_mode = #tpu.pipeline_mode<synchronous>, transform_indices = @transform_9, window_bounds = array<i64: 1, 128>}, {pipeline_mode = #tpu.pipeline_mode<synchronous>, transform_indices = @transform_10, window_bounds = array<i64: 4, 128, 128>}, {pipeline_mode = #tpu.pipeline_mode<synchronous>, transform_indices = @transform_11, window_bounds = array<i64: 1, 128>}, {pipeline_mode = #tpu.pipeline_mode<synchronous>, transform_indices = @transform_12, window_bounds = array<i64: 128, 128>}, {pipeline_mode = #tpu.pipeline_mode<synchronous>, transform_indices = @transform_13, window_bounds = array<i64: 1, 128>}, {pipeline_mode = #tpu.pipeline_mode<synchronous>, transform_indices = @transform_14, window_bounds = array<i64: 128, 128>}, {pipeline_mode = #tpu.pipeline_mode<synchronous>, transform_indices = @transform_15, window_bounds = array<i64: 1, 128>}, {pipeline_mode = #tpu.pipeline_mode<synchronous>, transform_indices = @transform_16, window_bounds = array<i64: 128, 128>}, {pipeline_mode = #tpu.pipeline_mode<synchronous>, transform_indices = @transform_17, window_bounds = array<i64: 1, 128>}, {transform_indices = @transform_18, window_bounds = array<i64: 1, 1, 128>}, {transform_indices = @transform_19, window_bounds = array<i64: 1, 1, 128>}]} {
    %c0 = arith.constant 0 : index
    %c0_0 = arith.constant 0 : index
    %0 = vector.load %arg3[%c0, %c0_0] : memref<1x128xf32, #tpu.memory_space<vmem>>, vector<1x128xf32>
    %c0_1 = arith.constant 0 : index
    %c0_2 = arith.constant 0 : index
    %1 = vector.load %arg4[%c0_1, %c0_2] : memref<1x128xf32, #tpu.memory_space<vmem>>, vector<1x128xf32>
    %c0_3 = arith.constant 0 : index
    %c0_4 = arith.constant 0 : index
    %c0_5 = arith.constant 0 : index
    %2 = vector.load %arg1[%c0_3, %c0_4, %c0_5] : memref<1x384x128xbf16, #tpu.memory_space<vmem>>, vector<1x256x128xbf16>
    %3 = vector.shape_cast %2 : vector<1x256x128xbf16> to vector<256x128xbf16>
    %c0_6 = arith.constant 0 : index
    %c0_7 = arith.constant 0 : index
    %c0_8 = arith.constant 0 : index
    %4 = vector.load %arg2[%c0_6, %c0_7, %c0_8] : memref<9x128x128xbf16, #tpu.memory_space<vmem>>, vector<1x128x128xbf16>
    %5 = vector.shape_cast %4 : vector<1x128x128xbf16> to vector<128x128xbf16>
    %cst = arith.constant dense<0.000000e+00> : vector<256x128xf32>
    %6 = tpu.matmul %3, %5, %cst {dimension_numbers = #tpu.dot_dimension_numbers<[1], [0], [0], [1], [0, 0, 1, 1], [], []>} : vector<256x128xbf16>, vector<128x128xbf16>, vector<256x128xf32> -> vector<256x128xf32>
    %c0_9 = arith.constant 0 : index
    %c1 = arith.constant 1 : index
    %c0_10 = arith.constant 0 : index
    %7 = vector.load %arg1[%c0_9, %c1, %c0_10] : memref<1x384x128xbf16, #tpu.memory_space<vmem>>, vector<1x256x128xbf16>
    %8 = vector.shape_cast %7 : vector<1x256x128xbf16> to vector<256x128xbf16>
    %c1_11 = arith.constant 1 : index
    %c0_12 = arith.constant 0 : index
    %c0_13 = arith.constant 0 : index
    %9 = vector.load %arg2[%c1_11, %c0_12, %c0_13] : memref<9x128x128xbf16, #tpu.memory_space<vmem>>, vector<1x128x128xbf16>
    %10 = vector.shape_cast %9 : vector<1x128x128xbf16> to vector<128x128xbf16>
    %cst_14 = arith.constant dense<0.000000e+00> : vector<256x128xf32>
    %11 = tpu.matmul %8, %10, %cst_14 {dimension_numbers = #tpu.dot_dimension_numbers<[1], [0], [0], [1], [0, 0, 1, 1], [], []>} : vector<256x128xbf16>, vector<128x128xbf16>, vector<256x128xf32> -> vector<256x128xf32>
    %12 = arith.addf %6, %11 : vector<256x128xf32>
    %c0_15 = arith.constant 0 : index
    %c2 = arith.constant 2 : index
    %c0_16 = arith.constant 0 : index
    %13 = vector.load %arg1[%c0_15, %c2, %c0_16] : memref<1x384x128xbf16, #tpu.memory_space<vmem>>, vector<1x256x128xbf16>
    %14 = vector.shape_cast %13 : vector<1x256x128xbf16> to vector<256x128xbf16>
    %c2_17 = arith.constant 2 : index
    %c0_18 = arith.constant 0 : index
    %c0_19 = arith.constant 0 : index
    %15 = vector.load %arg2[%c2_17, %c0_18, %c0_19] : memref<9x128x128xbf16, #tpu.memory_space<vmem>>, vector<1x128x128xbf16>
    %16 = vector.shape_cast %15 : vector<1x128x128xbf16> to vector<128x128xbf16>
    %cst_20 = arith.constant dense<0.000000e+00> : vector<256x128xf32>
    %17 = tpu.matmul %14, %16, %cst_20 {dimension_numbers = #tpu.dot_dimension_numbers<[1], [0], [0], [1], [0, 0, 1, 1], [], []>} : vector<256x128xbf16>, vector<128x128xbf16>, vector<256x128xf32> -> vector<256x128xf32>
    %18 = arith.addf %12, %17 : vector<256x128xf32>
    %c0_21 = arith.constant 0 : index
    %c18 = arith.constant 18 : index
    %c0_22 = arith.constant 0 : index
    %19 = vector.load %arg1[%c0_21, %c18, %c0_22] : memref<1x384x128xbf16, #tpu.memory_space<vmem>>, vector<1x256x128xbf16>
    %20 = vector.shape_cast %19 : vector<1x256x128xbf16> to vector<256x128xbf16>
    %c3 = arith.constant 3 : index
    %c0_23 = arith.constant 0 : index
    %c0_24 = arith.constant 0 : index
    %21 = vector.load %arg2[%c3, %c0_23, %c0_24] : memref<9x128x128xbf16, #tpu.memory_space<vmem>>, vector<1x128x128xbf16>
    %22 = vector.shape_cast %21 : vector<1x128x128xbf16> to vector<128x128xbf16>
    %cst_25 = arith.constant dense<0.000000e+00> : vector<256x128xf32>
    %23 = tpu.matmul %20, %22, %cst_25 {dimension_numbers = #tpu.dot_dimension_numbers<[1], [0], [0], [1], [0, 0, 1, 1], [], []>} : vector<256x128xbf16>, vector<128x128xbf16>, vector<256x128xf32> -> vector<256x128xf32>
    %24 = arith.addf %18, %23 : vector<256x128xf32>
    %c0_26 = arith.constant 0 : index
    %c19 = arith.constant 19 : index
    %c0_27 = arith.constant 0 : index
    %25 = vector.load %arg1[%c0_26, %c19, %c0_27] : memref<1x384x128xbf16, #tpu.memory_space<vmem>>, vector<1x256x128xbf16>
    %26 = vector.shape_cast %25 : vector<1x256x128xbf16> to vector<256x128xbf16>
    %c4 = arith.constant 4 : index
    %c0_28 = arith.constant 0 : index
    %c0_29 = arith.constant 0 : index
    %27 = vector.load %arg2[%c4, %c0_28, %c0_29] : memref<9x128x128xbf16, #tpu.memory_space<vmem>>, vector<1x128x128xbf16>
    %28 = vector.shape_cast %27 : vector<1x128x128xbf16> to vector<128x128xbf16>
    %cst_30 = arith.constant dense<0.000000e+00> : vector<256x128xf32>
    %29 = tpu.matmul %26, %28, %cst_30 {dimension_numbers = #tpu.dot_dimension_numbers<[1], [0], [0], [1], [0, 0, 1, 1], [], []>} : vector<256x128xbf16>, vector<128x128xbf16>, vector<256x128xf32> -> vector<256x128xf32>
    %30 = arith.addf %24, %29 : vector<256x128xf32>
    %c0_31 = arith.constant 0 : index
    %c20 = arith.constant 20 : index
    %c0_32 = arith.constant 0 : index
    %31 = vector.load %arg1[%c0_31, %c20, %c0_32] : memref<1x384x128xbf16, #tpu.memory_space<vmem>>, vector<1x256x128xbf16>
    %32 = vector.shape_cast %31 : vector<1x256x128xbf16> to vector<256x128xbf16>
    %c5 = arith.constant 5 : index
    %c0_33 = arith.constant 0 : index
    %c0_34 = arith.constant 0 : index
    %33 = vector.load %arg2[%c5, %c0_33, %c0_34] : memref<9x128x128xbf16, #tpu.memory_space<vmem>>, vector<1x128x128xbf16>
    %34 = vector.shape_cast %33 : vector<1x128x128xbf16> to vector<128x128xbf16>
    %cst_35 = arith.constant dense<0.000000e+00> : vector<256x128xf32>
    %35 = tpu.matmul %32, %34, %cst_35 {dimension_numbers = #tpu.dot_dimension_numbers<[1], [0], [0], [1], [0, 0, 1, 1], [], []>} : vector<256x128xbf16>, vector<128x128xbf16>, vector<256x128xf32> -> vector<256x128xf32>
    %36 = arith.addf %30, %35 : vector<256x128xf32>
    %c0_36 = arith.constant 0 : index
    %c36 = arith.constant 36 : index
    %c0_37 = arith.constant 0 : index
    %37 = vector.load %arg1[%c0_36, %c36, %c0_37] : memref<1x384x128xbf16, #tpu.memory_space<vmem>>, vector<1x256x128xbf16>
    %38 = vector.shape_cast %37 : vector<1x256x128xbf16> to vector<256x128xbf16>
    %c6 = arith.constant 6 : index
    %c0_38 = arith.constant 0 : index
    %c0_39 = arith.constant 0 : index
    %39 = vector.load %arg2[%c6, %c0_38, %c0_39] : memref<9x128x128xbf16, #tpu.memory_space<vmem>>, vector<1x128x128xbf16>
    %40 = vector.shape_cast %39 : vector<1x128x128xbf16> to vector<128x128xbf16>
    %cst_40 = arith.constant dense<0.000000e+00> : vector<256x128xf32>
    %41 = tpu.matmul %38, %40, %cst_40 {dimension_numbers = #tpu.dot_dimension_numbers<[1], [0], [0], [1], [0, 0, 1, 1], [], []>} : vector<256x128xbf16>, vector<128x128xbf16>, vector<256x128xf32> -> vector<256x128xf32>
    %42 = arith.addf %36, %41 : vector<256x128xf32>
    %c0_41 = arith.constant 0 : index
    %c37 = arith.constant 37 : index
    %c0_42 = arith.constant 0 : index
    %43 = vector.load %arg1[%c0_41, %c37, %c0_42] : memref<1x384x128xbf16, #tpu.memory_space<vmem>>, vector<1x256x128xbf16>
    %44 = vector.shape_cast %43 : vector<1x256x128xbf16> to vector<256x128xbf16>
    %c7 = arith.constant 7 : index
    %c0_43 = arith.constant 0 : index
    %c0_44 = arith.constant 0 : index
    %45 = vector.load %arg2[%c7, %c0_43, %c0_44] : memref<9x128x128xbf16, #tpu.memory_space<vmem>>, vector<1x128x128xbf16>
    %46 = vector.shape_cast %45 : vector<1x128x128xbf16> to vector<128x128xbf16>
    %cst_45 = arith.constant dense<0.000000e+00> : vector<256x128xf32>
    %47 = tpu.matmul %44, %46, %cst_45 {dimension_numbers = #tpu.dot_dimension_numbers<[1], [0], [0], [1], [0, 0, 1, 1], [], []>} : vector<256x128xbf16>, vector<128x128xbf16>, vector<256x128xf32> -> vector<256x128xf32>
    %48 = arith.addf %42, %47 : vector<256x128xf32>
    %c0_46 = arith.constant 0 : index
    %c38 = arith.constant 38 : index
    %c0_47 = arith.constant 0 : index
    %49 = vector.load %arg1[%c0_46, %c38, %c0_47] : memref<1x384x128xbf16, #tpu.memory_space<vmem>>, vector<1x256x128xbf16>
    %50 = vector.shape_cast %49 : vector<1x256x128xbf16> to vector<256x128xbf16>
    %c8 = arith.constant 8 : index
    %c0_48 = arith.constant 0 : index
    %c0_49 = arith.constant 0 : index
    %51 = vector.load %arg2[%c8, %c0_48, %c0_49] : memref<9x128x128xbf16, #tpu.memory_space<vmem>>, vector<1x128x128xbf16>
    %52 = vector.shape_cast %51 : vector<1x128x128xbf16> to vector<128x128xbf16>
    %cst_50 = arith.constant dense<0.000000e+00> : vector<256x128xf32>
    %53 = tpu.matmul %50, %52, %cst_50 {dimension_numbers = #tpu.dot_dimension_numbers<[1], [0], [0], [1], [0, 0, 1, 1], [], []>} : vector<256x128xbf16>, vector<128x128xbf16>, vector<256x128xf32> -> vector<256x128xf32>
    %54 = arith.addf %48, %53 : vector<256x128xf32>
    %55 = vector.broadcast %0 : vector<1x128xf32> to vector<256x128xf32>
    %56 = arith.mulf %54, %55 : vector<256x128xf32>
    %57 = vector.broadcast %1 : vector<1x128xf32> to vector<256x128xf32>
    %58 = arith.addf %56, %57 : vector<256x128xf32>
    %cst_51 = arith.constant 0.000000e+00 : f32
    %59 = vector.broadcast %cst_51 : f32 to vector<256x128xf32>
    %60 = arith.maximumf %58, %59 : vector<256x128xf32>
    %c0_52 = arith.constant 0 : index
    %c0_53 = arith.constant 0 : index
    %61 = vector.load %arg21[%c0_52, %c0_53] : memref<324x128xf32, #tpu.memory_space<vmem>>, vector<256x128xf32>
    tpu.vector_store %arg21[%c0_52, %c0_53], %60 {strides = array<i32>} : memref<324x128xf32, #tpu.memory_space<vmem>>, vector<256x128xf32>,
    %c0_54 = arith.constant 0 : index
    %c256 = arith.constant 256 : index
    %c0_55 = arith.constant 0 : index
    %62 = vector.load %arg1[%c0_54, %c256, %c0_55] : memref<1x384x128xbf16, #tpu.memory_space<vmem>>, vector<1x68x128xbf16>
    %63 = vector.shape_cast %62 : vector<1x68x128xbf16> to vector<68x128xbf16>
    %c0_56 = arith.constant 0 : index
    %c0_57 = arith.constant 0 : index
    %c0_58 = arith.constant 0 : index
    %64 = vector.load %arg2[%c0_56, %c0_57, %c0_58] : memref<9x128x128xbf16, #tpu.memory_space<vmem>>, vector<1x128x128xbf16>
    %65 = vector.shape_cast %64 : vector<1x128x128xbf16> to vector<128x128xbf16>
    %cst_59 = arith.constant dense<0.000000e+00> : vector<68x128xf32>
    %66 = tpu.matmul %63, %65, %cst_59 {dimension_numbers = #tpu.dot_dimension_numbers<[1], [0], [0], [1], [0, 0, 1, 1], [], []>} : vector<68x128xbf16>, vector<128x128xbf16>, vector<68x128xf32> -> vector<68x128xf32>
    %c0_60 = arith.constant 0 : index
    %c257 = arith.constant 257 : index
    %c0_61 = arith.constant 0 : index
    %67 = vector.load %arg1[%c0_60, %c257, %c0_61] : memref<1x384x128xbf16, #tpu.memory_space<vmem>>, vector<1x68x128xbf16>
    %68 = vector.shape_cast %67 : vector<1x68x128xbf16> to vector<68x128xbf16>
    %c1_62 = arith.constant 1 : index
    %c0_63 = arith.constant 0 : index
    %c0_64 = arith.constant 0 : index
    %69 = vector.load %arg2[%c1_62, %c0_63, %c0_64] : memref<9x128x128xbf16, #tpu.memory_space<vmem>>, vector<1x128x128xbf16>
    %70 = vector.shape_cast %69 : vector<1x128x128xbf16> to vector<128x128xbf16>
    %cst_65 = arith.constant dense<0.000000e+00> : vector<68x128xf32>
    %71 = tpu.matmul %68, %70, %cst_65 {dimension_numbers = #tpu.dot_dimension_numbers<[1], [0], [0], [1], [0, 0, 1, 1], [], []>} : vector<68x128xbf16>, vector<128x128xbf16>, vector<68x128xf32> -> vector<68x128xf32>
    %72 = arith.addf %66, %71 : vector<68x128xf32>
    %c0_66 = arith.constant 0 : index
    %c258 = arith.constant 258 : index
    %c0_67 = arith.constant 0 : index
    %73 = vector.load %arg1[%c0_66, %c258, %c0_67] : memref<1x384x128xbf16, #tpu.memory_space<vmem>>, vector<1x68x128xbf16>
    %74 = vector.shape_cast %73 : vector<1x68x128xbf16> to vector<68x128xbf16>
    %c2_68 = arith.constant 2 : index
    %c0_69 = arith.constant 0 : index
    %c0_70 = arith.constant 0 : index
    %75 = vector.load %arg2[%c2_68, %c0_69, %c0_70] : memref<9x128x128xbf16, #tpu.memory_space<vmem>>, vector<1x128x128xbf16>
    %76 = vector.shape_cast %75 : vector<1x128x128xbf16> to vector<128x128xbf16>
    %cst_71 = arith.constant dense<0.000000e+00> : vector<68x128xf32>
    %77 = tpu.matmul %74, %76, %cst_71 {dimension_numbers = #tpu.dot_dimension_numbers<[1], [0], [0], [1], [0, 0, 1, 1], [], []>} : vector<68x128xbf16>, vector<128x128xbf16>, vector<68x128xf32> -> vector<68x128xf32>
    %78 = arith.addf %72, %77 : vector<68x128xf32>
    %c0_72 = arith.constant 0 : index
    %c274 = arith.constant 274 : index
    %c0_73 = arith.constant 0 : index
    %79 = vector.load %arg1[%c0_72, %c274, %c0_73] : memref<1x384x128xbf16, #tpu.memory_space<vmem>>, vector<1x68x128xbf16>
    %80 = vector.shape_cast %79 : vector<1x68x128xbf16> to vector<68x128xbf16>
    %c3_74 = arith.constant 3 : index
    %c0_75 = arith.constant 0 : index
    %c0_76 = arith.constant 0 : index
    %81 = vector.load %arg2[%c3_74, %c0_75, %c0_76] : memref<9x128x128xbf16, #tpu.memory_space<vmem>>, vector<1x128x128xbf16>
    %82 = vector.shape_cast %81 : vector<1x128x128xbf16> to vector<128x128xbf16>
    %cst_77 = arith.constant dense<0.000000e+00> : vector<68x128xf32>
    %83 = tpu.matmul %80, %82, %cst_77 {dimension_numbers = #tpu.dot_dimension_numbers<[1], [0], [0], [1], [0, 0, 1, 1], [], []>} : vector<68x128xbf16>, vector<128x128xbf16>, vector<68x128xf32> -> vector<68x128xf32>
    %84 = arith.addf %78, %83 : vector<68x128xf32>
    %c0_78 = arith.constant 0 : index
    %c275 = arith.constant 275 : index
    %c0_79 = arith.constant 0 : index
    %85 = vector.load %arg1[%c0_78, %c275, %c0_79] : memref<1x384x128xbf16, #tpu.memory_space<vmem>>, vector<1x68x128xbf16>
    %86 = vector.shape_cast %85 : vector<1x68x128xbf16> to vector<68x128xbf16>
    %c4_80 = arith.constant 4 : index
    %c0_81 = arith.constant 0 : index
    %c0_82 = arith.constant 0 : index
    %87 = vector.load %arg2[%c4_80, %c0_81, %c0_82] : memref<9x128x128xbf16, #tpu.memory_space<vmem>>, vector<1x128x128xbf16>
    %88 = vector.shape_cast %87 : vector<1x128x128xbf16> to vector<128x128xbf16>
    %cst_83 = arith.constant dense<0.000000e+00> : vector<68x128xf32>
    %89 = tpu.matmul %86, %88, %cst_83 {dimension_numbers = #tpu.dot_dimension_numbers<[1], [0], [0], [1], [0, 0, 1, 1], [], []>} : vector<68x128xbf16>, vector<128x128xbf16>, vector<68x128xf32> -> vector<68x128xf32>
    %90 = arith.addf %84, %89 : vector<68x128xf32>
    %c0_84 = arith.constant 0 : index
    %c276 = arith.constant 276 : index
    %c0_85 = arith.constant 0 : index
    %91 = vector.load %arg1[%c0_84, %c276, %c0_85] : memref<1x384x128xbf16, #tpu.memory_space<vmem>>, vector<1x68x128xbf16>
    %92 = vector.shape_cast %91 : vector<1x68x128xbf16> to vector<68x128xbf16>
    %c5_86 = arith.constant 5 : index
    %c0_87 = arith.constant 0 : index
    %c0_88 = arith.constant 0 : index
    %93 = vector.load %arg2[%c5_86, %c0_87, %c0_88] : memref<9x128x128xbf16, #tpu.memory_space<vmem>>, vector<1x128x128xbf16>
    %94 = vector.shape_cast %93 : vector<1x128x128xbf16> to vector<128x128xbf16>
    %cst_89 = arith.constant dense<0.000000e+00> : vector<68x128xf32>
    %95 = tpu.matmul %92, %94, %cst_89 {dimension_numbers = #tpu.dot_dimension_numbers<[1], [0], [0], [1], [0, 0, 1, 1], [], []>} : vector<68x128xbf16>, vector<128x128xbf16>, vector<68x128xf32> -> vector<68x128xf32>
    %96 = arith.addf %90, %95 : vector<68x128xf32>
    %c0_90 = arith.constant 0 : index
    %c292 = arith.constant 292 : index
    %c0_91 = arith.constant 0 : index
    %97 = vector.load %arg1[%c0_90, %c292, %c0_91] : memref<1x384x128xbf16, #tpu.memory_space<vmem>>, vector<1x68x128xbf16>
    %98 = vector.shape_cast %97 : vector<1x68x128xbf16> to vector<68x128xbf16>
    %c6_92 = arith.constant 6 : index
    %c0_93 = arith.constant 0 : index
    %c0_94 = arith.constant 0 : index
    %99 = vector.load %arg2[%c6_92, %c0_93, %c0_94] : memref<9x128x128xbf16, #tpu.memory_space<vmem>>, vector<1x128x128xbf16>
    %100 = vector.shape_cast %99 : vector<1x128x128xbf16> to vector<128x128xbf16>
    %cst_95 = arith.constant dense<0.000000e+00> : vector<68x128xf32>
    %101 = tpu.matmul %98, %100, %cst_95 {dimension_numbers = #tpu.dot_dimension_numbers<[1], [0], [0], [1], [0, 0, 1, 1], [], []>} : vector<68x128xbf16>, vector<128x128xbf16>, vector<68x128xf32> -> vector<68x128xf32>
    %102 = arith.addf %96, %101 : vector<68x128xf32>
    %c0_96 = arith.constant 0 : index
    %c293 = arith.constant 293 : index
    %c0_97 = arith.constant 0 : index
    %103 = vector.load %arg1[%c0_96, %c293, %c0_97] : memref<1x384x128xbf16, #tpu.memory_space<vmem>>, vector<1x68x128xbf16>
    %104 = vector.shape_cast %103 : vector<1x68x128xbf16> to vector<68x128xbf16>
    %c7_98 = arith.constant 7 : index
    %c0_99 = arith.constant 0 : index
    %c0_100 = arith.constant 0 : index
    %105 = vector.load %arg2[%c7_98, %c0_99, %c0_100] : memref<9x128x128xbf16, #tpu.memory_space<vmem>>, vector<1x128x128xbf16>
    %106 = vector.shape_cast %105 : vector<1x128x128xbf16> to vector<128x128xbf16>
    %cst_101 = arith.constant dense<0.000000e+00> : vector<68x128xf32>
    %107 = tpu.matmul %104, %106, %cst_101 {dimension_numbers = #tpu.dot_dimension_numbers<[1], [0], [0], [1], [0, 0, 1, 1], [], []>} : vector<68x128xbf16>, vector<128x128xbf16>, vector<68x128xf32> -> vector<68x128xf32>
    %108 = arith.addf %102, %107 : vector<68x128xf32>
    %c0_102 = arith.constant 0 : index
    %c294 = arith.constant 294 : index
    %c0_103 = arith.constant 0 : index
    %109 = vector.load %arg1[%c0_102, %c294, %c0_103] : memref<1x384x128xbf16, #tpu.memory_space<vmem>>, vector<1x68x128xbf16>
    %110 = vector.shape_cast %109 : vector<1x68x128xbf16> to vector<68x128xbf16>
    %c8_104 = arith.constant 8 : index
    %c0_105 = arith.constant 0 : index
    %c0_106 = arith.constant 0 : index
    %111 = vector.load %arg2[%c8_104, %c0_105, %c0_106] : memref<9x128x128xbf16, #tpu.memory_space<vmem>>, vector<1x128x128xbf16>
    %112 = vector.shape_cast %111 : vector<1x128x128xbf16> to vector<128x128xbf16>
    %cst_107 = arith.constant dense<0.000000e+00> : vector<68x128xf32>
    %113 = tpu.matmul %110, %112, %cst_107 {dimension_numbers = #tpu.dot_dimension_numbers<[1], [0], [0], [1], [0, 0, 1, 1], [], []>} : vector<68x128xbf16>, vector<128x128xbf16>, vector<68x128xf32> -> vector<68x128xf32>
    %114 = arith.addf %108, %113 : vector<68x128xf32>
    %115 = vector.broadcast %0 : vector<1x128xf32> to vector<68x128xf32>
    %116 = arith.mulf %114, %115 : vector<68x128xf32>
    %117 = vector.broadcast %1 : vector<1x128xf32> to vector<68x128xf32>
    %118 = arith.addf %116, %117 : vector<68x128xf32>
    %cst_108 = arith.constant 0.000000e+00 : f32
    %119 = vector.broadcast %cst_108 : f32 to vector<68x128xf32>
    %120 = arith.maximumf %118, %119 : vector<68x128xf32>
    %c256_109 = arith.constant 256 : index
    %c0_110 = arith.constant 0 : index
    %121 = vector.load %arg21[%c256_109, %c0_110] : memref<324x128xf32, #tpu.memory_space<vmem>>, vector<68x128xf32>
    tpu.vector_store %arg21[%c256_109, %c0_110], %120 {strides = array<i32>} : memref<324x128xf32, #tpu.memory_space<vmem>>, vector<68x128xf32>,
    %cst_111 = arith.constant 0.000000e+00 : bf16
    %122 = vector.broadcast %cst_111 : bf16 to vector<11x128xbf16>
    %cst_112 = arith.constant 0.000000e+00 : bf16
    %123 = vector.broadcast %cst_112 : bf16 to vector<2x128xbf16>
    %c0_113 = arith.constant 0 : index
    %c0_114 = arith.constant 0 : index
    %124 = vector.load %arg22[%c0_113, %c0_114] : memref<128x128xbf16, #tpu.memory_space<vmem>>, vector<11x128xbf16>
    tpu.vector_store %arg22[%c0_113, %c0_114], %122 {strides = array<i32>} : memref<128x128xbf16, #tpu.memory_space<vmem>>, vector<11x128xbf16>,
    %c19_115 = arith.constant 19 : index
    %c0_116 = arith.constant 0 : index
    %125 = vector.load %arg22[%c19_115, %c0_116] : memref<128x128xbf16, #tpu.memory_space<vmem>>, vector<2x128xbf16>
    tpu.vector_store %arg22[%c19_115, %c0_116], %123 {strides = array<i32>} : memref<128x128xbf16, #tpu.memory_space<vmem>>, vector<2x128xbf16>,
    %c29 = arith.constant 29 : index
    %c0_117 = arith.constant 0 : index
    %126 = vector.load %arg22[%c29, %c0_117] : memref<128x128xbf16, #tpu.memory_space<vmem>>, vector<2x128xbf16>
    tpu.vector_store %arg22[%c29, %c0_117], %123 {strides = array<i32>} : memref<128x128xbf16, #tpu.memory_space<vmem>>, vector<2x128xbf16>,
    %c39 = arith.constant 39 : index
    %c0_118 = arith.constant 0 : index
    %127 = vector.load %arg22[%c39, %c0_118] : memref<128x128xbf16, #tpu.memory_space<vmem>>, vector<2x128xbf16>
    tpu.vector_store %arg22[%c39, %c0_118], %123 {strides = array<i32>} : memref<128x128xbf16, #tpu.memory_space<vmem>>, vector<2x128xbf16>,
    %c49 = arith.constant 49 : index
    %c0_119 = arith.constant 0 : index
    %128 = vector.load %arg22[%c49, %c0_119] : memref<128x128xbf16, #tpu.memory_space<vmem>>, vector<2x128xbf16>
    tpu.vector_store %arg22[%c49, %c0_119], %123 {strides = array<i32>} : memref<128x128xbf16, #tpu.memory_space<vmem>>, vector<2x128xbf16>,
    %c59 = arith.constant 59 : index
    %c0_120 = arith.constant 0 : index
    %129 = vector.load %arg22[%c59, %c0_120] : memref<128x128xbf16, #tpu.memory_space<vmem>>, vector<2x128xbf16>
    tpu.vector_store %arg22[%c59, %c0_120], %123 {strides = array<i32>} : memref<128x128xbf16, #tpu.memory_space<vmem>>, vector<2x128xbf16>,
    %c69 = arith.constant 69 : index
    %c0_121 = arith.constant 0 : index
    %130 = vector.load %arg22[%c69, %c0_121] : memref<128x128xbf16, #tpu.memory_space<vmem>>, vector<2x128xbf16>
    tpu.vector_store %arg22[%c69, %c0_121], %123 {strides = array<i32>} : memref<128x128xbf16, #tpu.memory_space<vmem>>, vector<2x128xbf16>,
    %c79 = arith.constant 79 : index
    %c0_122 = arith.constant 0 : index
    %131 = vector.load %arg22[%c79, %c0_122] : memref<128x128xbf16, #tpu.memory_space<vmem>>, vector<2x128xbf16>
    tpu.vector_store %arg22[%c79, %c0_122], %123 {strides = array<i32>} : memref<128x128xbf16, #tpu.memory_space<vmem>>, vector<2x128xbf16>,
    %c89 = arith.constant 89 : index
    %c0_123 = arith.constant 0 : index
    %132 = vector.load %arg22[%c89, %c0_123] : memref<128x128xbf16, #tpu.memory_space<vmem>>, vector<11x128xbf16>
    tpu.vector_store %arg22[%c89, %c0_123], %122 {strides = array<i32>} : memref<128x128xbf16, #tpu.memory_space<vmem>>, vector<11x128xbf16>,
    %cst_124 = arith.constant 0.000000e+00 : bf16
    %133 = vector.broadcast %cst_124 : bf16 to vector<28x128xbf16>
    %c100 = arith.constant 100 : index
    %c0_125 = arith.constant 0 : index
    %134 = vector.load %arg22[%c100, %c0_125] : memref<128x128xbf16, #tpu.memory_space<vmem>>, vector<28x128xbf16>
    tpu.vector_store %arg22[%c100, %c0_125], %133 {strides = array<i32>} : memref<128x128xbf16, #tpu.memory_space<vmem>>, vector<28x128xbf16>,
    %c0_126 = arith.constant 0 : index
    %c0_127 = arith.constant 0 : index
    %135 = tpu.strided_load %arg21[%c0_126, %c0_127] {strides = array<i32: 2, 1>} : memref<324x128xf32, #tpu.memory_space<vmem>>, vector<8x128xf32>
    %c1_128 = arith.constant 1 : index
    %c0_129 = arith.constant 0 : index
    %136 = tpu.strided_load %arg21[%c1_128, %c0_129] {strides = array<i32: 2, 1>} : memref<324x128xf32, #tpu.memory_space<vmem>>, vector<8x128xf32>
    %c18_130 = arith.constant 18 : index
    %c0_131 = arith.constant 0 : index
    %137 = tpu.strided_load %arg21[%c18_130, %c0_131] {strides = array<i32: 2, 1>} : memref<324x128xf32, #tpu.memory_space<vmem>>, vector<8x128xf32>
    %c19_132 = arith.constant 19 : index
    %c0_133 = arith.constant 0 : index
    %138 = tpu.strided_load %arg21[%c19_132, %c0_133] {strides = array<i32: 2, 1>} : memref<324x128xf32, #tpu.memory_space<vmem>>, vector<8x128xf32>
    %139 = arith.maximumf %135, %136 : vector<8x128xf32>
    %140 = arith.maximumf %137, %138 : vector<8x128xf32>
    %141 = arith.maximumf %139, %140 : vector<8x128xf32>
    %142 = arith.truncf %141 : vector<8x128xf32> to vector<8x128xbf16>
    %c11 = arith.constant 11 : index
    %c0_134 = arith.constant 0 : index
    %143 = vector.load %arg22[%c11, %c0_134] : memref<128x128xbf16, #tpu.memory_space<vmem>>, vector<8x128xbf16>
    tpu.vector_store %arg22[%c11, %c0_134], %142 {strides = array<i32>} : memref<128x128xbf16, #tpu.memory_space<vmem>>, vector<8x128xbf16>,
    %c36_135 = arith.constant 36 : index
    %c0_136 = arith.constant 0 : index
    %144 = tpu.strided_load %arg21[%c36_135, %c0_136] {strides = array<i32: 2, 1>} : memref<324x128xf32, #tpu.memory_space<vmem>>, vector<8x128xf32>
    %c37_137 = arith.constant 37 : index
    %c0_138 = arith.constant 0 : index
    %145 = tpu.strided_load %arg21[%c37_137, %c0_138] {strides = array<i32: 2, 1>} : memref<324x128xf32, #tpu.memory_space<vmem>>, vector<8x128xf32>
    %c54 = arith.constant 54 : index
    %c0_139 = arith.constant 0 : index
    %146 = tpu.strided_load %arg21[%c54, %c0_139] {strides = array<i32: 2, 1>} : memref<324x128xf32, #tpu.memory_space<vmem>>, vector<8x128xf32>
    %c55 = arith.constant 55 : index
    %c0_140 = arith.constant 0 : index
    %147 = tpu.strided_load %arg21[%c55, %c0_140] {strides = array<i32: 2, 1>} : memref<324x128xf32, #tpu.memory_space<vmem>>, vector<8x128xf32>
    %148 = arith.maximumf %144, %145 : vector<8x128xf32>
    %149 = arith.maximumf %146, %147 : vector<8x128xf32>
    %150 = arith.maximumf %148, %149 : vector<8x128xf32>
    %151 = arith.truncf %150 : vector<8x128xf32> to vector<8x128xbf16>
    %c21 = arith.constant 21 : index
    %c0_141 = arith.constant 0 : index
    %152 = vector.load %arg22[%c21, %c0_141] : memref<128x128xbf16, #tpu.memory_space<vmem>>, vector<8x128xbf16>
    tpu.vector_store %arg22[%c21, %c0_141], %151 {strides = array<i32>} : memref<128x128xbf16, #tpu.memory_space<vmem>>, vector<8x128xbf16>,
    %c72 = arith.constant 72 : index
    %c0_142 = arith.constant 0 : index
    %153 = tpu.strided_load %arg21[%c72, %c0_142] {strides = array<i32: 2, 1>} : memref<324x128xf32, #tpu.memory_space<vmem>>, vector<8x128xf32>
    %c73 = arith.constant 73 : index
    %c0_143 = arith.constant 0 : index
    %154 = tpu.strided_load %arg21[%c73, %c0_143] {strides = array<i32: 2, 1>} : memref<324x128xf32, #tpu.memory_space<vmem>>, vector<8x128xf32>
    %c90 = arith.constant 90 : index
    %c0_144 = arith.constant 0 : index
    %155 = tpu.strided_load %arg21[%c90, %c0_144] {strides = array<i32: 2, 1>} : memref<324x128xf32, #tpu.memory_space<vmem>>, vector<8x128xf32>
    %c91 = arith.constant 91 : index
    %c0_145 = arith.constant 0 : index
    %156 = tpu.strided_load %arg21[%c91, %c0_145] {strides = array<i32: 2, 1>} : memref<324x128xf32, #tpu.memory_space<vmem>>, vector<8x128xf32>
    %157 = arith.maximumf %153, %154 : vector<8x128xf32>
    %158 = arith.maximumf %155, %156 : vector<8x128xf32>
    %159 = arith.maximumf %157, %158 : vector<8x128xf32>
    %160 = arith.truncf %159 : vector<8x128xf32> to vector<8x128xbf16>
    %c31 = arith.constant 31 : index
    %c0_146 = arith.constant 0 : index
    %161 = vector.load %arg22[%c31, %c0_146] : memref<128x128xbf16, #tpu.memory_space<vmem>>, vector<8x128xbf16>
    tpu.vector_store %arg22[%c31, %c0_146], %160 {strides = array<i32>} : memref<128x128xbf16, #tpu.memory_space<vmem>>, vector<8x128xbf16>,
    %c108 = arith.constant 108 : index
    %c0_147 = arith.constant 0 : index
    %162 = tpu.strided_load %arg21[%c108, %c0_147] {strides = array<i32: 2, 1>} : memref<324x128xf32, #tpu.memory_space<vmem>>, vector<8x128xf32>
    %c109 = arith.constant 109 : index
    %c0_148 = arith.constant 0 : index
    %163 = tpu.strided_load %arg21[%c109, %c0_148] {strides = array<i32: 2, 1>} : memref<324x128xf32, #tpu.memory_space<vmem>>, vector<8x128xf32>
    %c126 = arith.constant 126 : index
    %c0_149 = arith.constant 0 : index
    %164 = tpu.strided_load %arg21[%c126, %c0_149] {strides = array<i32: 2, 1>} : memref<324x128xf32, #tpu.memory_space<vmem>>, vector<8x128xf32>
    %c127 = arith.constant 127 : index
    %c0_150 = arith.constant 0 : index
    %165 = tpu.strided_load %arg21[%c127, %c0_150] {strides = array<i32: 2, 1>} : memref<324x128xf32, #tpu.memory_space<vmem>>, vector<8x128xf32>
    %166 = arith.maximumf %162, %163 : vector<8x128xf32>
    %167 = arith.maximumf %164, %165 : vector<8x128xf32>
    %168 = arith.maximumf %166, %167 : vector<8x128xf32>
    %169 = arith.truncf %168 : vector<8x128xf32> to vector<8x128xbf16>
    %c41 = arith.constant 41 : index
    %c0_151 = arith.constant 0 : index
    %170 = vector.load %arg22[%c41, %c0_151] : memref<128x128xbf16, #tpu.memory_space<vmem>>, vector<8x128xbf16>
    tpu.vector_store %arg22[%c41, %c0_151], %169 {strides = array<i32>} : memref<128x128xbf16, #tpu.memory_space<vmem>>, vector<8x128xbf16>,
    %c144 = arith.constant 144 : index
    %c0_152 = arith.constant 0 : index
    %171 = tpu.strided_load %arg21[%c144, %c0_152] {strides = array<i32: 2, 1>} : memref<324x128xf32, #tpu.memory_space<vmem>>, vector<8x128xf32>
    %c145 = arith.constant 145 : index
    %c0_153 = arith.constant 0 : index
    %172 = tpu.strided_load %arg21[%c145, %c0_153] {strides = array<i32: 2, 1>} : memref<324x128xf32, #tpu.memory_space<vmem>>, vector<8x128xf32>
    %c162 = arith.constant 162 : index
    %c0_154 = arith.constant 0 : index
    %173 = tpu.strided_load %arg21[%c162, %c0_154] {strides = array<i32: 2, 1>} : memref<324x128xf32, #tpu.memory_space<vmem>>, vector<8x128xf32>
    %c163 = arith.constant 163 : index
    %c0_155 = arith.constant 0 : index
    %174 = tpu.strided_load %arg21[%c163, %c0_155] {strides = array<i32: 2, 1>} : memref<324x128xf32, #tpu.memory_space<vmem>>, vector<8x128xf32>
    %175 = arith.maximumf %171, %172 : vector<8x128xf32>
    %176 = arith.maximumf %173, %174 : vector<8x128xf32>
    %177 = arith.maximumf %175, %176 : vector<8x128xf32>
    %178 = arith.truncf %177 : vector<8x128xf32> to vector<8x128xbf16>
    %c51 = arith.constant 51 : index
    %c0_156 = arith.constant 0 : index
    %179 = vector.load %arg22[%c51, %c0_156] : memref<128x128xbf16, #tpu.memory_space<vmem>>, vector<8x128xbf16>
    tpu.vector_store %arg22[%c51, %c0_156], %178 {strides = array<i32>} : memref<128x128xbf16, #tpu.memory_space<vmem>>, vector<8x128xbf16>,
    %c180 = arith.constant 180 : index
    %c0_157 = arith.constant 0 : index
    %180 = tpu.strided_load %arg21[%c180, %c0_157] {strides = array<i32: 2, 1>} : memref<324x128xf32, #tpu.memory_space<vmem>>, vector<8x128xf32>
    %c181 = arith.constant 181 : index
    %c0_158 = arith.constant 0 : index
    %181 = tpu.strided_load %arg21[%c181, %c0_158] {strides = array<i32: 2, 1>} : memref<324x128xf32, #tpu.memory_space<vmem>>, vector<8x128xf32>
    %c198 = arith.constant 198 : index
    %c0_159 = arith.constant 0 : index
    %182 = tpu.strided_load %arg21[%c198, %c0_159] {strides = array<i32: 2, 1>} : memref<324x128xf32, #tpu.memory_space<vmem>>, vector<8x128xf32>
    %c199 = arith.constant 199 : index
    %c0_160 = arith.constant 0 : index
    %183 = tpu.strided_load %arg21[%c199, %c0_160] {strides = array<i32: 2, 1>} : memref<324x128xf32, #tpu.memory_space<vmem>>, vector<8x128xf32>
    %184 = arith.maximumf %180, %181 : vector<8x128xf32>
    %185 = arith.maximumf %182, %183 : vector<8x128xf32>
    %186 = arith.maximumf %184, %185 : vector<8x128xf32>
    %187 = arith.truncf %186 : vector<8x128xf32> to vector<8x128xbf16>
    %c61 = arith.constant 61 : index
    %c0_161 = arith.constant 0 : index
    %188 = vector.load %arg22[%c61, %c0_161] : memref<128x128xbf16, #tpu.memory_space<vmem>>, vector<8x128xbf16>
    tpu.vector_store %arg22[%c61, %c0_161], %187 {strides = array<i32>} : memref<128x128xbf16, #tpu.memory_space<vmem>>, vector<8x128xbf16>,
    %c216 = arith.constant 216 : index
    %c0_162 = arith.constant 0 : index
    %189 = tpu.strided_load %arg21[%c216, %c0_162] {strides = array<i32: 2, 1>} : memref<324x128xf32, #tpu.memory_space<vmem>>, vector<8x128xf32>
    %c217 = arith.constant 217 : index
    %c0_163 = arith.constant 0 : index
    %190 = tpu.strided_load %arg21[%c217, %c0_163] {strides = array<i32: 2, 1>} : memref<324x128xf32, #tpu.memory_space<vmem>>, vector<8x128xf32>
    %c234 = arith.constant 234 : index
    %c0_164 = arith.constant 0 : index
    %191 = tpu.strided_load %arg21[%c234, %c0_164] {strides = array<i32: 2, 1>} : memref<324x128xf32, #tpu.memory_space<vmem>>, vector<8x128xf32>
    %c235 = arith.constant 235 : index
    %c0_165 = arith.constant 0 : index
    %192 = tpu.strided_load %arg21[%c235, %c0_165] {strides = array<i32: 2, 1>} : memref<324x128xf32, #tpu.memory_space<vmem>>, vector<8x128xf32>
    %193 = arith.maximumf %189, %190 : vector<8x128xf32>
    %194 = arith.maximumf %191, %192 : vector<8x128xf32>
    %195 = arith.maximumf %193, %194 : vector<8x128xf32>
    %196 = arith.truncf %195 : vector<8x128xf32> to vector<8x128xbf16>
    %c71 = arith.constant 71 : index
    %c0_166 = arith.constant 0 : index
    %197 = vector.load %arg22[%c71, %c0_166] : memref<128x128xbf16, #tpu.memory_space<vmem>>, vector<8x128xbf16>
    tpu.vector_store %arg22[%c71, %c0_166], %196 {strides = array<i32>} : memref<128x128xbf16, #tpu.memory_space<vmem>>, vector<8x128xbf16>,
    %c252 = arith.constant 252 : index
    %c0_167 = arith.constant 0 : index
    %198 = tpu.strided_load %arg21[%c252, %c0_167] {strides = array<i32: 2, 1>} : memref<324x128xf32, #tpu.memory_space<vmem>>, vector<8x128xf32>
    %c253 = arith.constant 253 : index
    %c0_168 = arith.constant 0 : index
    %199 = tpu.strided_load %arg21[%c253, %c0_168] {strides = array<i32: 2, 1>} : memref<324x128xf32, #tpu.memory_space<vmem>>, vector<8x128xf32>
    %c270 = arith.constant 270 : index
    %c0_169 = arith.constant 0 : index
    %200 = tpu.strided_load %arg21[%c270, %c0_169] {strides = array<i32: 2, 1>} : memref<324x128xf32, #tpu.memory_space<vmem>>, vector<8x128xf32>
    %c271 = arith.constant 271 : index
    %c0_170 = arith.constant 0 : index
    %201 = tpu.strided_load %arg21[%c271, %c0_170] {strides = array<i32: 2, 1>} : memref<324x128xf32, #tpu.memory_space<vmem>>, vector<8x128xf32>
    %202 = arith.maximumf %198, %199 : vector<8x128xf32>
    %203 = arith.maximumf %200, %201 : vector<8x128xf32>
    %204 = arith.maximumf %202, %203 : vector<8x128xf32>
    %205 = arith.truncf %204 : vector<8x128xf32> to vector<8x128xbf16>
    %c81 = arith.constant 81 : index
    %c0_171 = arith.constant 0 : index
    %206 = vector.load %arg22[%c81, %c0_171] : memref<128x128xbf16, #tpu.memory_space<vmem>>, vector<8x128xbf16>
    tpu.vector_store %arg22[%c81, %c0_171], %205 {strides = array<i32>} : memref<128x128xbf16, #tpu.memory_space<vmem>>, vector<8x128xbf16>,
    %c0_172 = arith.constant 0 : index
    %c0_173 = arith.constant 0 : index
    %207 = vector.load %arg6[%c0_172, %c0_173] : memref<1x128xf32, #tpu.memory_space<vmem>>, vector<1x128xf32>
    %c0_174 = arith.constant 0 : index
    %c0_175 = arith.constant 0 : index
    %208 = vector.load %arg7[%c0_174, %c0_175] : memref<1x128xf32, #tpu.memory_space<vmem>>, vector<1x128xf32>
    %c0_176 = arith.constant 0 : index
    %c0_177 = arith.constant 0 : index
    %209 = vector.load %arg22[%c0_176, %c0_177] : memref<128x128xbf16, #tpu.memory_space<vmem>>, vector<100x128xbf16>
    %c0_178 = arith.constant 0 : index
    %c0_179 = arith.constant 0 : index
    %c0_180 = arith.constant 0 : index
    %210 = vector.load %arg5[%c0_178, %c0_179, %c0_180] : memref<9x128x128xbf16, #tpu.memory_space<vmem>>, vector<1x128x128xbf16>
    %211 = vector.shape_cast %210 : vector<1x128x128xbf16> to vector<128x128xbf16>
    %cst_181 = arith.constant dense<0.000000e+00> : vector<100x128xf32>
    %212 = tpu.matmul %209, %211, %cst_181 {dimension_numbers = #tpu.dot_dimension_numbers<[1], [0], [0], [1], [0, 0, 1, 1], [], []>} : vector<100x128xbf16>, vector<128x128xbf16>, vector<100x128xf32> -> vector<100x128xf32>
    %c1_182 = arith.constant 1 : index
    %c0_183 = arith.constant 0 : index
    %213 = vector.load %arg22[%c1_182, %c0_183] : memref<128x128xbf16, #tpu.memory_space<vmem>>, vector<100x128xbf16>
    %c1_184 = arith.constant 1 : index
    %c0_185 = arith.constant 0 : index
    %c0_186 = arith.constant 0 : index
    %214 = vector.load %arg5[%c1_184, %c0_185, %c0_186] : memref<9x128x128xbf16, #tpu.memory_space<vmem>>, vector<1x128x128xbf16>
    %215 = vector.shape_cast %214 : vector<1x128x128xbf16> to vector<128x128xbf16>
    %cst_187 = arith.constant dense<0.000000e+00> : vector<100x128xf32>
    %216 = tpu.matmul %213, %215, %cst_187 {dimension_numbers = #tpu.dot_dimension_numbers<[1], [0], [0], [1], [0, 0, 1, 1], [], []>} : vector<100x128xbf16>, vector<128x128xbf16>, vector<100x128xf32> -> vector<100x128xf32>
    %217 = arith.addf %212, %216 : vector<100x128xf32>
    %c2_188 = arith.constant 2 : index
    %c0_189 = arith.constant 0 : index
    %218 = vector.load %arg22[%c2_188, %c0_189] : memref<128x128xbf16, #tpu.memory_space<vmem>>, vector<100x128xbf16>
    %c2_190 = arith.constant 2 : index
    %c0_191 = arith.constant 0 : index
    %c0_192 = arith.constant 0 : index
    %219 = vector.load %arg5[%c2_190, %c0_191, %c0_192] : memref<9x128x128xbf16, #tpu.memory_space<vmem>>, vector<1x128x128xbf16>
    %220 = vector.shape_cast %219 : vector<1x128x128xbf16> to vector<128x128xbf16>
    %cst_193 = arith.constant dense<0.000000e+00> : vector<100x128xf32>
    %221 = tpu.matmul %218, %220, %cst_193 {dimension_numbers = #tpu.dot_dimension_numbers<[1], [0], [0], [1], [0, 0, 1, 1], [], []>} : vector<100x128xbf16>, vector<128x128xbf16>, vector<100x128xf32> -> vector<100x128xf32>
    %222 = arith.addf %217, %221 : vector<100x128xf32>
    %c10 = arith.constant 10 : index
    %c0_194 = arith.constant 0 : index
    %223 = vector.load %arg22[%c10, %c0_194] : memref<128x128xbf16, #tpu.memory_space<vmem>>, vector<100x128xbf16>
    %c3_195 = arith.constant 3 : index
    %c0_196 = arith.constant 0 : index
    %c0_197 = arith.constant 0 : index
    %224 = vector.load %arg5[%c3_195, %c0_196, %c0_197] : memref<9x128x128xbf16, #tpu.memory_space<vmem>>, vector<1x128x128xbf16>
    %225 = vector.shape_cast %224 : vector<1x128x128xbf16> to vector<128x128xbf16>
    %cst_198 = arith.constant dense<0.000000e+00> : vector<100x128xf32>
    %226 = tpu.matmul %223, %225, %cst_198 {dimension_numbers = #tpu.dot_dimension_numbers<[1], [0], [0], [1], [0, 0, 1, 1], [], []>} : vector<100x128xbf16>, vector<128x128xbf16>, vector<100x128xf32> -> vector<100x128xf32>
    %227 = arith.addf %222, %226 : vector<100x128xf32>
    %c11_199 = arith.constant 11 : index
    %c0_200 = arith.constant 0 : index
    %228 = vector.load %arg22[%c11_199, %c0_200] : memref<128x128xbf16, #tpu.memory_space<vmem>>, vector<100x128xbf16>
    %c4_201 = arith.constant 4 : index
    %c0_202 = arith.constant 0 : index
    %c0_203 = arith.constant 0 : index
    %229 = vector.load %arg5[%c4_201, %c0_202, %c0_203] : memref<9x128x128xbf16, #tpu.memory_space<vmem>>, vector<1x128x128xbf16>
    %230 = vector.shape_cast %229 : vector<1x128x128xbf16> to vector<128x128xbf16>
    %cst_204 = arith.constant dense<0.000000e+00> : vector<100x128xf32>
    %231 = tpu.matmul %228, %230, %cst_204 {dimension_numbers = #tpu.dot_dimension_numbers<[1], [0], [0], [1], [0, 0, 1, 1], [], []>} : vector<100x128xbf16>, vector<128x128xbf16>, vector<100x128xf32> -> vector<100x128xf32>
    %232 = arith.addf %227, %231 : vector<100x128xf32>
    %c12 = arith.constant 12 : index
    %c0_205 = arith.constant 0 : index
    %233 = vector.load %arg22[%c12, %c0_205] : memref<128x128xbf16, #tpu.memory_space<vmem>>, vector<100x128xbf16>
    %c5_206 = arith.constant 5 : index
    %c0_207 = arith.constant 0 : index
    %c0_208 = arith.constant 0 : index
    %234 = vector.load %arg5[%c5_206, %c0_207, %c0_208] : memref<9x128x128xbf16, #tpu.memory_space<vmem>>, vector<1x128x128xbf16>
    %235 = vector.shape_cast %234 : vector<1x128x128xbf16> to vector<128x128xbf16>
    %cst_209 = arith.constant dense<0.000000e+00> : vector<100x128xf32>
    %236 = tpu.matmul %233, %235, %cst_209 {dimension_numbers = #tpu.dot_dimension_numbers<[1], [0], [0], [1], [0, 0, 1, 1], [], []>} : vector<100x128xbf16>, vector<128x128xbf16>, vector<100x128xf32> -> vector<100x128xf32>
    %237 = arith.addf %232, %236 : vector<100x128xf32>
    %c20_210 = arith.constant 20 : index
    %c0_211 = arith.constant 0 : index
    %238 = vector.load %arg22[%c20_210, %c0_211] : memref<128x128xbf16, #tpu.memory_space<vmem>>, vector<100x128xbf16>
    %c6_212 = arith.constant 6 : index
    %c0_213 = arith.constant 0 : index
    %c0_214 = arith.constant 0 : index
    %239 = vector.load %arg5[%c6_212, %c0_213, %c0_214] : memref<9x128x128xbf16, #tpu.memory_space<vmem>>, vector<1x128x128xbf16>
    %240 = vector.shape_cast %239 : vector<1x128x128xbf16> to vector<128x128xbf16>
    %cst_215 = arith.constant dense<0.000000e+00> : vector<100x128xf32>
    %241 = tpu.matmul %238, %240, %cst_215 {dimension_numbers = #tpu.dot_dimension_numbers<[1], [0], [0], [1], [0, 0, 1, 1], [], []>} : vector<100x128xbf16>, vector<128x128xbf16>, vector<100x128xf32> -> vector<100x128xf32>
    %242 = arith.addf %237, %241 : vector<100x128xf32>
    %c21_216 = arith.constant 21 : index
    %c0_217 = arith.constant 0 : index
    %243 = vector.load %arg22[%c21_216, %c0_217] : memref<128x128xbf16, #tpu.memory_space<vmem>>, vector<100x128xbf16>
    %c7_218 = arith.constant 7 : index
    %c0_219 = arith.constant 0 : index
    %c0_220 = arith.constant 0 : index
    %244 = vector.load %arg5[%c7_218, %c0_219, %c0_220] : memref<9x128x128xbf16, #tpu.memory_space<vmem>>, vector<1x128x128xbf16>
    %245 = vector.shape_cast %244 : vector<1x128x128xbf16> to vector<128x128xbf16>
    %cst_221 = arith.constant dense<0.000000e+00> : vector<100x128xf32>
    %246 = tpu.matmul %243, %245, %cst_221 {dimension_numbers = #tpu.dot_dimension_numbers<[1], [0], [0], [1], [0, 0, 1, 1], [], []>} : vector<100x128xbf16>, vector<128x128xbf16>, vector<100x128xf32> -> vector<100x128xf32>
    %247 = arith.addf %242, %246 : vector<100x128xf32>
    %c22 = arith.constant 22 : index
    %c0_222 = arith.constant 0 : index
    %248 = vector.load %arg22[%c22, %c0_222] : memref<128x128xbf16, #tpu.memory_space<vmem>>, vector<100x128xbf16>
    %c8_223 = arith.constant 8 : index
    %c0_224 = arith.constant 0 : index
    %c0_225 = arith.constant 0 : index
    %249 = vector.load %arg5[%c8_223, %c0_224, %c0_225] : memref<9x128x128xbf16, #tpu.memory_space<vmem>>, vector<1x128x128xbf16>
    %250 = vector.shape_cast %249 : vector<1x128x128xbf16> to vector<128x128xbf16>
    %cst_226 = arith.constant dense<0.000000e+00> : vector<100x128xf32>
    %251 = tpu.matmul %248, %250, %cst_226 {dimension_numbers = #tpu.dot_dimension_numbers<[1], [0], [0], [1], [0, 0, 1, 1], [], []>} : vector<100x128xbf16>, vector<128x128xbf16>, vector<100x128xf32> -> vector<100x128xf32>
    %252 = arith.addf %247, %251 : vector<100x128xf32>
    %253 = vector.broadcast %207 : vector<1x128xf32> to vector<100x128xf32>
    %254 = arith.mulf %252, %253 : vector<100x128xf32>
    %255 = vector.broadcast %208 : vector<1x128xf32> to vector<100x128xf32>
    %256 = arith.addf %254, %255 : vector<100x128xf32>
    %cst_227 = arith.constant 0.000000e+00 : f32
    %257 = vector.broadcast %cst_227 : f32 to vector<100x128xf32>
    %258 = arith.maximumf %256, %257 : vector<100x128xf32>
    %c0_228 = arith.constant 0 : index
    %c0_229 = arith.constant 0 : index
    %259 = vector.load %arg23[%c0_228, %c0_229] : memref<100x128xf32, #tpu.memory_space<vmem>>, vector<100x128xf32>
    tpu.vector_store %arg23[%c0_228, %c0_229], %258 {strides = array<i32>} : memref<100x128xf32, #tpu.memory_space<vmem>>, vector<100x128xf32>,
    %cst_230 = arith.constant 0.000000e+00 : bf16
    %260 = vector.broadcast %cst_230 : bf16 to vector<7x128xbf16>
    %cst_231 = arith.constant 0.000000e+00 : bf16
    %261 = vector.broadcast %cst_231 : bf16 to vector<2x128xbf16>
    %c0_232 = arith.constant 0 : index
    %c0_233 = arith.constant 0 : index
    %262 = vector.load %arg24[%c0_232, %c0_233] : memref<64x128xbf16, #tpu.memory_space<vmem>>, vector<7x128xbf16>
    tpu.vector_store %arg24[%c0_232, %c0_233], %260 {strides = array<i32>} : memref<64x128xbf16, #tpu.memory_space<vmem>>, vector<7x128xbf16>,
    %c11_234 = arith.constant 11 : index
    %c0_235 = arith.constant 0 : index
    %263 = vector.load %arg24[%c11_234, %c0_235] : memref<64x128xbf16, #tpu.memory_space<vmem>>, vector<2x128xbf16>
    tpu.vector_store %arg24[%c11_234, %c0_235], %261 {strides = array<i32>} : memref<64x128xbf16, #tpu.memory_space<vmem>>, vector<2x128xbf16>,
    %c17 = arith.constant 17 : index
    %c0_236 = arith.constant 0 : index
    %264 = vector.load %arg24[%c17, %c0_236] : memref<64x128xbf16, #tpu.memory_space<vmem>>, vector<2x128xbf16>
    tpu.vector_store %arg24[%c17, %c0_236], %261 {strides = array<i32>} : memref<64x128xbf16, #tpu.memory_space<vmem>>, vector<2x128xbf16>,
    %c23 = arith.constant 23 : index
    %c0_237 = arith.constant 0 : index
    %265 = vector.load %arg24[%c23, %c0_237] : memref<64x128xbf16, #tpu.memory_space<vmem>>, vector<2x128xbf16>
    tpu.vector_store %arg24[%c23, %c0_237], %261 {strides = array<i32>} : memref<64x128xbf16, #tpu.memory_space<vmem>>, vector<2x128xbf16>,
    %c29_238 = arith.constant 29 : index
    %c0_239 = arith.constant 0 : index
    %266 = vector.load %arg24[%c29_238, %c0_239] : memref<64x128xbf16, #tpu.memory_space<vmem>>, vector<7x128xbf16>
    tpu.vector_store %arg24[%c29_238, %c0_239], %260 {strides = array<i32>} : memref<64x128xbf16, #tpu.memory_space<vmem>>, vector<7x128xbf16>,
    %cst_240 = arith.constant 0.000000e+00 : bf16
    %267 = vector.broadcast %cst_240 : bf16 to vector<28x128xbf16>
    %c36_241 = arith.constant 36 : index
    %c0_242 = arith.constant 0 : index
    %268 = vector.load %arg24[%c36_241, %c0_242] : memref<64x128xbf16, #tpu.memory_space<vmem>>, vector<28x128xbf16>
    tpu.vector_store %arg24[%c36_241, %c0_242], %267 {strides = array<i32>} : memref<64x128xbf16, #tpu.memory_space<vmem>>, vector<28x128xbf16>,
    %c0_243 = arith.constant 0 : index
    %c0_244 = arith.constant 0 : index
    %269 = tpu.strided_load %arg23[%c0_243, %c0_244] {strides = array<i32: 2, 1>} : memref<100x128xf32, #tpu.memory_space<vmem>>, vector<4x128xf32>
    %c1_245 = arith.constant 1 : index
    %c0_246 = arith.constant 0 : index
    %270 = tpu.strided_load %arg23[%c1_245, %c0_246] {strides = array<i32: 2, 1>} : memref<100x128xf32, #tpu.memory_space<vmem>>, vector<4x128xf32>
    %c10_247 = arith.constant 10 : index
    %c0_248 = arith.constant 0 : index
    %271 = tpu.strided_load %arg23[%c10_247, %c0_248] {strides = array<i32: 2, 1>} : memref<100x128xf32, #tpu.memory_space<vmem>>, vector<4x128xf32>
    %c11_249 = arith.constant 11 : index
    %c0_250 = arith.constant 0 : index
    %272 = tpu.strided_load %arg23[%c11_249, %c0_250] {strides = array<i32: 2, 1>} : memref<100x128xf32, #tpu.memory_space<vmem>>, vector<4x128xf32>
    %273 = arith.maximumf %269, %270 : vector<4x128xf32>
    %274 = arith.maximumf %271, %272 : vector<4x128xf32>
    %275 = arith.maximumf %273, %274 : vector<4x128xf32>
    %276 = arith.truncf %275 : vector<4x128xf32> to vector<4x128xbf16>
    %c7_251 = arith.constant 7 : index
    %c0_252 = arith.constant 0 : index
    %277 = vector.load %arg24[%c7_251, %c0_252] : memref<64x128xbf16, #tpu.memory_space<vmem>>, vector<4x128xbf16>
    tpu.vector_store %arg24[%c7_251, %c0_252], %276 {strides = array<i32>} : memref<64x128xbf16, #tpu.memory_space<vmem>>, vector<4x128xbf16>,
    %c20_253 = arith.constant 20 : index
    %c0_254 = arith.constant 0 : index
    %278 = tpu.strided_load %arg23[%c20_253, %c0_254] {strides = array<i32: 2, 1>} : memref<100x128xf32, #tpu.memory_space<vmem>>, vector<4x128xf32>
    %c21_255 = arith.constant 21 : index
    %c0_256 = arith.constant 0 : index
    %279 = tpu.strided_load %arg23[%c21_255, %c0_256] {strides = array<i32: 2, 1>} : memref<100x128xf32, #tpu.memory_space<vmem>>, vector<4x128xf32>
    %c30 = arith.constant 30 : index
    %c0_257 = arith.constant 0 : index
    %280 = tpu.strided_load %arg23[%c30, %c0_257] {strides = array<i32: 2, 1>} : memref<100x128xf32, #tpu.memory_space<vmem>>, vector<4x128xf32>
    %c31_258 = arith.constant 31 : index
    %c0_259 = arith.constant 0 : index
    %281 = tpu.strided_load %arg23[%c31_258, %c0_259] {strides = array<i32: 2, 1>} : memref<100x128xf32, #tpu.memory_space<vmem>>, vector<4x128xf32>
    %282 = arith.maximumf %278, %279 : vector<4x128xf32>
    %283 = arith.maximumf %280, %281 : vector<4x128xf32>
    %284 = arith.maximumf %282, %283 : vector<4x128xf32>
    %285 = arith.truncf %284 : vector<4x128xf32> to vector<4x128xbf16>
    %c13 = arith.constant 13 : index
    %c0_260 = arith.constant 0 : index
    %286 = vector.load %arg24[%c13, %c0_260] : memref<64x128xbf16, #tpu.memory_space<vmem>>, vector<4x128xbf16>
    tpu.vector_store %arg24[%c13, %c0_260], %285 {strides = array<i32>} : memref<64x128xbf16, #tpu.memory_space<vmem>>, vector<4x128xbf16>,
    %c40 = arith.constant 40 : index
    %c0_261 = arith.constant 0 : index
    %287 = tpu.strided_load %arg23[%c40, %c0_261] {strides = array<i32: 2, 1>} : memref<100x128xf32, #tpu.memory_space<vmem>>, vector<4x128xf32>
    %c41_262 = arith.constant 41 : index
    %c0_263 = arith.constant 0 : index
    %288 = tpu.strided_load %arg23[%c41_262, %c0_263] {strides = array<i32: 2, 1>} : memref<100x128xf32, #tpu.memory_space<vmem>>, vector<4x128xf32>
    %c50 = arith.constant 50 : index
    %c0_264 = arith.constant 0 : index
    %289 = tpu.strided_load %arg23[%c50, %c0_264] {strides = array<i32: 2, 1>} : memref<100x128xf32, #tpu.memory_space<vmem>>, vector<4x128xf32>
    %c51_265 = arith.constant 51 : index
    %c0_266 = arith.constant 0 : index
    %290 = tpu.strided_load %arg23[%c51_265, %c0_266] {strides = array<i32: 2, 1>} : memref<100x128xf32, #tpu.memory_space<vmem>>, vector<4x128xf32>
    %291 = arith.maximumf %287, %288 : vector<4x128xf32>
    %292 = arith.maximumf %289, %290 : vector<4x128xf32>
    %293 = arith.maximumf %291, %292 : vector<4x128xf32>
    %294 = arith.truncf %293 : vector<4x128xf32> to vector<4x128xbf16>
    %c19_267 = arith.constant 19 : index
    %c0_268 = arith.constant 0 : index
    %295 = vector.load %arg24[%c19_267, %c0_268] : memref<64x128xbf16, #tpu.memory_space<vmem>>, vector<4x128xbf16>
    tpu.vector_store %arg24[%c19_267, %c0_268], %294 {strides = array<i32>} : memref<64x128xbf16, #tpu.memory_space<vmem>>, vector<4x128xbf16>,
    %c60 = arith.constant 60 : index
    %c0_269 = arith.constant 0 : index
    %296 = tpu.strided_load %arg23[%c60, %c0_269] {strides = array<i32: 2, 1>} : memref<100x128xf32, #tpu.memory_space<vmem>>, vector<4x128xf32>
    %c61_270 = arith.constant 61 : index
    %c0_271 = arith.constant 0 : index
    %297 = tpu.strided_load %arg23[%c61_270, %c0_271] {strides = array<i32: 2, 1>} : memref<100x128xf32, #tpu.memory_space<vmem>>, vector<4x128xf32>
    %c70 = arith.constant 70 : index
    %c0_272 = arith.constant 0 : index
    %298 = tpu.strided_load %arg23[%c70, %c0_272] {strides = array<i32: 2, 1>} : memref<100x128xf32, #tpu.memory_space<vmem>>, vector<4x128xf32>
    %c71_273 = arith.constant 71 : index
    %c0_274 = arith.constant 0 : index
    %299 = tpu.strided_load %arg23[%c71_273, %c0_274] {strides = array<i32: 2, 1>} : memref<100x128xf32, #tpu.memory_space<vmem>>, vector<4x128xf32>
    %300 = arith.maximumf %296, %297 : vector<4x128xf32>
    %301 = arith.maximumf %298, %299 : vector<4x128xf32>
    %302 = arith.maximumf %300, %301 : vector<4x128xf32>
    %303 = arith.truncf %302 : vector<4x128xf32> to vector<4x128xbf16>
    %c25 = arith.constant 25 : index
    %c0_275 = arith.constant 0 : index
    %304 = vector.load %arg24[%c25, %c0_275] : memref<64x128xbf16, #tpu.memory_space<vmem>>, vector<4x128xbf16>
    tpu.vector_store %arg24[%c25, %c0_275], %303 {strides = array<i32>} : memref<64x128xbf16, #tpu.memory_space<vmem>>, vector<4x128xbf16>,
    %c0_276 = arith.constant 0 : index
    %c0_277 = arith.constant 0 : index
    %305 = vector.load %arg9[%c0_276, %c0_277] : memref<1x128xf32, #tpu.memory_space<vmem>>, vector<1x128xf32>
    %c0_278 = arith.constant 0 : index
    %c0_279 = arith.constant 0 : index
    %306 = vector.load %arg10[%c0_278, %c0_279] : memref<1x128xf32, #tpu.memory_space<vmem>>, vector<1x128xf32>
    %c0_280 = arith.constant 0 : index
    %c0_281 = arith.constant 0 : index
    %307 = vector.load %arg24[%c0_280, %c0_281] : memref<64x128xbf16, #tpu.memory_space<vmem>>, vector<36x128xbf16>
    %c0_282 = arith.constant 0 : index
    %c0_283 = arith.constant 0 : index
    %c0_284 = arith.constant 0 : index
    %308 = vector.load %arg8[%c0_282, %c0_283, %c0_284] : memref<9x128x128xbf16, #tpu.memory_space<vmem>>, vector<1x128x128xbf16>
    %309 = vector.shape_cast %308 : vector<1x128x128xbf16> to vector<128x128xbf16>
    %cst_285 = arith.constant dense<0.000000e+00> : vector<36x128xf32>
    %310 = tpu.matmul %307, %309, %cst_285 {dimension_numbers = #tpu.dot_dimension_numbers<[1], [0], [0], [1], [0, 0, 1, 1], [], []>} : vector<36x128xbf16>, vector<128x128xbf16>, vector<36x128xf32> -> vector<36x128xf32>
    %c1_286 = arith.constant 1 : index
    %c0_287 = arith.constant 0 : index
    %311 = vector.load %arg24[%c1_286, %c0_287] : memref<64x128xbf16, #tpu.memory_space<vmem>>, vector<36x128xbf16>
    %c1_288 = arith.constant 1 : index
    %c0_289 = arith.constant 0 : index
    %c0_290 = arith.constant 0 : index
    %312 = vector.load %arg8[%c1_288, %c0_289, %c0_290] : memref<9x128x128xbf16, #tpu.memory_space<vmem>>, vector<1x128x128xbf16>
    %313 = vector.shape_cast %312 : vector<1x128x128xbf16> to vector<128x128xbf16>
    %cst_291 = arith.constant dense<0.000000e+00> : vector<36x128xf32>
    %314 = tpu.matmul %311, %313, %cst_291 {dimension_numbers = #tpu.dot_dimension_numbers<[1], [0], [0], [1], [0, 0, 1, 1], [], []>} : vector<36x128xbf16>, vector<128x128xbf16>, vector<36x128xf32> -> vector<36x128xf32>
    %315 = arith.addf %310, %314 : vector<36x128xf32>
    %c2_292 = arith.constant 2 : index
    %c0_293 = arith.constant 0 : index
    %316 = vector.load %arg24[%c2_292, %c0_293] : memref<64x128xbf16, #tpu.memory_space<vmem>>, vector<36x128xbf16>
    %c2_294 = arith.constant 2 : index
    %c0_295 = arith.constant 0 : index
    %c0_296 = arith.constant 0 : index
    %317 = vector.load %arg8[%c2_294, %c0_295, %c0_296] : memref<9x128x128xbf16, #tpu.memory_space<vmem>>, vector<1x128x128xbf16>
    %318 = vector.shape_cast %317 : vector<1x128x128xbf16> to vector<128x128xbf16>
    %cst_297 = arith.constant dense<0.000000e+00> : vector<36x128xf32>
    %319 = tpu.matmul %316, %318, %cst_297 {dimension_numbers = #tpu.dot_dimension_numbers<[1], [0], [0], [1], [0, 0, 1, 1], [], []>} : vector<36x128xbf16>, vector<128x128xbf16>, vector<36x128xf32> -> vector<36x128xf32>
    %320 = arith.addf %315, %319 : vector<36x128xf32>
    %c6_298 = arith.constant 6 : index
    %c0_299 = arith.constant 0 : index
    %321 = vector.load %arg24[%c6_298, %c0_299] : memref<64x128xbf16, #tpu.memory_space<vmem>>, vector<36x128xbf16>
    %c3_300 = arith.constant 3 : index
    %c0_301 = arith.constant 0 : index
    %c0_302 = arith.constant 0 : index
    %322 = vector.load %arg8[%c3_300, %c0_301, %c0_302] : memref<9x128x128xbf16, #tpu.memory_space<vmem>>, vector<1x128x128xbf16>
    %323 = vector.shape_cast %322 : vector<1x128x128xbf16> to vector<128x128xbf16>
    %cst_303 = arith.constant dense<0.000000e+00> : vector<36x128xf32>
    %324 = tpu.matmul %321, %323, %cst_303 {dimension_numbers = #tpu.dot_dimension_numbers<[1], [0], [0], [1], [0, 0, 1, 1], [], []>} : vector<36x128xbf16>, vector<128x128xbf16>, vector<36x128xf32> -> vector<36x128xf32>
    %325 = arith.addf %320, %324 : vector<36x128xf32>
    %c7_304 = arith.constant 7 : index
    %c0_305 = arith.constant 0 : index
    %326 = vector.load %arg24[%c7_304, %c0_305] : memref<64x128xbf16, #tpu.memory_space<vmem>>, vector<36x128xbf16>
    %c4_306 = arith.constant 4 : index
    %c0_307 = arith.constant 0 : index
    %c0_308 = arith.constant 0 : index
    %327 = vector.load %arg8[%c4_306, %c0_307, %c0_308] : memref<9x128x128xbf16, #tpu.memory_space<vmem>>, vector<1x128x128xbf16>
    %328 = vector.shape_cast %327 : vector<1x128x128xbf16> to vector<128x128xbf16>
    %cst_309 = arith.constant dense<0.000000e+00> : vector<36x128xf32>
    %329 = tpu.matmul %326, %328, %cst_309 {dimension_numbers = #tpu.dot_dimension_numbers<[1], [0], [0], [1], [0, 0, 1, 1], [], []>} : vector<36x128xbf16>, vector<128x128xbf16>, vector<36x128xf32> -> vector<36x128xf32>
    %330 = arith.addf %325, %329 : vector<36x128xf32>
    %c8_310 = arith.constant 8 : index
    %c0_311 = arith.constant 0 : index
    %331 = vector.load %arg24[%c8_310, %c0_311] : memref<64x128xbf16, #tpu.memory_space<vmem>>, vector<36x128xbf16>
    %c5_312 = arith.constant 5 : index
    %c0_313 = arith.constant 0 : index
    %c0_314 = arith.constant 0 : index
    %332 = vector.load %arg8[%c5_312, %c0_313, %c0_314] : memref<9x128x128xbf16, #tpu.memory_space<vmem>>, vector<1x128x128xbf16>
    %333 = vector.shape_cast %332 : vector<1x128x128xbf16> to vector<128x128xbf16>
    %cst_315 = arith.constant dense<0.000000e+00> : vector<36x128xf32>
    %334 = tpu.matmul %331, %333, %cst_315 {dimension_numbers = #tpu.dot_dimension_numbers<[1], [0], [0], [1], [0, 0, 1, 1], [], []>} : vector<36x128xbf16>, vector<128x128xbf16>, vector<36x128xf32> -> vector<36x128xf32>
    %335 = arith.addf %330, %334 : vector<36x128xf32>
    %c12_316 = arith.constant 12 : index
    %c0_317 = arith.constant 0 : index
    %336 = vector.load %arg24[%c12_316, %c0_317] : memref<64x128xbf16, #tpu.memory_space<vmem>>, vector<36x128xbf16>
    %c6_318 = arith.constant 6 : index
    %c0_319 = arith.constant 0 : index
    %c0_320 = arith.constant 0 : index
    %337 = vector.load %arg8[%c6_318, %c0_319, %c0_320] : memref<9x128x128xbf16, #tpu.memory_space<vmem>>, vector<1x128x128xbf16>
    %338 = vector.shape_cast %337 : vector<1x128x128xbf16> to vector<128x128xbf16>
    %cst_321 = arith.constant dense<0.000000e+00> : vector<36x128xf32>
    %339 = tpu.matmul %336, %338, %cst_321 {dimension_numbers = #tpu.dot_dimension_numbers<[1], [0], [0], [1], [0, 0, 1, 1], [], []>} : vector<36x128xbf16>, vector<128x128xbf16>, vector<36x128xf32> -> vector<36x128xf32>
    %340 = arith.addf %335, %339 : vector<36x128xf32>
    %c13_322 = arith.constant 13 : index
    %c0_323 = arith.constant 0 : index
    %341 = vector.load %arg24[%c13_322, %c0_323] : memref<64x128xbf16, #tpu.memory_space<vmem>>, vector<36x128xbf16>
    %c7_324 = arith.constant 7 : index
    %c0_325 = arith.constant 0 : index
    %c0_326 = arith.constant 0 : index
    %342 = vector.load %arg8[%c7_324, %c0_325, %c0_326] : memref<9x128x128xbf16, #tpu.memory_space<vmem>>, vector<1x128x128xbf16>
    %343 = vector.shape_cast %342 : vector<1x128x128xbf16> to vector<128x128xbf16>
    %cst_327 = arith.constant dense<0.000000e+00> : vector<36x128xf32>
    %344 = tpu.matmul %341, %343, %cst_327 {dimension_numbers = #tpu.dot_dimension_numbers<[1], [0], [0], [1], [0, 0, 1, 1], [], []>} : vector<36x128xbf16>, vector<128x128xbf16>, vector<36x128xf32> -> vector<36x128xf32>
    %345 = arith.addf %340, %344 : vector<36x128xf32>
    %c14 = arith.constant 14 : index
    %c0_328 = arith.constant 0 : index
    %346 = vector.load %arg24[%c14, %c0_328] : memref<64x128xbf16, #tpu.memory_space<vmem>>, vector<36x128xbf16>
    %c8_329 = arith.constant 8 : index
    %c0_330 = arith.constant 0 : index
    %c0_331 = arith.constant 0 : index
    %347 = vector.load %arg8[%c8_329, %c0_330, %c0_331] : memref<9x128x128xbf16, #tpu.memory_space<vmem>>, vector<1x128x128xbf16>
    %348 = vector.shape_cast %347 : vector<1x128x128xbf16> to vector<128x128xbf16>
    %cst_332 = arith.constant dense<0.000000e+00> : vector<36x128xf32>
    %349 = tpu.matmul %346, %348, %cst_332 {dimension_numbers = #tpu.dot_dimension_numbers<[1], [0], [0], [1], [0, 0, 1, 1], [], []>} : vector<36x128xbf16>, vector<128x128xbf16>, vector<36x128xf32> -> vector<36x128xf32>
    %350 = arith.addf %345, %349 : vector<36x128xf32>
    %351 = vector.broadcast %305 : vector<1x128xf32> to vector<36x128xf32>
    %352 = arith.mulf %350, %351 : vector<36x128xf32>
    %353 = vector.broadcast %306 : vector<1x128xf32> to vector<36x128xf32>
    %354 = arith.addf %352, %353 : vector<36x128xf32>
    %cst_333 = arith.constant 0.000000e+00 : f32
    %355 = vector.broadcast %cst_333 : f32 to vector<36x128xf32>
    %356 = arith.maximumf %354, %355 : vector<36x128xf32>
    %c0_334 = arith.constant 0 : index
    %c0_335 = arith.constant 0 : index
    %357 = vector.load %arg25[%c0_334, %c0_335] : memref<36x128xf32, #tpu.memory_space<vmem>>, vector<36x128xf32>
    tpu.vector_store %arg25[%c0_334, %c0_335], %356 {strides = array<i32>} : memref<36x128xf32, #tpu.memory_space<vmem>>, vector<36x128xf32>,
    %c0_336 = arith.constant 0 : index
    %c0_337 = arith.constant 0 : index
    %358 = tpu.strided_load %arg25[%c0_336, %c0_337] {strides = array<i32: 2, 1>} : memref<36x128xf32, #tpu.memory_space<vmem>>, vector<2x128xf32>
    %c1_338 = arith.constant 1 : index
    %c0_339 = arith.constant 0 : index
    %359 = tpu.strided_load %arg25[%c1_338, %c0_339] {strides = array<i32: 2, 1>} : memref<36x128xf32, #tpu.memory_space<vmem>>, vector<2x128xf32>
    %c6_340 = arith.constant 6 : index
    %c0_341 = arith.constant 0 : index
    %360 = tpu.strided_load %arg25[%c6_340, %c0_341] {strides = array<i32: 2, 1>} : memref<36x128xf32, #tpu.memory_space<vmem>>, vector<2x128xf32>
    %c7_342 = arith.constant 7 : index
    %c0_343 = arith.constant 0 : index
    %361 = tpu.strided_load %arg25[%c7_342, %c0_343] {strides = array<i32: 2, 1>} : memref<36x128xf32, #tpu.memory_space<vmem>>, vector<2x128xf32>
    %362 = arith.maximumf %358, %359 : vector<2x128xf32>
    %363 = arith.maximumf %360, %361 : vector<2x128xf32>
    %364 = arith.maximumf %362, %363 : vector<2x128xf32>
    %365 = arith.truncf %364 : vector<2x128xf32> to vector<2x128xbf16>
    %c0_344 = arith.constant 0 : index
    %c0_345 = arith.constant 0 : index
    %366 = vector.load %arg26[%c0_344, %c0_345] : memref<4x128xbf16, #tpu.memory_space<vmem>>, vector<2x128xbf16>
    tpu.vector_store %arg26[%c0_344, %c0_345], %365 {strides = array<i32>} : memref<4x128xbf16, #tpu.memory_space<vmem>>, vector<2x128xbf16>,
    %c12_346 = arith.constant 12 : index
    %c0_347 = arith.constant 0 : index
    %367 = tpu.strided_load %arg25[%c12_346, %c0_347] {strides = array<i32: 2, 1>} : memref<36x128xf32, #tpu.memory_space<vmem>>, vector<2x128xf32>
    %c13_348 = arith.constant 13 : index
    %c0_349 = arith.constant 0 : index
    %368 = tpu.strided_load %arg25[%c13_348, %c0_349] {strides = array<i32: 2, 1>} : memref<36x128xf32, #tpu.memory_space<vmem>>, vector<2x128xf32>
    %c18_350 = arith.constant 18 : index
    %c0_351 = arith.constant 0 : index
    %369 = tpu.strided_load %arg25[%c18_350, %c0_351] {strides = array<i32: 2, 1>} : memref<36x128xf32, #tpu.memory_space<vmem>>, vector<2x128xf32>
    %c19_352 = arith.constant 19 : index
    %c0_353 = arith.constant 0 : index
    %370 = tpu.strided_load %arg25[%c19_352, %c0_353] {strides = array<i32: 2, 1>} : memref<36x128xf32, #tpu.memory_space<vmem>>, vector<2x128xf32>
    %371 = arith.maximumf %367, %368 : vector<2x128xf32>
    %372 = arith.maximumf %369, %370 : vector<2x128xf32>
    %373 = arith.maximumf %371, %372 : vector<2x128xf32>
    %374 = arith.truncf %373 : vector<2x128xf32> to vector<2x128xbf16>
    %c2_354 = arith.constant 2 : index
    %c0_355 = arith.constant 0 : index
    %375 = vector.load %arg26[%c2_354, %c0_355] : memref<4x128xbf16, #tpu.memory_space<vmem>>, vector<2x128xbf16>
    tpu.vector_store %arg26[%c2_354, %c0_355], %374 {strides = array<i32>} : memref<4x128xbf16, #tpu.memory_space<vmem>>, vector<2x128xbf16>,
    %c0_356 = arith.constant 0 : index
    %c0_357 = arith.constant 0 : index
    %376 = vector.load %arg26[%c0_356, %c0_357] : memref<4x128xbf16, #tpu.memory_space<vmem>>, vector<1x128xbf16>
    %c0_358 = arith.constant 0 : index
    %c0_359 = arith.constant 0 : index
    %c0_360 = arith.constant 0 : index
    %377 = vector.load %arg11[%c0_358, %c0_359, %c0_360] : memref<4x128x128xbf16, #tpu.memory_space<vmem>>, vector<1x128x128xbf16>
    %378 = vector.shape_cast %377 : vector<1x128x128xbf16> to vector<128x128xbf16>
    %cst_361 = arith.constant dense<0.000000e+00> : vector<1x128xf32>
    %379 = tpu.matmul %376, %378, %cst_361 {dimension_numbers = #tpu.dot_dimension_numbers<[1], [0], [0], [1], [0, 0, 1, 1], [], []>} : vector<1x128xbf16>, vector<128x128xbf16>, vector<1x128xf32> -> vector<1x128xf32>
    %c1_362 = arith.constant 1 : index
    %c0_363 = arith.constant 0 : index
    %380 = vector.load %arg26[%c1_362, %c0_363] : memref<4x128xbf16, #tpu.memory_space<vmem>>, vector<1x128xbf16>
    %c1_364 = arith.constant 1 : index
    %c0_365 = arith.constant 0 : index
    %c0_366 = arith.constant 0 : index
    %381 = vector.load %arg11[%c1_364, %c0_365, %c0_366] : memref<4x128x128xbf16, #tpu.memory_space<vmem>>, vector<1x128x128xbf16>
    %382 = vector.shape_cast %381 : vector<1x128x128xbf16> to vector<128x128xbf16>
    %cst_367 = arith.constant dense<0.000000e+00> : vector<1x128xf32>
    %383 = tpu.matmul %380, %382, %cst_367 {dimension_numbers = #tpu.dot_dimension_numbers<[1], [0], [0], [1], [0, 0, 1, 1], [], []>} : vector<1x128xbf16>, vector<128x128xbf16>, vector<1x128xf32> -> vector<1x128xf32>
    %384 = arith.addf %379, %383 : vector<1x128xf32>
    %c2_368 = arith.constant 2 : index
    %c0_369 = arith.constant 0 : index
    %385 = vector.load %arg26[%c2_368, %c0_369] : memref<4x128xbf16, #tpu.memory_space<vmem>>, vector<1x128xbf16>
    %c2_370 = arith.constant 2 : index
    %c0_371 = arith.constant 0 : index
    %c0_372 = arith.constant 0 : index
    %386 = vector.load %arg11[%c2_370, %c0_371, %c0_372] : memref<4x128x128xbf16, #tpu.memory_space<vmem>>, vector<1x128x128xbf16>
    %387 = vector.shape_cast %386 : vector<1x128x128xbf16> to vector<128x128xbf16>
    %cst_373 = arith.constant dense<0.000000e+00> : vector<1x128xf32>
    %388 = tpu.matmul %385, %387, %cst_373 {dimension_numbers = #tpu.dot_dimension_numbers<[1], [0], [0], [1], [0, 0, 1, 1], [], []>} : vector<1x128xbf16>, vector<128x128xbf16>, vector<1x128xf32> -> vector<1x128xf32>
    %389 = arith.addf %384, %388 : vector<1x128xf32>
    %c3_374 = arith.constant 3 : index
    %c0_375 = arith.constant 0 : index
    %390 = vector.load %arg26[%c3_374, %c0_375] : memref<4x128xbf16, #tpu.memory_space<vmem>>, vector<1x128xbf16>
    %c3_376 = arith.constant 3 : index
    %c0_377 = arith.constant 0 : index
    %c0_378 = arith.constant 0 : index
    %391 = vector.load %arg11[%c3_376, %c0_377, %c0_378] : memref<4x128x128xbf16, #tpu.memory_space<vmem>>, vector<1x128x128xbf16>
    %392 = vector.shape_cast %391 : vector<1x128x128xbf16> to vector<128x128xbf16>
    %cst_379 = arith.constant dense<0.000000e+00> : vector<1x128xf32>
    %393 = tpu.matmul %390, %392, %cst_379 {dimension_numbers = #tpu.dot_dimension_numbers<[1], [0], [0], [1], [0, 0, 1, 1], [], []>} : vector<1x128xbf16>, vector<128x128xbf16>, vector<1x128xf32> -> vector<1x128xf32>
    %394 = arith.addf %389, %393 : vector<1x128xf32>
    %c0_380 = arith.constant 0 : index
    %c0_381 = arith.constant 0 : index
    %395 = vector.load %arg12[%c0_380, %c0_381] : memref<1x128xf32, #tpu.memory_space<vmem>>, vector<1x128xf32>
    %396 = arith.addf %394, %395 : vector<1x128xf32>
    %cst_382 = arith.constant 0.000000e+00 : f32
    %397 = vector.broadcast %cst_382 : f32 to vector<1x128xf32>
    %398 = arith.maximumf %396, %397 : vector<1x128xf32>
    %399 = arith.truncf %398 : vector<1x128xf32> to vector<1x128xbf16>
    %c0_383 = arith.constant 0 : index
    %c0_384 = arith.constant 0 : index
    %400 = vector.load %arg13[%c0_383, %c0_384] : memref<128x128xbf16, #tpu.memory_space<vmem>>, vector<128x128xbf16>
    %cst_385 = arith.constant dense<0.000000e+00> : vector<1x128xf32>
    %401 = tpu.matmul %399, %400, %cst_385 {dimension_numbers = #tpu.dot_dimension_numbers<[1], [0], [0], [1], [0, 0, 1, 1], [], []>} : vector<1x128xbf16>, vector<128x128xbf16>, vector<1x128xf32> -> vector<1x128xf32>
    %c0_386 = arith.constant 0 : index
    %c0_387 = arith.constant 0 : index
    %402 = vector.load %arg14[%c0_386, %c0_387] : memref<1x128xf32, #tpu.memory_space<vmem>>, vector<1x128xf32>
    %403 = arith.addf %401, %402 : vector<1x128xf32>
    %cst_388 = arith.constant 0.000000e+00 : f32
    %404 = vector.broadcast %cst_388 : f32 to vector<1x128xf32>
    %405 = arith.maximumf %403, %404 : vector<1x128xf32>
    %406 = arith.truncf %405 : vector<1x128xf32> to vector<1x128xbf16>
    %c0_389 = arith.constant 0 : index
    %c0_390 = arith.constant 0 : index
    %407 = vector.load %arg15[%c0_389, %c0_390] : memref<128x128xbf16, #tpu.memory_space<vmem>>, vector<128x128xbf16>
    %cst_391 = arith.constant dense<0.000000e+00> : vector<1x128xf32>
    %408 = tpu.matmul %406, %407, %cst_391 {dimension_numbers = #tpu.dot_dimension_numbers<[1], [0], [0], [1], [0, 0, 1, 1], [], []>} : vector<1x128xbf16>, vector<128x128xbf16>, vector<1x128xf32> -> vector<1x128xf32>
    %c0_392 = arith.constant 0 : index
    %c0_393 = arith.constant 0 : index
    %409 = vector.load %arg16[%c0_392, %c0_393] : memref<1x128xf32, #tpu.memory_space<vmem>>, vector<1x128xf32>
    %410 = arith.addf %408, %409 : vector<1x128xf32>
    %411 = arith.truncf %410 : vector<1x128xf32> to vector<1x128xbf16>
    %c0_394 = arith.constant 0 : index
    %c0_395 = arith.constant 0 : index
    %412 = vector.load %arg17[%c0_394, %c0_395] : memref<128x128xbf16, #tpu.memory_space<vmem>>, vector<128x128xbf16>
    %cst_396 = arith.constant dense<0.000000e+00> : vector<1x128xf32>
    %413 = tpu.matmul %411, %412, %cst_396 {dimension_numbers = #tpu.dot_dimension_numbers<[1], [0], [0], [1], [0, 0, 1, 1], [], []>} : vector<1x128xbf16>, vector<128x128xbf16>, vector<1x128xf32> -> vector<1x128xf32>
    %c0_397 = arith.constant 0 : index
    %c0_398 = arith.constant 0 : index
    %414 = vector.load %arg18[%c0_397, %c0_398] : memref<1x128xf32, #tpu.memory_space<vmem>>, vector<1x128xf32>
    %415 = arith.addf %413, %414 : vector<1x128xf32>
    %c0_399 = arith.constant 0 : index
    %c0_400 = arith.constant 0 : index
    %c0_401 = arith.constant 0 : index
    %416 = vector.load %arg19[%c0_399, %c0_400, %c0_401] : memref<1x1x128xf32, #tpu.memory_space<vmem>>, vector<1x1x128xf32>
    %417 = vector.shape_cast %416 : vector<1x1x128xf32> to vector<1x128xf32>
    %418 = vector.shape_cast %410 : vector<1x128xf32> to vector<1x1x128xf32>
    tpu.vector_store %arg19[%c0_399, %c0_400, %c0_401], %418 {strides = array<i32>} : memref<1x1x128xf32, #tpu.memory_space<vmem>>, vector<1x1x128xf32>,
    %c0_402 = arith.constant 0 : index
    %c0_403 = arith.constant 0 : index
    %c0_404 = arith.constant 0 : index
    %419 = vector.load %arg20[%c0_402, %c0_403, %c0_404] : memref<1x1x128xf32, #tpu.memory_space<vmem>>, vector<1x1x128xf32>
    %420 = vector.shape_cast %419 : vector<1x1x128xf32> to vector<1x128xf32>
    %421 = vector.shape_cast %415 : vector<1x128xf32> to vector<1x1x128xf32>
    tpu.vector_store %arg20[%c0_402, %c0_403, %c0_404], %421 {strides = array<i32>} : memref<1x1x128xf32, #tpu.memory_space<vmem>>, vector<1x1x128xf32>,
    return
  }
  func.func @transform_0(%arg0: i32) -> (i32, i32, i32) {
    %c0_i32 = arith.constant 0 : i32
    %c0_i32_0 = arith.constant 0 : i32
    %c0_i32_1 = arith.constant 0 : i32
    return %arg0, %c0_i32, %c0_i32_0 : i32, i32, i32
  }
  func.func @transform_1(%arg0: i32) -> (i32, i32, i32) {
    %c0_i32 = arith.constant 0 : i32
    %c0_i32_0 = arith.constant 0 : i32
    %c0_i32_1 = arith.constant 0 : i32
    %c0_i32_2 = arith.constant 0 : i32
    return %c0_i32, %c0_i32_0, %c0_i32_1 : i32, i32, i32
  }
  func.func @transform_2(%arg0: i32) -> (i32, i32) {
    %c0_i32 = arith.constant 0 : i32
    %c0_i32_0 = arith.constant 0 : i32
    %c0_i32_1 = arith.constant 0 : i32
    return %c0_i32, %c0_i32_0 : i32, i32
  }
  func.func @transform_3(%arg0: i32) -> (i32, i32) {
    %c0_i32 = arith.constant 0 : i32
    %c0_i32_0 = arith.constant 0 : i32
    %c0_i32_1 = arith.constant 0 : i32
    return %c0_i32, %c0_i32_0 : i32, i32
  }
  func.func @transform_4(%arg0: i32) -> (i32, i32, i32) {
    %c0_i32 = arith.constant 0 : i32
    %c0_i32_0 = arith.constant 0 : i32
    %c0_i32_1 = arith.constant 0 : i32
    %c0_i32_2 = arith.constant 0 : i32
    return %c0_i32, %c0_i32_0, %c0_i32_1 : i32, i32, i32
  }
  func.func @transform_5(%arg0: i32) -> (i32, i32) {
    %c0_i32 = arith.constant 0 : i32
    %c0_i32_0 = arith.constant 0 : i32
    %c0_i32_1 = arith.constant 0 : i32
    return %c0_i32, %c0_i32_0 : i32, i32
  }
  func.func @transform_6(%arg0: i32) -> (i32, i32) {
    %c0_i32 = arith.constant 0 : i32
    %c0_i32_0 = arith.constant 0 : i32
    %c0_i32_1 = arith.constant 0 : i32
    return %c0_i32, %c0_i32_0 : i32, i32
  }
  func.func @transform_7(%arg0: i32) -> (i32, i32, i32) {
    %c0_i32 = arith.constant 0 : i32
    %c0_i32_0 = arith.constant 0 : i32
    %c0_i32_1 = arith.constant 0 : i32
    %c0_i32_2 = arith.constant 0 : i32
    return %c0_i32, %c0_i32_0, %c0_i32_1 : i32, i32, i32
  }
  func.func @transform_8(%arg0: i32) -> (i32, i32) {
    %c0_i32 = arith.constant 0 : i32
    %c0_i32_0 = arith.constant 0 : i32
    %c0_i32_1 = arith.constant 0 : i32
    return %c0_i32, %c0_i32_0 : i32, i32
  }
  func.func @transform_9(%arg0: i32) -> (i32, i32) {
    %c0_i32 = arith.constant 0 : i32
    %c0_i32_0 = arith.constant 0 : i32
    %c0_i32_1 = arith.constant 0 : i32
    return %c0_i32, %c0_i32_0 : i32, i32
  }
  func.func @transform_10(%arg0: i32) -> (i32, i32, i32) {
    %c0_i32 = arith.constant 0 : i32
    %c0_i32_0 = arith.constant 0 : i32
    %c0_i32_1 = arith.constant 0 : i32
    %c0_i32_2 = arith.constant 0 : i32
    return %c0_i32, %c0_i32_0, %c0_i32_1 : i32, i32, i32
  }
  func.func @transform_11(%arg0: i32) -> (i32, i32) {
    %c0_i32 = arith.constant 0 : i32
    %c0_i32_0 = arith.constant 0 : i32
    %c0_i32_1 = arith.constant 0 : i32
    return %c0_i32, %c0_i32_0 : i32, i32
  }
  func.func @transform_12(%arg0: i32) -> (i32, i32) {
    %c0_i32 = arith.constant 0 : i32
    %c0_i32_0 = arith.constant 0 : i32
    %c0_i32_1 = arith.constant 0 : i32
    return %c0_i32, %c0_i32_0 : i32, i32
  }
  func.func @transform_13(%arg0: i32) -> (i32, i32) {
    %c0_i32 = arith.constant 0 : i32
    %c0_i32_0 = arith.constant 0 : i32
    %c0_i32_1 = arith.constant 0 : i32
    return %c0_i32, %c0_i32_0 : i32, i32
  }
  func.func @transform_14(%arg0: i32) -> (i32, i32) {
    %c0_i32 = arith.constant 0 : i32
    %c0_i32_0 = arith.constant 0 : i32
    %c0_i32_1 = arith.constant 0 : i32
    return %c0_i32, %c0_i32_0 : i32, i32
  }
  func.func @transform_15(%arg0: i32) -> (i32, i32) {
    %c0_i32 = arith.constant 0 : i32
    %c0_i32_0 = arith.constant 0 : i32
    %c0_i32_1 = arith.constant 0 : i32
    return %c0_i32, %c0_i32_0 : i32, i32
  }
  func.func @transform_16(%arg0: i32) -> (i32, i32) {
    %c0_i32 = arith.constant 0 : i32
    %c0_i32_0 = arith.constant 0 : i32
    %c0_i32_1 = arith.constant 0 : i32
    return %c0_i32, %c0_i32_0 : i32, i32
  }
  func.func @transform_17(%arg0: i32) -> (i32, i32) {
    %c0_i32 = arith.constant 0 : i32
    %c0_i32_0 = arith.constant 0 : i32
    %c0_i32_1 = arith.constant 0 : i32
    return %c0_i32, %c0_i32_0 : i32, i32
  }
  func.func @transform_18(%arg0: i32) -> (i32, i32, i32) {
    %c0_i32 = arith.constant 0 : i32
    %c0_i32_0 = arith.constant 0 : i32
    %c0_i32_1 = arith.constant 0 : i32
    return %arg0, %c0_i32, %c0_i32_0 : i32, i32, i32
  }
  func.func @transform_19(%arg0: i32) -> (i32, i32, i32) {
    %c0_i32 = arith.constant 0 : i32
    %c0_i32_0 = arith.constant 0 : i32
    %c0_i32_1 = arith.constant 0 : i32
    return %arg0, %c0_i32, %c0_i32_0 : i32, i32, i32
  }
}

</mosaic_0001>

<llo_original>
// kernel: classifier_forward.1
$region0: #{classifier_forward.1}
  #allocation0 [shape = 'u32[]', space=smem, size = 0x4, offset = 0x4, fixed_abs, tag = 'smem constant byte address 0x4 - core index']
  #allocation1 [shape = 'u32[144,128]{1,0:T(1,128)}', space=vmem, size = 0x12000, scoped, tag = 'internal scratch']
  #allocation2 [shape = 'f32[324,128]{1,0:T(8,128)}', space=vmem, size = 0x29000, scoped, tag = 'scratch operand']
  #allocation3 [shape = 'bf16[128,128]{1,0:T(16,128)(2,1)}', space=vmem, size = 0x8000, scoped, tag = 'scratch operand']
  #allocation4 [shape = 'f32[100,128]{1,0:T(8,128)}', space=vmem, size = 0xd000, scoped, tag = 'scratch operand']
  #allocation5 [shape = 'bf16[64,128]{1,0:T(16,128)(2,1)}', space=vmem, size = 0x4000, scoped, tag = 'scratch operand']
  #allocation6 [shape = 'f32[36,128]{1,0:T(8,128)}', space=vmem, size = 0x5000, scoped, tag = 'scratch operand']
  #allocation7 [shape = 'bf16[4,128]{1,0:T(4,128)(2,1)}', space=vmem, size = 0x400, scoped, tag = 'scratch operand']
  %s0 = inlined_call_operand.vmem [shape: bf16[2,384,128], index: 0, kind: input, shape index: {}]
  %s1 = inlined_call_operand.vmem [shape: bf16[9,128,128], index: 1, kind: input, shape index: {}]
  %s2 = inlined_call_operand.vmem [shape: f32[1,128], index: 2, kind: input, shape index: {}]
  %s3 = inlined_call_operand.vmem [shape: f32[1,128], index: 3, kind: input, shape index: {}]
  %s4 = inlined_call_operand.vmem [shape: bf16[9,128,128], index: 4, kind: input, shape index: {}]
  %s5 = inlined_call_operand.vmem [shape: f32[1,128], index: 5, kind: input, shape index: {}]
  %s6 = inlined_call_operand.vmem [shape: f32[1,128], index: 6, kind: input, shape index: {}]
  %s7 = inlined_call_operand.vmem [shape: bf16[9,128,128], index: 7, kind: input, shape index: {}]
  %s8 = inlined_call_operand.vmem [shape: f32[1,128], index: 8, kind: input, shape index: {}]
  %s9 = inlined_call_operand.vmem [shape: f32[1,128], index: 9, kind: input, shape index: {}]
  %s10 = inlined_call_operand.vmem [shape: bf16[4,128,128], index: 10, kind: input, shape index: {}]
  %s11 = inlined_call_operand.vmem [shape: f32[1,128], index: 11, kind: input, shape index: {}]
  %s12 = inlined_call_operand.vmem [shape: bf16[128,128], index: 12, kind: input, shape index: {}]
  %s13 = inlined_call_operand.vmem [shape: f32[1,128], index: 13, kind: input, shape index: {}]
  %s14 = inlined_call_operand.vmem [shape: bf16[128,128], index: 14, kind: input, shape index: {}]
  %s15 = inlined_call_operand.vmem [shape: f32[1,128], index: 15, kind: input, shape index: {}]
  %s16 = inlined_call_operand.vmem [shape: bf16[128,128], index: 16, kind: input, shape index: {}]
  %s17 = inlined_call_operand.vmem [shape: f32[1,128], index: 17, kind: input, shape index: {}]
  %s18 = inlined_call_operand.hbm [shape: f32[2,1,128], index: 18, kind: output, shape index: {0}]
  %s19 = inlined_call_operand.vmem [shape: f32[2,1,128], index: 19, kind: output, shape index: {1}]
  %20 = xla_tuple %s18, %s19
  %s21 = sld [smem:[#allocation0]]
  $region113: #{classifier_forward.1} parent=0
    _
  %s23 = ssub.s32 1, %s21
  %s24 = scalar_select 0, %s23, %s21
  $region1: #{classifier_forward.1} parent=0
    #allocation8 [shape = 'u8[1024]{0}', space=vmem, size = 0x400, scoped, tag = 'output window, operand 0']
    #allocation9 [shape = 's32[2]{0}', space=sflag, size = 0x8, scoped, tag = 'scoped memory for classifier_forward.1']
    %25 = vsyncpa [#allocation9], 0
    %s26 = scalar_lea.sflag [#allocation9], 1
    %27 = vsyncpa %s26, 0
    loop: start=0, step=1, limit=4
    $region2: #{classifier_forward.1} parent=1 // loop_pre_header
      _
    $region3: #{classifier_forward.1} parent=1 // loop_header
      %s29 = sphi 0, %s33
      %p30 = scmp.ge.s32.totalorder %s29, 4
      %s39 = sphi 0, %s41
      %s42 = sphi 0, %s39
      %s43 = sphi 0, %s42
      %s59 = sphi 0, %s43
      %s63 = sphi 0, %s63
      %s65 = sphi 0, %s63
      %s66 = sphi 0, %s65
      %s80 = sphi 0, %s66
      %s84 = sphi 0, %s84
      %s86 = sphi 0, %s84
      %s87 = sphi 0, %s86
      %s101 = sphi 0, %s87
      %s105 = sphi 0, %s105
      %s107 = sphi 0, %s105
      %s108 = sphi 0, %s107
      %s122 = sphi 0, %s108
      %s126 = sphi 0, %s126
      %s128 = sphi 0, %s126
      %s129 = sphi 0, %s128
      %s143 = sphi 0, %s129
      %s147 = sphi 0, %s147
      %s149 = sphi 0, %s147
      %s150 = sphi 0, %s149
      %s164 = sphi 0, %s150
      %s168 = sphi 0, %s168
      %s170 = sphi 0, %s168
      %s171 = sphi 0, %s170
      %s185 = sphi 0, %s171
      %s189 = sphi 0, %s189
      %s191 = sphi 0, %s189
      %s192 = sphi 0, %s191
      %s206 = sphi 0, %s192
      %s210 = sphi 0, %s210
      %s212 = sphi 0, %s210
      %s213 = sphi 0, %s212
      %s227 = sphi 0, %s213
      %s231 = sphi 0, %s231
      %s233 = sphi 0, %s231
      %s234 = sphi 0, %s233
      %s248 = sphi 0, %s234
      %s252 = sphi 0, %s252
      %s254 = sphi 0, %s252
      %s255 = sphi 0, %s254
      %s269 = sphi 0, %s255
      %s273 = sphi 0, %s273
      %s275 = sphi 0, %s273
      %s276 = sphi 0, %s275
      %s290 = sphi 0, %s276
      %s294 = sphi 0, %s294
      %s296 = sphi 0, %s294
      %s297 = sphi 0, %s296
      %s311 = sphi 0, %s297
      %s315 = sphi 0, %s315
      %s317 = sphi 0, %s315
      %s318 = sphi 0, %s317
      %s332 = sphi 0, %s318
      %s336 = sphi 0, %s336
      %s338 = sphi 0, %s336
      %s339 = sphi 0, %s338
      %s353 = sphi 0, %s339
      %s357 = sphi 0, %s357
      %s359 = sphi 0, %s357
      %s360 = sphi 0, %s359
      %s374 = sphi 0, %s360
      %s378 = sphi 0, %s378
      %s380 = sphi 0, %s378
      %s381 = sphi 0, %s380
      %s395 = sphi 0, %s381
      %s399 = sphi 0, %s399
      %s401 = sphi 0, %s399
      %s402 = sphi 0, %s401
      %s416 = sphi 0, %s402
      %s422 = sphi 0, %s424
      %s425 = sphi 0, %s422
      %s426 = sphi 0, %s425
      %s442 = sphi 0, %s426
      %s448 = sphi 0, %s450
      %s451 = sphi 0, %s448
      %s452 = sphi 0, %s451
      %s468 = sphi 0, %s452
    $region4: #{classifier_forward.1} parent=1 // loop_header_branch
      %32 = sbr.rel (%p30) target = $region8
    $region5: #{classifier_forward.1} parent=1 // loop_body
      %s34 = ssub.s32 %s29, 1
      %s35 = ssub.s32 %s29, 2
      %s36 = sadd.s32 %s29, 1
      %s37 = ssub.s32 %s29, %s36
      %p38 = scmp.eq.s32.totalorder %s37, 0
      %s40 = sadd.s32 %s39, 1
      %s41 = scalar_select %p38, %s39, %s40
      %p44 = pneg %p38
      %p45 = scmp.eq.s32.totalorder %s29, 1
      %p46 = por %p44, %p45
      %p47 = scmp.ne.s32.totalorder %s39, %s42
      %p48 = scmp.eq.s32.totalorder %s29, 0
      %p49 = por %p47, %p48
      %p50 = scmp.ne.s32.totalorder %s39, %s42
      %p51 = scmp.eq.s32.totalorder %s34, 1
      %p52 = por %p50, %p51
      %p53 = scmp.ne.s32.totalorder %s42, %s43
      %p54 = scmp.eq.s32.totalorder %s34, 0
      %p55 = por %p53, %p54
      %p56 = scmp.ne.s32.totalorder %s42, %s43
      %p57 = scmp.eq.s32.totalorder %s35, 1
      %p58 = por %p56, %p57
      %p60 = scmp.ne.s32.totalorder %s43, %s59
      %p61 = scmp.eq.s32.totalorder %s35, 0
      %p62 = por %p60, %p61
      %s64 = sadd.s32 %s63, 1
      %p67 = scmp.eq.s32.totalorder %s29, 1
      %p68 = scmp.ne.s32.totalorder %s63, %s65
      %p69 = scmp.eq.s32.totalorder %s29, 0
      %p70 = por %p68, %p69
      %p71 = scmp.ne.s32.totalorder %s63, %s65
      %p72 = scmp.eq.s32.totalorder %s34, 1
      %p73 = por %p71, %p72
      %p74 = scmp.ne.s32.totalorder %s65, %s66
      %p75 = scmp.eq.s32.totalorder %s34, 0
      %p76 = por %p74, %p75
      %p77 = scmp.ne.s32.totalorder %s65, %s66
      %p78 = scmp.eq.s32.totalorder %s35, 1
      %p79 = por %p77, %p78
      %p81 = scmp.ne.s32.totalorder %s66, %s80
      %p82 = scmp.eq.s32.totalorder %s35, 0
      %p83 = por %p81, %p82
      %s85 = sadd.s32 %s84, 1
      %p88 = scmp.eq.s32.totalorder %s29, 1
      %p89 = scmp.ne.s32.totalorder %s84, %s86
      %p90 = scmp.eq.s32.totalorder %s29, 0
      %p91 = por %p89, %p90
      %p92 = scmp.ne.s32.totalorder %s84, %s86
      %p93 = scmp.eq.s32.totalorder %s34, 1
      %p94 = por %p92, %p93
      %p95 = scmp.ne.s32.totalorder %s86, %s87
      %p96 = scmp.eq.s32.totalorder %s34, 0
      %p97 = por %p95, %p96
      %p98 = scmp.ne.s32.totalorder %s86, %s87
      %p99 = scmp.eq.s32.totalorder %s35, 1
      %p100 = por %p98, %p99
      %p102 = scmp.ne.s32.totalorder %s87, %s101
      %p103 = scmp.eq.s32.totalorder %s35, 0
      %p104 = por %p102, %p103
      %s106 = sadd.s32 %s105, 1
      %p109 = scmp.eq.s32.totalorder %s29, 1
      %p110 = scmp.ne.s32.totalorder %s105, %s107
      %p111 = scmp.eq.s32.totalorder %s29, 0
      %p112 = por %p110, %p111
      %p113 = scmp.ne.s32.totalorder %s105, %s107
      %p114 = scmp.eq.s32.totalorder %s34, 1
      %p115 = por %p113, %p114
      %p116 = scmp.ne.s32.totalorder %s107, %s108
      %p117 = scmp.eq.s32.totalorder %s34, 0
      %p118 = por %p116, %p117
      %p119 = scmp.ne.s32.totalorder %s107, %s108
      %p120 = scmp.eq.s32.totalorder %s35, 1
      %p121 = por %p119, %p120
      %p123 = scmp.ne.s32.totalorder %s108, %s122
      %p124 = scmp.eq.s32.totalorder %s35, 0
      %p125 = por %p123, %p124
      %s127 = sadd.s32 %s126, 1
      %p130 = scmp.eq.s32.totalorder %s29, 1
      %p131 = scmp.ne.s32.totalorder %s126, %s128
      %p132 = scmp.eq.s32.totalorder %s29, 0
      %p133 = por %p131, %p132
      %p134 = scmp.ne.s32.totalorder %s126, %s128
      %p135 = scmp.eq.s32.totalorder %s34, 1
      %p136 = por %p134, %p135
      %p137 = scmp.ne.s32.totalorder %s128, %s129
      %p138 = scmp.eq.s32.totalorder %s34, 0
      %p139 = por %p137, %p138
      %p140 = scmp.ne.s32.totalorder %s128, %s129
      %p141 = scmp.eq.s32.totalorder %s35, 1
      %p142 = por %p140, %p141
      %p144 = scmp.ne.s32.totalorder %s129, %s143
      %p145 = scmp.eq.s32.totalorder %s35, 0
      %p146 = por %p144, %p145
      %s148 = sadd.s32 %s147, 1
      %p151 = scmp.eq.s32.totalorder %s29, 1
      %p152 = scmp.ne.s32.totalorder %s147, %s149
      %p153 = scmp.eq.s32.totalorder %s29, 0
      %p154 = por %p152, %p153
      %p155 = scmp.ne.s32.totalorder %s147, %s149
      %p156 = scmp.eq.s32.totalorder %s34, 1
      %p157 = por %p155, %p156
      %p158 = scmp.ne.s32.totalorder %s149, %s150
      %p159 = scmp.eq.s32.totalorder %s34, 0
      %p160 = por %p158, %p159
      %p161 = scmp.ne.s32.totalorder %s149, %s150
      %p162 = scmp.eq.s32.totalorder %s35, 1
      %p163 = por %p161, %p162
      %p165 = scmp.ne.s32.totalorder %s150, %s164
      %p166 = scmp.eq.s32.totalorder %s35, 0
      %p167 = por %p165, %p166
      %s169 = sadd.s32 %s168, 1
      %p172 = scmp.eq.s32.totalorder %s29, 1
      %p173 = scmp.ne.s32.totalorder %s168, %s170
      %p174 = scmp.eq.s32.totalorder %s29, 0
      %p175 = por %p173, %p174
      %p176 = scmp.ne.s32.totalorder %s168, %s170
      %p177 = scmp.eq.s32.totalorder %s34, 1
      %p178 = por %p176, %p177
      %p179 = scmp.ne.s32.totalorder %s170, %s171
      %p180 = scmp.eq.s32.totalorder %s34, 0
      %p181 = por %p179, %p180
      %p182 = scmp.ne.s32.totalorder %s170, %s171
      %p183 = scmp.eq.s32.totalorder %s35, 1
      %p184 = por %p182, %p183
      %p186 = scmp.ne.s32.totalorder %s171, %s185
      %p187 = scmp.eq.s32.totalorder %s35, 0
      %p188 = por %p186, %p187
      %s190 = sadd.s32 %s189, 1
      %p193 = scmp.eq.s32.totalorder %s29, 1
      %p194 = scmp.ne.s32.totalorder %s189, %s191
      %p195 = scmp.eq.s32.totalorder %s29, 0
      %p196 = por %p194, %p195
      %p197 = scmp.ne.s32.totalorder %s189, %s191
      %p198 = scmp.eq.s32.totalorder %s34, 1
      %p199 = por %p197, %p198
      %p200 = scmp.ne.s32.totalorder %s191, %s192
      %p201 = scmp.eq.s32.totalorder %s34, 0
      %p202 = por %p200, %p201
      %p203 = scmp.ne.s32.totalorder %s191, %s192
      %p204 = scmp.eq.s32.totalorder %s35, 1
      %p205 = por %p203, %p204
      %p207 = scmp.ne.s32.totalorder %s192, %s206
      %p208 = scmp.eq.s32.totalorder %s35, 0
      %p209 = por %p207, %p208
      %s211 = sadd.s32 %s210, 1
      %p214 = scmp.eq.s32.totalorder %s29, 1
      %p215 = scmp.ne.s32.totalorder %s210, %s212
      %p216 = scmp.eq.s32.totalorder %s29, 0
      %p217 = por %p215, %p216
      %p218 = scmp.ne.s32.totalorder %s210, %s212
      %p219 = scmp.eq.s32.totalorder %s34, 1
      %p220 = por %p218, %p219
      %p221 = scmp.ne.s32.totalorder %s212, %s213
      %p222 = scmp.eq.s32.totalorder %s34, 0
      %p223 = por %p221, %p222
      %p224 = scmp.ne.s32.totalorder %s212, %s213
      %p225 = scmp.eq.s32.totalorder %s35, 1
      %p226 = por %p224, %p225
      %p228 = scmp.ne.s32.totalorder %s213, %s227
      %p229 = scmp.eq.s32.totalorder %s35, 0
      %p230 = por %p228, %p229
      %s232 = sadd.s32 %s231, 1
      %p235 = scmp.eq.s32.totalorder %s29, 1
      %p236 = scmp.ne.s32.totalorder %s231, %s233
      %p237 = scmp.eq.s32.totalorder %s29, 0
      %p238 = por %p236, %p237
      %p239 = scmp.ne.s32.totalorder %s231, %s233
      %p240 = scmp.eq.s32.totalorder %s34, 1
      %p241 = por %p239, %p240
      %p242 = scmp.ne.s32.totalorder %s233, %s234
      %p243 = scmp.eq.s32.totalorder %s34, 0
      %p244 = por %p242, %p243
      %p245 = scmp.ne.s32.totalorder %s233, %s234
      %p246 = scmp.eq.s32.totalorder %s35, 1
      %p247 = por %p245, %p246
      %p249 = scmp.ne.s32.totalorder %s234, %s248
      %p250 = scmp.eq.s32.totalorder %s35, 0
      %p251 = por %p249, %p250
      %s253 = sadd.s32 %s252, 1
      %p256 = scmp.eq.s32.totalorder %s29, 1
      %p257 = scmp.ne.s32.totalorder %s252, %s254
      %p258 = scmp.eq.s32.totalorder %s29, 0
      %p259 = por %p257, %p258
      %p260 = scmp.ne.s32.totalorder %s252, %s254
      %p261 = scmp.eq.s32.totalorder %s34, 1
      %p262 = por %p260, %p261
      %p263 = scmp.ne.s32.totalorder %s254, %s255
      %p264 = scmp.eq.s32.totalorder %s34, 0
      %p265 = por %p263, %p264
      %p266 = scmp.ne.s32.totalorder %s254, %s255
      %p267 = scmp.eq.s32.totalorder %s35, 1
      %p268 = por %p266, %p267
      %p270 = scmp.ne.s32.totalorder %s255, %s269
      %p271 = scmp.eq.s32.totalorder %s35, 0
      %p272 = por %p270, %p271
      %s274 = sadd.s32 %s273, 1
      %p277 = scmp.eq.s32.totalorder %s29, 1
      %p278 = scmp.ne.s32.totalorder %s273, %s275
      %p279 = scmp.eq.s32.totalorder %s29, 0
      %p280 = por %p278, %p279
      %p281 = scmp.ne.s32.totalorder %s273, %s275
      %p282 = scmp.eq.s32.totalorder %s34, 1
      %p283 = por %p281, %p282
      %p284 = scmp.ne.s32.totalorder %s275, %s276
      %p285 = scmp.eq.s32.totalorder %s34, 0
      %p286 = por %p284, %p285
      %p287 = scmp.ne.s32.totalorder %s275, %s276
      %p288 = scmp.eq.s32.totalorder %s35, 1
      %p289 = por %p287, %p288
      %p291 = scmp.ne.s32.totalorder %s276, %s290
      %p292 = scmp.eq.s32.totalorder %s35, 0
      %p293 = por %p291, %p292
      %s295 = sadd.s32 %s294, 1
      %p298 = scmp.eq.s32.totalorder %s29, 1
      %p299 = scmp.ne.s32.totalorder %s294, %s296
      %p300 = scmp.eq.s32.totalorder %s29, 0
      %p301 = por %p299, %p300
      %p302 = scmp.ne.s32.totalorder %s294, %s296
      %p303 = scmp.eq.s32.totalorder %s34, 1
      %p304 = por %p302, %p303
      %p305 = scmp.ne.s32.totalorder %s296, %s297
      %p306 = scmp.eq.s32.totalorder %s34, 0
      %p307 = por %p305, %p306
      %p308 = scmp.ne.s32.totalorder %s296, %s297
      %p309 = scmp.eq.s32.totalorder %s35, 1
      %p310 = por %p308, %p309
      %p312 = scmp.ne.s32.totalorder %s297, %s311
      %p313 = scmp.eq.s32.totalorder %s35, 0
      %p314 = por %p312, %p313
      %s316 = sadd.s32 %s315, 1
      %p319 = scmp.eq.s32.totalorder %s29, 1
      %p320 = scmp.ne.s32.totalorder %s315, %s317
      %p321 = scmp.eq.s32.totalorder %s29, 0
      %p322 = por %p320, %p321
      %p323 = scmp.ne.s32.totalorder %s315, %s317
      %p324 = scmp.eq.s32.totalorder %s34, 1
      %p325 = por %p323, %p324
      %p326 = scmp.ne.s32.totalorder %s317, %s318
      %p327 = scmp.eq.s32.totalorder %s34, 0
      %p328 = por %p326, %p327
      %p329 = scmp.ne.s32.totalorder %s317, %s318
      %p330 = scmp.eq.s32.totalorder %s35, 1
      %p331 = por %p329, %p330
      %p333 = scmp.ne.s32.totalorder %s318, %s332
      %p334 = scmp.eq.s32.totalorder %s35, 0
      %p335 = por %p333, %p334
      %s337 = sadd.s32 %s336, 1
      %p340 = scmp.eq.s32.totalorder %s29, 1
      %p341 = scmp.ne.s32.totalorder %s336, %s338
      %p342 = scmp.eq.s32.totalorder %s29, 0
      %p343 = por %p341, %p342
      %p344 = scmp.ne.s32.totalorder %s336, %s338
      %p345 = scmp.eq.s32.totalorder %s34, 1
      %p346 = por %p344, %p345
      %p347 = scmp.ne.s32.totalorder %s338, %s339
      %p348 = scmp.eq.s32.totalorder %s34, 0
      %p349 = por %p347, %p348
      %p350 = scmp.ne.s32.totalorder %s338, %s339
      %p351 = scmp.eq.s32.totalorder %s35, 1
      %p352 = por %p350, %p351
      %p354 = scmp.ne.s32.totalorder %s339, %s353
      %p355 = scmp.eq.s32.totalorder %s35, 0
      %p356 = por %p354, %p355
      %s358 = sadd.s32 %s357, 1
      %p361 = scmp.eq.s32.totalorder %s29, 1
      %p362 = scmp.ne.s32.totalorder %s357, %s359
      %p363 = scmp.eq.s32.totalorder %s29, 0
      %p364 = por %p362, %p363
      %p365 = scmp.ne.s32.totalorder %s357, %s359
      %p366 = scmp.eq.s32.totalorder %s34, 1
      %p367 = por %p365, %p366
      %p368 = scmp.ne.s32.totalorder %s359, %s360
      %p369 = scmp.eq.s32.totalorder %s34, 0
      %p370 = por %p368, %p369
      %p371 = scmp.ne.s32.totalorder %s359, %s360
      %p372 = scmp.eq.s32.totalorder %s35, 1
      %p373 = por %p371, %p372
      %p375 = scmp.ne.s32.totalorder %s360, %s374
      %p376 = scmp.eq.s32.totalorder %s35, 0
      %p377 = por %p375, %p376
      %s379 = sadd.s32 %s378, 1
      %p382 = scmp.eq.s32.totalorder %s29, 1
      %p383 = scmp.ne.s32.totalorder %s378, %s380
      %p384 = scmp.eq.s32.totalorder %s29, 0
      %p385 = por %p383, %p384
      %p386 = scmp.ne.s32.totalorder %s378, %s380
      %p387 = scmp.eq.s32.totalorder %s34, 1
      %p388 = por %p386, %p387
      %p389 = scmp.ne.s32.totalorder %s380, %s381
      %p390 = scmp.eq.s32.totalorder %s34, 0
      %p391 = por %p389, %p390
      %p392 = scmp.ne.s32.totalorder %s380, %s381
      %p393 = scmp.eq.s32.totalorder %s35, 1
      %p394 = por %p392, %p393
      %p396 = scmp.ne.s32.totalorder %s381, %s395
      %p397 = scmp.eq.s32.totalorder %s35, 0
      %p398 = por %p396, %p397
      %s400 = sadd.s32 %s399, 1
      %p403 = scmp.eq.s32.totalorder %s29, 1
      %p404 = scmp.ne.s32.totalorder %s399, %s401
      %p405 = scmp.eq.s32.totalorder %s29, 0
      %p406 = por %p404, %p405
      %p407 = scmp.ne.s32.totalorder %s399, %s401
      %p408 = scmp.eq.s32.totalorder %s34, 1
      %p409 = por %p407, %p408
      %p410 = scmp.ne.s32.totalorder %s401, %s402
      %p411 = scmp.eq.s32.totalorder %s34, 0
      %p412 = por %p410, %p411
      %p413 = scmp.ne.s32.totalorder %s401, %s402
      %p414 = scmp.eq.s32.totalorder %s35, 1
      %p415 = por %p413, %p414
      %p417 = scmp.ne.s32.totalorder %s402, %s416
      %p418 = scmp.eq.s32.totalorder %s35, 0
      %p419 = por %p417, %p418
      %s420 = ssub.s32 %s29, %s36
      %p421 = scmp.eq.s32.totalorder %s420, 0
      %s423 = sadd.s32 %s422, 1
      %s424 = scalar_select %p421, %s422, %s423
      %p427 = pneg %p421
      %p428 = scmp.eq.s32.totalorder %s29, 1
      %p429 = por %p427, %p428
      %p430 = scmp.ne.s32.totalorder %s422, %s425
      %p431 = scmp.eq.s32.totalorder %s29, 0
      %p432 = por %p430, %p431
      %p433 = scmp.ne.s32.totalorder %s422, %s425
      %p434 = scmp.eq.s32.totalorder %s34, 1
      %p435 = por %p433, %p434
      %p436 = scmp.ne.s32.totalorder %s425, %s426
      %p437 = scmp.eq.s32.totalorder %s34, 0
      %p438 = por %p436, %p437
      %p439 = scmp.ne.s32.totalorder %s425, %s426
      %p440 = scmp.eq.s32.totalorder %s35, 1
      %p441 = por %p439, %p440
      %p443 = scmp.ne.s32.totalorder %s426, %s442
      %p444 = scmp.eq.s32.totalorder %s35, 0
      %p445 = por %p443, %p444
      %s446 = ssub.s32 %s29, %s36
      %p447 = scmp.eq.s32.totalorder %s446, 0
      %s449 = sadd.s32 %s448, 1
      %s450 = scalar_select %p447, %s448, %s449
      %p453 = pneg %p447
      %p454 = scmp.eq.s32.totalorder %s29, 1
      %p455 = por %p453, %p454
      %p456 = scmp.ne.s32.totalorder %s448, %s451
      %p457 = scmp.eq.s32.totalorder %s29, 0
      %p458 = por %p456, %p457
      %p459 = scmp.ne.s32.totalorder %s448, %s451
      %p460 = scmp.eq.s32.totalorder %s34, 1
      %p461 = por %p459, %p460
      %p462 = scmp.ne.s32.totalorder %s451, %s452
      %p463 = scmp.eq.s32.totalorder %s34, 0
      %p464 = por %p462, %p463
      %p465 = scmp.ne.s32.totalorder %s451, %s452
      %p466 = scmp.eq.s32.totalorder %s35, 1
      %p467 = por %p465, %p466
      %p469 = scmp.ne.s32.totalorder %s452, %s468
      %p470 = scmp.eq.s32.totalorder %s35, 0
      %p471 = por %p469, %p470
      %p472 = scmp.le.s32.totalorder 1, %s29
      %p473 = scmp.lt.s32.totalorder %s29, 3
      %p474 = pnand %p472, %p473
      %p475 = pneg %p474
      // Predicated region
      $region9: #{classifier_forward.1} parent=5 // pred_check
        _
      $region10: #{classifier_forward.1} parent=5 // pred_check_branch
        %477 = sbr.rel (%p474) target = $region12
      $region11: #{classifier_forward.1} parent=5 // pred_region
        %s478 = ssub.s32 %s29, 1
        // Predicated region
        $region13: #{classifier_forward.1} parent=11 // pred_check
          %p479 = pneg %p76
        $region14: #{classifier_forward.1} parent=11 // pred_check_branch
          %481 = sbr.rel (%p479) target = $region16
        $region15: #{classifier_forward.1} parent=11 // pred_region
          _
        $region16: #{classifier_forward.1} parent=11 // pred_fallthru
          _
        // Predicated region
        $region17: #{classifier_forward.1} parent=11 // pred_check
          %p482 = pneg %p97
        $region18: #{classifier_forward.1} parent=11 // pred_check_branch
          %484 = sbr.rel (%p482) target = $region20
        $region19: #{classifier_forward.1} parent=11 // pred_region
          _
        $region20: #{classifier_forward.1} parent=11 // pred_fallthru
          _
        // Predicated region
        $region21: #{classifier_forward.1} parent=11 // pred_check
          %p485 = pneg %p118
        $region22: #{classifier_forward.1} parent=11 // pred_check_branch
          %487 = sbr.rel (%p485) target = $region24
        $region23: #{classifier_forward.1} parent=11 // pred_region
          _
        $region24: #{classifier_forward.1} parent=11 // pred_fallthru
          _
        // Predicated region
        $region25: #{classifier_forward.1} parent=11 // pred_check
          %p488 = pneg %p139
        $region26: #{classifier_forward.1} parent=11 // pred_check_branch
          %490 = sbr.rel (%p488) target = $region28
        $region27: #{classifier_forward.1} parent=11 // pred_region
          _
        $region28: #{classifier_forward.1} parent=11 // pred_fallthru
          _
        // Predicated region
        $region29: #{classifier_forward.1} parent=11 // pred_check
          %p491 = pneg %p160
        $region30: #{classifier_forward.1} parent=11 // pred_check_branch
          %493 = sbr.rel (%p491) target = $region32
        $region31: #{classifier_forward.1} parent=11 // pred_region
          _
        $region32: #{classifier_forward.1} parent=11 // pred_fallthru
          _
        // Predicated region
        $region33: #{classifier_forward.1} parent=11 // pred_check
          %p494 = pneg %p181
        $region34: #{classifier_forward.1} parent=11 // pred_check_branch
          %496 = sbr.rel (%p494) target = $region36
        $region35: #{classifier_forward.1} parent=11 // pred_region
          _
        $region36: #{classifier_forward.1} parent=11 // pred_fallthru
          _
        // Predicated region
        $region37: #{classifier_forward.1} parent=11 // pred_check
          %p497 = pneg %p202
        $region38: #{classifier_forward.1} parent=11 // pred_check_branch
          %499 = sbr.rel (%p497) target = $region40
        $region39: #{classifier_forward.1} parent=11 // pred_region
          _
        $region40: #{classifier_forward.1} parent=11 // pred_fallthru
          _
        // Predicated region
        $region41: #{classifier_forward.1} parent=11 // pred_check
          %p500 = pneg %p223
        $region42: #{classifier_forward.1} parent=11 // pred_check_branch
          %502 = sbr.rel (%p500) target = $region44
        $region43: #{classifier_forward.1} parent=11 // pred_region
          _
        $region44: #{classifier_forward.1} parent=11 // pred_fallthru
          _
        // Predicated region
        $region45: #{classifier_forward.1} parent=11 // pred_check
          %p503 = pneg %p244
        $region46: #{classifier_forward.1} parent=11 // pred_check_branch
          %505 = sbr.rel (%p503) target = $region48
        $region47: #{classifier_forward.1} parent=11 // pred_region
          _
        $region48: #{classifier_forward.1} parent=11 // pred_fallthru
          _
        // Predicated region
        $region49: #{classifier_forward.1} parent=11 // pred_check
          %p506 = pneg %p265
        $region50: #{classifier_forward.1} parent=11 // pred_check_branch
          %508 = sbr.rel (%p506) target = $region52
        $region51: #{classifier_forward.1} parent=11 // pred_region
          _
        $region52: #{classifier_forward.1} parent=11 // pred_fallthru
          _
        // Predicated region
        $region53: #{classifier_forward.1} parent=11 // pred_check
          %p509 = pneg %p286
        $region54: #{classifier_forward.1} parent=11 // pred_check_branch
          %511 = sbr.rel (%p509) target = $region56
        $region55: #{classifier_forward.1} parent=11 // pred_region
          _
        $region56: #{classifier_forward.1} parent=11 // pred_fallthru
          _
        // Predicated region
        $region57: #{classifier_forward.1} parent=11 // pred_check
          %p512 = pneg %p307
        $region58: #{classifier_forward.1} parent=11 // pred_check_branch
          %514 = sbr.rel (%p512) target = $region60
        $region59: #{classifier_forward.1} parent=11 // pred_region
          _
        $region60: #{classifier_forward.1} parent=11 // pred_fallthru
          _
        // Predicated region
        $region61: #{classifier_forward.1} parent=11 // pred_check
          %p515 = pneg %p328
        $region62: #{classifier_forward.1} parent=11 // pred_check_branch
          %517 = sbr.rel (%p515) target = $region64
        $region63: #{classifier_forward.1} parent=11 // pred_region
          _
        $region64: #{classifier_forward.1} parent=11 // pred_fallthru
          _
        // Predicated region
        $region65: #{classifier_forward.1} parent=11 // pred_check
          %p518 = pneg %p349
        $region66: #{classifier_forward.1} parent=11 // pred_check_branch
          %520 = sbr.rel (%p518) target = $region68
        $region67: #{classifier_forward.1} parent=11 // pred_region
          _
        $region68: #{classifier_forward.1} parent=11 // pred_fallthru
          _
        // Predicated region
        $region69: #{classifier_forward.1} parent=11 // pred_check
          %p521 = pneg %p370
        $region70: #{classifier_forward.1} parent=11 // pred_check_branch
          %523 = sbr.rel (%p521) target = $region72
        $region71: #{classifier_forward.1} parent=11 // pred_region
          _
        $region72: #{classifier_forward.1} parent=11 // pred_fallthru
          _
        // Predicated region
        $region73: #{classifier_forward.1} parent=11 // pred_check
          %p524 = pneg %p391
        $region74: #{classifier_forward.1} parent=11 // pred_check_branch
          %526 = sbr.rel (%p524) target = $region76
        $region75: #{classifier_forward.1} parent=11 // pred_region
          _
        $region76: #{classifier_forward.1} parent=11 // pred_fallthru
          _
        // Predicated region
        $region77: #{classifier_forward.1} parent=11 // pred_check
          %p527 = pneg %p412
        $region78: #{classifier_forward.1} parent=11 // pred_check_branch
          %529 = sbr.rel (%p527) target = $region80
        $region79: #{classifier_forward.1} parent=11 // pred_region
          _
        $region80: #{classifier_forward.1} parent=11 // pred_fallthru
          _
      $region12: #{classifier_forward.1} parent=5 // pred_fallthru
        _
      %p530 = scmp.lt.s32.totalorder %s29, 2
      // Predicated region
      $region81: #{classifier_forward.1} parent=5 // pred_check
        %p531 = pneg %p530
      $region82: #{classifier_forward.1} parent=5 // pred_check_branch
        %533 = sbr.rel (%p531) target = $region84
      $region83: #{classifier_forward.1} parent=5 // pred_region
        // Predicated region
        $region85: #{classifier_forward.1} parent=83 // pred_check
          %p534 = pneg %p49
        $region86: #{classifier_forward.1} parent=83 // pred_check_branch
          %536 = sbr.rel (%p534) target = $region88
        $region87: #{classifier_forward.1} parent=83 // pred_region
          %p537 = scmp.lt.s32.totalorder %s29, 1
          %s538 = scalar_select %p537, %s29, 1
          %s539 = smul.addr %s538, 48
          %s540 = smul.addr %s539, 4
          %s541 = scalar_lea.vmem %s0, %s540
        $region88: #{classifier_forward.1} parent=83 // pred_fallthru
          _
      $region84: #{classifier_forward.1} parent=5 // pred_fallthru
        _
      %p542 = scmp.le.s32.totalorder 1, %s29
      %p543 = scmp.lt.s32.totalorder %s29, 3
      %p544 = pnand %p542, %p543
      %p545 = pneg %p544
      // Predicated region
      $region89: #{classifier_forward.1} parent=5 // pred_check
        _
      $region90: #{classifier_forward.1} parent=5 // pred_check_branch
        %547 = sbr.rel (%p544) target = $region92
      $region91: #{classifier_forward.1} parent=5 // pred_region
        %s548 = ssub.s32 %s29, 1
        %p549 = scmp.lt.s32.totalorder %s34, 1
        %s550 = scalar_select %p549, %s34, 1
        %s551 = smul.addr %s550, 48
        %s552 = smul.addr %s551, 4
        %s553 = scalar_lea.vmem %s0, %s552
        %p554 = pneg %p55
        %p555 = pneg %p52
        %p556 = pneg %p76
        %p557 = pneg %p73
        %p558 = pneg %p97
        %p559 = pneg %p94
        %p560 = pneg %p118
        %p561 = pneg %p115
        %p562 = pneg %p139
        %p563 = pneg %p136
        %p564 = pneg %p160
        %p565 = pneg %p157
        %p566 = pneg %p181
        %p567 = pneg %p178
        %p568 = pneg %p202
        %p569 = pneg %p199
        %p570 = pneg %p223
        %p571 = pneg %p220
        %p572 = pneg %p244
        %p573 = pneg %p241
        %p574 = pneg %p265
        %p575 = pneg %p262
        %p576 = pneg %p286
        %p577 = pneg %p283
        %p578 = pneg %p307
        %p579 = pneg %p304
        %p580 = pneg %p328
        %p581 = pneg %p325
        %p582 = pneg %p349
        %p583 = pneg %p346
        %p584 = pneg %p370
        %p585 = pneg %p367
        %p586 = pneg %p391
        %p587 = pneg %p388
        %p588 = pneg %p412
        %p589 = pneg %p409
        %p590 = pneg %p438
        %p591 = pneg %p435
        %s592 = sand.u32 %s425, 1
        %s593 = scalar_lea.sflag [#allocation9], %s592
        %s594 = sand.u32 %s425, 1
        %s595 = scalar_lea.vmem [#allocation8], %s594
        %p596 = pneg %p464
        %p597 = pneg %p461
        %p598 = scmp.lt.s32.totalorder %s34, 1
        %s599 = scalar_select %p598, %s34, 1
        %s600 = scalar_lea.vmem %s19, %s599
        %p601 = scmp.lt.s32.totalorder %s34, 1
        %s602 = scalar_select %p601, %s34, 1
        %s603 = smul.addr %s602, 48
        %s604 = smul.addr %s603, 4
        %s605 = scalar_lea.vmem %s0, %s604
        %p606 = scmp.lt.s32.totalorder %s34, 1
        %s607 = scalar_select %p606, %s34, 1
        %s608 = scalar_lea.vmem %s19, %s607
        %v610 = vld [vmem:[%s2] sm:$0x1]
        %v611 = vld [vmem:[%s3] sm:$0x1]
        %v612 = vld [vmem:[%s605] sm:$0xf]
        %v613 = vld [vmem:[%s605 + $0x4] sm:$0xf]
        %v614 = vld [vmem:[%s605 + $0x8] sm:$0xf]
        %v615 = vld [vmem:[%s605 + $0xc] sm:$0xf]
        %v616 = vld [vmem:[%s605 + $0x10] sm:$0xf]
        %v617 = vld [vmem:[%s605 + $0x14] sm:$0xf]
        %v618 = vld [vmem:[%s605 + $0x18] sm:$0xf]
        %v619 = vld [vmem:[%s605 + $0x1c] sm:$0xf]
        %v620 = vld [vmem:[%s605 + $0x20] sm:$0xf]
        %v621 = vld [vmem:[%s605 + $0x24] sm:$0xf]
        %v622 = vld [vmem:[%s605 + $0x28] sm:$0xf]
        %v623 = vld [vmem:[%s605 + $0x2c] sm:$0xf]
        %v624 = vld [vmem:[%s605 + $0x30] sm:$0xf]
        %v625 = vld [vmem:[%s605 + $0x34] sm:$0xf]
        %v626 = vld [vmem:[%s605 + $0x38] sm:$0xf]
        %v627 = vld [vmem:[%s605 + $0x3c] sm:$0xf]
        %v628 = vld [vmem:[%s605 + $0x40] sm:$0xf]
        %v629 = vld [vmem:[%s605 + $0x44] sm:$0xf]
        %v630 = vld [vmem:[%s605 + $0x48] sm:$0xf]
        %v631 = vld [vmem:[%s605 + $0x4c] sm:$0xf]
        %v632 = vld [vmem:[%s605 + $0x50] sm:$0xf]
        %v633 = vld [vmem:[%s605 + $0x54] sm:$0xf]
        %v634 = vld [vmem:[%s605 + $0x58] sm:$0xf]
        %v635 = vld [vmem:[%s605 + $0x5c] sm:$0xf]
        %v636 = vld [vmem:[%s605 + $0x60] sm:$0xf]
        %v637 = vld [vmem:[%s605 + $0x64] sm:$0xf]
        %v638 = vld [vmem:[%s605 + $0x68] sm:$0xf]
        %v639 = vld [vmem:[%s605 + $0x6c] sm:$0xf]
        %v640 = vld [vmem:[%s605 + $0x70] sm:$0xf]
        %v641 = vld [vmem:[%s605 + $0x74] sm:$0xf]
        %v642 = vld [vmem:[%s605 + $0x78] sm:$0xf]
        %v643 = vld [vmem:[%s605 + $0x7c] sm:$0xf]
        %v644 = vld [vmem:[%s1] sm:$0xf]
        %v645 = vld [vmem:[%s1 + $0x4] sm:$0xf]
        %v646 = vld [vmem:[%s1 + $0x8] sm:$0xf]
        %v647 = vld [vmem:[%s1 + $0xc] sm:$0xf]
        %v648 = vld [vmem:[%s1 + $0x10] sm:$0xf]
        %v649 = vld [vmem:[%s1 + $0x14] sm:$0xf]
        %v650 = vld [vmem:[%s1 + $0x18] sm:$0xf]
        %v651 = vld [vmem:[%s1 + $0x1c] sm:$0xf]
        %v652 = vld [vmem:[%s1 + $0x20] sm:$0xf]
        %v653 = vld [vmem:[%s1 + $0x24] sm:$0xf]
        %v654 = vld [vmem:[%s1 + $0x28] sm:$0xf]
        %v655 = vld [vmem:[%s1 + $0x2c] sm:$0xf]
        %v656 = vld [vmem:[%s1 + $0x30] sm:$0xf]
        %v657 = vld [vmem:[%s1 + $0x34] sm:$0xf]
        %v658 = vld [vmem:[%s1 + $0x38] sm:$0xf]
        %v659 = vld [vmem:[%s1 + $0x3c] sm:$0xf]
        %v660 = vld [vmem:[%s605 + $0x80] sm:$0x1]
        %s661 = scalar_lea.vmem %s1, 64
        %v662 = vld [vmem:[%s661] sm:$0xf]
        %v663 = vld [vmem:[%s661 + $0x4] sm:$0xf]
        %v664 = vld [vmem:[%s661 + $0x8] sm:$0xf]
        %v665 = vld [vmem:[%s661 + $0xc] sm:$0xf]
        %v666 = vld [vmem:[%s661 + $0x10] sm:$0xf]
        %v667 = vld [vmem:[%s661 + $0x14] sm:$0xf]
        %v668 = vld [vmem:[%s661 + $0x18] sm:$0xf]
        %v669 = vld [vmem:[%s661 + $0x1c] sm:$0xf]
        %v670 = vld [vmem:[%s661 + $0x20] sm:$0xf]
        %v671 = vld [vmem:[%s661 + $0x24] sm:$0xf]
        %v672 = vld [vmem:[%s661 + $0x28] sm:$0xf]
        %v673 = vld [vmem:[%s661 + $0x2c] sm:$0xf]
        %v674 = vld [vmem:[%s661 + $0x30] sm:$0xf]
        %v675 = vld [vmem:[%s661 + $0x34] sm:$0xf]
        %v676 = vld [vmem:[%s661 + $0x38] sm:$0xf]
        %v677 = vld [vmem:[%s661 + $0x3c] sm:$0xf]
        %v711 = vunpack.c.l.b16 %v612
        %v712 = vunpack.c.l.b16 %v613
        %v713 = vunpack.c.l.b16 %v614
        %v714 = vunpack.c.l.b16 %v615
        %v715 = vunpack.c.l.b16 %v616
        %v716 = vunpack.c.l.b16 %v617
        %v717 = vunpack.c.l.b16 %v618
        %v718 = vunpack.c.l.b16 %v619
        %v719 = vunpack.c.l.b16 %v620
        %v720 = vunpack.c.l.b16 %v621
        %v721 = vunpack.c.l.b16 %v622
        %v722 = vunpack.c.l.b16 %v623
        %v723 = vunpack.c.l.b16 %v624
        %v724 = vunpack.c.l.b16 %v625
        %v725 = vunpack.c.l.b16 %v626
        %v726 = vunpack.c.l.b16 %v627
        %v727 = vunpack.c.l.b16 %v628
        %v728 = vunpack.c.l.b16 %v629
        %v729 = vunpack.c.l.b16 %v630
        %v730 = vunpack.c.l.b16 %v631
        %v731 = vunpack.c.l.b16 %v632
        %v732 = vunpack.c.l.b16 %v633
        %v733 = vunpack.c.l.b16 %v634
        %v734 = vunpack.c.l.b16 %v635
        %v735 = vunpack.c.l.b16 %v636
        %v736 = vunpack.c.l.b16 %v637
        %v737 = vunpack.c.l.b16 %v638
        %v738 = vunpack.c.l.b16 %v639
        %v739 = vunpack.c.l.b16 %v640
        %v740 = vunpack.c.l.b16 %v641
        %v741 = vunpack.c.l.b16 %v642
        %v742 = vunpack.c.l.b16 %v643
        %v743 = vunpack.c.l.b16 %v660
        %v744 = vpack.c.b16 %v712, %v711
        %v745 = vpack.c.b16 %v714, %v713
        %v746 = vpack.c.b16 %v716, %v715
        %v747 = vpack.c.b16 %v718, %v717
        %v748 = vpack.c.b16 %v720, %v719
        %v749 = vpack.c.b16 %v722, %v721
        %v750 = vpack.c.b16 %v724, %v723
        %v751 = vpack.c.b16 %v726, %v725
        %v752 = vpack.c.b16 %v728, %v727
        %v753 = vpack.c.b16 %v730, %v729
        %v754 = vpack.c.b16 %v732, %v731
        %v755 = vpack.c.b16 %v734, %v733
        %v756 = vpack.c.b16 %v736, %v735
        %v757 = vpack.c.b16 %v738, %v737
        %v758 = vpack.c.b16 %v740, %v739
        %v759 = vpack.c.b16 %v742, %v741
        %v760 = vpack.c.b16 %v743, %v743
        %vm761 = vsmask.f32 7424
        %v763 = vshrl.u32 %v744, 16
        %v765 = vshll.u32 %v744, 16
        %v767 = vrot.slane %v765, 1
        %v768 = vor.u32 %v763, %v767
        %v770 = vshll.u32 %v745, 16
        %v772 = vrot.slane %v770, 1
        %v773 = vsel %vm761, %v768, %v772
        %v774 = vshrl.u32 %v745, 16
        %v776 = vor.u32 %v774, %v772
        %v778 = vshll.u32 %v746, 16
        %v780 = vrot.slane %v778, 1
        %v781 = vsel %vm761, %v776, %v780
        %v782 = vshrl.u32 %v746, 16
        %v784 = vor.u32 %v782, %v780
        %v786 = vshll.u32 %v747, 16
        %v788 = vrot.slane %v786, 1
        %v789 = vsel %vm761, %v784, %v788
        %v790 = vshrl.u32 %v747, 16
        %v792 = vor.u32 %v790, %v788
        %v794 = vshll.u32 %v748, 16
        %v796 = vrot.slane %v794, 1
        %v797 = vsel %vm761, %v792, %v796
        %v798 = vshrl.u32 %v748, 16
        %v800 = vor.u32 %v798, %v796
        %v802 = vshll.u32 %v749, 16
        %v804 = vrot.slane %v802, 1
        %v805 = vsel %vm761, %v800, %v804
        %v806 = vshrl.u32 %v749, 16
        %v808 = vor.u32 %v806, %v804
        %v810 = vshll.u32 %v750, 16
        %v812 = vrot.slane %v810, 1
        %v813 = vsel %vm761, %v808, %v812
        %v814 = vshrl.u32 %v750, 16
        %v816 = vor.u32 %v814, %v812
        %v818 = vshll.u32 %v751, 16
        %v820 = vrot.slane %v818, 1
        %v821 = vsel %vm761, %v816, %v820
        %v822 = vshrl.u32 %v751, 16
        %v824 = vor.u32 %v822, %v820
        %v826 = vshll.u32 %v752, 16
        %v828 = vrot.slane %v826, 1
        %v829 = vsel %vm761, %v824, %v828
        %v830 = vshrl.u32 %v752, 16
        %v832 = vor.u32 %v830, %v828
        %v834 = vshll.u32 %v753, 16
        %v836 = vrot.slane %v834, 1
        %v837 = vsel %vm761, %v832, %v836
        %v838 = vshrl.u32 %v753, 16
        %v840 = vor.u32 %v838, %v836
        %v842 = vshll.u32 %v754, 16
        %v844 = vrot.slane %v842, 1
        %v845 = vsel %vm761, %v840, %v844
        %v846 = vshrl.u32 %v754, 16
        %v848 = vor.u32 %v846, %v844
        %v850 = vshll.u32 %v755, 16
        %v852 = vrot.slane %v850, 1
        %v853 = vsel %vm761, %v848, %v852
        %v854 = vshrl.u32 %v755, 16
        %v856 = vor.u32 %v854, %v852
        %v858 = vshll.u32 %v756, 16
        %v860 = vrot.slane %v858, 1
        %v861 = vsel %vm761, %v856, %v860
        %v862 = vshrl.u32 %v756, 16
        %v864 = vor.u32 %v862, %v860
        %v866 = vshll.u32 %v757, 16
        %v868 = vrot.slane %v866, 1
        %v869 = vsel %vm761, %v864, %v868
        %v870 = vshrl.u32 %v757, 16
        %v872 = vor.u32 %v870, %v868
        %v874 = vshll.u32 %v758, 16
        %v876 = vrot.slane %v874, 1
        %v877 = vsel %vm761, %v872, %v876
        %v878 = vshrl.u32 %v758, 16
        %v880 = vor.u32 %v878, %v876
        %v882 = vshll.u32 %v759, 16
        %v884 = vrot.slane %v882, 1
        %v885 = vsel %vm761, %v880, %v884
        %v886 = vshrl.u32 %v759, 16
        %v888 = vor.u32 %v886, %v884
        %v890 = vshll.u32 %v760, 16
        %v892 = vrot.slane %v890, 1
        %v893 = vsel %vm761, %v888, %v892
        %v926 = vunpack.c.l.b16 %v662
        %v927 = vunpack.c.l.b16 %v663
        %v928 = vunpack.c.l.b16 %v664
        %v929 = vunpack.c.l.b16 %v665
        %v930 = vunpack.c.l.b16 %v666
        %v931 = vunpack.c.l.b16 %v667
        %v932 = vunpack.c.l.b16 %v668
        %v933 = vunpack.c.l.b16 %v669
        %v934 = vunpack.c.l.b16 %v670
        %v935 = vunpack.c.l.b16 %v671
        %v936 = vunpack.c.l.b16 %v672
        %v937 = vunpack.c.l.b16 %v673
        %v938 = vunpack.c.l.b16 %v674
        %v939 = vunpack.c.l.b16 %v675
        %v940 = vunpack.c.l.b16 %v676
        %v941 = vunpack.c.l.b16 %v677
        %v942 = vpack.c.b16 %v927, %v926
        %v943 = vpack.c.b16 %v929, %v928
        %v944 = vpack.c.b16 %v931, %v930
        %v945 = vpack.c.b16 %v933, %v932
        %v946 = vpack.c.b16 %v935, %v934
        %v947 = vpack.c.b16 %v937, %v936
        %v948 = vpack.c.b16 %v939, %v938
        %v949 = vpack.c.b16 %v941, %v940
        %958 = vmatprep.subr.bf16.mxu0 0
        %959 = vmatpush1.bf16.msra.mxu0 %v942
        %960 = vmatprep.subr.bf16.mxu0 0
        %961 = vmatpush1.bf16.msra.mxu0 %v943
        %962 = vmatprep.subr.bf16.mxu0 0
        %963 = vmatpush1.bf16.msra.mxu0 %v944
        %964 = vmatprep.subr.bf16.mxu0 0
        %965 = vmatpush1.bf16.msra.mxu0 %v945
        %966 = vmatprep.subr.bf16.mxu0 0
        %967 = vmatpush1.bf16.msra.mxu0 %v946
        %968 = vmatprep.subr.bf16.mxu0 0
        %969 = vmatpush1.bf16.msra.mxu0 %v947
        %970 = vmatprep.subr.bf16.mxu0 0
        %971 = vmatpush1.bf16.msra.mxu0 %v948
        %972 = vmatprep.subr.bf16.mxu0 0
        %973 = vmatpush1.bf16.msra.mxu0 %v949
        %974 = vmatprep.subr.bf16.mxu0 0
        %975 = vmatpush1.bf16.msra.mxu0 0
        %976 = vmatprep.subr.bf16.mxu0 0
        %977 = vmatpush1.bf16.msra.mxu0 0
        %978 = vmatprep.subr.bf16.mxu0 0
        %979 = vmatpush1.bf16.msra.mxu0 0
        %980 = vmatprep.subr.bf16.mxu0 0
        %981 = vmatpush1.bf16.msra.mxu0 0
        %982 = vmatprep.subr.bf16.mxu0 0
        %983 = vmatpush1.bf16.msra.mxu0 0
        %984 = vmatprep.subr.bf16.mxu0 0
        %985 = vmatpush1.bf16.msra.mxu0 0
        %986 = vmatprep.subr.bf16.mxu0 0
        %987 = vmatpush1.bf16.msra.mxu0 0
        %988 = vmatprep.subr.bf16.mxu0 0
        %989 = vmatpush1.bf16.msra.mxu0 0
        %990 = vmatprep.mubr.bf16.mxu0 0
        %991 = vmatmul.mubr.bf16.gmra.mrb[0].mxu0 %v773
        %v992 = vpop.f32.mrb[0].mxu0
        %v993 = vadd.f32 0.0, %v992
        %v994 = vpop.f32.mrb[0].mxu0
        %v995 = vpop.f32.mrb[0].mxu0
        %v996 = vadd.f32 0.0, %v995
        %v997 = vpop.f32.mrb[0].mxu0
        %998 = vmatprep.mubr.bf16.mxu0 0
        %999 = vmatmul.mubr.bf16.gmra.mrb[0].mxu0 %v781
        %v1000 = vpop.f32.mrb[0].mxu0
        %v1001 = vadd.f32 0.0, %v1000
        %v1002 = vpop.f32.mrb[0].mxu0
        %v1003 = vpop.f32.mrb[0].mxu0
        %v1004 = vadd.f32 0.0, %v1003
        %v1005 = vpop.f32.mrb[0].mxu0
        %1006 = vmatprep.mubr.bf16.mxu0 0
        %1007 = vmatmul.mubr.bf16.gmra.mrb[0].mxu0 %v789
        %v1008 = vpop.f32.mrb[0].mxu0
        %v1009 = vadd.f32 0.0, %v1008
        %v1010 = vpop.f32.mrb[0].mxu0
        %v1011 = vpop.f32.mrb[0].mxu0
        %v1012 = vadd.f32 0.0, %v1011
        %v1013 = vpop.f32.mrb[0].mxu0
        %1014 = vmatprep.mubr.bf16.mxu0 0
        %1015 = vmatmul.mubr.bf16.gmra.mrb[0].mxu0 %v797
        %v1016 = vpop.f32.mrb[0].mxu0
        %v1017 = vadd.f32 0.0, %v1016
        %v1018 = vpop.f32.mrb[0].mxu0
        %v1019 = vpop.f32.mrb[0].mxu0
        %v1020 = vadd.f32 0.0, %v1019
        %v1021 = vpop.f32.mrb[0].mxu0
        %1022 = vmatprep.mubr.bf16.mxu0 0
        %1023 = vmatmul.mubr.bf16.gmra.mrb[0].mxu0 %v805
        %v1024 = vpop.f32.mrb[0].mxu0
        %v1025 = vadd.f32 0.0, %v1024
        %v1026 = vpop.f32.mrb[0].mxu0
        %v1027 = vpop.f32.mrb[0].mxu0
        %v1028 = vadd.f32 0.0, %v1027
        %v1029 = vpop.f32.mrb[0].mxu0
        %1030 = vmatprep.mubr.bf16.mxu0 0
        %1031 = vmatmul.mubr.bf16.gmra.mrb[0].mxu0 %v813
        %v1032 = vpop.f32.mrb[0].mxu0
        %v1033 = vadd.f32 0.0, %v1032
        %v1034 = vpop.f32.mrb[0].mxu0
        %v1035 = vpop.f32.mrb[0].mxu0
        %v1036 = vadd.f32 0.0, %v1035
        %v1037 = vpop.f32.mrb[0].mxu0
        %1038 = vmatprep.mubr.bf16.mxu0 0
        %1039 = vmatmul.mubr.bf16.gmra.mrb[0].mxu0 %v821
        %v1040 = vpop.f32.mrb[0].mxu0
        %v1041 = vadd.f32 0.0, %v1040
        %v1042 = vpop.f32.mrb[0].mxu0
        %v1043 = vpop.f32.mrb[0].mxu0
        %v1044 = vadd.f32 0.0, %v1043
        %v1045 = vpop.f32.mrb[0].mxu0
        %1046 = vmatprep.mubr.bf16.mxu0 0
        %1047 = vmatmul.mubr.bf16.gmra.mrb[0].mxu0 %v829
        %v1048 = vpop.f32.mrb[0].mxu0
        %v1049 = vadd.f32 0.0, %v1048
        %v1050 = vpop.f32.mrb[0].mxu0
        %v1051 = vpop.f32.mrb[0].mxu0
        %v1052 = vadd.f32 0.0, %v1051
        %v1053 = vpop.f32.mrb[0].mxu0
        %1054 = vmatprep.mubr.bf16.mxu0 0
        %1055 = vmatmul.mubr.bf16.gmra.mrb[0].mxu0 %v837
        %v1056 = vpop.f32.mrb[0].mxu0
        %v1057 = vadd.f32 0.0, %v1056
        %v1058 = vpop.f32.mrb[0].mxu0
        %v1059 = vpop.f32.mrb[0].mxu0
        %v1060 = vadd.f32 0.0, %v1059
        %v1061 = vpop.f32.mrb[0].mxu0
        %1062 = vmatprep.mubr.bf16.mxu0 0
        %1063 = vmatmul.mubr.bf16.gmra.mrb[0].mxu0 %v845
        %v1064 = vpop.f32.mrb[0].mxu0
        %v1065 = vadd.f32 0.0, %v1064
        %v1066 = vpop.f32.mrb[0].mxu0
        %v1067 = vpop.f32.mrb[0].mxu0
        %v1068 = vadd.f32 0.0, %v1067
        %v1069 = vpop.f32.mrb[0].mxu0
        %1070 = vmatprep.mubr.bf16.mxu0 0
        %1071 = vmatmul.mubr.bf16.gmra.mrb[0].mxu0 %v853
        %v1072 = vpop.f32.mrb[0].mxu0
        %v1073 = vadd.f32 0.0, %v1072
        %v1074 = vpop.f32.mrb[0].mxu0
        %v1075 = vpop.f32.mrb[0].mxu0
        %v1076 = vadd.f32 0.0, %v1075
        %v1077 = vpop.f32.mrb[0].mxu0
        %1078 = vmatprep.mubr.bf16.mxu0 0
        %1079 = vmatmul.mubr.bf16.gmra.mrb[0].mxu0 %v861
        %v1080 = vpop.f32.mrb[0].mxu0
        %v1081 = vadd.f32 0.0, %v1080
        %v1082 = vpop.f32.mrb[0].mxu0
        %v1083 = vpop.f32.mrb[0].mxu0
        %v1084 = vadd.f32 0.0, %v1083
        %v1085 = vpop.f32.mrb[0].mxu0
        %1086 = vmatprep.mubr.bf16.mxu0 0
        %1087 = vmatmul.mubr.bf16.gmra.mrb[0].mxu0 %v869
        %v1088 = vpop.f32.mrb[0].mxu0
        %v1089 = vadd.f32 0.0, %v1088
        %v1090 = vpop.f32.mrb[0].mxu0
        %v1091 = vpop.f32.mrb[0].mxu0
        %v1092 = vadd.f32 0.0, %v1091
        %v1093 = vpop.f32.mrb[0].mxu0
        %1094 = vmatprep.mubr.bf16.mxu0 0
        %1095 = vmatmul.mubr.bf16.gmra.mrb[0].mxu0 %v877
        %v1096 = vpop.f32.mrb[0].mxu0
        %v1097 = vadd.f32 0.0, %v1096
        %v1098 = vpop.f32.mrb[0].mxu0
        %v1099 = vpop.f32.mrb[0].mxu0
        %v1100 = vadd.f32 0.0, %v1099
        %v1101 = vpop.f32.mrb[0].mxu0
        %1102 = vmatprep.mubr.bf16.mxu0 0
        %1103 = vmatmul.mubr.bf16.gmra.mrb[0].mxu0 %v885
        %v1104 = vpop.f32.mrb[0].mxu0
        %v1105 = vadd.f32 0.0, %v1104
        %v1106 = vpop.f32.mrb[0].mxu0
        %v1107 = vpop.f32.mrb[0].mxu0
        %v1108 = vadd.f32 0.0, %v1107
        %v1109 = vpop.f32.mrb[0].mxu0
        %1110 = vmatprep.mubr.bf16.mxu0 0
        %1111 = vmatmul.mubr.bf16.gmra.mrb[0].mxu0 %v893
        %v1112 = vpop.f32.mrb[0].mxu0
        %v1113 = vadd.f32 0.0, %v1112
        %v1114 = vpop.f32.mrb[0].mxu0
        %v1115 = vpop.f32.mrb[0].mxu0
        %v1116 = vadd.f32 0.0, %v1115
        %v1117 = vpop.f32.mrb[0].mxu0
        %1118 = vdwg.mxu0
        %v1151 = vunpack.c.l.b16 %v644
        %v1152 = vunpack.c.l.b16 %v645
        %v1153 = vunpack.c.l.b16 %v646
        %v1154 = vunpack.c.l.b16 %v647
        %v1155 = vunpack.c.l.b16 %v648
        %v1156 = vunpack.c.l.b16 %v649
        %v1157 = vunpack.c.l.b16 %v650
        %v1158 = vunpack.c.l.b16 %v651
        %v1159 = vunpack.c.l.b16 %v652
        %v1160 = vunpack.c.l.b16 %v653
        %v1161 = vunpack.c.l.b16 %v654
        %v1162 = vunpack.c.l.b16 %v655
        %v1163 = vunpack.c.l.b16 %v656
        %v1164 = vunpack.c.l.b16 %v657
        %v1165 = vunpack.c.l.b16 %v658
        %v1166 = vunpack.c.l.b16 %v659
        %v1167 = vpack.c.b16 %v1152, %v1151
        %v1168 = vpack.c.b16 %v1154, %v1153
        %v1169 = vpack.c.b16 %v1156, %v1155
        %v1170 = vpack.c.b16 %v1158, %v1157
        %v1171 = vpack.c.b16 %v1160, %v1159
        %v1172 = vpack.c.b16 %v1162, %v1161
        %v1173 = vpack.c.b16 %v1164, %v1163
        %v1174 = vpack.c.b16 %v1166, %v1165
        %1183 = vmatprep.subr.bf16.mxu0 0
        %1184 = vmatpush1.bf16.msra.mxu0 %v1167
        %1185 = vmatprep.subr.bf16.mxu0 0
        %1186 = vmatpush1.bf16.msra.mxu0 %v1168
        %1187 = vmatprep.subr.bf16.mxu0 0
        %1188 = vmatpush1.bf16.msra.mxu0 %v1169
        %1189 = vmatprep.subr.bf16.mxu0 0
        %1190 = vmatpush1.bf16.msra.mxu0 %v1170
        %1191 = vmatprep.subr.bf16.mxu0 0
        %1192 = vmatpush1.bf16.msra.mxu0 %v1171
        %1193 = vmatprep.subr.bf16.mxu0 0
        %1194 = vmatpush1.bf16.msra.mxu0 %v1172
        %1195 = vmatprep.subr.bf16.mxu0 0
        %1196 = vmatpush1.bf16.msra.mxu0 %v1173
        %1197 = vmatprep.subr.bf16.mxu0 0
        %1198 = vmatpush1.bf16.msra.mxu0 %v1174
        %1199 = vmatprep.subr.bf16.mxu0 0
        %1200 = vmatpush1.bf16.msra.mxu0 0
        %1201 = vmatprep.subr.bf16.mxu0 0
        %1202 = vmatpush1.bf16.msra.mxu0 0
        %1203 = vmatprep.subr.bf16.mxu0 0
        %1204 = vmatpush1.bf16.msra.mxu0 0
        %1205 = vmatprep.subr.bf16.mxu0 0
        %1206 = vmatpush1.bf16.msra.mxu0 0
        %1207 = vmatprep.subr.bf16.mxu0 0
        %1208 = vmatpush1.bf16.msra.mxu0 0
        %1209 = vmatprep.subr.bf16.mxu0 0
        %1210 = vmatpush1.bf16.msra.mxu0 0
        %1211 = vmatprep.subr.bf16.mxu0 0
        %1212 = vmatpush1.bf16.msra.mxu0 0
        %1213 = vmatprep.subr.bf16.mxu0 0
        %1214 = vmatpush1.bf16.msra.mxu0 0
        %1215 = vmatprep.mubr.bf16.mxu0 0
        %1216 = vmatmul.mubr.bf16.gmra.mrb[0].mxu0 %v744
        %v1217 = vpop.f32.mrb[0].mxu0
        %v1218 = vadd.f32 %v993, %v1217
        %v1219 = vpop.f32.mrb[0].mxu0
        %v1220 = vpop.f32.mrb[0].mxu0
        %v1221 = vadd.f32 %v996, %v1220
        %v1222 = vpop.f32.mrb[0].mxu0
        %1223 = vmatprep.mubr.bf16.mxu0 0
        %1224 = vmatmul.mubr.bf16.gmra.mrb[0].mxu0 %v745
        %v1225 = vpop.f32.mrb[0].mxu0
        %v1226 = vadd.f32 %v1001, %v1225
        %v1227 = vpop.f32.mrb[0].mxu0
        %v1228 = vpop.f32.mrb[0].mxu0
        %v1229 = vadd.f32 %v1004, %v1228
        %v1230 = vpop.f32.mrb[0].mxu0
        %1231 = vmatprep.mubr.bf16.mxu0 0
        %1232 = vmatmul.mubr.bf16.gmra.mrb[0].mxu0 %v746
        %v1233 = vpop.f32.mrb[0].mxu0
        %v1234 = vadd.f32 %v1009, %v1233
        %v1235 = vpop.f32.mrb[0].mxu0
        %v1236 = vpop.f32.mrb[0].mxu0
        %v1237 = vadd.f32 %v1012, %v1236
        %v1238 = vpop.f32.mrb[0].mxu0
        %1239 = vmatprep.mubr.bf16.mxu0 0
        %1240 = vmatmul.mubr.bf16.gmra.mrb[0].mxu0 %v747
        %v1241 = vpop.f32.mrb[0].mxu0
        %v1242 = vadd.f32 %v1017, %v1241
        %v1243 = vpop.f32.mrb[0].mxu0
        %v1244 = vpop.f32.mrb[0].mxu0
        %v1245 = vadd.f32 %v1020, %v1244
        %v1246 = vpop.f32.mrb[0].mxu0
        %1247 = vmatprep.mubr.bf16.mxu0 0
        %1248 = vmatmul.mubr.bf16.gmra.mrb[0].mxu0 %v748
        %v1249 = vpop.f32.mrb[0].mxu0
        %v1250 = vadd.f32 %v1025, %v1249
        %v1251 = vpop.f32.mrb[0].mxu0
        %v1252 = vpop.f32.mrb[0].mxu0
        %v1253 = vadd.f32 %v1028, %v1252
        %v1254 = vpop.f32.mrb[0].mxu0
        %1255 = vmatprep.mubr.bf16.mxu0 0
        %1256 = vmatmul.mubr.bf16.gmra.mrb[0].mxu0 %v749
        %v1257 = vpop.f32.mrb[0].mxu0
        %v1258 = vadd.f32 %v1033, %v1257
        %v1259 = vpop.f32.mrb[0].mxu0
        %v1260 = vpop.f32.mrb[0].mxu0
        %v1261 = vadd.f32 %v1036, %v1260
        %v1262 = vpop.f32.mrb[0].mxu0
        %1263 = vmatprep.mubr.bf16.mxu0 0
        %1264 = vmatmul.mubr.bf16.gmra.mrb[0].mxu0 %v750
        %v1265 = vpop.f32.mrb[0].mxu0
        %v1266 = vadd.f32 %v1041, %v1265
        %v1267 = vpop.f32.mrb[0].mxu0
        %v1268 = vpop.f32.mrb[0].mxu0
        %v1269 = vadd.f32 %v1044, %v1268
        %v1270 = vpop.f32.mrb[0].mxu0
        %1271 = vmatprep.mubr.bf16.mxu0 0
        %1272 = vmatmul.mubr.bf16.gmra.mrb[0].mxu0 %v751
        %v1273 = vpop.f32.mrb[0].mxu0
        %v1274 = vadd.f32 %v1049, %v1273
        %v1275 = vpop.f32.mrb[0].mxu0
        %v1276 = vpop.f32.mrb[0].mxu0
        %v1277 = vadd.f32 %v1052, %v1276
        %v1278 = vpop.f32.mrb[0].mxu0
        %1279 = vmatprep.mubr.bf16.mxu0 0
        %1280 = vmatmul.mubr.bf16.gmra.mrb[0].mxu0 %v752
        %v1281 = vpop.f32.mrb[0].mxu0
        %v1282 = vadd.f32 %v1057, %v1281
        %v1283 = vpop.f32.mrb[0].mxu0
        %v1284 = vpop.f32.mrb[0].mxu0
        %v1285 = vadd.f32 %v1060, %v1284
        %v1286 = vpop.f32.mrb[0].mxu0
        %1287 = vmatprep.mubr.bf16.mxu0 0
        %1288 = vmatmul.mubr.bf16.gmra.mrb[0].mxu0 %v753
        %v1289 = vpop.f32.mrb[0].mxu0
        %v1290 = vadd.f32 %v1065, %v1289
        %v1291 = vpop.f32.mrb[0].mxu0
        %v1292 = vpop.f32.mrb[0].mxu0
        %v1293 = vadd.f32 %v1068, %v1292
        %v1294 = vpop.f32.mrb[0].mxu0
        %1295 = vmatprep.mubr.bf16.mxu0 0
        %1296 = vmatmul.mubr.bf16.gmra.mrb[0].mxu0 %v754
        %v1297 = vpop.f32.mrb[0].mxu0
        %v1298 = vadd.f32 %v1073, %v1297
        %v1299 = vpop.f32.mrb[0].mxu0
        %v1300 = vpop.f32.mrb[0].mxu0
        %v1301 = vadd.f32 %v1076, %v1300
        %v1302 = vpop.f32.mrb[0].mxu0
        %1303 = vmatprep.mubr.bf16.mxu0 0
        %1304 = vmatmul.mubr.bf16.gmra.mrb[0].mxu0 %v755
        %v1305 = vpop.f32.mrb[0].mxu0
        %v1306 = vadd.f32 %v1081, %v1305
        %v1307 = vpop.f32.mrb[0].mxu0
        %v1308 = vpop.f32.mrb[0].mxu0
        %v1309 = vadd.f32 %v1084, %v1308
        %v1310 = vpop.f32.mrb[0].mxu0
        %1311 = vmatprep.mubr.bf16.mxu0 0
        %1312 = vmatmul.mubr.bf16.gmra.mrb[0].mxu0 %v756
        %v1313 = vpop.f32.mrb[0].mxu0
        %v1314 = vadd.f32 %v1089, %v1313
        %v1315 = vpop.f32.mrb[0].mxu0
        %v1316 = vpop.f32.mrb[0].mxu0
        %v1317 = vadd.f32 %v1092, %v1316
        %v1318 = vpop.f32.mrb[0].mxu0
        %1319 = vmatprep.mubr.bf16.mxu0 0
        %1320 = vmatmul.mubr.bf16.gmra.mrb[0].mxu0 %v757
        %v1321 = vpop.f32.mrb[0].mxu0
        %v1322 = vadd.f32 %v1097, %v1321
        %v1323 = vpop.f32.mrb[0].mxu0
        %v1324 = vpop.f32.mrb[0].mxu0
        %v1325 = vadd.f32 %v1100, %v1324
        %v1326 = vpop.f32.mrb[0].mxu0
        %1327 = vmatprep.mubr.bf16.mxu0 0
        %1328 = vmatmul.mubr.bf16.gmra.mrb[0].mxu0 %v758
        %v1329 = vpop.f32.mrb[0].mxu0
        %v1330 = vadd.f32 %v1105, %v1329
        %v1331 = vpop.f32.mrb[0].mxu0
        %v1332 = vpop.f32.mrb[0].mxu0
        %v1333 = vadd.f32 %v1108, %v1332
        %v1334 = vpop.f32.mrb[0].mxu0
        %1335 = vmatprep.mubr.bf16.mxu0 0
        %1336 = vmatmul.mubr.bf16.gmra.mrb[0].mxu0 %v759
        %v1337 = vpop.f32.mrb[0].mxu0
        %v1338 = vadd.f32 %v1113, %v1337
        %v1339 = vpop.f32.mrb[0].mxu0
        %v1340 = vpop.f32.mrb[0].mxu0
        %v1341 = vadd.f32 %v1116, %v1340
        %v1342 = vpop.f32.mrb[0].mxu0
        %1343 = vdwg.mxu0
        %v1344 = vld [vmem:[%s605] sm:$0xe]
        %s1345 = scalar_lea.vmem %s1, 128
        %v1346 = vld [vmem:[%s1345] sm:$0xf]
        %v1347 = vld [vmem:[%s1345 + $0x4] sm:$0xf]
        %v1348 = vld [vmem:[%s1345 + $0x8] sm:$0xf]
        %v1349 = vld [vmem:[%s1345 + $0xc] sm:$0xf]
        %v1350 = vld [vmem:[%s1345 + $0x10] sm:$0xf]
        %v1351 = vld [vmem:[%s1345 + $0x14] sm:$0xf]
        %v1352 = vld [vmem:[%s1345 + $0x18] sm:$0xf]
        %v1353 = vld [vmem:[%s1345 + $0x1c] sm:$0xf]
        %v1354 = vld [vmem:[%s1345 + $0x20] sm:$0xf]
        %v1355 = vld [vmem:[%s1345 + $0x24] sm:$0xf]
        %v1356 = vld [vmem:[%s1345 + $0x28] sm:$0xf]
        %v1357 = vld [vmem:[%s1345 + $0x2c] sm:$0xf]
        %v1358 = vld [vmem:[%s1345 + $0x30] sm:$0xf]
        %v1359 = vld [vmem:[%s1345 + $0x34] sm:$0xf]
        %v1360 = vld [vmem:[%s1345 + $0x38] sm:$0xf]
        %v1361 = vld [vmem:[%s1345 + $0x3c] sm:$0xf]
        %v1363 = vunpack.c.l.b16 %v1344
        %v1364 = vpack.c.b16 %v712, %v1363
        %vm1365 = vcmask 1046528
        %v1366 = vrot.slane %v1364, 1
        %v1367 = vrot.slane %v745, 1
        %v1368 = vsel %vm1365, %v1366, %v1367
        %v1369 = vrot.slane %v746, 1
        %v1370 = vsel %vm1365, %v1367, %v1369
        %v1371 = vrot.slane %v747, 1
        %v1372 = vsel %vm1365, %v1369, %v1371
        %v1373 = vrot.slane %v748, 1
        %v1374 = vsel %vm1365, %v1371, %v1373
        %v1375 = vrot.slane %v749, 1
        %v1376 = vsel %vm1365, %v1373, %v1375
        %v1377 = vrot.slane %v750, 1
        %v1378 = vsel %vm1365, %v1375, %v1377
        %v1379 = vrot.slane %v751, 1
        %v1380 = vsel %vm1365, %v1377, %v1379
        %v1381 = vrot.slane %v752, 1
        %v1382 = vsel %vm1365, %v1379, %v1381
        %v1383 = vrot.slane %v753, 1
        %v1384 = vsel %vm1365, %v1381, %v1383
        %v1385 = vrot.slane %v754, 1
        %v1386 = vsel %vm1365, %v1383, %v1385
        %v1387 = vrot.slane %v755, 1
        %v1388 = vsel %vm1365, %v1385, %v1387
        %v1389 = vrot.slane %v756, 1
        %v1390 = vsel %vm1365, %v1387, %v1389
        %v1391 = vrot.slane %v757, 1
        %v1392 = vsel %vm1365, %v1389, %v1391
        %v1393 = vrot.slane %v758, 1
        %v1394 = vsel %vm1365, %v1391, %v1393
        %v1395 = vrot.slane %v759, 1
        %v1396 = vsel %vm1365, %v1393, %v1395
        %v1397 = vrot.slane %v760, 1
        %v1398 = vsel %vm1365, %v1395, %v1397
        %v1431 = vunpack.c.l.b16 %v1346
        %v1432 = vunpack.c.l.b16 %v1347
        %v1433 = vunpack.c.l.b16 %v1348
        %v1434 = vunpack.c.l.b16 %v1349
        %v1435 = vunpack.c.l.b16 %v1350
        %v1436 = vunpack.c.l.b16 %v1351
        %v1437 = vunpack.c.l.b16 %v1352
        %v1438 = vunpack.c.l.b16 %v1353
        %v1439 = vunpack.c.l.b16 %v1354
        %v1440 = vunpack.c.l.b16 %v1355
        %v1441 = vunpack.c.l.b16 %v1356
        %v1442 = vunpack.c.l.b16 %v1357
        %v1443 = vunpack.c.l.b16 %v1358
        %v1444 = vunpack.c.l.b16 %v1359
        %v1445 = vunpack.c.l.b16 %v1360
        %v1446 = vunpack.c.l.b16 %v1361
        %v1447 = vpack.c.b16 %v1432, %v1431
        %v1448 = vpack.c.b16 %v1434, %v1433
        %v1449 = vpack.c.b16 %v1436, %v1435
        %v1450 = vpack.c.b16 %v1438, %v1437
        %v1451 = vpack.c.b16 %v1440, %v1439
        %v1452 = vpack.c.b16 %v1442, %v1441
        %v1453 = vpack.c.b16 %v1444, %v1443
        %v1454 = vpack.c.b16 %v1446, %v1445
        %1463 = vmatprep.subr.bf16.mxu0 0
        %1464 = vmatpush1.bf16.msra.mxu0 %v1447
        %1465 = vmatprep.subr.bf16.mxu0 0
        %1466 = vmatpush1.bf16.msra.mxu0 %v1448
        %1467 = vmatprep.subr.bf16.mxu0 0
        %1468 = vmatpush1.bf16.msra.mxu0 %v1449
        %1469 = vmatprep.subr.bf16.mxu0 0
        %1470 = vmatpush1.bf16.msra.mxu0 %v1450
        %1471 = vmatprep.subr.bf16.mxu0 0
        %1472 = vmatpush1.bf16.msra.mxu0 %v1451
        %1473 = vmatprep.subr.bf16.mxu0 0
        %1474 = vmatpush1.bf16.msra.mxu0 %v1452
        %1475 = vmatprep.subr.bf16.mxu0 0
        %1476 = vmatpush1.bf16.msra.mxu0 %v1453
        %1477 = vmatprep.subr.bf16.mxu0 0
        %1478 = vmatpush1.bf16.msra.mxu0 %v1454
        %1479 = vmatprep.subr.bf16.mxu0 0
        %1480 = vmatpush1.bf16.msra.mxu0 0
        %1481 = vmatprep.subr.bf16.mxu0 0
        %1482 = vmatpush1.bf16.msra.mxu0 0
        %1483 = vmatprep.subr.bf16.mxu0 0
        %1484 = vmatpush1.bf16.msra.mxu0 0
        %1485 = vmatprep.subr.bf16.mxu0 0
        %1486 = vmatpush1.bf16.msra.mxu0 0
        %1487 = vmatprep.subr.bf16.mxu0 0
        %1488 = vmatpush1.bf16.msra.mxu0 0
        %1489 = vmatprep.subr.bf16.mxu0 0
        %1490 = vmatpush1.bf16.msra.mxu0 0
        %1491 = vmatprep.subr.bf16.mxu0 0
        %1492 = vmatpush1.bf16.msra.mxu0 0
        %1493 = vmatprep.subr.bf16.mxu0 0
        %1494 = vmatpush1.bf16.msra.mxu0 0
        %1495 = vmatprep.mubr.bf16.mxu0 0
        %1496 = vmatmul.mubr.bf16.gmra.mrb[0].mxu0 %v1368
        %v1497 = vpop.f32.mrb[0].mxu0
        %v1498 = vadd.f32 0.0, %v1497
        %v1499 = vpop.f32.mrb[0].mxu0
        %v1500 = vpop.f32.mrb[0].mxu0
        %v1501 = vadd.f32 0.0, %v1500
        %v1502 = vpop.f32.mrb[0].mxu0
        %1503 = vmatprep.mubr.bf16.mxu0 0
        %1504 = vmatmul.mubr.bf16.gmra.mrb[0].mxu0 %v1370
        %v1505 = vpop.f32.mrb[0].mxu0
        %v1506 = vadd.f32 0.0, %v1505
        %v1507 = vpop.f32.mrb[0].mxu0
        %v1508 = vpop.f32.mrb[0].mxu0
        %v1509 = vadd.f32 0.0, %v1508
        %v1510 = vpop.f32.mrb[0].mxu0
        %1511 = vmatprep.mubr.bf16.mxu0 0
        %1512 = vmatmul.mubr.bf16.gmra.mrb[0].mxu0 %v1372
        %v1513 = vpop.f32.mrb[0].mxu0
        %v1514 = vadd.f32 0.0, %v1513
        %v1515 = vpop.f32.mrb[0].mxu0
        %v1516 = vpop.f32.mrb[0].mxu0
        %v1517 = vadd.f32 0.0, %v1516
        %v1518 = vpop.f32.mrb[0].mxu0
        %1519 = vmatprep.mubr.bf16.mxu0 0
        %1520 = vmatmul.mubr.bf16.gmra.mrb[0].mxu0 %v1374
        %v1521 = vpop.f32.mrb[0].mxu0
        %v1522 = vadd.f32 0.0, %v1521
        %v1523 = vpop.f32.mrb[0].mxu0
        %v1524 = vpop.f32.mrb[0].mxu0
        %v1525 = vadd.f32 0.0, %v1524
        %v1526 = vpop.f32.mrb[0].mxu0
        %1527 = vmatprep.mubr.bf16.mxu0 0
        %1528 = vmatmul.mubr.bf16.gmra.mrb[0].mxu0 %v1376
        %v1529 = vpop.f32.mrb[0].mxu0
        %v1530 = vadd.f32 0.0, %v1529
        %v1531 = vpop.f32.mrb[0].mxu0
        %v1532 = vpop.f32.mrb[0].mxu0
        %v1533 = vadd.f32 0.0, %v1532
        %v1534 = vpop.f32.mrb[0].mxu0
        %1535 = vmatprep.mubr.bf16.mxu0 0
        %1536 = vmatmul.mubr.bf16.gmra.mrb[0].mxu0 %v1378
        %v1537 = vpop.f32.mrb[0].mxu0
        %v1538 = vadd.f32 0.0, %v1537
        %v1539 = vpop.f32.mrb[0].mxu0
        %v1540 = vpop.f32.mrb[0].mxu0
        %v1541 = vadd.f32 0.0, %v1540
        %v1542 = vpop.f32.mrb[0].mxu0
        %1543 = vmatprep.mubr.bf16.mxu0 0
        %1544 = vmatmul.mubr.bf16.gmra.mrb[0].mxu0 %v1380
        %v1545 = vpop.f32.mrb[0].mxu0
        %v1546 = vadd.f32 0.0, %v1545
        %v1547 = vpop.f32.mrb[0].mxu0
        %v1548 = vpop.f32.mrb[0].mxu0
        %v1549 = vadd.f32 0.0, %v1548
        %v1550 = vpop.f32.mrb[0].mxu0
        %1551 = vmatprep.mubr.bf16.mxu0 0
        %1552 = vmatmul.mubr.bf16.gmra.mrb[0].mxu0 %v1382
        %v1553 = vpop.f32.mrb[0].mxu0
        %v1554 = vadd.f32 0.0, %v1553
        %v1555 = vpop.f32.mrb[0].mxu0
        %v1556 = vpop.f32.mrb[0].mxu0
        %v1557 = vadd.f32 0.0, %v1556
        %v1558 = vpop.f32.mrb[0].mxu0
        %1559 = vmatprep.mubr.bf16.mxu0 0
        %1560 = vmatmul.mubr.bf16.gmra.mrb[0].mxu0 %v1384
        %v1561 = vpop.f32.mrb[0].mxu0
        %v1562 = vadd.f32 0.0, %v1561
        %v1563 = vpop.f32.mrb[0].mxu0
        %v1564 = vpop.f32.mrb[0].mxu0
        %v1565 = vadd.f32 0.0, %v1564
        %v1566 = vpop.f32.mrb[0].mxu0
        %1567 = vmatprep.mubr.bf16.mxu0 0
        %1568 = vmatmul.mubr.bf16.gmra.mrb[0].mxu0 %v1386
        %v1569 = vpop.f32.mrb[0].mxu0
        %v1570 = vadd.f32 0.0, %v1569
        %v1571 = vpop.f32.mrb[0].mxu0
        %v1572 = vpop.f32.mrb[0].mxu0
        %v1573 = vadd.f32 0.0, %v1572
        %v1574 = vpop.f32.mrb[0].mxu0
        %1575 = vmatprep.mubr.bf16.mxu0 0
        %1576 = vmatmul.mubr.bf16.gmra.mrb[0].mxu0 %v1388
        %v1577 = vpop.f32.mrb[0].mxu0
        %v1578 = vadd.f32 0.0, %v1577
        %v1579 = vpop.f32.mrb[0].mxu0
        %v1580 = vpop.f32.mrb[0].mxu0
        %v1581 = vadd.f32 0.0, %v1580
        %v1582 = vpop.f32.mrb[0].mxu0
        %1583 = vmatprep.mubr.bf16.mxu0 0
        %1584 = vmatmul.mubr.bf16.gmra.mrb[0].mxu0 %v1390
        %v1585 = vpop.f32.mrb[0].mxu0
        %v1586 = vadd.f32 0.0, %v1585
        %v1587 = vpop.f32.mrb[0].mxu0
        %v1588 = vpop.f32.mrb[0].mxu0
        %v1589 = vadd.f32 0.0, %v1588
        %v1590 = vpop.f32.mrb[0].mxu0
        %1591 = vmatprep.mubr.bf16.mxu0 0
        %1592 = vmatmul.mubr.bf16.gmra.mrb[0].mxu0 %v1392
        %v1593 = vpop.f32.mrb[0].mxu0
        %v1594 = vadd.f32 0.0, %v1593
        %v1595 = vpop.f32.mrb[0].mxu0
        %v1596 = vpop.f32.mrb[0].mxu0
        %v1597 = vadd.f32 0.0, %v1596
        %v1598 = vpop.f32.mrb[0].mxu0
        %1599 = vmatprep.mubr.bf16.mxu0 0
        %1600 = vmatmul.mubr.bf16.gmra.mrb[0].mxu0 %v1394
        %v1601 = vpop.f32.mrb[0].mxu0
        %v1602 = vadd.f32 0.0, %v1601
        %v1603 = vpop.f32.mrb[0].mxu0
        %v1604 = vpop.f32.mrb[0].mxu0
        %v1605 = vadd.f32 0.0, %v1604
        %v1606 = vpop.f32.mrb[0].mxu0
        %1607 = vmatprep.mubr.bf16.mxu0 0
        %1608 = vmatmul.mubr.bf16.gmra.mrb[0].mxu0 %v1396
        %v1609 = vpop.f32.mrb[0].mxu0
        %v1610 = vadd.f32 0.0, %v1609
        %v1611 = vpop.f32.mrb[0].mxu0
        %v1612 = vpop.f32.mrb[0].mxu0
        %v1613 = vadd.f32 0.0, %v1612
        %v1614 = vpop.f32.mrb[0].mxu0
        %1615 = vmatprep.mubr.bf16.mxu0 0
        %1616 = vmatmul.mubr.bf16.gmra.mrb[0].mxu0 %v1398
        %v1617 = vpop.f32.mrb[0].mxu0
        %v1618 = vadd.f32 0.0, %v1617
        %v1619 = vpop.f32.mrb[0].mxu0
        %v1620 = vpop.f32.mrb[0].mxu0
        %v1621 = vadd.f32 0.0, %v1620
        %v1622 = vpop.f32.mrb[0].mxu0
        %1623 = vdwg.mxu0
        %v1624 = vadd.f32 %v1218, %v1498
        %v1625 = vadd.f32 %v1221, %v1501
        %v1626 = vadd.f32 %v1226, %v1506
        %v1627 = vadd.f32 %v1229, %v1509
        %v1628 = vadd.f32 %v1234, %v1514
        %v1629 = vadd.f32 %v1237, %v1517
        %v1630 = vadd.f32 %v1242, %v1522
        %v1631 = vadd.f32 %v1245, %v1525
        %v1632 = vadd.f32 %v1250, %v1530
        %v1633 = vadd.f32 %v1253, %v1533
        %v1634 = vadd.f32 %v1258, %v1538
        %v1635 = vadd.f32 %v1261, %v1541
        %v1636 = vadd.f32 %v1266, %v1546
        %v1637 = vadd.f32 %v1269, %v1549
        %v1638 = vadd.f32 %v1274, %v1554
        %v1639 = vadd.f32 %v1277, %v1557
        %v1640 = vadd.f32 %v1282, %v1562
        %v1641 = vadd.f32 %v1285, %v1565
        %v1642 = vadd.f32 %v1290, %v1570
        %v1643 = vadd.f32 %v1293, %v1573
        %v1644 = vadd.f32 %v1298, %v1578
        %v1645 = vadd.f32 %v1301, %v1581
        %v1646 = vadd.f32 %v1306, %v1586
        %v1647 = vadd.f32 %v1309, %v1589
        %v1648 = vadd.f32 %v1314, %v1594
        %v1649 = vadd.f32 %v1317, %v1597
        %v1650 = vadd.f32 %v1322, %v1602
        %v1651 = vadd.f32 %v1325, %v1605
        %v1652 = vadd.f32 %v1330, %v1610
        %v1653 = vadd.f32 %v1333, %v1613
        %v1654 = vadd.f32 %v1338, %v1618
        %v1655 = vadd.f32 %v1341, %v1621
        %v1656 = vld [vmem:[%s605 + $0x8] sm:$0xe]
        %v1657 = vld [vmem:[%s605 + $0xc] sm:$0xf]
        %v1658 = vld [vmem:[%s605 + $0x10] sm:$0xf]
        %v1659 = vld [vmem:[%s605 + $0x14] sm:$0xf]
        %v1660 = vld [vmem:[%s605 + $0x18] sm:$0xf]
        %v1661 = vld [vmem:[%s605 + $0x1c] sm:$0xf]
        %v1662 = vld [vmem:[%s605 + $0x20] sm:$0xf]
        %v1663 = vld [vmem:[%s605 + $0x24] sm:$0xf]
        %v1664 = vld [vmem:[%s605 + $0x28] sm:$0xf]
        %v1665 = vld [vmem:[%s605 + $0x2c] sm:$0xf]
        %v1666 = vld [vmem:[%s605 + $0x30] sm:$0xf]
        %v1667 = vld [vmem:[%s605 + $0x34] sm:$0xf]
        %v1668 = vld [vmem:[%s605 + $0x38] sm:$0xf]
        %v1669 = vld [vmem:[%s605 + $0x3c] sm:$0xf]
        %v1670 = vld [vmem:[%s605 + $0x40] sm:$0xf]
        %v1671 = vld [vmem:[%s605 + $0x44] sm:$0xf]
        %v1672 = vld [vmem:[%s605 + $0x48] sm:$0xf]
        %v1673 = vld [vmem:[%s605 + $0x4c] sm:$0xf]
        %v1674 = vld [vmem:[%s605 + $0x50] sm:$0xf]
        %v1675 = vld [vmem:[%s605 + $0x54] sm:$0xf]
        %v1676 = vld [vmem:[%s605 + $0x58] sm:$0xf]
        %v1677 = vld [vmem:[%s605 + $0x5c] sm:$0xf]
        %v1678 = vld [vmem:[%s605 + $0x60] sm:$0xf]
        %v1679 = vld [vmem:[%s605 + $0x64] sm:$0xf]
        %v1680 = vld [vmem:[%s605 + $0x68] sm:$0xf]
        %v1681 = vld [vmem:[%s605 + $0x6c] sm:$0xf]
        %v1682 = vld [vmem:[%s605 + $0x70] sm:$0xf]
        %v1683 = vld [vmem:[%s605 + $0x74] sm:$0xf]
        %v1684 = vld [vmem:[%s605 + $0x78] sm:$0xf]
        %v1685 = vld [vmem:[%s605 + $0x7c] sm:$0xf]
        %v1686 = vld [vmem:[%s605 + $0x80] sm:$0xf]
        %v1687 = vld [vmem:[%s605 + $0x84] sm:$0xf]
        %v1688 = vld [vmem:[%s605 + $0x88] sm:$0x1]
        %s1689 = scalar_lea.vmem %s1, 192
        %v1690 = vld [vmem:[%s1689] sm:$0xf]
        %v1691 = vld [vmem:[%s1689 + $0x4] sm:$0xf]
        %v1692 = vld [vmem:[%s1689 + $0x8] sm:$0xf]
        %v1693 = vld [vmem:[%s1689 + $0xc] sm:$0xf]
        %v1694 = vld [vmem:[%s1689 + $0x10] sm:$0xf]
        %v1695 = vld [vmem:[%s1689 + $0x14] sm:$0xf]
        %v1696 = vld [vmem:[%s1689 + $0x18] sm:$0xf]
        %v1697 = vld [vmem:[%s1689 + $0x1c] sm:$0xf]
        %v1698 = vld [vmem:[%s1689 + $0x20] sm:$0xf]
        %v1699 = vld [vmem:[%s1689 + $0x24] sm:$0xf]
        %v1700 = vld [vmem:[%s1689 + $0x28] sm:$0xf]
        %v1701 = vld [vmem:[%s1689 + $0x2c] sm:$0xf]
        %v1702 = vld [vmem:[%s1689 + $0x30] sm:$0xf]
        %v1703 = vld [vmem:[%s1689 + $0x34] sm:$0xf]
        %v1704 = vld [vmem:[%s1689 + $0x38] sm:$0xf]
        %v1705 = vld [vmem:[%s1689 + $0x3c] sm:$0xf]
        %v1739 = vunpack.c.l.b16 %v1656
        %v1740 = vunpack.c.l.b16 %v1657
        %v1741 = vunpack.c.l.b16 %v1658
        %v1742 = vunpack.c.l.b16 %v1659
        %v1743 = vunpack.c.l.b16 %v1660
        %v1744 = vunpack.c.l.b16 %v1661
        %v1745 = vunpack.c.l.b16 %v1662
        %v1746 = vunpack.c.l.b16 %v1663
        %v1747 = vunpack.c.l.b16 %v1664
        %v1748 = vunpack.c.l.b16 %v1665
        %v1749 = vunpack.c.l.b16 %v1666
        %v1750 = vunpack.c.l.b16 %v1667
        %v1751 = vunpack.c.l.b16 %v1668
        %v1752 = vunpack.c.l.b16 %v1669
        %v1753 = vunpack.c.l.b16 %v1670
        %v1754 = vunpack.c.l.b16 %v1671
        %v1755 = vunpack.c.l.b16 %v1672
        %v1756 = vunpack.c.l.b16 %v1673
        %v1757 = vunpack.c.l.b16 %v1674
        %v1758 = vunpack.c.l.b16 %v1675
        %v1759 = vunpack.c.l.b16 %v1676
        %v1760 = vunpack.c.l.b16 %v1677
        %v1761 = vunpack.c.l.b16 %v1678
        %v1762 = vunpack.c.l.b16 %v1679
        %v1763 = vunpack.c.l.b16 %v1680
        %v1764 = vunpack.c.l.b16 %v1681
        %v1765 = vunpack.c.l.b16 %v1682
        %v1766 = vunpack.c.l.b16 %v1683
        %v1767 = vunpack.c.l.b16 %v1684
        %v1768 = vunpack.c.l.b16 %v1685
        %v1769 = vunpack.c.l.b16 %v1686
        %v1770 = vunpack.c.l.b16 %v1687
        %v1771 = vunpack.c.l.b16 %v1688
        %v1772 = vpack.c.b16 %v1740, %v1739
        %v1773 = vpack.c.b16 %v1742, %v1741
        %v1774 = vpack.c.b16 %v1744, %v1743
        %v1775 = vpack.c.b16 %v1746, %v1745
        %v1776 = vpack.c.b16 %v1748, %v1747
        %v1777 = vpack.c.b16 %v1750, %v1749
        %v1778 = vpack.c.b16 %v1752, %v1751
        %v1779 = vpack.c.b16 %v1754, %v1753
        %v1780 = vpack.c.b16 %v1756, %v1755
        %v1781 = vpack.c.b16 %v1758, %v1757
        %v1782 = vpack.c.b16 %v1760, %v1759
        %v1783 = vpack.c.b16 %v1762, %v1761
        %v1784 = vpack.c.b16 %v1764, %v1763
        %v1785 = vpack.c.b16 %v1766, %v1765
        %v1786 = vpack.c.b16 %v1768, %v1767
        %v1787 = vpack.c.b16 %v1770, %v1769
        %v1788 = vpack.c.b16 %v1771, %v1771
        %v1789 = vrot.slane %v1772, 1
        %v1790 = vrot.slane %v1773, 1
        %v1791 = vsel %vm1365, %v1789, %v1790
        %v1792 = vrot.slane %v1774, 1
        %v1793 = vsel %vm1365, %v1790, %v1792
        %v1794 = vrot.slane %v1775, 1
        %v1795 = vsel %vm1365, %v1792, %v1794
        %v1796 = vrot.slane %v1776, 1
        %v1797 = vsel %vm1365, %v1794, %v1796
        %v1798 = vrot.slane %v1777, 1
        %v1799 = vsel %vm1365, %v1796, %v1798
        %v1800 = vrot.slane %v1778, 1
        %v1801 = vsel %vm1365, %v1798, %v1800
        %v1802 = vrot.slane %v1779, 1
        %v1803 = vsel %vm1365, %v1800, %v1802
        %v1804 = vrot.slane %v1780, 1
        %v1805 = vsel %vm1365, %v1802, %v1804
        %v1806 = vrot.slane %v1781, 1
        %v1807 = vsel %vm1365, %v1804, %v1806
        %v1808 = vrot.slane %v1782, 1
        %v1809 = vsel %vm1365, %v1806, %v1808
        %v1810 = vrot.slane %v1783, 1
        %v1811 = vsel %vm1365, %v1808, %v1810
        %v1812 = vrot.slane %v1784, 1
        %v1813 = vsel %vm1365, %v1810, %v1812
        %v1814 = vrot.slane %v1785, 1
        %v1815 = vsel %vm1365, %v1812, %v1814
        %v1816 = vrot.slane %v1786, 1
        %v1817 = vsel %vm1365, %v1814, %v1816
        %v1818 = vrot.slane %v1787, 1
        %v1819 = vsel %vm1365, %v1816, %v1818
        %v1820 = vrot.slane %v1788, 1
        %v1821 = vsel %vm1365, %v1818, %v1820
        %v1854 = vunpack.c.l.b16 %v1690
        %v1855 = vunpack.c.l.b16 %v1691
        %v1856 = vunpack.c.l.b16 %v1692
        %v1857 = vunpack.c.l.b16 %v1693
        %v1858 = vunpack.c.l.b16 %v1694
        %v1859 = vunpack.c.l.b16 %v1695
        %v1860 = vunpack.c.l.b16 %v1696
        %v1861 = vunpack.c.l.b16 %v1697
        %v1862 = vunpack.c.l.b16 %v1698
        %v1863 = vunpack.c.l.b16 %v1699
        %v1864 = vunpack.c.l.b16 %v1700
        %v1865 = vunpack.c.l.b16 %v1701
        %v1866 = vunpack.c.l.b16 %v1702
        %v1867 = vunpack.c.l.b16 %v1703
        %v1868 = vunpack.c.l.b16 %v1704
        %v1869 = vunpack.c.l.b16 %v1705
        %v1870 = vpack.c.b16 %v1855, %v1854
        %v1871 = vpack.c.b16 %v1857, %v1856
        %v1872 = vpack.c.b16 %v1859, %v1858
        %v1873 = vpack.c.b16 %v1861, %v1860
        %v1874 = vpack.c.b16 %v1863, %v1862
        %v1875 = vpack.c.b16 %v1865, %v1864
        %v1876 = vpack.c.b16 %v1867, %v1866
        %v1877 = vpack.c.b16 %v1869, %v1868
        %1886 = vmatprep.subr.bf16.mxu0 0
        %1887 = vmatpush1.bf16.msra.mxu0 %v1870
        %1888 = vmatprep.subr.bf16.mxu0 0
        %1889 = vmatpush1.bf16.msra.mxu0 %v1871
        %1890 = vmatprep.subr.bf16.mxu0 0
        %1891 = vmatpush1.bf16.msra.mxu0 %v1872
        %1892 = vmatprep.subr.bf16.mxu0 0
        %1893 = vmatpush1.bf16.msra.mxu0 %v1873
        %1894 = vmatprep.subr.bf16.mxu0 0
        %1895 = vmatpush1.bf16.msra.mxu0 %v1874
        %1896 = vmatprep.subr.bf16.mxu0 0
        %1897 = vmatpush1.bf16.msra.mxu0 %v1875
        %1898 = vmatprep.subr.bf16.mxu0 0
        %1899 = vmatpush1.bf16.msra.mxu0 %v1876
        %1900 = vmatprep.subr.bf16.mxu0 0
        %1901 = vmatpush1.bf16.msra.mxu0 %v1877
        %1902 = vmatprep.subr.bf16.mxu0 0
        %1903 = vmatpush1.bf16.msra.mxu0 0
        %1904 = vmatprep.subr.bf16.mxu0 0
        %1905 = vmatpush1.bf16.msra.mxu0 0
        %1906 = vmatprep.subr.bf16.mxu0 0
        %1907 = vmatpush1.bf16.msra.mxu0 0
        %1908 = vmatprep.subr.bf16.mxu0 0
        %1909 = vmatpush1.bf16.msra.mxu0 0
        %1910 = vmatprep.subr.bf16.mxu0 0
        %1911 = vmatpush1.bf16.msra.mxu0 0
        %1912 = vmatprep.subr.bf16.mxu0 0
        %1913 = vmatpush1.bf16.msra.mxu0 0
        %1914 = vmatprep.subr.bf16.mxu0 0
        %1915 = vmatpush1.bf16.msra.mxu0 0
        %1916 = vmatprep.subr.bf16.mxu0 0
        %1917 = vmatpush1.bf16.msra.mxu0 0
        %1918 = vmatprep.mubr.bf16.mxu0 0
        %1919 = vmatmul.mubr.bf16.gmra.mrb[0].mxu0 %v1791
        %v1920 = vpop.f32.mrb[0].mxu0
        %v1921 = vadd.f32 0.0, %v1920
        %v1922 = vpop.f32.mrb[0].mxu0
        %v1923 = vpop.f32.mrb[0].mxu0
        %v1924 = vadd.f32 0.0, %v1923
        %v1925 = vpop.f32.mrb[0].mxu0
        %1926 = vmatprep.mubr.bf16.mxu0 0
        %1927 = vmatmul.mubr.bf16.gmra.mrb[0].mxu0 %v1793
        %v1928 = vpop.f32.mrb[0].mxu0
        %v1929 = vadd.f32 0.0, %v1928
        %v1930 = vpop.f32.mrb[0].mxu0
        %v1931 = vpop.f32.mrb[0].mxu0
        %v1932 = vadd.f32 0.0, %v1931
        %v1933 = vpop.f32.mrb[0].mxu0
        %1934 = vmatprep.mubr.bf16.mxu0 0
        %1935 = vmatmul.mubr.bf16.gmra.mrb[0].mxu0 %v1795
        %v1936 = vpop.f32.mrb[0].mxu0
        %v1937 = vadd.f32 0.0, %v1936
        %v1938 = vpop.f32.mrb[0].mxu0
        %v1939 = vpop.f32.mrb[0].mxu0
        %v1940 = vadd.f32 0.0, %v1939
        %v1941 = vpop.f32.mrb[0].mxu0
        %1942 = vmatprep.mubr.bf16.mxu0 0
        %1943 = vmatmul.mubr.bf16.gmra.mrb[0].mxu0 %v1797
        %v1944 = vpop.f32.mrb[0].mxu0
        %v1945 = vadd.f32 0.0, %v1944
        %v1946 = vpop.f32.mrb[0].mxu0
        %v1947 = vpop.f32.mrb[0].mxu0
        %v1948 = vadd.f32 0.0, %v1947
        %v1949 = vpop.f32.mrb[0].mxu0
        %1950 = vmatprep.mubr.bf16.mxu0 0
        %1951 = vmatmul.mubr.bf16.gmra.mrb[0].mxu0 %v1799
        %v1952 = vpop.f32.mrb[0].mxu0
        %v1953 = vadd.f32 0.0, %v1952
        %v1954 = vpop.f32.mrb[0].mxu0
        %v1955 = vpop.f32.mrb[0].mxu0
        %v1956 = vadd.f32 0.0, %v1955
        %v1957 = vpop.f32.mrb[0].mxu0
        %1958 = vmatprep.mubr.bf16.mxu0 0
        %1959 = vmatmul.mubr.bf16.gmra.mrb[0].mxu0 %v1801
        %v1960 = vpop.f32.mrb[0].mxu0
        %v1961 = vadd.f32 0.0, %v1960
        %v1962 = vpop.f32.mrb[0].mxu0
        %v1963 = vpop.f32.mrb[0].mxu0
        %v1964 = vadd.f32 0.0, %v1963
        %v1965 = vpop.f32.mrb[0].mxu0
        %1966 = vmatprep.mubr.bf16.mxu0 0
        %1967 = vmatmul.mubr.bf16.gmra.mrb[0].mxu0 %v1803
        %v1968 = vpop.f32.mrb[0].mxu0
        %v1969 = vadd.f32 0.0, %v1968
        %v1970 = vpop.f32.mrb[0].mxu0
        %v1971 = vpop.f32.mrb[0].mxu0
        %v1972 = vadd.f32 0.0, %v1971
        %v1973 = vpop.f32.mrb[0].mxu0
        %1974 = vmatprep.mubr.bf16.mxu0 0
        %1975 = vmatmul.mubr.bf16.gmra.mrb[0].mxu0 %v1805
        %v1976 = vpop.f32.mrb[0].mxu0
        %v1977 = vadd.f32 0.0, %v1976
        %v1978 = vpop.f32.mrb[0].mxu0
        %v1979 = vpop.f32.mrb[0].mxu0
        %v1980 = vadd.f32 0.0, %v1979
        %v1981 = vpop.f32.mrb[0].mxu0
        %1982 = vmatprep.mubr.bf16.mxu0 0
        %1983 = vmatmul.mubr.bf16.gmra.mrb[0].mxu0 %v1807
        %v1984 = vpop.f32.mrb[0].mxu0
        %v1985 = vadd.f32 0.0, %v1984
        %v1986 = vpop.f32.mrb[0].mxu0
        %v1987 = vpop.f32.mrb[0].mxu0
        %v1988 = vadd.f32 0.0, %v1987
        %v1989 = vpop.f32.mrb[0].mxu0
        %1990 = vmatprep.mubr.bf16.mxu0 0
        %1991 = vmatmul.mubr.bf16.gmra.mrb[0].mxu0 %v1809
        %v1992 = vpop.f32.mrb[0].mxu0
        %v1993 = vadd.f32 0.0, %v1992
        %v1994 = vpop.f32.mrb[0].mxu0
        %v1995 = vpop.f32.mrb[0].mxu0
        %v1996 = vadd.f32 0.0, %v1995
        %v1997 = vpop.f32.mrb[0].mxu0
        %1998 = vmatprep.mubr.bf16.mxu0 0
        %1999 = vmatmul.mubr.bf16.gmra.mrb[0].mxu0 %v1811
        %v2000 = vpop.f32.mrb[0].mxu0
        %v2001 = vadd.f32 0.0, %v2000
        %v2002 = vpop.f32.mrb[0].mxu0
        %v2003 = vpop.f32.mrb[0].mxu0
        %v2004 = vadd.f32 0.0, %v2003
        %v2005 = vpop.f32.mrb[0].mxu0
        %2006 = vmatprep.mubr.bf16.mxu0 0
        %2007 = vmatmul.mubr.bf16.gmra.mrb[0].mxu0 %v1813
        %v2008 = vpop.f32.mrb[0].mxu0
        %v2009 = vadd.f32 0.0, %v2008
        %v2010 = vpop.f32.mrb[0].mxu0
        %v2011 = vpop.f32.mrb[0].mxu0
        %v2012 = vadd.f32 0.0, %v2011
        %v2013 = vpop.f32.mrb[0].mxu0
        %2014 = vmatprep.mubr.bf16.mxu0 0
        %2015 = vmatmul.mubr.bf16.gmra.mrb[0].mxu0 %v1815
        %v2016 = vpop.f32.mrb[0].mxu0
        %v2017 = vadd.f32 0.0, %v2016
        %v2018 = vpop.f32.mrb[0].mxu0
        %v2019 = vpop.f32.mrb[0].mxu0
        %v2020 = vadd.f32 0.0, %v2019
        %v2021 = vpop.f32.mrb[0].mxu0
        %2022 = vmatprep.mubr.bf16.mxu0 0
        %2023 = vmatmul.mubr.bf16.gmra.mrb[0].mxu0 %v1817
        %v2024 = vpop.f32.mrb[0].mxu0
        %v2025 = vadd.f32 0.0, %v2024
        %v2026 = vpop.f32.mrb[0].mxu0
        %v2027 = vpop.f32.mrb[0].mxu0
        %v2028 = vadd.f32 0.0, %v2027
        %v2029 = vpop.f32.mrb[0].mxu0
        %2030 = vmatprep.mubr.bf16.mxu0 0
        %2031 = vmatmul.mubr.bf16.gmra.mrb[0].mxu0 %v1819
        %v2032 = vpop.f32.mrb[0].mxu0
        %v2033 = vadd.f32 0.0, %v2032
        %v2034 = vpop.f32.mrb[0].mxu0
        %v2035 = vpop.f32.mrb[0].mxu0
        %v2036 = vadd.f32 0.0, %v2035
        %v2037 = vpop.f32.mrb[0].mxu0
        %2038 = vmatprep.mubr.bf16.mxu0 0
        %2039 = vmatmul.mubr.bf16.gmra.mrb[0].mxu0 %v1821
        %v2040 = vpop.f32.mrb[0].mxu0
        %v2041 = vadd.f32 0.0, %v2040
        %v2042 = vpop.f32.mrb[0].mxu0
        %v2043 = vpop.f32.mrb[0].mxu0
        %v2044 = vadd.f32 0.0, %v2043
        %v2045 = vpop.f32.mrb[0].mxu0
        %2046 = vdwg.mxu0
        %v2047 = vadd.f32 %v1624, %v1921
        %v2048 = vadd.f32 %v1625, %v1924
        %v2049 = vadd.f32 %v1626, %v1929
        %v2050 = vadd.f32 %v1627, %v1932
        %v2051 = vadd.f32 %v1628, %v1937
        %v2052 = vadd.f32 %v1629, %v1940
        %v2053 = vadd.f32 %v1630, %v1945
        %v2054 = vadd.f32 %v1631, %v1948
        %v2055 = vadd.f32 %v1632, %v1953
        %v2056 = vadd.f32 %v1633, %v1956
        %v2057 = vadd.f32 %v1634, %v1961
        %v2058 = vadd.f32 %v1635, %v1964
        %v2059 = vadd.f32 %v1636, %v1969
        %v2060 = vadd.f32 %v1637, %v1972
        %v2061 = vadd.f32 %v1638, %v1977
        %v2062 = vadd.f32 %v1639, %v1980
        %v2063 = vadd.f32 %v1640, %v1985
        %v2064 = vadd.f32 %v1641, %v1988
        %v2065 = vadd.f32 %v1642, %v1993
        %v2066 = vadd.f32 %v1643, %v1996
        %v2067 = vadd.f32 %v1644, %v2001
        %v2068 = vadd.f32 %v1645, %v2004
        %v2069 = vadd.f32 %v1646, %v2009
        %v2070 = vadd.f32 %v1647, %v2012
        %v2071 = vadd.f32 %v1648, %v2017
        %v2072 = vadd.f32 %v1649, %v2020
        %v2073 = vadd.f32 %v1650, %v2025
        %v2074 = vadd.f32 %v1651, %v2028
        %v2075 = vadd.f32 %v1652, %v2033
        %v2076 = vadd.f32 %v1653, %v2036
        %v2077 = vadd.f32 %v1654, %v2041
        %v2078 = vadd.f32 %v1655, %v2044
        %v2079 = vld [vmem:[%s605 + $0x88] sm:$0x3]
        %s2080 = scalar_lea.vmem %s1, 256
        %v2081 = vld [vmem:[%s2080] sm:$0xf]
        %v2082 = vld [vmem:[%s2080 + $0x4] sm:$0xf]
        %v2083 = vld [vmem:[%s2080 + $0x8] sm:$0xf]
        %v2084 = vld [vmem:[%s2080 + $0xc] sm:$0xf]
        %v2085 = vld [vmem:[%s2080 + $0x10] sm:$0xf]
        %v2086 = vld [vmem:[%s2080 + $0x14] sm:$0xf]
        %v2087 = vld [vmem:[%s2080 + $0x18] sm:$0xf]
        %v2088 = vld [vmem:[%s2080 + $0x1c] sm:$0xf]
        %v2089 = vld [vmem:[%s2080 + $0x20] sm:$0xf]
        %v2090 = vld [vmem:[%s2080 + $0x24] sm:$0xf]
        %v2091 = vld [vmem:[%s2080 + $0x28] sm:$0xf]
        %v2092 = vld [vmem:[%s2080 + $0x2c] sm:$0xf]
        %v2093 = vld [vmem:[%s2080 + $0x30] sm:$0xf]
        %v2094 = vld [vmem:[%s2080 + $0x34] sm:$0xf]
        %v2095 = vld [vmem:[%s2080 + $0x38] sm:$0xf]
        %v2096 = vld [vmem:[%s2080 + $0x3c] sm:$0xf]
        %v2098 = vunpack.c.l.b16 %v2079
        %v2099 = vpack.c.b16 %v2098, %v2098
        %vm2100 = vsmask.f32 6400
        %v2102 = vshrl.u32 %v1772, 16
        %v2104 = vrot.slane %v2102, 1
        %v2105 = vshll.u32 %v1772, 16
        %v2107 = vrot.slane %v2105, 2
        %v2108 = vor.u32 %v2104, %v2107
        %v2110 = vshrl.u32 %v1773, 16
        %v2112 = vrot.slane %v2110, 1
        %v2113 = vshll.u32 %v1773, 16
        %v2115 = vrot.slane %v2113, 2
        %v2116 = vor.u32 %v2112, %v2115
        %v2117 = vsel %vm2100, %v2108, %v2116
        %v2119 = vshrl.u32 %v1774, 16
        %v2121 = vrot.slane %v2119, 1
        %v2122 = vshll.u32 %v1774, 16
        %v2124 = vrot.slane %v2122, 2
        %v2125 = vor.u32 %v2121, %v2124
        %v2126 = vsel %vm2100, %v2116, %v2125
        %v2128 = vshrl.u32 %v1775, 16
        %v2130 = vrot.slane %v2128, 1
        %v2131 = vshll.u32 %v1775, 16
        %v2133 = vrot.slane %v2131, 2
        %v2134 = vor.u32 %v2130, %v2133
        %v2135 = vsel %vm2100, %v2125, %v2134
        %v2137 = vshrl.u32 %v1776, 16
        %v2139 = vrot.slane %v2137, 1
        %v2140 = vshll.u32 %v1776, 16
        %v2142 = vrot.slane %v2140, 2
        %v2143 = vor.u32 %v2139, %v2142
        %v2144 = vsel %vm2100, %v2134, %v2143
        %v2146 = vshrl.u32 %v1777, 16
        %v2148 = vrot.slane %v2146, 1
        %v2149 = vshll.u32 %v1777, 16
        %v2151 = vrot.slane %v2149, 2
        %v2152 = vor.u32 %v2148, %v2151
        %v2153 = vsel %vm2100, %v2143, %v2152
        %v2155 = vshrl.u32 %v1778, 16
        %v2157 = vrot.slane %v2155, 1
        %v2158 = vshll.u32 %v1778, 16
        %v2160 = vrot.slane %v2158, 2
        %v2161 = vor.u32 %v2157, %v2160
        %v2162 = vsel %vm2100, %v2152, %v2161
        %v2164 = vshrl.u32 %v1779, 16
        %v2166 = vrot.slane %v2164, 1
        %v2167 = vshll.u32 %v1779, 16
        %v2169 = vrot.slane %v2167, 2
        %v2170 = vor.u32 %v2166, %v2169
        %v2171 = vsel %vm2100, %v2161, %v2170
        %v2173 = vshrl.u32 %v1780, 16
        %v2175 = vrot.slane %v2173, 1
        %v2176 = vshll.u32 %v1780, 16
        %v2178 = vrot.slane %v2176, 2
        %v2179 = vor.u32 %v2175, %v2178
        %v2180 = vsel %vm2100, %v2170, %v2179
        %v2182 = vshrl.u32 %v1781, 16
        %v2184 = vrot.slane %v2182, 1
        %v2185 = vshll.u32 %v1781, 16
        %v2187 = vrot.slane %v2185, 2
        %v2188 = vor.u32 %v2184, %v2187
        %v2189 = vsel %vm2100, %v2179, %v2188
        %v2191 = vshrl.u32 %v1782, 16
        %v2193 = vrot.slane %v2191, 1
        %v2194 = vshll.u32 %v1782, 16
        %v2196 = vrot.slane %v2194, 2
        %v2197 = vor.u32 %v2193, %v2196
        %v2198 = vsel %vm2100, %v2188, %v2197
        %v2200 = vshrl.u32 %v1783, 16
        %v2202 = vrot.slane %v2200, 1
        %v2203 = vshll.u32 %v1783, 16
        %v2205 = vrot.slane %v2203, 2
        %v2206 = vor.u32 %v2202, %v2205
        %v2207 = vsel %vm2100, %v2197, %v2206
        %v2209 = vshrl.u32 %v1784, 16
        %v2211 = vrot.slane %v2209, 1
        %v2212 = vshll.u32 %v1784, 16
        %v2214 = vrot.slane %v2212, 2
        %v2215 = vor.u32 %v2211, %v2214
        %v2216 = vsel %vm2100, %v2206, %v2215
        %v2218 = vshrl.u32 %v1785, 16
        %v2220 = vrot.slane %v2218, 1
        %v2221 = vshll.u32 %v1785, 16
        %v2223 = vrot.slane %v2221, 2
        %v2224 = vor.u32 %v2220, %v2223
        %v2225 = vsel %vm2100, %v2215, %v2224
        %v2227 = vshrl.u32 %v1786, 16
        %v2229 = vrot.slane %v2227, 1
        %v2230 = vshll.u32 %v1786, 16
        %v2232 = vrot.slane %v2230, 2
        %v2233 = vor.u32 %v2229, %v2232
        %v2234 = vsel %vm2100, %v2224, %v2233
        %v2236 = vshrl.u32 %v1787, 16
        %v2238 = vrot.slane %v2236, 1
        %v2239 = vshll.u32 %v1787, 16
        %v2241 = vrot.slane %v2239, 2
        %v2242 = vor.u32 %v2238, %v2241
        %v2243 = vsel %vm2100, %v2233, %v2242
        %v2245 = vshrl.u32 %v2099, 16
        %v2247 = vrot.slane %v2245, 1
        %v2248 = vshll.u32 %v2099, 16
        %v2250 = vrot.slane %v2248, 2
        %v2251 = vor.u32 %v2247, %v2250
        %v2252 = vsel %vm2100, %v2242, %v2251
        %v2285 = vunpack.c.l.b16 %v2081
        %v2286 = vunpack.c.l.b16 %v2082
        %v2287 = vunpack.c.l.b16 %v2083
        %v2288 = vunpack.c.l.b16 %v2084
        %v2289 = vunpack.c.l.b16 %v2085
        %v2290 = vunpack.c.l.b16 %v2086
        %v2291 = vunpack.c.l.b16 %v2087
        %v2292 = vunpack.c.l.b16 %v2088
        %v2293 = vunpack.c.l.b16 %v2089
        %v2294 = vunpack.c.l.b16 %v2090
        %v2295 = vunpack.c.l.b16 %v2091
        %v2296 = vunpack.c.l.b16 %v2092
        %v2297 = vunpack.c.l.b16 %v2093
        %v2298 = vunpack.c.l.b16 %v2094
        %v2299 = vunpack.c.l.b16 %v2095
        %v2300 = vunpack.c.l.b16 %v2096
        %v2301 = vpack.c.b16 %v2286, %v2285
        %v2302 = vpack.c.b16 %v2288, %v2287
        %v2303 = vpack.c.b16 %v2290, %v2289
        %v2304 = vpack.c.b16 %v2292, %v2291
        %v2305 = vpack.c.b16 %v2294, %v2293
        %v2306 = vpack.c.b16 %v2296, %v2295
        %v2307 = vpack.c.b16 %v2298, %v2297
        %v2308 = vpack.c.b16 %v2300, %v2299
        %2317 = vmatprep.subr.bf16.mxu0 0
        %2318 = vmatpush1.bf16.msra.mxu0 %v2301
        %2319 = vmatprep.subr.bf16.mxu0 0
        %2320 = vmatpush1.bf16.msra.mxu0 %v2302
        %2321 = vmatprep.subr.bf16.mxu0 0
        %2322 = vmatpush1.bf16.msra.mxu0 %v2303
        %2323 = vmatprep.subr.bf16.mxu0 0
        %2324 = vmatpush1.bf16.msra.mxu0 %v2304
        %2325 = vmatprep.subr.bf16.mxu0 0
        %2326 = vmatpush1.bf16.msra.mxu0 %v2305
        %2327 = vmatprep.subr.bf16.mxu0 0
        %2328 = vmatpush1.bf16.msra.mxu0 %v2306
        %2329 = vmatprep.subr.bf16.mxu0 0
        %2330 = vmatpush1.bf16.msra.mxu0 %v2307
        %2331 = vmatprep.subr.bf16.mxu0 0
        %2332 = vmatpush1.bf16.msra.mxu0 %v2308
        %2333 = vmatprep.subr.bf16.mxu0 0
        %2334 = vmatpush1.bf16.msra.mxu0 0
        %2335 = vmatprep.subr.bf16.mxu0 0
        %2336 = vmatpush1.bf16.msra.mxu0 0
        %2337 = vmatprep.subr.bf16.mxu0 0
        %2338 = vmatpush1.bf16.msra.mxu0 0
        %2339 = vmatprep.subr.bf16.mxu0 0
        %2340 = vmatpush1.bf16.msra.mxu0 0
        %2341 = vmatprep.subr.bf16.mxu0 0
        %2342 = vmatpush1.bf16.msra.mxu0 0
        %2343 = vmatprep.subr.bf16.mxu0 0
        %2344 = vmatpush1.bf16.msra.mxu0 0
        %2345 = vmatprep.subr.bf16.mxu0 0
        %2346 = vmatpush1.bf16.msra.mxu0 0
        %2347 = vmatprep.subr.bf16.mxu0 0
        %2348 = vmatpush1.bf16.msra.mxu0 0
        %2349 = vmatprep.mubr.bf16.mxu0 0
        %2350 = vmatmul.mubr.bf16.gmra.mrb[0].mxu0 %v2117
        %v2351 = vpop.f32.mrb[0].mxu0
        %v2352 = vadd.f32 0.0, %v2351
        %v2353 = vpop.f32.mrb[0].mxu0
        %v2354 = vpop.f32.mrb[0].mxu0
        %v2355 = vadd.f32 0.0, %v2354
        %v2356 = vpop.f32.mrb[0].mxu0
        %2357 = vmatprep.mubr.bf16.mxu0 0
        %2358 = vmatmul.mubr.bf16.gmra.mrb[0].mxu0 %v2126
        %v2359 = vpop.f32.mrb[0].mxu0
        %v2360 = vadd.f32 0.0, %v2359
        %v2361 = vpop.f32.mrb[0].mxu0
        %v2362 = vpop.f32.mrb[0].mxu0
        %v2363 = vadd.f32 0.0, %v2362
        %v2364 = vpop.f32.mrb[0].mxu0
        %2365 = vmatprep.mubr.bf16.mxu0 0
        %2366 = vmatmul.mubr.bf16.gmra.mrb[0].mxu0 %v2135
        %v2367 = vpop.f32.mrb[0].mxu0
        %v2368 = vadd.f32 0.0, %v2367
        %v2369 = vpop.f32.mrb[0].mxu0
        %v2370 = vpop.f32.mrb[0].mxu0
        %v2371 = vadd.f32 0.0, %v2370
        %v2372 = vpop.f32.mrb[0].mxu0
        %2373 = vmatprep.mubr.bf16.mxu0 0
        %2374 = vmatmul.mubr.bf16.gmra.mrb[0].mxu0 %v2144
        %v2375 = vpop.f32.mrb[0].mxu0
        %v2376 = vadd.f32 0.0, %v2375
        %v2377 = vpop.f32.mrb[0].mxu0
        %v2378 = vpop.f32.mrb[0].mxu0
        %v2379 = vadd.f32 0.0, %v2378
        %v2380 = vpop.f32.mrb[0].mxu0
        %2381 = vmatprep.mubr.bf16.mxu0 0
        %2382 = vmatmul.mubr.bf16.gmra.mrb[0].mxu0 %v2153
        %v2383 = vpop.f32.mrb[0].mxu0
        %v2384 = vadd.f32 0.0, %v2383
        %v2385 = vpop.f32.mrb[0].mxu0
        %v2386 = vpop.f32.mrb[0].mxu0
        %v2387 = vadd.f32 0.0, %v2386
        %v2388 = vpop.f32.mrb[0].mxu0
        %2389 = vmatprep.mubr.bf16.mxu0 0
        %2390 = vmatmul.mubr.bf16.gmra.mrb[0].mxu0 %v2162
        %v2391 = vpop.f32.mrb[0].mxu0
        %v2392 = vadd.f32 0.0, %v2391
        %v2393 = vpop.f32.mrb[0].mxu0
        %v2394 = vpop.f32.mrb[0].mxu0
        %v2395 = vadd.f32 0.0, %v2394
        %v2396 = vpop.f32.mrb[0].mxu0
        %2397 = vmatprep.mubr.bf16.mxu0 0
        %2398 = vmatmul.mubr.bf16.gmra.mrb[0].mxu0 %v2171
        %v2399 = vpop.f32.mrb[0].mxu0
        %v2400 = vadd.f32 0.0, %v2399
        %v2401 = vpop.f32.mrb[0].mxu0
        %v2402 = vpop.f32.mrb[0].mxu0
        %v2403 = vadd.f32 0.0, %v2402
        %v2404 = vpop.f32.mrb[0].mxu0
        %2405 = vmatprep.mubr.bf16.mxu0 0
        %2406 = vmatmul.mubr.bf16.gmra.mrb[0].mxu0 %v2180
        %v2407 = vpop.f32.mrb[0].mxu0
        %v2408 = vadd.f32 0.0, %v2407
        %v2409 = vpop.f32.mrb[0].mxu0
        %v2410 = vpop.f32.mrb[0].mxu0
        %v2411 = vadd.f32 0.0, %v2410
        %v2412 = vpop.f32.mrb[0].mxu0
        %2413 = vmatprep.mubr.bf16.mxu0 0
        %2414 = vmatmul.mubr.bf16.gmra.mrb[0].mxu0 %v2189
        %v2415 = vpop.f32.mrb[0].mxu0
        %v2416 = vadd.f32 0.0, %v2415
        %v2417 = vpop.f32.mrb[0].mxu0
        %v2418 = vpop.f32.mrb[0].mxu0
        %v2419 = vadd.f32 0.0, %v2418
        %v2420 = vpop.f32.mrb[0].mxu0
        %2421 = vmatprep.mubr.bf16.mxu0 0
        %2422 = vmatmul.mubr.bf16.gmra.mrb[0].mxu0 %v2198
        %v2423 = vpop.f32.mrb[0].mxu0
        %v2424 = vadd.f32 0.0, %v2423
        %v2425 = vpop.f32.mrb[0].mxu0
        %v2426 = vpop.f32.mrb[0].mxu0
        %v2427 = vadd.f32 0.0, %v2426
        %v2428 = vpop.f32.mrb[0].mxu0
        %2429 = vmatprep.mubr.bf16.mxu0 0
        %2430 = vmatmul.mubr.bf16.gmra.mrb[0].mxu0 %v2207
        %v2431 = vpop.f32.mrb[0].mxu0
        %v2432 = vadd.f32 0.0, %v2431
        %v2433 = vpop.f32.mrb[0].mxu0
        %v2434 = vpop.f32.mrb[0].mxu0
        %v2435 = vadd.f32 0.0, %v2434
        %v2436 = vpop.f32.mrb[0].mxu0
        %2437 = vmatprep.mubr.bf16.mxu0 0
        %2438 = vmatmul.mubr.bf16.gmra.mrb[0].mxu0 %v2216
        %v2439 = vpop.f32.mrb[0].mxu0
        %v2440 = vadd.f32 0.0, %v2439
        %v2441 = vpop.f32.mrb[0].mxu0
        %v2442 = vpop.f32.mrb[0].mxu0
        %v2443 = vadd.f32 0.0, %v2442
        %v2444 = vpop.f32.mrb[0].mxu0
        %2445 = vmatprep.mubr.bf16.mxu0 0
        %2446 = vmatmul.mubr.bf16.gmra.mrb[0].mxu0 %v2225
        %v2447 = vpop.f32.mrb[0].mxu0
        %v2448 = vadd.f32 0.0, %v2447
        %v2449 = vpop.f32.mrb[0].mxu0
        %v2450 = vpop.f32.mrb[0].mxu0
        %v2451 = vadd.f32 0.0, %v2450
        %v2452 = vpop.f32.mrb[0].mxu0
        %2453 = vmatprep.mubr.bf16.mxu0 0
        %2454 = vmatmul.mubr.bf16.gmra.mrb[0].mxu0 %v2234
        %v2455 = vpop.f32.mrb[0].mxu0
        %v2456 = vadd.f32 0.0, %v2455
        %v2457 = vpop.f32.mrb[0].mxu0
        %v2458 = vpop.f32.mrb[0].mxu0
        %v2459 = vadd.f32 0.0, %v2458
        %v2460 = vpop.f32.mrb[0].mxu0
        %2461 = vmatprep.mubr.bf16.mxu0 0
        %2462 = vmatmul.mubr.bf16.gmra.mrb[0].mxu0 %v2243
        %v2463 = vpop.f32.mrb[0].mxu0
        %v2464 = vadd.f32 0.0, %v2463
        %v2465 = vpop.f32.mrb[0].mxu0
        %v2466 = vpop.f32.mrb[0].mxu0
        %v2467 = vadd.f32 0.0, %v2466
        %v2468 = vpop.f32.mrb[0].mxu0
        %2469 = vmatprep.mubr.bf16.mxu0 0
        %2470 = vmatmul.mubr.bf16.gmra.mrb[0].mxu0 %v2252
        %v2471 = vpop.f32.mrb[0].mxu0
        %v2472 = vadd.f32 0.0, %v2471
        %v2473 = vpop.f32.mrb[0].mxu0
        %v2474 = vpop.f32.mrb[0].mxu0
        %v2475 = vadd.f32 0.0, %v2474
        %v2476 = vpop.f32.mrb[0].mxu0
        %2477 = vdwg.mxu0
        %v2478 = vadd.f32 %v2047, %v2352
        %v2479 = vadd.f32 %v2048, %v2355
        %v2480 = vadd.f32 %v2049, %v2360
        %v2481 = vadd.f32 %v2050, %v2363
        %v2482 = vadd.f32 %v2051, %v2368
        %v2483 = vadd.f32 %v2052, %v2371
        %v2484 = vadd.f32 %v2053, %v2376
        %v2485 = vadd.f32 %v2054, %v2379
        %v2486 = vadd.f32 %v2055, %v2384
        %v2487 = vadd.f32 %v2056, %v2387
        %v2488 = vadd.f32 %v2057, %v2392
        %v2489 = vadd.f32 %v2058, %v2395
        %v2490 = vadd.f32 %v2059, %v2400
        %v2491 = vadd.f32 %v2060, %v2403
        %v2492 = vadd.f32 %v2061, %v2408
        %v2493 = vadd.f32 %v2062, %v2411
        %v2494 = vadd.f32 %v2063, %v2416
        %v2495 = vadd.f32 %v2064, %v2419
        %v2496 = vadd.f32 %v2065, %v2424
        %v2497 = vadd.f32 %v2066, %v2427
        %v2498 = vadd.f32 %v2067, %v2432
        %v2499 = vadd.f32 %v2068, %v2435
        %v2500 = vadd.f32 %v2069, %v2440
        %v2501 = vadd.f32 %v2070, %v2443
        %v2502 = vadd.f32 %v2071, %v2448
        %v2503 = vadd.f32 %v2072, %v2451
        %v2504 = vadd.f32 %v2073, %v2456
        %v2505 = vadd.f32 %v2074, %v2459
        %v2506 = vadd.f32 %v2075, %v2464
        %v2507 = vadd.f32 %v2076, %v2467
        %v2508 = vadd.f32 %v2077, %v2472
        %v2509 = vadd.f32 %v2078, %v2475
        %v2510 = vld [vmem:[%s605 + $0x8] sm:$0xc]
        %s2511 = scalar_lea.vmem %s1, 320
        %v2512 = vld [vmem:[%s2511] sm:$0xf]
        %v2513 = vld [vmem:[%s2511 + $0x4] sm:$0xf]
        %v2514 = vld [vmem:[%s2511 + $0x8] sm:$0xf]
        %v2515 = vld [vmem:[%s2511 + $0xc] sm:$0xf]
        %v2516 = vld [vmem:[%s2511 + $0x10] sm:$0xf]
        %v2517 = vld [vmem:[%s2511 + $0x14] sm:$0xf]
        %v2518 = vld [vmem:[%s2511 + $0x18] sm:$0xf]
        %v2519 = vld [vmem:[%s2511 + $0x1c] sm:$0xf]
        %v2520 = vld [vmem:[%s2511 + $0x20] sm:$0xf]
        %v2521 = vld [vmem:[%s2511 + $0x24] sm:$0xf]
        %v2522 = vld [vmem:[%s2511 + $0x28] sm:$0xf]
        %v2523 = vld [vmem:[%s2511 + $0x2c] sm:$0xf]
        %v2524 = vld [vmem:[%s2511 + $0x30] sm:$0xf]
        %v2525 = vld [vmem:[%s2511 + $0x34] sm:$0xf]
        %v2526 = vld [vmem:[%s2511 + $0x38] sm:$0xf]
        %v2527 = vld [vmem:[%s2511 + $0x3c] sm:$0xf]
        %v2529 = vunpack.c.l.b16 %v2510
        %v2530 = vpack.c.b16 %v1740, %v2529
        %vm2531 = vcmask 1045504
        %v2532 = vrot.slane %v2530, 2
        %v2533 = vrot.slane %v1773, 2
        %v2534 = vsel %vm2531, %v2532, %v2533
        %v2535 = vrot.slane %v1774, 2
        %v2536 = vsel %vm2531, %v2533, %v2535
        %v2537 = vrot.slane %v1775, 2
        %v2538 = vsel %vm2531, %v2535, %v2537
        %v2539 = vrot.slane %v1776, 2
        %v2540 = vsel %vm2531, %v2537, %v2539
        %v2541 = vrot.slane %v1777, 2
        %v2542 = vsel %vm2531, %v2539, %v2541
        %v2543 = vrot.slane %v1778, 2
        %v2544 = vsel %vm2531, %v2541, %v2543
        %v2545 = vrot.slane %v1779, 2
        %v2546 = vsel %vm2531, %v2543, %v2545
        %v2547 = vrot.slane %v1780, 2
        %v2548 = vsel %vm2531, %v2545, %v2547
        %v2549 = vrot.slane %v1781, 2
        %v2550 = vsel %vm2531, %v2547, %v2549
        %v2551 = vrot.slane %v1782, 2
        %v2552 = vsel %vm2531, %v2549, %v2551
        %v2553 = vrot.slane %v1783, 2
        %v2554 = vsel %vm2531, %v2551, %v2553
        %v2555 = vrot.slane %v1784, 2
        %v2556 = vsel %vm2531, %v2553, %v2555
        %v2557 = vrot.slane %v1785, 2
        %v2558 = vsel %vm2531, %v2555, %v2557
        %v2559 = vrot.slane %v1786, 2
        %v2560 = vsel %vm2531, %v2557, %v2559
        %v2561 = vrot.slane %v1787, 2
        %v2562 = vsel %vm2531, %v2559, %v2561
        %v2563 = vrot.slane %v2099, 2
        %v2564 = vsel %vm2531, %v2561, %v2563
        %v2597 = vunpack.c.l.b16 %v2512
        %v2598 = vunpack.c.l.b16 %v2513
        %v2599 = vunpack.c.l.b16 %v2514
        %v2600 = vunpack.c.l.b16 %v2515
        %v2601 = vunpack.c.l.b16 %v2516
        %v2602 = vunpack.c.l.b16 %v2517
        %v2603 = vunpack.c.l.b16 %v2518
        %v2604 = vunpack.c.l.b16 %v2519
        %v2605 = vunpack.c.l.b16 %v2520
        %v2606 = vunpack.c.l.b16 %v2521
        %v2607 = vunpack.c.l.b16 %v2522
        %v2608 = vunpack.c.l.b16 %v2523
        %v2609 = vunpack.c.l.b16 %v2524
        %v2610 = vunpack.c.l.b16 %v2525
        %v2611 = vunpack.c.l.b16 %v2526
        %v2612 = vunpack.c.l.b16 %v2527
        %v2613 = vpack.c.b16 %v2598, %v2597
        %v2614 = vpack.c.b16 %v2600, %v2599
        %v2615 = vpack.c.b16 %v2602, %v2601
        %v2616 = vpack.c.b16 %v2604, %v2603
        %v2617 = vpack.c.b16 %v2606, %v2605
        %v2618 = vpack.c.b16 %v2608, %v2607
        %v2619 = vpack.c.b16 %v2610, %v2609
        %v2620 = vpack.c.b16 %v2612, %v2611
        %2629 = vmatprep.subr.bf16.mxu0 0
        %2630 = vmatpush1.bf16.msra.mxu0 %v2613
        %2631 = vmatprep.subr.bf16.mxu0 0
        %2632 = vmatpush1.bf16.msra.mxu0 %v2614
        %2633 = vmatprep.subr.bf16.mxu0 0
        %2634 = vmatpush1.bf16.msra.mxu0 %v2615
        %2635 = vmatprep.subr.bf16.mxu0 0
        %2636 = vmatpush1.bf16.msra.mxu0 %v2616
        %2637 = vmatprep.subr.bf16.mxu0 0
        %2638 = vmatpush1.bf16.msra.mxu0 %v2617
        %2639 = vmatprep.subr.bf16.mxu0 0
        %2640 = vmatpush1.bf16.msra.mxu0 %v2618
        %2641 = vmatprep.subr.bf16.mxu0 0
        %2642 = vmatpush1.bf16.msra.mxu0 %v2619
        %2643 = vmatprep.subr.bf16.mxu0 0
        %2644 = vmatpush1.bf16.msra.mxu0 %v2620
        %2645 = vmatprep.subr.bf16.mxu0 0
        %2646 = vmatpush1.bf16.msra.mxu0 0
        %2647 = vmatprep.subr.bf16.mxu0 0
        %2648 = vmatpush1.bf16.msra.mxu0 0
        %2649 = vmatprep.subr.bf16.mxu0 0
        %2650 = vmatpush1.bf16.msra.mxu0 0
        %2651 = vmatprep.subr.bf16.mxu0 0
        %2652 = vmatpush1.bf16.msra.mxu0 0
        %2653 = vmatprep.subr.bf16.mxu0 0
        %2654 = vmatpush1.bf16.msra.mxu0 0
        %2655 = vmatprep.subr.bf16.mxu0 0
        %2656 = vmatpush1.bf16.msra.mxu0 0
        %2657 = vmatprep.subr.bf16.mxu0 0
        %2658 = vmatpush1.bf16.msra.mxu0 0
        %2659 = vmatprep.subr.bf16.mxu0 0
        %2660 = vmatpush1.bf16.msra.mxu0 0
        %2661 = vmatprep.mubr.bf16.mxu0 0
        %2662 = vmatmul.mubr.bf16.gmra.mrb[0].mxu0 %v2534
        %v2663 = vpop.f32.mrb[0].mxu0
        %v2664 = vadd.f32 0.0, %v2663
        %v2665 = vpop.f32.mrb[0].mxu0
        %v2666 = vpop.f32.mrb[0].mxu0
        %v2667 = vadd.f32 0.0, %v2666
        %v2668 = vpop.f32.mrb[0].mxu0
        %2669 = vmatprep.mubr.bf16.mxu0 0
        %2670 = vmatmul.mubr.bf16.gmra.mrb[0].mxu0 %v2536
        %v2671 = vpop.f32.mrb[0].mxu0
        %v2672 = vadd.f32 0.0, %v2671
        %v2673 = vpop.f32.mrb[0].mxu0
        %v2674 = vpop.f32.mrb[0].mxu0
        %v2675 = vadd.f32 0.0, %v2674
        %v2676 = vpop.f32.mrb[0].mxu0
        %2677 = vmatprep.mubr.bf16.mxu0 0
        %2678 = vmatmul.mubr.bf16.gmra.mrb[0].mxu0 %v2538
        %v2679 = vpop.f32.mrb[0].mxu0
        %v2680 = vadd.f32 0.0, %v2679
        %v2681 = vpop.f32.mrb[0].mxu0
        %v2682 = vpop.f32.mrb[0].mxu0
        %v2683 = vadd.f32 0.0, %v2682
        %v2684 = vpop.f32.mrb[0].mxu0
        %2685 = vmatprep.mubr.bf16.mxu0 0
        %2686 = vmatmul.mubr.bf16.gmra.mrb[0].mxu0 %v2540
        %v2687 = vpop.f32.mrb[0].mxu0
        %v2688 = vadd.f32 0.0, %v2687
        %v2689 = vpop.f32.mrb[0].mxu0
        %v2690 = vpop.f32.mrb[0].mxu0
        %v2691 = vadd.f32 0.0, %v2690
        %v2692 = vpop.f32.mrb[0].mxu0
        %2693 = vmatprep.mubr.bf16.mxu0 0
        %2694 = vmatmul.mubr.bf16.gmra.mrb[0].mxu0 %v2542
        %v2695 = vpop.f32.mrb[0].mxu0
        %v2696 = vadd.f32 0.0, %v2695
        %v2697 = vpop.f32.mrb[0].mxu0
        %v2698 = vpop.f32.mrb[0].mxu0
        %v2699 = vadd.f32 0.0, %v2698
        %v2700 = vpop.f32.mrb[0].mxu0
        %2701 = vmatprep.mubr.bf16.mxu0 0
        %2702 = vmatmul.mubr.bf16.gmra.mrb[0].mxu0 %v2544
        %v2703 = vpop.f32.mrb[0].mxu0
        %v2704 = vadd.f32 0.0, %v2703
        %v2705 = vpop.f32.mrb[0].mxu0
        %v2706 = vpop.f32.mrb[0].mxu0
        %v2707 = vadd.f32 0.0, %v2706
        %v2708 = vpop.f32.mrb[0].mxu0
        %2709 = vmatprep.mubr.bf16.mxu0 0
        %2710 = vmatmul.mubr.bf16.gmra.mrb[0].mxu0 %v2546
        %v2711 = vpop.f32.mrb[0].mxu0
        %v2712 = vadd.f32 0.0, %v2711
        %v2713 = vpop.f32.mrb[0].mxu0
        %v2714 = vpop.f32.mrb[0].mxu0
        %v2715 = vadd.f32 0.0, %v2714
        %v2716 = vpop.f32.mrb[0].mxu0
        %2717 = vmatprep.mubr.bf16.mxu0 0
        %2718 = vmatmul.mubr.bf16.gmra.mrb[0].mxu0 %v2548
        %v2719 = vpop.f32.mrb[0].mxu0
        %v2720 = vadd.f32 0.0, %v2719
        %v2721 = vpop.f32.mrb[0].mxu0
        %v2722 = vpop.f32.mrb[0].mxu0
        %v2723 = vadd.f32 0.0, %v2722
        %v2724 = vpop.f32.mrb[0].mxu0
        %2725 = vmatprep.mubr.bf16.mxu0 0
        %2726 = vmatmul.mubr.bf16.gmra.mrb[0].mxu0 %v2550
        %v2727 = vpop.f32.mrb[0].mxu0
        %v2728 = vadd.f32 0.0, %v2727
        %v2729 = vpop.f32.mrb[0].mxu0
        %v2730 = vpop.f32.mrb[0].mxu0
        %v2731 = vadd.f32 0.0, %v2730
        %v2732 = vpop.f32.mrb[0].mxu0
        %2733 = vmatprep.mubr.bf16.mxu0 0
        %2734 = vmatmul.mubr.bf16.gmra.mrb[0].mxu0 %v2552
        %v2735 = vpop.f32.mrb[0].mxu0
        %v2736 = vadd.f32 0.0, %v2735
        %v2737 = vpop.f32.mrb[0].mxu0
        %v2738 = vpop.f32.mrb[0].mxu0
        %v2739 = vadd.f32 0.0, %v2738
        %v2740 = vpop.f32.mrb[0].mxu0
        %2741 = vmatprep.mubr.bf16.mxu0 0
        %2742 = vmatmul.mubr.bf16.gmra.mrb[0].mxu0 %v2554
        %v2743 = vpop.f32.mrb[0].mxu0
        %v2744 = vadd.f32 0.0, %v2743
        %v2745 = vpop.f32.mrb[0].mxu0
        %v2746 = vpop.f32.mrb[0].mxu0
        %v2747 = vadd.f32 0.0, %v2746
        %v2748 = vpop.f32.mrb[0].mxu0
        %2749 = vmatprep.mubr.bf16.mxu0 0
        %2750 = vmatmul.mubr.bf16.gmra.mrb[0].mxu0 %v2556
        %v2751 = vpop.f32.mrb[0].mxu0
        %v2752 = vadd.f32 0.0, %v2751
        %v2753 = vpop.f32.mrb[0].mxu0
        %v2754 = vpop.f32.mrb[0].mxu0
        %v2755 = vadd.f32 0.0, %v2754
        %v2756 = vpop.f32.mrb[0].mxu0
        %2757 = vmatprep.mubr.bf16.mxu0 0
        %2758 = vmatmul.mubr.bf16.gmra.mrb[0].mxu0 %v2558
        %v2759 = vpop.f32.mrb[0].mxu0
        %v2760 = vadd.f32 0.0, %v2759
        %v2761 = vpop.f32.mrb[0].mxu0
        %v2762 = vpop.f32.mrb[0].mxu0
        %v2763 = vadd.f32 0.0, %v2762
        %v2764 = vpop.f32.mrb[0].mxu0
        %2765 = vmatprep.mubr.bf16.mxu0 0
        %2766 = vmatmul.mubr.bf16.gmra.mrb[0].mxu0 %v2560
        %v2767 = vpop.f32.mrb[0].mxu0
        %v2768 = vadd.f32 0.0, %v2767
        %v2769 = vpop.f32.mrb[0].mxu0
        %v2770 = vpop.f32.mrb[0].mxu0
        %v2771 = vadd.f32 0.0, %v2770
        %v2772 = vpop.f32.mrb[0].mxu0
        %2773 = vmatprep.mubr.bf16.mxu0 0
        %2774 = vmatmul.mubr.bf16.gmra.mrb[0].mxu0 %v2562
        %v2775 = vpop.f32.mrb[0].mxu0
        %v2776 = vadd.f32 0.0, %v2775
        %v2777 = vpop.f32.mrb[0].mxu0
        %v2778 = vpop.f32.mrb[0].mxu0
        %v2779 = vadd.f32 0.0, %v2778
        %v2780 = vpop.f32.mrb[0].mxu0
        %2781 = vmatprep.mubr.bf16.mxu0 0
        %2782 = vmatmul.mubr.bf16.gmra.mrb[0].mxu0 %v2564
        %v2783 = vpop.f32.mrb[0].mxu0
        %v2784 = vadd.f32 0.0, %v2783
        %v2785 = vpop.f32.mrb[0].mxu0
        %v2786 = vpop.f32.mrb[0].mxu0
        %v2787 = vadd.f32 0.0, %v2786
        %v2788 = vpop.f32.mrb[0].mxu0
        %2789 = vdwg.mxu0
        %v2790 = vadd.f32 %v2478, %v2664
        %v2791 = vadd.f32 %v2479, %v2667
        %v2792 = vadd.f32 %v2480, %v2672
        %v2793 = vadd.f32 %v2481, %v2675
        %v2794 = vadd.f32 %v2482, %v2680
        %v2795 = vadd.f32 %v2483, %v2683
        %v2796 = vadd.f32 %v2484, %v2688
        %v2797 = vadd.f32 %v2485, %v2691
        %v2798 = vadd.f32 %v2486, %v2696
        %v2799 = vadd.f32 %v2487, %v2699
        %v2800 = vadd.f32 %v2488, %v2704
        %v2801 = vadd.f32 %v2489, %v2707
        %v2802 = vadd.f32 %v2490, %v2712
        %v2803 = vadd.f32 %v2491, %v2715
        %v2804 = vadd.f32 %v2492, %v2720
        %v2805 = vadd.f32 %v2493, %v2723
        %v2806 = vadd.f32 %v2494, %v2728
        %v2807 = vadd.f32 %v2495, %v2731
        %v2808 = vadd.f32 %v2496, %v2736
        %v2809 = vadd.f32 %v2497, %v2739
        %v2810 = vadd.f32 %v2498, %v2744
        %v2811 = vadd.f32 %v2499, %v2747
        %v2812 = vadd.f32 %v2500, %v2752
        %v2813 = vadd.f32 %v2501, %v2755
        %v2814 = vadd.f32 %v2502, %v2760
        %v2815 = vadd.f32 %v2503, %v2763
        %v2816 = vadd.f32 %v2504, %v2768
        %v2817 = vadd.f32 %v2505, %v2771
        %v2818 = vadd.f32 %v2506, %v2776
        %v2819 = vadd.f32 %v2507, %v2779
        %v2820 = vadd.f32 %v2508, %v2784
        %v2821 = vadd.f32 %v2509, %v2787
        %v2822 = vld [vmem:[%s605 + $0x10] sm:$0xc]
        %v2823 = vld [vmem:[%s605 + $0x14] sm:$0xf]
        %v2824 = vld [vmem:[%s605 + $0x18] sm:$0xf]
        %v2825 = vld [vmem:[%s605 + $0x1c] sm:$0xf]
        %v2826 = vld [vmem:[%s605 + $0x20] sm:$0xf]
        %v2827 = vld [vmem:[%s605 + $0x24] sm:$0xf]
        %v2828 = vld [vmem:[%s605 + $0x28] sm:$0xf]
        %v2829 = vld [vmem:[%s605 + $0x2c] sm:$0xf]
        %v2830 = vld [vmem:[%s605 + $0x30] sm:$0xf]
        %v2831 = vld [vmem:[%s605 + $0x34] sm:$0xf]
        %v2832 = vld [vmem:[%s605 + $0x38] sm:$0xf]
        %v2833 = vld [vmem:[%s605 + $0x3c] sm:$0xf]
        %v2834 = vld [vmem:[%s605 + $0x40] sm:$0xf]
        %v2835 = vld [vmem:[%s605 + $0x44] sm:$0xf]
        %v2836 = vld [vmem:[%s605 + $0x48] sm:$0xf]
        %v2837 = vld [vmem:[%s605 + $0x4c] sm:$0xf]
        %v2838 = vld [vmem:[%s605 + $0x50] sm:$0xf]
        %v2839 = vld [vmem:[%s605 + $0x54] sm:$0xf]
        %v2840 = vld [vmem:[%s605 + $0x58] sm:$0xf]
        %v2841 = vld [vmem:[%s605 + $0x5c] sm:$0xf]
        %v2842 = vld [vmem:[%s605 + $0x60] sm:$0xf]
        %v2843 = vld [vmem:[%s605 + $0x64] sm:$0xf]
        %v2844 = vld [vmem:[%s605 + $0x68] sm:$0xf]
        %v2845 = vld [vmem:[%s605 + $0x6c] sm:$0xf]
        %v2846 = vld [vmem:[%s605 + $0x70] sm:$0xf]
        %v2847 = vld [vmem:[%s605 + $0x74] sm:$0xf]
        %v2848 = vld [vmem:[%s605 + $0x78] sm:$0xf]
        %v2849 = vld [vmem:[%s605 + $0x7c] sm:$0xf]
        %v2850 = vld [vmem:[%s605 + $0x80] sm:$0xf]
        %v2851 = vld [vmem:[%s605 + $0x84] sm:$0xf]
        %v2852 = vld [vmem:[%s605 + $0x88] sm:$0xf]
        %v2853 = vld [vmem:[%s605 + $0x8c] sm:$0xf]
        %v2854 = vld [vmem:[%s605 + $0x90] sm:$0x3]
        %s2855 = scalar_lea.vmem %s1, 384
        %v2856 = vld [vmem:[%s2855] sm:$0xf]
        %v2857 = vld [vmem:[%s2855 + $0x4] sm:$0xf]
        %v2858 = vld [vmem:[%s2855 + $0x8] sm:$0xf]
        %v2859 = vld [vmem:[%s2855 + $0xc] sm:$0xf]
        %v2860 = vld [vmem:[%s2855 + $0x10] sm:$0xf]
        %v2861 = vld [vmem:[%s2855 + $0x14] sm:$0xf]
        %v2862 = vld [vmem:[%s2855 + $0x18] sm:$0xf]
        %v2863 = vld [vmem:[%s2855 + $0x1c] sm:$0xf]
        %v2864 = vld [vmem:[%s2855 + $0x20] sm:$0xf]
        %v2865 = vld [vmem:[%s2855 + $0x24] sm:$0xf]
        %v2866 = vld [vmem:[%s2855 + $0x28] sm:$0xf]
        %v2867 = vld [vmem:[%s2855 + $0x2c] sm:$0xf]
        %v2868 = vld [vmem:[%s2855 + $0x30] sm:$0xf]
        %v2869 = vld [vmem:[%s2855 + $0x34] sm:$0xf]
        %v2870 = vld [vmem:[%s2855 + $0x38] sm:$0xf]
        %v2871 = vld [vmem:[%s2855 + $0x3c] sm:$0xf]
        %v2905 = vunpack.c.l.b16 %v2822
        %v2906 = vunpack.c.l.b16 %v2823
        %v2907 = vunpack.c.l.b16 %v2824
        %v2908 = vunpack.c.l.b16 %v2825
        %v2909 = vunpack.c.l.b16 %v2826
        %v2910 = vunpack.c.l.b16 %v2827
        %v2911 = vunpack.c.l.b16 %v2828
        %v2912 = vunpack.c.l.b16 %v2829
        %v2913 = vunpack.c.l.b16 %v2830
        %v2914 = vunpack.c.l.b16 %v2831
        %v2915 = vunpack.c.l.b16 %v2832
        %v2916 = vunpack.c.l.b16 %v2833
        %v2917 = vunpack.c.l.b16 %v2834
        %v2918 = vunpack.c.l.b16 %v2835
        %v2919 = vunpack.c.l.b16 %v2836
        %v2920 = vunpack.c.l.b16 %v2837
        %v2921 = vunpack.c.l.b16 %v2838
        %v2922 = vunpack.c.l.b16 %v2839
        %v2923 = vunpack.c.l.b16 %v2840
        %v2924 = vunpack.c.l.b16 %v2841
        %v2925 = vunpack.c.l.b16 %v2842
        %v2926 = vunpack.c.l.b16 %v2843
        %v2927 = vunpack.c.l.b16 %v2844
        %v2928 = vunpack.c.l.b16 %v2845
        %v2929 = vunpack.c.l.b16 %v2846
        %v2930 = vunpack.c.l.b16 %v2847
        %v2931 = vunpack.c.l.b16 %v2848
        %v2932 = vunpack.c.l.b16 %v2849
        %v2933 = vunpack.c.l.b16 %v2850
        %v2934 = vunpack.c.l.b16 %v2851
        %v2935 = vunpack.c.l.b16 %v2852
        %v2936 = vunpack.c.l.b16 %v2853
        %v2937 = vunpack.c.l.b16 %v2854
        %v2938 = vpack.c.b16 %v2906, %v2905
        %v2939 = vpack.c.b16 %v2908, %v2907
        %v2940 = vpack.c.b16 %v2910, %v2909
        %v2941 = vpack.c.b16 %v2912, %v2911
        %v2942 = vpack.c.b16 %v2914, %v2913
        %v2943 = vpack.c.b16 %v2916, %v2915
        %v2944 = vpack.c.b16 %v2918, %v2917
        %v2945 = vpack.c.b16 %v2920, %v2919
        %v2946 = vpack.c.b16 %v2922, %v2921
        %v2947 = vpack.c.b16 %v2924, %v2923
        %v2948 = vpack.c.b16 %v2926, %v2925
        %v2949 = vpack.c.b16 %v2928, %v2927
        %v2950 = vpack.c.b16 %v2930, %v2929
        %v2951 = vpack.c.b16 %v2932, %v2931
        %v2952 = vpack.c.b16 %v2934, %v2933
        %v2953 = vpack.c.b16 %v2936, %v2935
        %v2954 = vpack.c.b16 %v2937, %v2937
        %v2955 = vrot.slane %v2938, 2
        %v2956 = vrot.slane %v2939, 2
        %v2957 = vsel %vm2531, %v2955, %v2956
        %v2958 = vrot.slane %v2940, 2
        %v2959 = vsel %vm2531, %v2956, %v2958
        %v2960 = vrot.slane %v2941, 2
        %v2961 = vsel %vm2531, %v2958, %v2960
        %v2962 = vrot.slane %v2942, 2
        %v2963 = vsel %vm2531, %v2960, %v2962
        %v2964 = vrot.slane %v2943, 2
        %v2965 = vsel %vm2531, %v2962, %v2964
        %v2966 = vrot.slane %v2944, 2
        %v2967 = vsel %vm2531, %v2964, %v2966
        %v2968 = vrot.slane %v2945, 2
        %v2969 = vsel %vm2531, %v2966, %v2968
        %v2970 = vrot.slane %v2946, 2
        %v2971 = vsel %vm2531, %v2968, %v2970
        %v2972 = vrot.slane %v2947, 2
        %v2973 = vsel %vm2531, %v2970, %v2972
        %v2974 = vrot.slane %v2948, 2
        %v2975 = vsel %vm2531, %v2972, %v2974
        %v2976 = vrot.slane %v2949, 2
        %v2977 = vsel %vm2531, %v2974, %v2976
        %v2978 = vrot.slane %v2950, 2
        %v2979 = vsel %vm2531, %v2976, %v2978
        %v2980 = vrot.slane %v2951, 2
        %v2981 = vsel %vm2531, %v2978, %v2980
        %v2982 = vrot.slane %v2952, 2
        %v2983 = vsel %vm2531, %v2980, %v2982
        %v2984 = vrot.slane %v2953, 2
        %v2985 = vsel %vm2531, %v2982, %v2984
        %v2986 = vrot.slane %v2954, 2
        %v2987 = vsel %vm2531, %v2984, %v2986
        %v3020 = vunpack.c.l.b16 %v2856
        %v3021 = vunpack.c.l.b16 %v2857
        %v3022 = vunpack.c.l.b16 %v2858
        %v3023 = vunpack.c.l.b16 %v2859
        %v3024 = vunpack.c.l.b16 %v2860
        %v3025 = vunpack.c.l.b16 %v2861
        %v3026 = vunpack.c.l.b16 %v2862
        %v3027 = vunpack.c.l.b16 %v2863
        %v3028 = vunpack.c.l.b16 %v2864
        %v3029 = vunpack.c.l.b16 %v2865
        %v3030 = vunpack.c.l.b16 %v2866
        %v3031 = vunpack.c.l.b16 %v2867
        %v3032 = vunpack.c.l.b16 %v2868
        %v3033 = vunpack.c.l.b16 %v2869
        %v3034 = vunpack.c.l.b16 %v2870
        %v3035 = vunpack.c.l.b16 %v2871
        %v3036 = vpack.c.b16 %v3021, %v3020
        %v3037 = vpack.c.b16 %v3023, %v3022
        %v3038 = vpack.c.b16 %v3025, %v3024
        %v3039 = vpack.c.b16 %v3027, %v3026
        %v3040 = vpack.c.b16 %v3029, %v3028
        %v3041 = vpack.c.b16 %v3031, %v3030
        %v3042 = vpack.c.b16 %v3033, %v3032
        %v3043 = vpack.c.b16 %v3035, %v3034
        %3052 = vmatprep.subr.bf16.mxu0 0
        %3053 = vmatpush1.bf16.msra.mxu0 %v3036
        %3054 = vmatprep.subr.bf16.mxu0 0
        %3055 = vmatpush1.bf16.msra.mxu0 %v3037
        %3056 = vmatprep.subr.bf16.mxu0 0
        %3057 = vmatpush1.bf16.msra.mxu0 %v3038
        %3058 = vmatprep.subr.bf16.mxu0 0
        %3059 = vmatpush1.bf16.msra.mxu0 %v3039
        %3060 = vmatprep.subr.bf16.mxu0 0
        %3061 = vmatpush1.bf16.msra.mxu0 %v3040
        %3062 = vmatprep.subr.bf16.mxu0 0
        %3063 = vmatpush1.bf16.msra.mxu0 %v3041
        %3064 = vmatprep.subr.bf16.mxu0 0
        %3065 = vmatpush1.bf16.msra.mxu0 %v3042
        %3066 = vmatprep.subr.bf16.mxu0 0
        %3067 = vmatpush1.bf16.msra.mxu0 %v3043
        %3068 = vmatprep.subr.bf16.mxu0 0
        %3069 = vmatpush1.bf16.msra.mxu0 0
        %3070 = vmatprep.subr.bf16.mxu0 0
        %3071 = vmatpush1.bf16.msra.mxu0 0
        %3072 = vmatprep.subr.bf16.mxu0 0
        %3073 = vmatpush1.bf16.msra.mxu0 0
        %3074 = vmatprep.subr.bf16.mxu0 0
        %3075 = vmatpush1.bf16.msra.mxu0 0
        %3076 = vmatprep.subr.bf16.mxu0 0
        %3077 = vmatpush1.bf16.msra.mxu0 0
        %3078 = vmatprep.subr.bf16.mxu0 0
        %3079 = vmatpush1.bf16.msra.mxu0 0
        %3080 = vmatprep.subr.bf16.mxu0 0
        %3081 = vmatpush1.bf16.msra.mxu0 0
        %3082 = vmatprep.subr.bf16.mxu0 0
        %3083 = vmatpush1.bf16.msra.mxu0 0
        %3084 = vmatprep.mubr.bf16.mxu0 0
        %3085 = vmatmul.mubr.bf16.gmra.mrb[0].mxu0 %v2957
        %v3086 = vpop.f32.mrb[0].mxu0
        %v3087 = vadd.f32 0.0, %v3086
        %v3088 = vpop.f32.mrb[0].mxu0
        %v3089 = vpop.f32.mrb[0].mxu0
        %v3090 = vadd.f32 0.0, %v3089
        %v3091 = vpop.f32.mrb[0].mxu0
        %3092 = vmatprep.mubr.bf16.mxu0 0
        %3093 = vmatmul.mubr.bf16.gmra.mrb[0].mxu0 %v2959
        %v3094 = vpop.f32.mrb[0].mxu0
        %v3095 = vadd.f32 0.0, %v3094
        %v3096 = vpop.f32.mrb[0].mxu0
        %v3097 = vpop.f32.mrb[0].mxu0
        %v3098 = vadd.f32 0.0, %v3097
        %v3099 = vpop.f32.mrb[0].mxu0
        %3100 = vmatprep.mubr.bf16.mxu0 0
        %3101 = vmatmul.mubr.bf16.gmra.mrb[0].mxu0 %v2961
        %v3102 = vpop.f32.mrb[0].mxu0
        %v3103 = vadd.f32 0.0, %v3102
        %v3104 = vpop.f32.mrb[0].mxu0
        %v3105 = vpop.f32.mrb[0].mxu0
        %v3106 = vadd.f32 0.0, %v3105
        %v3107 = vpop.f32.mrb[0].mxu0
        %3108 = vmatprep.mubr.bf16.mxu0 0
        %3109 = vmatmul.mubr.bf16.gmra.mrb[0].mxu0 %v2963
        %v3110 = vpop.f32.mrb[0].mxu0
        %v3111 = vadd.f32 0.0, %v3110
        %v3112 = vpop.f32.mrb[0].mxu0
        %v3113 = vpop.f32.mrb[0].mxu0
        %v3114 = vadd.f32 0.0, %v3113
        %v3115 = vpop.f32.mrb[0].mxu0
        %3116 = vmatprep.mubr.bf16.mxu0 0
        %3117 = vmatmul.mubr.bf16.gmra.mrb[0].mxu0 %v2965
        %v3118 = vpop.f32.mrb[0].mxu0
        %v3119 = vadd.f32 0.0, %v3118
        %v3120 = vpop.f32.mrb[0].mxu0
        %v3121 = vpop.f32.mrb[0].mxu0
        %v3122 = vadd.f32 0.0, %v3121
        %v3123 = vpop.f32.mrb[0].mxu0
        %3124 = vmatprep.mubr.bf16.mxu0 0
        %3125 = vmatmul.mubr.bf16.gmra.mrb[0].mxu0 %v2967
        %v3126 = vpop.f32.mrb[0].mxu0
        %v3127 = vadd.f32 0.0, %v3126
        %v3128 = vpop.f32.mrb[0].mxu0
        %v3129 = vpop.f32.mrb[0].mxu0
        %v3130 = vadd.f32 0.0, %v3129
        %v3131 = vpop.f32.mrb[0].mxu0
        %3132 = vmatprep.mubr.bf16.mxu0 0
        %3133 = vmatmul.mubr.bf16.gmra.mrb[0].mxu0 %v2969
        %v3134 = vpop.f32.mrb[0].mxu0
        %v3135 = vadd.f32 0.0, %v3134
        %v3136 = vpop.f32.mrb[0].mxu0
        %v3137 = vpop.f32.mrb[0].mxu0
        %v3138 = vadd.f32 0.0, %v3137
        %v3139 = vpop.f32.mrb[0].mxu0
        %3140 = vmatprep.mubr.bf16.mxu0 0
        %3141 = vmatmul.mubr.bf16.gmra.mrb[0].mxu0 %v2971
        %v3142 = vpop.f32.mrb[0].mxu0
        %v3143 = vadd.f32 0.0, %v3142
        %v3144 = vpop.f32.mrb[0].mxu0
        %v3145 = vpop.f32.mrb[0].mxu0
        %v3146 = vadd.f32 0.0, %v3145
        %v3147 = vpop.f32.mrb[0].mxu0
        %3148 = vmatprep.mubr.bf16.mxu0 0
        %3149 = vmatmul.mubr.bf16.gmra.mrb[0].mxu0 %v2973
        %v3150 = vpop.f32.mrb[0].mxu0
        %v3151 = vadd.f32 0.0, %v3150
        %v3152 = vpop.f32.mrb[0].mxu0
        %v3153 = vpop.f32.mrb[0].mxu0
        %v3154 = vadd.f32 0.0, %v3153
        %v3155 = vpop.f32.mrb[0].mxu0
        %3156 = vmatprep.mubr.bf16.mxu0 0
        %3157 = vmatmul.mubr.bf16.gmra.mrb[0].mxu0 %v2975
        %v3158 = vpop.f32.mrb[0].mxu0
        %v3159 = vadd.f32 0.0, %v3158
        %v3160 = vpop.f32.mrb[0].mxu0
        %v3161 = vpop.f32.mrb[0].mxu0
        %v3162 = vadd.f32 0.0, %v3161
        %v3163 = vpop.f32.mrb[0].mxu0
        %3164 = vmatprep.mubr.bf16.mxu0 0
        %3165 = vmatmul.mubr.bf16.gmra.mrb[0].mxu0 %v2977
        %v3166 = vpop.f32.mrb[0].mxu0
        %v3167 = vadd.f32 0.0, %v3166
        %v3168 = vpop.f32.mrb[0].mxu0
        %v3169 = vpop.f32.mrb[0].mxu0
        %v3170 = vadd.f32 0.0, %v3169
        %v3171 = vpop.f32.mrb[0].mxu0
        %3172 = vmatprep.mubr.bf16.mxu0 0
        %3173 = vmatmul.mubr.bf16.gmra.mrb[0].mxu0 %v2979
        %v3174 = vpop.f32.mrb[0].mxu0
        %v3175 = vadd.f32 0.0, %v3174
        %v3176 = vpop.f32.mrb[0].mxu0
        %v3177 = vpop.f32.mrb[0].mxu0
        %v3178 = vadd.f32 0.0, %v3177
        %v3179 = vpop.f32.mrb[0].mxu0
        %3180 = vmatprep.mubr.bf16.mxu0 0
        %3181 = vmatmul.mubr.bf16.gmra.mrb[0].mxu0 %v2981
        %v3182 = vpop.f32.mrb[0].mxu0
        %v3183 = vadd.f32 0.0, %v3182
        %v3184 = vpop.f32.mrb[0].mxu0
        %v3185 = vpop.f32.mrb[0].mxu0
        %v3186 = vadd.f32 0.0, %v3185
        %v3187 = vpop.f32.mrb[0].mxu0
        %3188 = vmatprep.mubr.bf16.mxu0 0
        %3189 = vmatmul.mubr.bf16.gmra.mrb[0].mxu0 %v2983
        %v3190 = vpop.f32.mrb[0].mxu0
        %v3191 = vadd.f32 0.0, %v3190
        %v3192 = vpop.f32.mrb[0].mxu0
        %v3193 = vpop.f32.mrb[0].mxu0
        %v3194 = vadd.f32 0.0, %v3193
        %v3195 = vpop.f32.mrb[0].mxu0
        %3196 = vmatprep.mubr.bf16.mxu0 0
        %3197 = vmatmul.mubr.bf16.gmra.mrb[0].mxu0 %v2985
        %v3198 = vpop.f32.mrb[0].mxu0
        %v3199 = vadd.f32 0.0, %v3198
        %v3200 = vpop.f32.mrb[0].mxu0
        %v3201 = vpop.f32.mrb[0].mxu0
        %v3202 = vadd.f32 0.0, %v3201
        %v3203 = vpop.f32.mrb[0].mxu0
        %3204 = vmatprep.mubr.bf16.mxu0 0
        %3205 = vmatmul.mubr.bf16.gmra.mrb[0].mxu0 %v2987
        %v3206 = vpop.f32.mrb[0].mxu0
        %v3207 = vadd.f32 0.0, %v3206
        %v3208 = vpop.f32.mrb[0].mxu0
        %v3209 = vpop.f32.mrb[0].mxu0
        %v3210 = vadd.f32 0.0, %v3209
        %v3211 = vpop.f32.mrb[0].mxu0
        %3212 = vdwg.mxu0
        %v3213 = vadd.f32 %v2790, %v3087
        %v3214 = vadd.f32 %v2791, %v3090
        %v3215 = vadd.f32 %v2792, %v3095
        %v3216 = vadd.f32 %v2793, %v3098
        %v3217 = vadd.f32 %v2794, %v3103
        %v3218 = vadd.f32 %v2795, %v3106
        %v3219 = vadd.f32 %v2796, %v3111
        %v3220 = vadd.f32 %v2797, %v3114
        %v3221 = vadd.f32 %v2798, %v3119
        %v3222 = vadd.f32 %v2799, %v3122
        %v3223 = vadd.f32 %v2800, %v3127
        %v3224 = vadd.f32 %v2801, %v3130
        %v3225 = vadd.f32 %v2802, %v3135
        %v3226 = vadd.f32 %v2803, %v3138
        %v3227 = vadd.f32 %v2804, %v3143
        %v3228 = vadd.f32 %v2805, %v3146
        %v3229 = vadd.f32 %v2806, %v3151
        %v3230 = vadd.f32 %v2807, %v3154
        %v3231 = vadd.f32 %v2808, %v3159
        %v3232 = vadd.f32 %v2809, %v3162
        %v3233 = vadd.f32 %v2810, %v3167
        %v3234 = vadd.f32 %v2811, %v3170
        %v3235 = vadd.f32 %v2812, %v3175
        %v3236 = vadd.f32 %v2813, %v3178
        %v3237 = vadd.f32 %v2814, %v3183
        %v3238 = vadd.f32 %v2815, %v3186
        %v3239 = vadd.f32 %v2816, %v3191
        %v3240 = vadd.f32 %v2817, %v3194
        %v3241 = vadd.f32 %v2818, %v3199
        %v3242 = vadd.f32 %v2819, %v3202
        %v3243 = vadd.f32 %v2820, %v3207
        %v3244 = vadd.f32 %v2821, %v3210
        %v3245 = vld [vmem:[%s605 + $0x90] sm:$0x7]
        %s3246 = scalar_lea.vmem %s1, 448
        %v3247 = vld [vmem:[%s3246] sm:$0xf]
        %v3248 = vld [vmem:[%s3246 + $0x4] sm:$0xf]
        %v3249 = vld [vmem:[%s3246 + $0x8] sm:$0xf]
        %v3250 = vld [vmem:[%s3246 + $0xc] sm:$0xf]
        %v3251 = vld [vmem:[%s3246 + $0x10] sm:$0xf]
        %v3252 = vld [vmem:[%s3246 + $0x14] sm:$0xf]
        %v3253 = vld [vmem:[%s3246 + $0x18] sm:$0xf]
        %v3254 = vld [vmem:[%s3246 + $0x1c] sm:$0xf]
        %v3255 = vld [vmem:[%s3246 + $0x20] sm:$0xf]
        %v3256 = vld [vmem:[%s3246 + $0x24] sm:$0xf]
        %v3257 = vld [vmem:[%s3246 + $0x28] sm:$0xf]
        %v3258 = vld [vmem:[%s3246 + $0x2c] sm:$0xf]
        %v3259 = vld [vmem:[%s3246 + $0x30] sm:$0xf]
        %v3260 = vld [vmem:[%s3246 + $0x34] sm:$0xf]
        %v3261 = vld [vmem:[%s3246 + $0x38] sm:$0xf]
        %v3262 = vld [vmem:[%s3246 + $0x3c] sm:$0xf]
        %v3264 = vunpack.c.l.b16 %v3245
        %v3265 = vpack.c.b16 %v3264, %v3264
        %vm3266 = vsmask.f32 5376
        %v3268 = vshrl.u32 %v2938, 16
        %v3270 = vrot.slane %v3268, 2
        %v3271 = vshll.u32 %v2938, 16
        %v3273 = vrot.slane %v3271, 3
        %v3274 = vor.u32 %v3270, %v3273
        %v3276 = vshrl.u32 %v2939, 16
        %v3278 = vrot.slane %v3276, 2
        %v3279 = vshll.u32 %v2939, 16
        %v3281 = vrot.slane %v3279, 3
        %v3282 = vor.u32 %v3278, %v3281
        %v3283 = vsel %vm3266, %v3274, %v3282
        %v3285 = vshrl.u32 %v2940, 16
        %v3287 = vrot.slane %v3285, 2
        %v3288 = vshll.u32 %v2940, 16
        %v3290 = vrot.slane %v3288, 3
        %v3291 = vor.u32 %v3287, %v3290
        %v3292 = vsel %vm3266, %v3282, %v3291
        %v3294 = vshrl.u32 %v2941, 16
        %v3296 = vrot.slane %v3294, 2
        %v3297 = vshll.u32 %v2941, 16
        %v3299 = vrot.slane %v3297, 3
        %v3300 = vor.u32 %v3296, %v3299
        %v3301 = vsel %vm3266, %v3291, %v3300
        %v3303 = vshrl.u32 %v2942, 16
        %v3305 = vrot.slane %v3303, 2
        %v3306 = vshll.u32 %v2942, 16
        %v3308 = vrot.slane %v3306, 3
        %v3309 = vor.u32 %v3305, %v3308
        %v3310 = vsel %vm3266, %v3300, %v3309
        %v3312 = vshrl.u32 %v2943, 16
        %v3314 = vrot.slane %v3312, 2
        %v3315 = vshll.u32 %v2943, 16
        %v3317 = vrot.slane %v3315, 3
        %v3318 = vor.u32 %v3314, %v3317
        %v3319 = vsel %vm3266, %v3309, %v3318
        %v3321 = vshrl.u32 %v2944, 16
        %v3323 = vrot.slane %v3321, 2
        %v3324 = vshll.u32 %v2944, 16
        %v3326 = vrot.slane %v3324, 3
        %v3327 = vor.u32 %v3323, %v3326
        %v3328 = vsel %vm3266, %v3318, %v3327
        %v3330 = vshrl.u32 %v2945, 16
        %v3332 = vrot.slane %v3330, 2
        %v3333 = vshll.u32 %v2945, 16
        %v3335 = vrot.slane %v3333, 3
        %v3336 = vor.u32 %v3332, %v3335
        %v3337 = vsel %vm3266, %v3327, %v3336
        %v3339 = vshrl.u32 %v2946, 16
        %v3341 = vrot.slane %v3339, 2
        %v3342 = vshll.u32 %v2946, 16
        %v3344 = vrot.slane %v3342, 3
        %v3345 = vor.u32 %v3341, %v3344
        %v3346 = vsel %vm3266, %v3336, %v3345
        %v3348 = vshrl.u32 %v2947, 16
        %v3350 = vrot.slane %v3348, 2
        %v3351 = vshll.u32 %v2947, 16
        %v3353 = vrot.slane %v3351, 3
        %v3354 = vor.u32 %v3350, %v3353
        %v3355 = vsel %vm3266, %v3345, %v3354
        %v3357 = vshrl.u32 %v2948, 16
        %v3359 = vrot.slane %v3357, 2
        %v3360 = vshll.u32 %v2948, 16
        %v3362 = vrot.slane %v3360, 3
        %v3363 = vor.u32 %v3359, %v3362
        %v3364 = vsel %vm3266, %v3354, %v3363
        %v3366 = vshrl.u32 %v2949, 16
        %v3368 = vrot.slane %v3366, 2
        %v3369 = vshll.u32 %v2949, 16
        %v3371 = vrot.slane %v3369, 3
        %v3372 = vor.u32 %v3368, %v3371
        %v3373 = vsel %vm3266, %v3363, %v3372
        %v3375 = vshrl.u32 %v2950, 16
        %v3377 = vrot.slane %v3375, 2
        %v3378 = vshll.u32 %v2950, 16
        %v3380 = vrot.slane %v3378, 3
        %v3381 = vor.u32 %v3377, %v3380
        %v3382 = vsel %vm3266, %v3372, %v3381
        %v3384 = vshrl.u32 %v2951, 16
        %v3386 = vrot.slane %v3384, 2
        %v3387 = vshll.u32 %v2951, 16
        %v3389 = vrot.slane %v3387, 3
        %v3390 = vor.u32 %v3386, %v3389
        %v3391 = vsel %vm3266, %v3381, %v3390
        %v3393 = vshrl.u32 %v2952, 16
        %v3395 = vrot.slane %v3393, 2
        %v3396 = vshll.u32 %v2952, 16
        %v3398 = vrot.slane %v3396, 3
        %v3399 = vor.u32 %v3395, %v3398
        %v3400 = vsel %vm3266, %v3390, %v3399
        %v3402 = vshrl.u32 %v2953, 16
        %v3404 = vrot.slane %v3402, 2
        %v3405 = vshll.u32 %v2953, 16
        %v3407 = vrot.slane %v3405, 3
        %v3408 = vor.u32 %v3404, %v3407
        %v3409 = vsel %vm3266, %v3399, %v3408
        %v3411 = vshrl.u32 %v3265, 16
        %v3413 = vrot.slane %v3411, 2
        %v3414 = vshll.u32 %v3265, 16
        %v3416 = vrot.slane %v3414, 3
        %v3417 = vor.u32 %v3413, %v3416
        %v3418 = vsel %vm3266, %v3408, %v3417
        %v3451 = vunpack.c.l.b16 %v3247
        %v3452 = vunpack.c.l.b16 %v3248
        %v3453 = vunpack.c.l.b16 %v3249
        %v3454 = vunpack.c.l.b16 %v3250
        %v3455 = vunpack.c.l.b16 %v3251
        %v3456 = vunpack.c.l.b16 %v3252
        %v3457 = vunpack.c.l.b16 %v3253
        %v3458 = vunpack.c.l.b16 %v3254
        %v3459 = vunpack.c.l.b16 %v3255
        %v3460 = vunpack.c.l.b16 %v3256
        %v3461 = vunpack.c.l.b16 %v3257
        %v3462 = vunpack.c.l.b16 %v3258
        %v3463 = vunpack.c.l.b16 %v3259
        %v3464 = vunpack.c.l.b16 %v3260
        %v3465 = vunpack.c.l.b16 %v3261
        %v3466 = vunpack.c.l.b16 %v3262
        %v3467 = vpack.c.b16 %v3452, %v3451
        %v3468 = vpack.c.b16 %v3454, %v3453
        %v3469 = vpack.c.b16 %v3456, %v3455
        %v3470 = vpack.c.b16 %v3458, %v3457
        %v3471 = vpack.c.b16 %v3460, %v3459
        %v3472 = vpack.c.b16 %v3462, %v3461
        %v3473 = vpack.c.b16 %v3464, %v3463
        %v3474 = vpack.c.b16 %v3466, %v3465
        %3483 = vmatprep.subr.bf16.mxu0 0
        %3484 = vmatpush1.bf16.msra.mxu0 %v3467
        %3485 = vmatprep.subr.bf16.mxu0 0
        %3486 = vmatpush1.bf16.msra.mxu0 %v3468
        %3487 = vmatprep.subr.bf16.mxu0 0
        %3488 = vmatpush1.bf16.msra.mxu0 %v3469
        %3489 = vmatprep.subr.bf16.mxu0 0
        %3490 = vmatpush1.bf16.msra.mxu0 %v3470
        %3491 = vmatprep.subr.bf16.mxu0 0
        %3492 = vmatpush1.bf16.msra.mxu0 %v3471
        %3493 = vmatprep.subr.bf16.mxu0 0
        %3494 = vmatpush1.bf16.msra.mxu0 %v3472
        %3495 = vmatprep.subr.bf16.mxu0 0
        %3496 = vmatpush1.bf16.msra.mxu0 %v3473
        %3497 = vmatprep.subr.bf16.mxu0 0
        %3498 = vmatpush1.bf16.msra.mxu0 %v3474
        %3499 = vmatprep.subr.bf16.mxu0 0
        %3500 = vmatpush1.bf16.msra.mxu0 0
        %3501 = vmatprep.subr.bf16.mxu0 0
        %3502 = vmatpush1.bf16.msra.mxu0 0
        %3503 = vmatprep.subr.bf16.mxu0 0
        %3504 = vmatpush1.bf16.msra.mxu0 0
        %3505 = vmatprep.subr.bf16.mxu0 0
        %3506 = vmatpush1.bf16.msra.mxu0 0
        %3507 = vmatprep.subr.bf16.mxu0 0
        %3508 = vmatpush1.bf16.msra.mxu0 0
        %3509 = vmatprep.subr.bf16.mxu0 0
        %3510 = vmatpush1.bf16.msra.mxu0 0
        %3511 = vmatprep.subr.bf16.mxu0 0
        %3512 = vmatpush1.bf16.msra.mxu0 0
        %3513 = vmatprep.subr.bf16.mxu0 0
        %3514 = vmatpush1.bf16.msra.mxu0 0
        %3515 = vmatprep.mubr.bf16.mxu0 0
        %3516 = vmatmul.mubr.bf16.gmra.mrb[0].mxu0 %v3283
        %v3517 = vpop.f32.mrb[0].mxu0
        %v3518 = vadd.f32 0.0, %v3517
        %v3519 = vpop.f32.mrb[0].mxu0
        %v3520 = vpop.f32.mrb[0].mxu0
        %v3521 = vadd.f32 0.0, %v3520
        %v3522 = vpop.f32.mrb[0].mxu0
        %3523 = vmatprep.mubr.bf16.mxu0 0
        %3524 = vmatmul.mubr.bf16.gmra.mrb[0].mxu0 %v3292
        %v3525 = vpop.f32.mrb[0].mxu0
        %v3526 = vadd.f32 0.0, %v3525
        %v3527 = vpop.f32.mrb[0].mxu0
        %v3528 = vpop.f32.mrb[0].mxu0
        %v3529 = vadd.f32 0.0, %v3528
        %v3530 = vpop.f32.mrb[0].mxu0
        %3531 = vmatprep.mubr.bf16.mxu0 0
        %3532 = vmatmul.mubr.bf16.gmra.mrb[0].mxu0 %v3301
        %v3533 = vpop.f32.mrb[0].mxu0
        %v3534 = vadd.f32 0.0, %v3533
        %v3535 = vpop.f32.mrb[0].mxu0
        %v3536 = vpop.f32.mrb[0].mxu0
        %v3537 = vadd.f32 0.0, %v3536
        %v3538 = vpop.f32.mrb[0].mxu0
        %3539 = vmatprep.mubr.bf16.mxu0 0
        %3540 = vmatmul.mubr.bf16.gmra.mrb[0].mxu0 %v3310
        %v3541 = vpop.f32.mrb[0].mxu0
        %v3542 = vadd.f32 0.0, %v3541
        %v3543 = vpop.f32.mrb[0].mxu0
        %v3544 = vpop.f32.mrb[0].mxu0
        %v3545 = vadd.f32 0.0, %v3544
        %v3546 = vpop.f32.mrb[0].mxu0
        %3547 = vmatprep.mubr.bf16.mxu0 0
        %3548 = vmatmul.mubr.bf16.gmra.mrb[0].mxu0 %v3319
        %v3549 = vpop.f32.mrb[0].mxu0
        %v3550 = vadd.f32 0.0, %v3549
        %v3551 = vpop.f32.mrb[0].mxu0
        %v3552 = vpop.f32.mrb[0].mxu0
        %v3553 = vadd.f32 0.0, %v3552
        %v3554 = vpop.f32.mrb[0].mxu0
        %3555 = vmatprep.mubr.bf16.mxu0 0
        %3556 = vmatmul.mubr.bf16.gmra.mrb[0].mxu0 %v3328
        %v3557 = vpop.f32.mrb[0].mxu0
        %v3558 = vadd.f32 0.0, %v3557
        %v3559 = vpop.f32.mrb[0].mxu0
        %v3560 = vpop.f32.mrb[0].mxu0
        %v3561 = vadd.f32 0.0, %v3560
        %v3562 = vpop.f32.mrb[0].mxu0
        %3563 = vmatprep.mubr.bf16.mxu0 0
        %3564 = vmatmul.mubr.bf16.gmra.mrb[0].mxu0 %v3337
        %v3565 = vpop.f32.mrb[0].mxu0
        %v3566 = vadd.f32 0.0, %v3565
        %v3567 = vpop.f32.mrb[0].mxu0
        %v3568 = vpop.f32.mrb[0].mxu0
        %v3569 = vadd.f32 0.0, %v3568
        %v3570 = vpop.f32.mrb[0].mxu0
        %3571 = vmatprep.mubr.bf16.mxu0 0
        %3572 = vmatmul.mubr.bf16.gmra.mrb[0].mxu0 %v3346
        %v3573 = vpop.f32.mrb[0].mxu0
        %v3574 = vadd.f32 0.0, %v3573
        %v3575 = vpop.f32.mrb[0].mxu0
        %v3576 = vpop.f32.mrb[0].mxu0
        %v3577 = vadd.f32 0.0, %v3576
        %v3578 = vpop.f32.mrb[0].mxu0
        %3579 = vmatprep.mubr.bf16.mxu0 0
        %3580 = vmatmul.mubr.bf16.gmra.mrb[0].mxu0 %v3355
        %v3581 = vpop.f32.mrb[0].mxu0
        %v3582 = vadd.f32 0.0, %v3581
        %v3583 = vpop.f32.mrb[0].mxu0
        %v3584 = vpop.f32.mrb[0].mxu0
        %v3585 = vadd.f32 0.0, %v3584
        %v3586 = vpop.f32.mrb[0].mxu0
        %3587 = vmatprep.mubr.bf16.mxu0 0
        %3588 = vmatmul.mubr.bf16.gmra.mrb[0].mxu0 %v3364
        %v3589 = vpop.f32.mrb[0].mxu0
        %v3590 = vadd.f32 0.0, %v3589
        %v3591 = vpop.f32.mrb[0].mxu0
        %v3592 = vpop.f32.mrb[0].mxu0
        %v3593 = vadd.f32 0.0, %v3592
        %v3594 = vpop.f32.mrb[0].mxu0
        %3595 = vmatprep.mubr.bf16.mxu0 0
        %3596 = vmatmul.mubr.bf16.gmra.mrb[0].mxu0 %v3373
        %v3597 = vpop.f32.mrb[0].mxu0
        %v3598 = vadd.f32 0.0, %v3597
        %v3599 = vpop.f32.mrb[0].mxu0
        %v3600 = vpop.f32.mrb[0].mxu0
        %v3601 = vadd.f32 0.0, %v3600
        %v3602 = vpop.f32.mrb[0].mxu0
        %3603 = vmatprep.mubr.bf16.mxu0 0
        %3604 = vmatmul.mubr.bf16.gmra.mrb[0].mxu0 %v3382
        %v3605 = vpop.f32.mrb[0].mxu0
        %v3606 = vadd.f32 0.0, %v3605
        %v3607 = vpop.f32.mrb[0].mxu0
        %v3608 = vpop.f32.mrb[0].mxu0
        %v3609 = vadd.f32 0.0, %v3608
        %v3610 = vpop.f32.mrb[0].mxu0
        %3611 = vmatprep.mubr.bf16.mxu0 0
        %3612 = vmatmul.mubr.bf16.gmra.mrb[0].mxu0 %v3391
        %v3613 = vpop.f32.mrb[0].mxu0
        %v3614 = vadd.f32 0.0, %v3613
        %v3615 = vpop.f32.mrb[0].mxu0
        %v3616 = vpop.f32.mrb[0].mxu0
        %v3617 = vadd.f32 0.0, %v3616
        %v3618 = vpop.f32.mrb[0].mxu0
        %3619 = vmatprep.mubr.bf16.mxu0 0
        %3620 = vmatmul.mubr.bf16.gmra.mrb[0].mxu0 %v3400
        %v3621 = vpop.f32.mrb[0].mxu0
        %v3622 = vadd.f32 0.0, %v3621
        %v3623 = vpop.f32.mrb[0].mxu0
        %v3624 = vpop.f32.mrb[0].mxu0
        %v3625 = vadd.f32 0.0, %v3624
        %v3626 = vpop.f32.mrb[0].mxu0
        %3627 = vmatprep.mubr.bf16.mxu0 0
        %3628 = vmatmul.mubr.bf16.gmra.mrb[0].mxu0 %v3409
        %v3629 = vpop.f32.mrb[0].mxu0
        %v3630 = vadd.f32 0.0, %v3629
        %v3631 = vpop.f32.mrb[0].mxu0
        %v3632 = vpop.f32.mrb[0].mxu0
        %v3633 = vadd.f32 0.0, %v3632
        %v3634 = vpop.f32.mrb[0].mxu0
        %3635 = vmatprep.mubr.bf16.mxu0 0
        %3636 = vmatmul.mubr.bf16.gmra.mrb[0].mxu0 %v3418
        %v3637 = vpop.f32.mrb[0].mxu0
        %v3638 = vadd.f32 0.0, %v3637
        %v3639 = vpop.f32.mrb[0].mxu0
        %v3640 = vpop.f32.mrb[0].mxu0
        %v3641 = vadd.f32 0.0, %v3640
        %v3642 = vpop.f32.mrb[0].mxu0
        %3643 = vdwg.mxu0
        %v3644 = vadd.f32 %v3213, %v3518
        %v3645 = vadd.f32 %v3214, %v3521
        %v3646 = vadd.f32 %v3215, %v3526
        %v3647 = vadd.f32 %v3216, %v3529
        %v3648 = vadd.f32 %v3217, %v3534
        %v3649 = vadd.f32 %v3218, %v3537
        %v3650 = vadd.f32 %v3219, %v3542
        %v3651 = vadd.f32 %v3220, %v3545
        %v3652 = vadd.f32 %v3221, %v3550
        %v3653 = vadd.f32 %v3222, %v3553
        %v3654 = vadd.f32 %v3223, %v3558
        %v3655 = vadd.f32 %v3224, %v3561
        %v3656 = vadd.f32 %v3225, %v3566
        %v3657 = vadd.f32 %v3226, %v3569
        %v3658 = vadd.f32 %v3227, %v3574
        %v3659 = vadd.f32 %v3228, %v3577
        %v3660 = vadd.f32 %v3229, %v3582
        %v3661 = vadd.f32 %v3230, %v3585
        %v3662 = vadd.f32 %v3231, %v3590
        %v3663 = vadd.f32 %v3232, %v3593
        %v3664 = vadd.f32 %v3233, %v3598
        %v3665 = vadd.f32 %v3234, %v3601
        %v3666 = vadd.f32 %v3235, %v3606
        %v3667 = vadd.f32 %v3236, %v3609
        %v3668 = vadd.f32 %v3237, %v3614
        %v3669 = vadd.f32 %v3238, %v3617
        %v3670 = vadd.f32 %v3239, %v3622
        %v3671 = vadd.f32 %v3240, %v3625
        %v3672 = vadd.f32 %v3241, %v3630
        %v3673 = vadd.f32 %v3242, %v3633
        %v3674 = vadd.f32 %v3243, %v3638
        %v3675 = vadd.f32 %v3244, %v3641
        %v3676 = vld [vmem:[%s605 + $0x10] sm:$0x8]
        %s3677 = scalar_lea.vmem %s1, 512
        %v3678 = vld [vmem:[%s3677] sm:$0xf]
        %v3679 = vld [vmem:[%s3677 + $0x4] sm:$0xf]
        %v3680 = vld [vmem:[%s3677 + $0x8] sm:$0xf]
        %v3681 = vld [vmem:[%s3677 + $0xc] sm:$0xf]
        %v3682 = vld [vmem:[%s3677 + $0x10] sm:$0xf]
        %v3683 = vld [vmem:[%s3677 + $0x14] sm:$0xf]
        %v3684 = vld [vmem:[%s3677 + $0x18] sm:$0xf]
        %v3685 = vld [vmem:[%s3677 + $0x1c] sm:$0xf]
        %v3686 = vld [vmem:[%s3677 + $0x20] sm:$0xf]
        %v3687 = vld [vmem:[%s3677 + $0x24] sm:$0xf]
        %v3688 = vld [vmem:[%s3677 + $0x28] sm:$0xf]
        %v3689 = vld [vmem:[%s3677 + $0x2c] sm:$0xf]
        %v3690 = vld [vmem:[%s3677 + $0x30] sm:$0xf]
        %v3691 = vld [vmem:[%s3677 + $0x34] sm:$0xf]
        %v3692 = vld [vmem:[%s3677 + $0x38] sm:$0xf]
        %v3693 = vld [vmem:[%s3677 + $0x3c] sm:$0xf]
        %v3695 = vunpack.c.l.b16 %v3676
        %v3696 = vpack.c.b16 %v2906, %v3695
        %vm3697 = vcmask 1044480
        %v3698 = vrot.slane %v3696, 3
        %v3699 = vrot.slane %v2939, 3
        %v3700 = vsel %vm3697, %v3698, %v3699
        %v3701 = vrot.slane %v2940, 3
        %v3702 = vsel %vm3697, %v3699, %v3701
        %v3703 = vrot.slane %v2941, 3
        %v3704 = vsel %vm3697, %v3701, %v3703
        %v3705 = vrot.slane %v2942, 3
        %v3706 = vsel %vm3697, %v3703, %v3705
        %v3707 = vrot.slane %v2943, 3
        %v3708 = vsel %vm3697, %v3705, %v3707
        %v3709 = vrot.slane %v2944, 3
        %v3710 = vsel %vm3697, %v3707, %v3709
        %v3711 = vrot.slane %v2945, 3
        %v3712 = vsel %vm3697, %v3709, %v3711
        %v3713 = vrot.slane %v2946, 3
        %v3714 = vsel %vm3697, %v3711, %v3713
        %v3715 = vrot.slane %v2947, 3
        %v3716 = vsel %vm3697, %v3713, %v3715
        %v3717 = vrot.slane %v2948, 3
        %v3718 = vsel %vm3697, %v3715, %v3717
        %v3719 = vrot.slane %v2949, 3
        %v3720 = vsel %vm3697, %v3717, %v3719
        %v3721 = vrot.slane %v2950, 3
        %v3722 = vsel %vm3697, %v3719, %v3721
        %v3723 = vrot.slane %v2951, 3
        %v3724 = vsel %vm3697, %v3721, %v3723
        %v3725 = vrot.slane %v2952, 3
        %v3726 = vsel %vm3697, %v3723, %v3725
        %v3727 = vrot.slane %v2953, 3
        %v3728 = vsel %vm3697, %v3725, %v3727
        %v3729 = vrot.slane %v3265, 3
        %v3730 = vsel %vm3697, %v3727, %v3729
        %v3763 = vunpack.c.l.b16 %v3678
        %v3764 = vunpack.c.l.b16 %v3679
        %v3765 = vunpack.c.l.b16 %v3680
        %v3766 = vunpack.c.l.b16 %v3681
        %v3767 = vunpack.c.l.b16 %v3682
        %v3768 = vunpack.c.l.b16 %v3683
        %v3769 = vunpack.c.l.b16 %v3684
        %v3770 = vunpack.c.l.b16 %v3685
        %v3771 = vunpack.c.l.b16 %v3686
        %v3772 = vunpack.c.l.b16 %v3687
        %v3773 = vunpack.c.l.b16 %v3688
        %v3774 = vunpack.c.l.b16 %v3689
        %v3775 = vunpack.c.l.b16 %v3690
        %v3776 = vunpack.c.l.b16 %v3691
        %v3777 = vunpack.c.l.b16 %v3692
        %v3778 = vunpack.c.l.b16 %v3693
        %v3779 = vpack.c.b16 %v3764, %v3763
        %v3780 = vpack.c.b16 %v3766, %v3765
        %v3781 = vpack.c.b16 %v3768, %v3767
        %v3782 = vpack.c.b16 %v3770, %v3769
        %v3783 = vpack.c.b16 %v3772, %v3771
        %v3784 = vpack.c.b16 %v3774, %v3773
        %v3785 = vpack.c.b16 %v3776, %v3775
        %v3786 = vpack.c.b16 %v3778, %v3777
        %3795 = vmatprep.subr.bf16.mxu0 0
        %3796 = vmatpush1.bf16.msra.mxu0 %v3779
        %3797 = vmatprep.subr.bf16.mxu0 0
        %3798 = vmatpush1.bf16.msra.mxu0 %v3780
        %3799 = vmatprep.subr.bf16.mxu0 0
        %3800 = vmatpush1.bf16.msra.mxu0 %v3781
        %3801 = vmatprep.subr.bf16.mxu0 0
        %3802 = vmatpush1.bf16.msra.mxu0 %v3782
        %3803 = vmatprep.subr.bf16.mxu0 0
        %3804 = vmatpush1.bf16.msra.mxu0 %v3783
        %3805 = vmatprep.subr.bf16.mxu0 0
        %3806 = vmatpush1.bf16.msra.mxu0 %v3784
        %3807 = vmatprep.subr.bf16.mxu0 0
        %3808 = vmatpush1.bf16.msra.mxu0 %v3785
        %3809 = vmatprep.subr.bf16.mxu0 0
        %3810 = vmatpush1.bf16.msra.mxu0 %v3786
        %3811 = vmatprep.subr.bf16.mxu0 0
        %3812 = vmatpush1.bf16.msra.mxu0 0
        %3813 = vmatprep.subr.bf16.mxu0 0
        %3814 = vmatpush1.bf16.msra.mxu0 0
        %3815 = vmatprep.subr.bf16.mxu0 0
        %3816 = vmatpush1.bf16.msra.mxu0 0
        %3817 = vmatprep.subr.bf16.mxu0 0
        %3818 = vmatpush1.bf16.msra.mxu0 0
        %3819 = vmatprep.subr.bf16.mxu0 0
        %3820 = vmatpush1.bf16.msra.mxu0 0
        %3821 = vmatprep.subr.bf16.mxu0 0
        %3822 = vmatpush1.bf16.msra.mxu0 0
        %3823 = vmatprep.subr.bf16.mxu0 0
        %3824 = vmatpush1.bf16.msra.mxu0 0
        %3825 = vmatprep.subr.bf16.mxu0 0
        %3826 = vmatpush1.bf16.msra.mxu0 0
        %3827 = vmatprep.mubr.bf16.mxu0 0
        %3828 = vmatmul.mubr.bf16.gmra.mrb[0].mxu0 %v3700
        %v3829 = vpop.f32.mrb[0].mxu0
        %v3830 = vadd.f32 0.0, %v3829
        %v3831 = vpop.f32.mrb[0].mxu0
        %v3832 = vpop.f32.mrb[0].mxu0
        %v3833 = vadd.f32 0.0, %v3832
        %v3834 = vpop.f32.mrb[0].mxu0
        %3835 = vmatprep.mubr.bf16.mxu0 0
        %3836 = vmatmul.mubr.bf16.gmra.mrb[0].mxu0 %v3702
        %v3837 = vpop.f32.mrb[0].mxu0
        %v3838 = vadd.f32 0.0, %v3837
        %v3839 = vpop.f32.mrb[0].mxu0
        %v3840 = vpop.f32.mrb[0].mxu0
        %v3841 = vadd.f32 0.0, %v3840
        %v3842 = vpop.f32.mrb[0].mxu0
        %3843 = vmatprep.mubr.bf16.mxu0 0
        %3844 = vmatmul.mubr.bf16.gmra.mrb[0].mxu0 %v3704
        %v3845 = vpop.f32.mrb[0].mxu0
        %v3846 = vadd.f32 0.0, %v3845
        %v3847 = vpop.f32.mrb[0].mxu0
        %v3848 = vpop.f32.mrb[0].mxu0
        %v3849 = vadd.f32 0.0, %v3848
        %v3850 = vpop.f32.mrb[0].mxu0
        %3851 = vmatprep.mubr.bf16.mxu0 0
        %3852 = vmatmul.mubr.bf16.gmra.mrb[0].mxu0 %v3706
        %v3853 = vpop.f32.mrb[0].mxu0
        %v3854 = vadd.f32 0.0, %v3853
        %v3855 = vpop.f32.mrb[0].mxu0
        %v3856 = vpop.f32.mrb[0].mxu0
        %v3857 = vadd.f32 0.0, %v3856
        %v3858 = vpop.f32.mrb[0].mxu0
        %3859 = vmatprep.mubr.bf16.mxu0 0
        %3860 = vmatmul.mubr.bf16.gmra.mrb[0].mxu0 %v3708
        %v3861 = vpop.f32.mrb[0].mxu0
        %v3862 = vadd.f32 0.0, %v3861
        %v3863 = vpop.f32.mrb[0].mxu0
        %v3864 = vpop.f32.mrb[0].mxu0
        %v3865 = vadd.f32 0.0, %v3864
        %v3866 = vpop.f32.mrb[0].mxu0
        %3867 = vmatprep.mubr.bf16.mxu0 0
        %3868 = vmatmul.mubr.bf16.gmra.mrb[0].mxu0 %v3710
        %v3869 = vpop.f32.mrb[0].mxu0
        %v3870 = vadd.f32 0.0, %v3869
        %v3871 = vpop.f32.mrb[0].mxu0
        %v3872 = vpop.f32.mrb[0].mxu0
        %v3873 = vadd.f32 0.0, %v3872
        %v3874 = vpop.f32.mrb[0].mxu0
        %3875 = vmatprep.mubr.bf16.mxu0 0
        %3876 = vmatmul.mubr.bf16.gmra.mrb[0].mxu0 %v3712
        %v3877 = vpop.f32.mrb[0].mxu0
        %v3878 = vadd.f32 0.0, %v3877
        %v3879 = vpop.f32.mrb[0].mxu0
        %v3880 = vpop.f32.mrb[0].mxu0
        %v3881 = vadd.f32 0.0, %v3880
        %v3882 = vpop.f32.mrb[0].mxu0
        %3883 = vmatprep.mubr.bf16.mxu0 0
        %3884 = vmatmul.mubr.bf16.gmra.mrb[0].mxu0 %v3714
        %v3885 = vpop.f32.mrb[0].mxu0
        %v3886 = vadd.f32 0.0, %v3885
        %v3887 = vpop.f32.mrb[0].mxu0
        %v3888 = vpop.f32.mrb[0].mxu0
        %v3889 = vadd.f32 0.0, %v3888
        %v3890 = vpop.f32.mrb[0].mxu0
        %3891 = vmatprep.mubr.bf16.mxu0 0
        %3892 = vmatmul.mubr.bf16.gmra.mrb[0].mxu0 %v3716
        %v3893 = vpop.f32.mrb[0].mxu0
        %v3894 = vadd.f32 0.0, %v3893
        %v3895 = vpop.f32.mrb[0].mxu0
        %v3896 = vpop.f32.mrb[0].mxu0
        %v3897 = vadd.f32 0.0, %v3896
        %v3898 = vpop.f32.mrb[0].mxu0
        %3899 = vmatprep.mubr.bf16.mxu0 0
        %3900 = vmatmul.mubr.bf16.gmra.mrb[0].mxu0 %v3718
        %v3901 = vpop.f32.mrb[0].mxu0
        %v3902 = vadd.f32 0.0, %v3901
        %v3903 = vpop.f32.mrb[0].mxu0
        %v3904 = vpop.f32.mrb[0].mxu0
        %v3905 = vadd.f32 0.0, %v3904
        %v3906 = vpop.f32.mrb[0].mxu0
        %3907 = vmatprep.mubr.bf16.mxu0 0
        %3908 = vmatmul.mubr.bf16.gmra.mrb[0].mxu0 %v3720
        %v3909 = vpop.f32.mrb[0].mxu0
        %v3910 = vadd.f32 0.0, %v3909
        %v3911 = vpop.f32.mrb[0].mxu0
        %v3912 = vpop.f32.mrb[0].mxu0
        %v3913 = vadd.f32 0.0, %v3912
        %v3914 = vpop.f32.mrb[0].mxu0
        %3915 = vmatprep.mubr.bf16.mxu0 0
        %3916 = vmatmul.mubr.bf16.gmra.mrb[0].mxu0 %v3722
        %v3917 = vpop.f32.mrb[0].mxu0
        %v3918 = vadd.f32 0.0, %v3917
        %v3919 = vpop.f32.mrb[0].mxu0
        %v3920 = vpop.f32.mrb[0].mxu0
        %v3921 = vadd.f32 0.0, %v3920
        %v3922 = vpop.f32.mrb[0].mxu0
        %3923 = vmatprep.mubr.bf16.mxu0 0
        %3924 = vmatmul.mubr.bf16.gmra.mrb[0].mxu0 %v3724
        %v3925 = vpop.f32.mrb[0].mxu0
        %v3926 = vadd.f32 0.0, %v3925
        %v3927 = vpop.f32.mrb[0].mxu0
        %v3928 = vpop.f32.mrb[0].mxu0
        %v3929 = vadd.f32 0.0, %v3928
        %v3930 = vpop.f32.mrb[0].mxu0
        %3931 = vmatprep.mubr.bf16.mxu0 0
        %3932 = vmatmul.mubr.bf16.gmra.mrb[0].mxu0 %v3726
        %v3933 = vpop.f32.mrb[0].mxu0
        %v3934 = vadd.f32 0.0, %v3933
        %v3935 = vpop.f32.mrb[0].mxu0
        %v3936 = vpop.f32.mrb[0].mxu0
        %v3937 = vadd.f32 0.0, %v3936
        %v3938 = vpop.f32.mrb[0].mxu0
        %3939 = vmatprep.mubr.bf16.mxu0 0
        %3940 = vmatmul.mubr.bf16.gmra.mrb[0].mxu0 %v3728
        %v3941 = vpop.f32.mrb[0].mxu0
        %v3942 = vadd.f32 0.0, %v3941
        %v3943 = vpop.f32.mrb[0].mxu0
        %v3944 = vpop.f32.mrb[0].mxu0
        %v3945 = vadd.f32 0.0, %v3944
        %v3946 = vpop.f32.mrb[0].mxu0
        %3947 = vmatprep.mubr.bf16.mxu0 0
        %3948 = vmatmul.mubr.bf16.gmra.mrb[0].mxu0 %v3730
        %v3949 = vpop.f32.mrb[0].mxu0
        %v3950 = vadd.f32 0.0, %v3949
        %v3951 = vpop.f32.mrb[0].mxu0
        %v3952 = vpop.f32.mrb[0].mxu0
        %v3953 = vadd.f32 0.0, %v3952
        %v3954 = vpop.f32.mrb[0].mxu0
        %3955 = vdwg.mxu0
        %v3956 = vadd.f32 %v3644, %v3830
        %v3957 = vadd.f32 %v3645, %v3833
        %v3958 = vadd.f32 %v3646, %v3838
        %v3959 = vadd.f32 %v3647, %v3841
        %v3960 = vadd.f32 %v3648, %v3846
        %v3961 = vadd.f32 %v3649, %v3849
        %v3962 = vadd.f32 %v3650, %v3854
        %v3963 = vadd.f32 %v3651, %v3857
        %v3964 = vadd.f32 %v3652, %v3862
        %v3965 = vadd.f32 %v3653, %v3865
        %v3966 = vadd.f32 %v3654, %v3870
        %v3967 = vadd.f32 %v3655, %v3873
        %v3968 = vadd.f32 %v3656, %v3878
        %v3969 = vadd.f32 %v3657, %v3881
        %v3970 = vadd.f32 %v3658, %v3886
        %v3971 = vadd.f32 %v3659, %v3889
        %v3972 = vadd.f32 %v3660, %v3894
        %v3973 = vadd.f32 %v3661, %v3897
        %v3974 = vadd.f32 %v3662, %v3902
        %v3975 = vadd.f32 %v3663, %v3905
        %v3976 = vadd.f32 %v3664, %v3910
        %v3977 = vadd.f32 %v3665, %v3913
        %v3978 = vadd.f32 %v3666, %v3918
        %v3979 = vadd.f32 %v3667, %v3921
        %v3980 = vadd.f32 %v3668, %v3926
        %v3981 = vadd.f32 %v3669, %v3929
        %v3982 = vadd.f32 %v3670, %v3934
        %v3983 = vadd.f32 %v3671, %v3937
        %v3984 = vadd.f32 %v3672, %v3942
        %v3985 = vadd.f32 %v3673, %v3945
        %v3986 = vadd.f32 %v3674, %v3950
        %v3987 = vadd.f32 %v3675, %v3953
        %v3989 = vlaneseq
        %v3990 = vshrl.u32 %v3989, 7
        %v3991 = vsub.s32 0, %v3990
        %v3992 = vrot.slane %v610, %v3991
        %v3994 = vmul.f32 %v3956, %v3992
        %v3995 = vmul.f32 %v3957, %v3992
        %v3996 = vmul.f32 %v3958, %v3992
        %v3997 = vmul.f32 %v3959, %v3992
        %v3998 = vmul.f32 %v3960, %v3992
        %v3999 = vmul.f32 %v3961, %v3992
        %v4000 = vmul.f32 %v3962, %v3992
        %v4001 = vmul.f32 %v3963, %v3992
        %v4002 = vmul.f32 %v3964, %v3992
        %v4003 = vmul.f32 %v3965, %v3992
        %v4004 = vmul.f32 %v3966, %v3992
        %v4005 = vmul.f32 %v3967, %v3992
        %v4006 = vmul.f32 %v3968, %v3992
        %v4007 = vmul.f32 %v3969, %v3992
        %v4008 = vmul.f32 %v3970, %v3992
        %v4009 = vmul.f32 %v3971, %v3992
        %v4010 = vmul.f32 %v3972, %v3992
        %v4011 = vmul.f32 %v3973, %v3992
        %v4012 = vmul.f32 %v3974, %v3992
        %v4013 = vmul.f32 %v3975, %v3992
        %v4014 = vmul.f32 %v3976, %v3992
        %v4015 = vmul.f32 %v3977, %v3992
        %v4016 = vmul.f32 %v3978, %v3992
        %v4017 = vmul.f32 %v3979, %v3992
        %v4018 = vmul.f32 %v3980, %v3992
        %v4019 = vmul.f32 %v3981, %v3992
        %v4020 = vmul.f32 %v3982, %v3992
        %v4021 = vmul.f32 %v3983, %v3992
        %v4022 = vmul.f32 %v3984, %v3992
        %v4023 = vmul.f32 %v3985, %v3992
        %v4024 = vmul.f32 %v3986, %v3992
        %v4025 = vmul.f32 %v3987, %v3992
        %v4027 = vlaneseq
        %v4028 = vshrl.u32 %v4027, 7
        %v4029 = vsub.s32 0, %v4028
        %v4030 = vrot.slane %v611, %v4029
        %v4032 = vadd.f32 %v3994, %v4030
        %v4033 = vadd.f32 %v3995, %v4030
        %v4034 = vadd.f32 %v3996, %v4030
        %v4035 = vadd.f32 %v3997, %v4030
        %v4036 = vadd.f32 %v3998, %v4030
        %v4037 = vadd.f32 %v3999, %v4030
        %v4038 = vadd.f32 %v4000, %v4030
        %v4039 = vadd.f32 %v4001, %v4030
        %v4040 = vadd.f32 %v4002, %v4030
        %v4041 = vadd.f32 %v4003, %v4030
        %v4042 = vadd.f32 %v4004, %v4030
        %v4043 = vadd.f32 %v4005, %v4030
        %v4044 = vadd.f32 %v4006, %v4030
        %v4045 = vadd.f32 %v4007, %v4030
        %v4046 = vadd.f32 %v4008, %v4030
        %v4047 = vadd.f32 %v4009, %v4030
        %v4048 = vadd.f32 %v4010, %v4030
        %v4049 = vadd.f32 %v4011, %v4030
        %v4050 = vadd.f32 %v4012, %v4030
        %v4051 = vadd.f32 %v4013, %v4030
        %v4052 = vadd.f32 %v4014, %v4030
        %v4053 = vadd.f32 %v4015, %v4030
        %v4054 = vadd.f32 %v4016, %v4030
        %v4055 = vadd.f32 %v4017, %v4030
        %v4056 = vadd.f32 %v4018, %v4030
        %v4057 = vadd.f32 %v4019, %v4030
        %v4058 = vadd.f32 %v4020, %v4030
        %v4059 = vadd.f32 %v4021, %v4030
        %v4060 = vadd.f32 %v4022, %v4030
        %v4061 = vadd.f32 %v4023, %v4030
        %v4062 = vadd.f32 %v4024, %v4030
        %v4063 = vadd.f32 %v4025, %v4030
        %v4064 = vmax.f32 %v4032, 0.0
        %v4065 = vmax.f32 %v4033, 0.0
        %v4066 = vmax.f32 %v4034, 0.0
        %v4067 = vmax.f32 %v4035, 0.0
        %v4068 = vmax.f32 %v4036, 0.0
        %v4069 = vmax.f32 %v4037, 0.0
        %v4070 = vmax.f32 %v4038, 0.0
        %v4071 = vmax.f32 %v4039, 0.0
        %v4072 = vmax.f32 %v4040, 0.0
        %v4073 = vmax.f32 %v4041, 0.0
        %v4074 = vmax.f32 %v4042, 0.0
        %v4075 = vmax.f32 %v4043, 0.0
        %v4076 = vmax.f32 %v4044, 0.0
        %v4077 = vmax.f32 %v4045, 0.0
        %v4078 = vmax.f32 %v4046, 0.0
        %v4079 = vmax.f32 %v4047, 0.0
        %v4080 = vmax.f32 %v4048, 0.0
        %v4081 = vmax.f32 %v4049, 0.0
        %v4082 = vmax.f32 %v4050, 0.0
        %v4083 = vmax.f32 %v4051, 0.0
        %v4084 = vmax.f32 %v4052, 0.0
        %v4085 = vmax.f32 %v4053, 0.0
        %v4086 = vmax.f32 %v4054, 0.0
        %v4087 = vmax.f32 %v4055, 0.0
        %v4088 = vmax.f32 %v4056, 0.0
        %v4089 = vmax.f32 %v4057, 0.0
        %v4090 = vmax.f32 %v4058, 0.0
        %v4091 = vmax.f32 %v4059, 0.0
        %v4092 = vmax.f32 %v4060, 0.0
        %v4093 = vmax.f32 %v4061, 0.0
        %v4094 = vmax.f32 %v4062, 0.0
        %v4095 = vmax.f32 %v4063, 0.0
        %4096 = vst [vmem:[#allocation2] sm:$0xff] %v4064
        %4097 = vst [vmem:[#allocation2 + $0x8] sm:$0xff] %v4065
        %4098 = vst [vmem:[#allocation2 + $0x10] sm:$0xff] %v4066
        %4099 = vst [vmem:[#allocation2 + $0x18] sm:$0xff] %v4067
        %4100 = vst [vmem:[#allocation2 + $0x20] sm:$0xff] %v4068
        %4101 = vst [vmem:[#allocation2 + $0x28] sm:$0xff] %v4069
        %4102 = vst [vmem:[#allocation2 + $0x30] sm:$0xff] %v4070
        %4103 = vst [vmem:[#allocation2 + $0x38] sm:$0xff] %v4071
        %4104 = vst [vmem:[#allocation2 + $0x40] sm:$0xff] %v4072
        %4105 = vst [vmem:[#allocation2 + $0x48] sm:$0xff] %v4073
        %4106 = vst [vmem:[#allocation2 + $0x50] sm:$0xff] %v4074
        %4107 = vst [vmem:[#allocation2 + $0x58] sm:$0xff] %v4075
        %4108 = vst [vmem:[#allocation2 + $0x60] sm:$0xff] %v4076
        %4109 = vst [vmem:[#allocation2 + $0x68] sm:$0xff] %v4077
        %4110 = vst [vmem:[#allocation2 + $0x70] sm:$0xff] %v4078
        %4111 = vst [vmem:[#allocation2 + $0x78] sm:$0xff] %v4079
        %4112 = vst [vmem:[#allocation2 + $0x80] sm:$0xff] %v4080
        %4113 = vst [vmem:[#allocation2 + $0x88] sm:$0xff] %v4081
        %4114 = vst [vmem:[#allocation2 + $0x90] sm:$0xff] %v4082
        %4115 = vst [vmem:[#allocation2 + $0x98] sm:$0xff] %v4083
        %4116 = vst [vmem:[#allocation2 + $0xa0] sm:$0xff] %v4084
        %4117 = vst [vmem:[#allocation2 + $0xa8] sm:$0xff] %v4085
        %4118 = vst [vmem:[#allocation2 + $0xb0] sm:$0xff] %v4086
        %4119 = vst [vmem:[#allocation2 + $0xb8] sm:$0xff] %v4087
        %4120 = vst [vmem:[#allocation2 + $0xc0] sm:$0xff] %v4088
        %4121 = vst [vmem:[#allocation2 + $0xc8] sm:$0xff] %v4089
        %4122 = vst [vmem:[#allocation2 + $0xd0] sm:$0xff] %v4090
        %4123 = vst [vmem:[#allocation2 + $0xd8] sm:$0xff] %v4091
        %4124 = vst [vmem:[#allocation2 + $0xe0] sm:$0xff] %v4092
        %4125 = vst [vmem:[#allocation2 + $0xe8] sm:$0xff] %v4093
        %4126 = vst [vmem:[#allocation2 + $0xf0] sm:$0xff] %v4094
        %4127 = vst [vmem:[#allocation2 + $0xf8] sm:$0xff] %v4095
        %v4128 = vld [vmem:[%s605 + $0x80] sm:$0xf]
        %v4129 = vld [vmem:[%s605 + $0x84] sm:$0xf]
        %v4130 = vld [vmem:[%s605 + $0x88] sm:$0xf]
        %v4131 = vld [vmem:[%s605 + $0x8c] sm:$0xf]
        %v4132 = vld [vmem:[%s605 + $0x90] sm:$0xf]
        %v4133 = vld [vmem:[%s605 + $0x94] sm:$0xf]
        %v4134 = vld [vmem:[%s605 + $0x98] sm:$0xf]
        %v4135 = vld [vmem:[%s605 + $0x9c] sm:$0xf]
        %v4136 = vld [vmem:[%s605 + $0xa0] sm:$0x3]
        %v4137 = vld [vmem:[%s1] sm:$0xf]
        %v4138 = vld [vmem:[%s1 + $0x4] sm:$0xf]
        %v4139 = vld [vmem:[%s1 + $0x8] sm:$0xf]
        %v4140 = vld [vmem:[%s1 + $0xc] sm:$0xf]
        %v4141 = vld [vmem:[%s1 + $0x10] sm:$0xf]
        %v4142 = vld [vmem:[%s1 + $0x14] sm:$0xf]
        %v4143 = vld [vmem:[%s1 + $0x18] sm:$0xf]
        %v4144 = vld [vmem:[%s1 + $0x1c] sm:$0xf]
        %v4145 = vld [vmem:[%s1 + $0x20] sm:$0xf]
        %v4146 = vld [vmem:[%s1 + $0x24] sm:$0xf]
        %v4147 = vld [vmem:[%s1 + $0x28] sm:$0xf]
        %v4148 = vld [vmem:[%s1 + $0x2c] sm:$0xf]
        %v4149 = vld [vmem:[%s1 + $0x30] sm:$0xf]
        %v4150 = vld [vmem:[%s1 + $0x34] sm:$0xf]
        %v4151 = vld [vmem:[%s1 + $0x38] sm:$0xf]
        %v4152 = vld [vmem:[%s1 + $0x3c] sm:$0xf]
        %v4153 = vld [vmem:[%s605 + $0xa0] sm:$0x7]
        %v4154 = vld [vmem:[%s661] sm:$0xf]
        %v4155 = vld [vmem:[%s661 + $0x4] sm:$0xf]
        %v4156 = vld [vmem:[%s661 + $0x8] sm:$0xf]
        %v4157 = vld [vmem:[%s661 + $0xc] sm:$0xf]
        %v4158 = vld [vmem:[%s661 + $0x10] sm:$0xf]
        %v4159 = vld [vmem:[%s661 + $0x14] sm:$0xf]
        %v4160 = vld [vmem:[%s661 + $0x18] sm:$0xf]
        %v4161 = vld [vmem:[%s661 + $0x1c] sm:$0xf]
        %v4162 = vld [vmem:[%s661 + $0x20] sm:$0xf]
        %v4163 = vld [vmem:[%s661 + $0x24] sm:$0xf]
        %v4164 = vld [vmem:[%s661 + $0x28] sm:$0xf]
        %v4165 = vld [vmem:[%s661 + $0x2c] sm:$0xf]
        %v4166 = vld [vmem:[%s661 + $0x30] sm:$0xf]
        %v4167 = vld [vmem:[%s661 + $0x34] sm:$0xf]
        %v4168 = vld [vmem:[%s661 + $0x38] sm:$0xf]
        %v4169 = vld [vmem:[%s661 + $0x3c] sm:$0xf]
        %v4179 = vunpack.c.l.b16 %v4128
        %v4180 = vunpack.c.l.b16 %v4129
        %v4181 = vunpack.c.l.b16 %v4130
        %v4182 = vunpack.c.l.b16 %v4131
        %v4183 = vunpack.c.l.b16 %v4132
        %v4184 = vunpack.c.l.b16 %v4133
        %v4185 = vunpack.c.l.b16 %v4134
        %v4186 = vunpack.c.l.b16 %v4135
        %v4187 = vunpack.c.l.b16 %v4153
        %v4188 = vpack.c.b16 %v4180, %v4179
        %v4189 = vpack.c.b16 %v4182, %v4181
        %v4190 = vpack.c.b16 %v4184, %v4183
        %v4191 = vpack.c.b16 %v4186, %v4185
        %v4192 = vpack.c.b16 %v4187, %v4187
        %v4194 = vshrl.u32 %v4188, 16
        %v4196 = vshll.u32 %v4188, 16
        %v4198 = vrot.slane %v4196, 1
        %v4199 = vor.u32 %v4194, %v4198
        %v4201 = vshll.u32 %v4189, 16
        %v4203 = vrot.slane %v4201, 1
        %v4204 = vsel %vm761, %v4199, %v4203
        %v4205 = vshrl.u32 %v4189, 16
        %v4207 = vor.u32 %v4205, %v4203
        %v4209 = vshll.u32 %v4190, 16
        %v4211 = vrot.slane %v4209, 1
        %v4212 = vsel %vm761, %v4207, %v4211
        %v4213 = vshrl.u32 %v4190, 16
        %v4215 = vor.u32 %v4213, %v4211
        %v4217 = vshll.u32 %v4191, 16
        %v4219 = vrot.slane %v4217, 1
        %v4220 = vsel %vm761, %v4215, %v4219
        %v4221 = vshrl.u32 %v4191, 16
        %v4223 = vor.u32 %v4221, %v4219
        %v4225 = vshll.u32 %v4192, 16
        %v4227 = vrot.slane %v4225, 1
        %v4228 = vsel %vm761, %v4223, %v4227
        %v4229 = vshrl.u32 %v4192, 16
        %v4231 = vor.u32 %v4229, %v4227
        %v4253 = vunpack.c.l.b16 %v4154
        %v4254 = vunpack.c.l.b16 %v4155
        %v4255 = vunpack.c.l.b16 %v4156
        %v4256 = vunpack.c.l.b16 %v4157
        %v4257 = vunpack.c.l.b16 %v4158
        %v4258 = vunpack.c.l.b16 %v4159
        %v4259 = vunpack.c.l.b16 %v4160
        %v4260 = vunpack.c.l.b16 %v4161
        %v4261 = vunpack.c.l.b16 %v4162
        %v4262 = vunpack.c.l.b16 %v4163
        %v4263 = vunpack.c.l.b16 %v4164
        %v4264 = vunpack.c.l.b16 %v4165
        %v4265 = vunpack.c.l.b16 %v4166
        %v4266 = vunpack.c.l.b16 %v4167
        %v4267 = vunpack.c.l.b16 %v4168
        %v4268 = vunpack.c.l.b16 %v4169
        %v4269 = vpack.c.b16 %v4254, %v4253
        %v4270 = vpack.c.b16 %v4256, %v4255
        %v4271 = vpack.c.b16 %v4258, %v4257
        %v4272 = vpack.c.b16 %v4260, %v4259
        %v4273 = vpack.c.b16 %v4262, %v4261
        %v4274 = vpack.c.b16 %v4264, %v4263
        %v4275 = vpack.c.b16 %v4266, %v4265
        %v4276 = vpack.c.b16 %v4268, %v4267
        %4285 = vmatprep.subr.bf16.mxu0 0
        %4286 = vmatpush1.bf16.msra.mxu0 %v4269
        %4287 = vmatprep.subr.bf16.mxu0 0
        %4288 = vmatpush1.bf16.msra.mxu0 %v4270
        %4289 = vmatprep.subr.bf16.mxu0 0
        %4290 = vmatpush1.bf16.msra.mxu0 %v4271
        %4291 = vmatprep.subr.bf16.mxu0 0
        %4292 = vmatpush1.bf16.msra.mxu0 %v4272
        %4293 = vmatprep.subr.bf16.mxu0 0
        %4294 = vmatpush1.bf16.msra.mxu0 %v4273
        %4295 = vmatprep.subr.bf16.mxu0 0
        %4296 = vmatpush1.bf16.msra.mxu0 %v4274
        %4297 = vmatprep.subr.bf16.mxu0 0
        %4298 = vmatpush1.bf16.msra.mxu0 %v4275
        %4299 = vmatprep.subr.bf16.mxu0 0
        %4300 = vmatpush1.bf16.msra.mxu0 %v4276
        %4301 = vmatprep.subr.bf16.mxu0 0
        %4302 = vmatpush1.bf16.msra.mxu0 0
        %4303 = vmatprep.subr.bf16.mxu0 0
        %4304 = vmatpush1.bf16.msra.mxu0 0
        %4305 = vmatprep.subr.bf16.mxu0 0
        %4306 = vmatpush1.bf16.msra.mxu0 0
        %4307 = vmatprep.subr.bf16.mxu0 0
        %4308 = vmatpush1.bf16.msra.mxu0 0
        %4309 = vmatprep.subr.bf16.mxu0 0
        %4310 = vmatpush1.bf16.msra.mxu0 0
        %4311 = vmatprep.subr.bf16.mxu0 0
        %4312 = vmatpush1.bf16.msra.mxu0 0
        %4313 = vmatprep.subr.bf16.mxu0 0
        %4314 = vmatpush1.bf16.msra.mxu0 0
        %4315 = vmatprep.subr.bf16.mxu0 0
        %4316 = vmatpush1.bf16.msra.mxu0 0
        %4317 = vmatprep.mubr.bf16.mxu0 0
        %4318 = vmatmul.mubr.bf16.gmra.mrb[0].mxu0 %v4204
        %v4319 = vpop.f32.mrb[0].mxu0
        %v4320 = vadd.f32 0.0, %v4319
        %v4321 = vpop.f32.mrb[0].mxu0
        %v4322 = vpop.f32.mrb[0].mxu0
        %v4323 = vadd.f32 0.0, %v4322
        %v4324 = vpop.f32.mrb[0].mxu0
        %4325 = vmatprep.mubr.bf16.mxu0 0
        %4326 = vmatmul.mubr.bf16.gmra.mrb[0].mxu0 %v4212
        %v4327 = vpop.f32.mrb[0].mxu0
        %v4328 = vadd.f32 0.0, %v4327
        %v4329 = vpop.f32.mrb[0].mxu0
        %v4330 = vpop.f32.mrb[0].mxu0
        %v4331 = vadd.f32 0.0, %v4330
        %v4332 = vpop.f32.mrb[0].mxu0
        %4333 = vmatprep.mubr.bf16.mxu0 0
        %4334 = vmatmul.mubr.bf16.gmra.mrb[0].mxu0 %v4220
        %v4335 = vpop.f32.mrb[0].mxu0
        %v4336 = vadd.f32 0.0, %v4335
        %v4337 = vpop.f32.mrb[0].mxu0
        %v4338 = vpop.f32.mrb[0].mxu0
        %v4339 = vadd.f32 0.0, %v4338
        %v4340 = vpop.f32.mrb[0].mxu0
        %4341 = vmatprep.mubr.bf16.mxu0 0
        %4342 = vmatmul.mubr.bf16.gmra.mrb[0].mxu0 %v4228
        %v4343 = vpop.f32.mrb[0].mxu0
        %v4344 = vadd.f32 0.0, %v4343
        %v4345 = vpop.f32.mrb[0].mxu0
        %v4346 = vpop.f32.mrb[0].mxu0
        %v4347 = vadd.f32 0.0, %v4346
        %v4348 = vpop.f32.mrb[0].mxu0
        %4349 = vmatprep.mubr.bf16.mxu0 0
        %4350 = vmatmul.mubr.bf16.gmra.mrb[0].mxu0 %v4231
        %v4351 = vpop.f32.mrb[0].mxu0
        %v4352 = vadd.f32 0.0, %v4351
        %v4353 = vpop.f32.mrb[0].mxu0
        %v4354 = vpop.f32.mrb[0].mxu0
        %v4355 = vpop.f32.mrb[0].mxu0
        %4356 = vdwg.mxu0
        %v4358 = vunpack.c.l.b16 %v4136
        %v4359 = vpack.c.b16 %v4358, %v4358
        %v4381 = vunpack.c.l.b16 %v4137
        %v4382 = vunpack.c.l.b16 %v4138
        %v4383 = vunpack.c.l.b16 %v4139
        %v4384 = vunpack.c.l.b16 %v4140
        %v4385 = vunpack.c.l.b16 %v4141
        %v4386 = vunpack.c.l.b16 %v4142
        %v4387 = vunpack.c.l.b16 %v4143
        %v4388 = vunpack.c.l.b16 %v4144
        %v4389 = vunpack.c.l.b16 %v4145
        %v4390 = vunpack.c.l.b16 %v4146
        %v4391 = vunpack.c.l.b16 %v4147
        %v4392 = vunpack.c.l.b16 %v4148
        %v4393 = vunpack.c.l.b16 %v4149
        %v4394 = vunpack.c.l.b16 %v4150
        %v4395 = vunpack.c.l.b16 %v4151
        %v4396 = vunpack.c.l.b16 %v4152
        %v4397 = vpack.c.b16 %v4382, %v4381
        %v4398 = vpack.c.b16 %v4384, %v4383
        %v4399 = vpack.c.b16 %v4386, %v4385
        %v4400 = vpack.c.b16 %v4388, %v4387
        %v4401 = vpack.c.b16 %v4390, %v4389
        %v4402 = vpack.c.b16 %v4392, %v4391
        %v4403 = vpack.c.b16 %v4394, %v4393
        %v4404 = vpack.c.b16 %v4396, %v4395
        %4413 = vmatprep.subr.bf16.mxu0 0
        %4414 = vmatpush1.bf16.msra.mxu0 %v4397
        %4415 = vmatprep.subr.bf16.mxu0 0
        %4416 = vmatpush1.bf16.msra.mxu0 %v4398
        %4417 = vmatprep.subr.bf16.mxu0 0
        %4418 = vmatpush1.bf16.msra.mxu0 %v4399
        %4419 = vmatprep.subr.bf16.mxu0 0
        %4420 = vmatpush1.bf16.msra.mxu0 %v4400
        %4421 = vmatprep.subr.bf16.mxu0 0
        %4422 = vmatpush1.bf16.msra.mxu0 %v4401
        %4423 = vmatprep.subr.bf16.mxu0 0
        %4424 = vmatpush1.bf16.msra.mxu0 %v4402
        %4425 = vmatprep.subr.bf16.mxu0 0
        %4426 = vmatpush1.bf16.msra.mxu0 %v4403
        %4427 = vmatprep.subr.bf16.mxu0 0
        %4428 = vmatpush1.bf16.msra.mxu0 %v4404
        %4429 = vmatprep.subr.bf16.mxu0 0
        %4430 = vmatpush1.bf16.msra.mxu0 0
        %4431 = vmatprep.subr.bf16.mxu0 0
        %4432 = vmatpush1.bf16.msra.mxu0 0
        %4433 = vmatprep.subr.bf16.mxu0 0
        %4434 = vmatpush1.bf16.msra.mxu0 0
        %4435 = vmatprep.subr.bf16.mxu0 0
        %4436 = vmatpush1.bf16.msra.mxu0 0
        %4437 = vmatprep.subr.bf16.mxu0 0
        %4438 = vmatpush1.bf16.msra.mxu0 0
        %4439 = vmatprep.subr.bf16.mxu0 0
        %4440 = vmatpush1.bf16.msra.mxu0 0
        %4441 = vmatprep.subr.bf16.mxu0 0
        %4442 = vmatpush1.bf16.msra.mxu0 0
        %4443 = vmatprep.subr.bf16.mxu0 0
        %4444 = vmatpush1.bf16.msra.mxu0 0
        %4445 = vmatprep.mubr.bf16.mxu0 0
        %4446 = vmatmul.mubr.bf16.gmra.mrb[0].mxu0 %v4188
        %v4447 = vpop.f32.mrb[0].mxu0
        %v4448 = vadd.f32 %v4320, %v4447
        %v4449 = vpop.f32.mrb[0].mxu0
        %v4450 = vpop.f32.mrb[0].mxu0
        %v4451 = vadd.f32 %v4323, %v4450
        %v4452 = vpop.f32.mrb[0].mxu0
        %4453 = vmatprep.mubr.bf16.mxu0 0
        %4454 = vmatmul.mubr.bf16.gmra.mrb[0].mxu0 %v4189
        %v4455 = vpop.f32.mrb[0].mxu0
        %v4456 = vadd.f32 %v4328, %v4455
        %v4457 = vpop.f32.mrb[0].mxu0
        %v4458 = vpop.f32.mrb[0].mxu0
        %v4459 = vadd.f32 %v4331, %v4458
        %v4460 = vpop.f32.mrb[0].mxu0
        %4461 = vmatprep.mubr.bf16.mxu0 0
        %4462 = vmatmul.mubr.bf16.gmra.mrb[0].mxu0 %v4190
        %v4463 = vpop.f32.mrb[0].mxu0
        %v4464 = vadd.f32 %v4336, %v4463
        %v4465 = vpop.f32.mrb[0].mxu0
        %v4466 = vpop.f32.mrb[0].mxu0
        %v4467 = vadd.f32 %v4339, %v4466
        %v4468 = vpop.f32.mrb[0].mxu0
        %4469 = vmatprep.mubr.bf16.mxu0 0
        %4470 = vmatmul.mubr.bf16.gmra.mrb[0].mxu0 %v4191
        %v4471 = vpop.f32.mrb[0].mxu0
        %v4472 = vadd.f32 %v4344, %v4471
        %v4473 = vpop.f32.mrb[0].mxu0
        %v4474 = vpop.f32.mrb[0].mxu0
        %v4475 = vadd.f32 %v4347, %v4474
        %v4476 = vpop.f32.mrb[0].mxu0
        %4477 = vmatprep.mubr.bf16.mxu0 0
        %4478 = vmatmul.mubr.bf16.gmra.mrb[0].mxu0 %v4359
        %v4479 = vpop.f32.mrb[0].mxu0
        %v4480 = vadd.f32 %v4352, %v4479
        %v4481 = vpop.f32.mrb[0].mxu0
        %v4482 = vpop.f32.mrb[0].mxu0
        %v4483 = vpop.f32.mrb[0].mxu0
        %4484 = vdwg.mxu0
        %v4485 = vld [vmem:[%s605 + $0x80] sm:$0xe]
        %v4486 = vld [vmem:[%s1345] sm:$0xf]
        %v4487 = vld [vmem:[%s1345 + $0x4] sm:$0xf]
        %v4488 = vld [vmem:[%s1345 + $0x8] sm:$0xf]
        %v4489 = vld [vmem:[%s1345 + $0xc] sm:$0xf]
        %v4490 = vld [vmem:[%s1345 + $0x10] sm:$0xf]
        %v4491 = vld [vmem:[%s1345 + $0x14] sm:$0xf]
        %v4492 = vld [vmem:[%s1345 + $0x18] sm:$0xf]
        %v4493 = vld [vmem:[%s1345 + $0x1c] sm:$0xf]
        %v4494 = vld [vmem:[%s1345 + $0x20] sm:$0xf]
        %v4495 = vld [vmem:[%s1345 + $0x24] sm:$0xf]
        %v4496 = vld [vmem:[%s1345 + $0x28] sm:$0xf]
        %v4497 = vld [vmem:[%s1345 + $0x2c] sm:$0xf]
        %v4498 = vld [vmem:[%s1345 + $0x30] sm:$0xf]
        %v4499 = vld [vmem:[%s1345 + $0x34] sm:$0xf]
        %v4500 = vld [vmem:[%s1345 + $0x38] sm:$0xf]
        %v4501 = vld [vmem:[%s1345 + $0x3c] sm:$0xf]
        %v4503 = vunpack.c.l.b16 %v4485
        %v4504 = vpack.c.b16 %v4180, %v4503
        %v4505 = vrot.slane %v4504, 1
        %v4506 = vrot.slane %v4189, 1
        %v4507 = vsel %vm1365, %v4505, %v4506
        %v4508 = vrot.slane %v4190, 1
        %v4509 = vsel %vm1365, %v4506, %v4508
        %v4510 = vrot.slane %v4191, 1
        %v4511 = vsel %vm1365, %v4508, %v4510
        %v4512 = vrot.slane %v4192, 1
        %v4513 = vsel %vm1365, %v4510, %v4512
        %v4535 = vunpack.c.l.b16 %v4486
        %v4536 = vunpack.c.l.b16 %v4487
        %v4537 = vunpack.c.l.b16 %v4488
        %v4538 = vunpack.c.l.b16 %v4489
        %v4539 = vunpack.c.l.b16 %v4490
        %v4540 = vunpack.c.l.b16 %v4491
        %v4541 = vunpack.c.l.b16 %v4492
        %v4542 = vunpack.c.l.b16 %v4493
        %v4543 = vunpack.c.l.b16 %v4494
        %v4544 = vunpack.c.l.b16 %v4495
        %v4545 = vunpack.c.l.b16 %v4496
        %v4546 = vunpack.c.l.b16 %v4497
        %v4547 = vunpack.c.l.b16 %v4498
        %v4548 = vunpack.c.l.b16 %v4499
        %v4549 = vunpack.c.l.b16 %v4500
        %v4550 = vunpack.c.l.b16 %v4501
        %v4551 = vpack.c.b16 %v4536, %v4535
        %v4552 = vpack.c.b16 %v4538, %v4537
        %v4553 = vpack.c.b16 %v4540, %v4539
        %v4554 = vpack.c.b16 %v4542, %v4541
        %v4555 = vpack.c.b16 %v4544, %v4543
        %v4556 = vpack.c.b16 %v4546, %v4545
        %v4557 = vpack.c.b16 %v4548, %v4547
        %v4558 = vpack.c.b16 %v4550, %v4549
        %4567 = vmatprep.subr.bf16.mxu0 0
        %4568 = vmatpush1.bf16.msra.mxu0 %v4551
        %4569 = vmatprep.subr.bf16.mxu0 0
        %4570 = vmatpush1.bf16.msra.mxu0 %v4552
        %4571 = vmatprep.subr.bf16.mxu0 0
        %4572 = vmatpush1.bf16.msra.mxu0 %v4553
        %4573 = vmatprep.subr.bf16.mxu0 0
        %4574 = vmatpush1.bf16.msra.mxu0 %v4554
        %4575 = vmatprep.subr.bf16.mxu0 0
        %4576 = vmatpush1.bf16.msra.mxu0 %v4555
        %4577 = vmatprep.subr.bf16.mxu0 0
        %4578 = vmatpush1.bf16.msra.mxu0 %v4556
        %4579 = vmatprep.subr.bf16.mxu0 0
        %4580 = vmatpush1.bf16.msra.mxu0 %v4557
        %4581 = vmatprep.subr.bf16.mxu0 0
        %4582 = vmatpush1.bf16.msra.mxu0 %v4558
        %4583 = vmatprep.subr.bf16.mxu0 0
        %4584 = vmatpush1.bf16.msra.mxu0 0
        %4585 = vmatprep.subr.bf16.mxu0 0
        %4586 = vmatpush1.bf16.msra.mxu0 0
        %4587 = vmatprep.subr.bf16.mxu0 0
        %4588 = vmatpush1.bf16.msra.mxu0 0
        %4589 = vmatprep.subr.bf16.mxu0 0
        %4590 = vmatpush1.bf16.msra.mxu0 0
        %4591 = vmatprep.subr.bf16.mxu0 0
        %4592 = vmatpush1.bf16.msra.mxu0 0
        %4593 = vmatprep.subr.bf16.mxu0 0
        %4594 = vmatpush1.bf16.msra.mxu0 0
        %4595 = vmatprep.subr.bf16.mxu0 0
        %4596 = vmatpush1.bf16.msra.mxu0 0
        %4597 = vmatprep.subr.bf16.mxu0 0
        %4598 = vmatpush1.bf16.msra.mxu0 0
        %4599 = vmatprep.mubr.bf16.mxu0 0
        %4600 = vmatmul.mubr.bf16.gmra.mrb[0].mxu0 %v4507
        %v4601 = vpop.f32.mrb[0].mxu0
        %v4602 = vadd.f32 0.0, %v4601
        %v4603 = vpop.f32.mrb[0].mxu0
        %v4604 = vpop.f32.mrb[0].mxu0
        %v4605 = vadd.f32 0.0, %v4604
        %v4606 = vpop.f32.mrb[0].mxu0
        %4607 = vmatprep.mubr.bf16.mxu0 0
        %4608 = vmatmul.mubr.bf16.gmra.mrb[0].mxu0 %v4509
        %v4609 = vpop.f32.mrb[0].mxu0
        %v4610 = vadd.f32 0.0, %v4609
        %v4611 = vpop.f32.mrb[0].mxu0
        %v4612 = vpop.f32.mrb[0].mxu0
        %v4613 = vadd.f32 0.0, %v4612
        %v4614 = vpop.f32.mrb[0].mxu0
        %4615 = vmatprep.mubr.bf16.mxu0 0
        %4616 = vmatmul.mubr.bf16.gmra.mrb[0].mxu0 %v4511
        %v4617 = vpop.f32.mrb[0].mxu0
        %v4618 = vadd.f32 0.0, %v4617
        %v4619 = vpop.f32.mrb[0].mxu0
        %v4620 = vpop.f32.mrb[0].mxu0
        %v4621 = vadd.f32 0.0, %v4620
        %v4622 = vpop.f32.mrb[0].mxu0
        %4623 = vmatprep.mubr.bf16.mxu0 0
        %4624 = vmatmul.mubr.bf16.gmra.mrb[0].mxu0 %v4513
        %v4625 = vpop.f32.mrb[0].mxu0
        %v4626 = vadd.f32 0.0, %v4625
        %v4627 = vpop.f32.mrb[0].mxu0
        %v4628 = vpop.f32.mrb[0].mxu0
        %v4629 = vadd.f32 0.0, %v4628
        %v4630 = vpop.f32.mrb[0].mxu0
        %4631 = vmatprep.mubr.bf16.mxu0 0
        %4632 = vmatmul.mubr.bf16.gmra.mrb[0].mxu0 %v4512
        %v4633 = vpop.f32.mrb[0].mxu0
        %v4634 = vadd.f32 0.0, %v4633
        %v4635 = vpop.f32.mrb[0].mxu0
        %v4636 = vpop.f32.mrb[0].mxu0
        %v4637 = vpop.f32.mrb[0].mxu0
        %4638 = vdwg.mxu0
        %v4639 = vadd.f32 %v4448, %v4602
        %v4640 = vadd.f32 %v4451, %v4605
        %v4641 = vadd.f32 %v4456, %v4610
        %v4642 = vadd.f32 %v4459, %v4613
        %v4643 = vadd.f32 %v4464, %v4618
        %v4644 = vadd.f32 %v4467, %v4621
        %v4645 = vadd.f32 %v4472, %v4626
        %v4646 = vadd.f32 %v4475, %v4629
        %v4647 = vadd.f32 %v4480, %v4634
        %v4648 = vld [vmem:[%s605 + $0x88] sm:$0xe]
        %v4649 = vld [vmem:[%s605 + $0x8c] sm:$0xf]
        %v4650 = vld [vmem:[%s605 + $0x90] sm:$0xf]
        %v4651 = vld [vmem:[%s605 + $0x94] sm:$0xf]
        %v4652 = vld [vmem:[%s605 + $0x98] sm:$0xf]
        %v4653 = vld [vmem:[%s605 + $0x9c] sm:$0xf]
        %v4654 = vld [vmem:[%s605 + $0xa0] sm:$0xf]
        %v4655 = vld [vmem:[%s605 + $0xa4] sm:$0xf]
        %v4656 = vld [vmem:[%s605 + $0xa8] sm:$0x7]
        %v4657 = vld [vmem:[%s1689] sm:$0xf]
        %v4658 = vld [vmem:[%s1689 + $0x4] sm:$0xf]
        %v4659 = vld [vmem:[%s1689 + $0x8] sm:$0xf]
        %v4660 = vld [vmem:[%s1689 + $0xc] sm:$0xf]
        %v4661 = vld [vmem:[%s1689 + $0x10] sm:$0xf]
        %v4662 = vld [vmem:[%s1689 + $0x14] sm:$0xf]
        %v4663 = vld [vmem:[%s1689 + $0x18] sm:$0xf]
        %v4664 = vld [vmem:[%s1689 + $0x1c] sm:$0xf]
        %v4665 = vld [vmem:[%s1689 + $0x20] sm:$0xf]
        %v4666 = vld [vmem:[%s1689 + $0x24] sm:$0xf]
        %v4667 = vld [vmem:[%s1689 + $0x28] sm:$0xf]
        %v4668 = vld [vmem:[%s1689 + $0x2c] sm:$0xf]
        %v4669 = vld [vmem:[%s1689 + $0x30] sm:$0xf]
        %v4670 = vld [vmem:[%s1689 + $0x34] sm:$0xf]
        %v4671 = vld [vmem:[%s1689 + $0x38] sm:$0xf]
        %v4672 = vld [vmem:[%s1689 + $0x3c] sm:$0xf]
        %v4682 = vunpack.c.l.b16 %v4648
        %v4683 = vunpack.c.l.b16 %v4649
        %v4684 = vunpack.c.l.b16 %v4650
        %v4685 = vunpack.c.l.b16 %v4651
        %v4686 = vunpack.c.l.b16 %v4652
        %v4687 = vunpack.c.l.b16 %v4653
        %v4688 = vunpack.c.l.b16 %v4654
        %v4689 = vunpack.c.l.b16 %v4655
        %v4690 = vunpack.c.l.b16 %v4656
        %v4691 = vpack.c.b16 %v4683, %v4682
        %v4692 = vpack.c.b16 %v4685, %v4684
        %v4693 = vpack.c.b16 %v4687, %v4686
        %v4694 = vpack.c.b16 %v4689, %v4688
        %v4695 = vpack.c.b16 %v4690, %v4690
        %v4696 = vrot.slane %v4691, 1
        %v4697 = vrot.slane %v4692, 1
        %v4698 = vsel %vm1365, %v4696, %v4697
        %v4699 = vrot.slane %v4693, 1
        %v4700 = vsel %vm1365, %v4697, %v4699
        %v4701 = vrot.slane %v4694, 1
        %v4702 = vsel %vm1365, %v4699, %v4701
        %v4703 = vrot.slane %v4695, 1
        %v4704 = vsel %vm1365, %v4701, %v4703
        %v4726 = vunpack.c.l.b16 %v4657
        %v4727 = vunpack.c.l.b16 %v4658
        %v4728 = vunpack.c.l.b16 %v4659
        %v4729 = vunpack.c.l.b16 %v4660
        %v4730 = vunpack.c.l.b16 %v4661
        %v4731 = vunpack.c.l.b16 %v4662
        %v4732 = vunpack.c.l.b16 %v4663
        %v4733 = vunpack.c.l.b16 %v4664
        %v4734 = vunpack.c.l.b16 %v4665
        %v4735 = vunpack.c.l.b16 %v4666
        %v4736 = vunpack.c.l.b16 %v4667
        %v4737 = vunpack.c.l.b16 %v4668
        %v4738 = vunpack.c.l.b16 %v4669
        %v4739 = vunpack.c.l.b16 %v4670
        %v4740 = vunpack.c.l.b16 %v4671
        %v4741 = vunpack.c.l.b16 %v4672
        %v4742 = vpack.c.b16 %v4727, %v4726
        %v4743 = vpack.c.b16 %v4729, %v4728
        %v4744 = vpack.c.b16 %v4731, %v4730
        %v4745 = vpack.c.b16 %v4733, %v4732
        %v4746 = vpack.c.b16 %v4735, %v4734
        %v4747 = vpack.c.b16 %v4737, %v4736
        %v4748 = vpack.c.b16 %v4739, %v4738
        %v4749 = vpack.c.b16 %v4741, %v4740
        %4758 = vmatprep.subr.bf16.mxu0 0
        %4759 = vmatpush1.bf16.msra.mxu0 %v4742
        %4760 = vmatprep.subr.bf16.mxu0 0
        %4761 = vmatpush1.bf16.msra.mxu0 %v4743
        %4762 = vmatprep.subr.bf16.mxu0 0
        %4763 = vmatpush1.bf16.msra.mxu0 %v4744
        %4764 = vmatprep.subr.bf16.mxu0 0
        %4765 = vmatpush1.bf16.msra.mxu0 %v4745
        %4766 = vmatprep.subr.bf16.mxu0 0
        %4767 = vmatpush1.bf16.msra.mxu0 %v4746
        %4768 = vmatprep.subr.bf16.mxu0 0
        %4769 = vmatpush1.bf16.msra.mxu0 %v4747
        %4770 = vmatprep.subr.bf16.mxu0 0
        %4771 = vmatpush1.bf16.msra.mxu0 %v4748
        %4772 = vmatprep.subr.bf16.mxu0 0
        %4773 = vmatpush1.bf16.msra.mxu0 %v4749
        %4774 = vmatprep.subr.bf16.mxu0 0
        %4775 = vmatpush1.bf16.msra.mxu0 0
        %4776 = vmatprep.subr.bf16.mxu0 0
        %4777 = vmatpush1.bf16.msra.mxu0 0
        %4778 = vmatprep.subr.bf16.mxu0 0
        %4779 = vmatpush1.bf16.msra.mxu0 0
        %4780 = vmatprep.subr.bf16.mxu0 0
        %4781 = vmatpush1.bf16.msra.mxu0 0
        %4782 = vmatprep.subr.bf16.mxu0 0
        %4783 = vmatpush1.bf16.msra.mxu0 0
        %4784 = vmatprep.subr.bf16.mxu0 0
        %4785 = vmatpush1.bf16.msra.mxu0 0
        %4786 = vmatprep.subr.bf16.mxu0 0
        %4787 = vmatpush1.bf16.msra.mxu0 0
        %4788 = vmatprep.subr.bf16.mxu0 0
        %4789 = vmatpush1.bf16.msra.mxu0 0
        %4790 = vmatprep.mubr.bf16.mxu0 0
        %4791 = vmatmul.mubr.bf16.gmra.mrb[0].mxu0 %v4698
        %v4792 = vpop.f32.mrb[0].mxu0
        %v4793 = vadd.f32 0.0, %v4792
        %v4794 = vpop.f32.mrb[0].mxu0
        %v4795 = vpop.f32.mrb[0].mxu0
        %v4796 = vadd.f32 0.0, %v4795
        %v4797 = vpop.f32.mrb[0].mxu0
        %4798 = vmatprep.mubr.bf16.mxu0 0
        %4799 = vmatmul.mubr.bf16.gmra.mrb[0].mxu0 %v4700
        %v4800 = vpop.f32.mrb[0].mxu0
        %v4801 = vadd.f32 0.0, %v4800
        %v4802 = vpop.f32.mrb[0].mxu0
        %v4803 = vpop.f32.mrb[0].mxu0
        %v4804 = vadd.f32 0.0, %v4803
        %v4805 = vpop.f32.mrb[0].mxu0
        %4806 = vmatprep.mubr.bf16.mxu0 0
        %4807 = vmatmul.mubr.bf16.gmra.mrb[0].mxu0 %v4702
        %v4808 = vpop.f32.mrb[0].mxu0
        %v4809 = vadd.f32 0.0, %v4808
        %v4810 = vpop.f32.mrb[0].mxu0
        %v4811 = vpop.f32.mrb[0].mxu0
        %v4812 = vadd.f32 0.0, %v4811
        %v4813 = vpop.f32.mrb[0].mxu0
        %4814 = vmatprep.mubr.bf16.mxu0 0
        %4815 = vmatmul.mubr.bf16.gmra.mrb[0].mxu0 %v4704
        %v4816 = vpop.f32.mrb[0].mxu0
        %v4817 = vadd.f32 0.0, %v4816
        %v4818 = vpop.f32.mrb[0].mxu0
        %v4819 = vpop.f32.mrb[0].mxu0
        %v4820 = vadd.f32 0.0, %v4819
        %v4821 = vpop.f32.mrb[0].mxu0
        %4822 = vmatprep.mubr.bf16.mxu0 0
        %4823 = vmatmul.mubr.bf16.gmra.mrb[0].mxu0 %v4703
        %v4824 = vpop.f32.mrb[0].mxu0
        %v4825 = vadd.f32 0.0, %v4824
        %v4826 = vpop.f32.mrb[0].mxu0
        %v4827 = vpop.f32.mrb[0].mxu0
        %v4828 = vpop.f32.mrb[0].mxu0
        %4829 = vdwg.mxu0
        %v4830 = vadd.f32 %v4639, %v4793
        %v4831 = vadd.f32 %v4640, %v4796
        %v4832 = vadd.f32 %v4641, %v4801
        %v4833 = vadd.f32 %v4642, %v4804
        %v4834 = vadd.f32 %v4643, %v4809
        %v4835 = vadd.f32 %v4644, %v4812
        %v4836 = vadd.f32 %v4645, %v4817
        %v4837 = vadd.f32 %v4646, %v4820
        %v4838 = vadd.f32 %v4647, %v4825
        %v4839 = vld [vmem:[%s605 + $0xa8] sm:$0xf]
        %v4840 = vld [vmem:[%s2080] sm:$0xf]
        %v4841 = vld [vmem:[%s2080 + $0x4] sm:$0xf]
        %v4842 = vld [vmem:[%s2080 + $0x8] sm:$0xf]
        %v4843 = vld [vmem:[%s2080 + $0xc] sm:$0xf]
        %v4844 = vld [vmem:[%s2080 + $0x10] sm:$0xf]
        %v4845 = vld [vmem:[%s2080 + $0x14] sm:$0xf]
        %v4846 = vld [vmem:[%s2080 + $0x18] sm:$0xf]
        %v4847 = vld [vmem:[%s2080 + $0x1c] sm:$0xf]
        %v4848 = vld [vmem:[%s2080 + $0x20] sm:$0xf]
        %v4849 = vld [vmem:[%s2080 + $0x24] sm:$0xf]
        %v4850 = vld [vmem:[%s2080 + $0x28] sm:$0xf]
        %v4851 = vld [vmem:[%s2080 + $0x2c] sm:$0xf]
        %v4852 = vld [vmem:[%s2080 + $0x30] sm:$0xf]
        %v4853 = vld [vmem:[%s2080 + $0x34] sm:$0xf]
        %v4854 = vld [vmem:[%s2080 + $0x38] sm:$0xf]
        %v4855 = vld [vmem:[%s2080 + $0x3c] sm:$0xf]
        %v4857 = vunpack.c.l.b16 %v4839
        %v4858 = vpack.c.b16 %v4857, %v4857
        %v4860 = vshrl.u32 %v4691, 16
        %v4862 = vrot.slane %v4860, 1
        %v4863 = vshll.u32 %v4691, 16
        %v4865 = vrot.slane %v4863, 2
        %v4866 = vor.u32 %v4862, %v4865
        %v4868 = vshrl.u32 %v4692, 16
        %v4870 = vrot.slane %v4868, 1
        %v4871 = vshll.u32 %v4692, 16
        %v4873 = vrot.slane %v4871, 2
        %v4874 = vor.u32 %v4870, %v4873
        %v4875 = vsel %vm2100, %v4866, %v4874
        %v4877 = vshrl.u32 %v4693, 16
        %v4879 = vrot.slane %v4877, 1
        %v4880 = vshll.u32 %v4693, 16
        %v4882 = vrot.slane %v4880, 2
        %v4883 = vor.u32 %v4879, %v4882
        %v4884 = vsel %vm2100, %v4874, %v4883
        %v4886 = vshrl.u32 %v4694, 16
        %v4888 = vrot.slane %v4886, 1
        %v4889 = vshll.u32 %v4694, 16
        %v4891 = vrot.slane %v4889, 2
        %v4892 = vor.u32 %v4888, %v4891
        %v4893 = vsel %vm2100, %v4883, %v4892
        %v4895 = vshrl.u32 %v4858, 16
        %v4897 = vrot.slane %v4895, 1
        %v4898 = vshll.u32 %v4858, 16
        %v4900 = vrot.slane %v4898, 2
        %v4901 = vor.u32 %v4897, %v4900
        %v4902 = vsel %vm2100, %v4892, %v4901
        %v4924 = vunpack.c.l.b16 %v4840
        %v4925 = vunpack.c.l.b16 %v4841
        %v4926 = vunpack.c.l.b16 %v4842
        %v4927 = vunpack.c.l.b16 %v4843
        %v4928 = vunpack.c.l.b16 %v4844
        %v4929 = vunpack.c.l.b16 %v4845
        %v4930 = vunpack.c.l.b16 %v4846
        %v4931 = vunpack.c.l.b16 %v4847
        %v4932 = vunpack.c.l.b16 %v4848
        %v4933 = vunpack.c.l.b16 %v4849
        %v4934 = vunpack.c.l.b16 %v4850
        %v4935 = vunpack.c.l.b16 %v4851
        %v4936 = vunpack.c.l.b16 %v4852
        %v4937 = vunpack.c.l.b16 %v4853
        %v4938 = vunpack.c.l.b16 %v4854
        %v4939 = vunpack.c.l.b16 %v4855
        %v4940 = vpack.c.b16 %v4925, %v4924
        %v4941 = vpack.c.b16 %v4927, %v4926
        %v4942 = vpack.c.b16 %v4929, %v4928
        %v4943 = vpack.c.b16 %v4931, %v4930
        %v4944 = vpack.c.b16 %v4933, %v4932
        %v4945 = vpack.c.b16 %v4935, %v4934
        %v4946 = vpack.c.b16 %v4937, %v4936
        %v4947 = vpack.c.b16 %v4939, %v4938
        %4956 = vmatprep.subr.bf16.mxu0 0
        %4957 = vmatpush1.bf16.msra.mxu0 %v4940
        %4958 = vmatprep.subr.bf16.mxu0 0
        %4959 = vmatpush1.bf16.msra.mxu0 %v4941
        %4960 = vmatprep.subr.bf16.mxu0 0
        %4961 = vmatpush1.bf16.msra.mxu0 %v4942
        %4962 = vmatprep.subr.bf16.mxu0 0
        %4963 = vmatpush1.bf16.msra.mxu0 %v4943
        %4964 = vmatprep.subr.bf16.mxu0 0
        %4965 = vmatpush1.bf16.msra.mxu0 %v4944
        %4966 = vmatprep.subr.bf16.mxu0 0
        %4967 = vmatpush1.bf16.msra.mxu0 %v4945
        %4968 = vmatprep.subr.bf16.mxu0 0
        %4969 = vmatpush1.bf16.msra.mxu0 %v4946
        %4970 = vmatprep.subr.bf16.mxu0 0
        %4971 = vmatpush1.bf16.msra.mxu0 %v4947
        %4972 = vmatprep.subr.bf16.mxu0 0
        %4973 = vmatpush1.bf16.msra.mxu0 0
        %4974 = vmatprep.subr.bf16.mxu0 0
        %4975 = vmatpush1.bf16.msra.mxu0 0
        %4976 = vmatprep.subr.bf16.mxu0 0
        %4977 = vmatpush1.bf16.msra.mxu0 0
        %4978 = vmatprep.subr.bf16.mxu0 0
        %4979 = vmatpush1.bf16.msra.mxu0 0
        %4980 = vmatprep.subr.bf16.mxu0 0
        %4981 = vmatpush1.bf16.msra.mxu0 0
        %4982 = vmatprep.subr.bf16.mxu0 0
        %4983 = vmatpush1.bf16.msra.mxu0 0
        %4984 = vmatprep.subr.bf16.mxu0 0
        %4985 = vmatpush1.bf16.msra.mxu0 0
        %4986 = vmatprep.subr.bf16.mxu0 0
        %4987 = vmatpush1.bf16.msra.mxu0 0
        %4988 = vmatprep.mubr.bf16.mxu0 0
        %4989 = vmatmul.mubr.bf16.gmra.mrb[0].mxu0 %v4875
        %v4990 = vpop.f32.mrb[0].mxu0
        %v4991 = vadd.f32 0.0, %v4990
        %v4992 = vpop.f32.mrb[0].mxu0
        %v4993 = vpop.f32.mrb[0].mxu0
        %v4994 = vadd.f32 0.0, %v4993
        %v4995 = vpop.f32.mrb[0].mxu0
        %4996 = vmatprep.mubr.bf16.mxu0 0
        %4997 = vmatmul.mubr.bf16.gmra.mrb[0].mxu0 %v4884
        %v4998 = vpop.f32.mrb[0].mxu0
        %v4999 = vadd.f32 0.0, %v4998
        %v5000 = vpop.f32.mrb[0].mxu0
        %v5001 = vpop.f32.mrb[0].mxu0
        %v5002 = vadd.f32 0.0, %v5001
        %v5003 = vpop.f32.mrb[0].mxu0
        %5004 = vmatprep.mubr.bf16.mxu0 0
        %5005 = vmatmul.mubr.bf16.gmra.mrb[0].mxu0 %v4893
        %v5006 = vpop.f32.mrb[0].mxu0
        %v5007 = vadd.f32 0.0, %v5006
        %v5008 = vpop.f32.mrb[0].mxu0
        %v5009 = vpop.f32.mrb[0].mxu0
        %v5010 = vadd.f32 0.0, %v5009
        %v5011 = vpop.f32.mrb[0].mxu0
        %5012 = vmatprep.mubr.bf16.mxu0 0
        %5013 = vmatmul.mubr.bf16.gmra.mrb[0].mxu0 %v4902
        %v5014 = vpop.f32.mrb[0].mxu0
        %v5015 = vadd.f32 0.0, %v5014
        %v5016 = vpop.f32.mrb[0].mxu0
        %v5017 = vpop.f32.mrb[0].mxu0
        %v5018 = vadd.f32 0.0, %v5017
        %v5019 = vpop.f32.mrb[0].mxu0
        %5020 = vmatprep.mubr.bf16.mxu0 0
        %5021 = vmatmul.mubr.bf16.gmra.mrb[0].mxu0 %v4901
        %v5022 = vpop.f32.mrb[0].mxu0
        %v5023 = vadd.f32 0.0, %v5022
        %v5024 = vpop.f32.mrb[0].mxu0
        %v5025 = vpop.f32.mrb[0].mxu0
        %v5026 = vpop.f32.mrb[0].mxu0
        %5027 = vdwg.mxu0
        %v5028 = vadd.f32 %v4830, %v4991
        %v5029 = vadd.f32 %v4831, %v4994
        %v5030 = vadd.f32 %v4832, %v4999
        %v5031 = vadd.f32 %v4833, %v5002
        %v5032 = vadd.f32 %v4834, %v5007
        %v5033 = vadd.f32 %v4835, %v5010
        %v5034 = vadd.f32 %v4836, %v5015
        %v5035 = vadd.f32 %v4837, %v5018
        %v5036 = vadd.f32 %v4838, %v5023
        %v5037 = vld [vmem:[%s605 + $0x88] sm:$0xc]
        %v5038 = vld [vmem:[%s2511] sm:$0xf]
        %v5039 = vld [vmem:[%s2511 + $0x4] sm:$0xf]
        %v5040 = vld [vmem:[%s2511 + $0x8] sm:$0xf]
        %v5041 = vld [vmem:[%s2511 + $0xc] sm:$0xf]
        %v5042 = vld [vmem:[%s2511 + $0x10] sm:$0xf]
        %v5043 = vld [vmem:[%s2511 + $0x14] sm:$0xf]
        %v5044 = vld [vmem:[%s2511 + $0x18] sm:$0xf]
        %v5045 = vld [vmem:[%s2511 + $0x1c] sm:$0xf]
        %v5046 = vld [vmem:[%s2511 + $0x20] sm:$0xf]
        %v5047 = vld [vmem:[%s2511 + $0x24] sm:$0xf]
        %v5048 = vld [vmem:[%s2511 + $0x28] sm:$0xf]
        %v5049 = vld [vmem:[%s2511 + $0x2c] sm:$0xf]
        %v5050 = vld [vmem:[%s2511 + $0x30] sm:$0xf]
        %v5051 = vld [vmem:[%s2511 + $0x34] sm:$0xf]
        %v5052 = vld [vmem:[%s2511 + $0x38] sm:$0xf]
        %v5053 = vld [vmem:[%s2511 + $0x3c] sm:$0xf]
        %v5055 = vunpack.c.l.b16 %v5037
        %v5056 = vpack.c.b16 %v4683, %v5055
        %v5057 = vrot.slane %v5056, 2
        %v5058 = vrot.slane %v4692, 2
        %v5059 = vsel %vm2531, %v5057, %v5058
        %v5060 = vrot.slane %v4693, 2
        %v5061 = vsel %vm2531, %v5058, %v5060
        %v5062 = vrot.slane %v4694, 2
        %v5063 = vsel %vm2531, %v5060, %v5062
        %v5064 = vrot.slane %v4858, 2
        %v5065 = vsel %vm2531, %v5062, %v5064
        %v5087 = vunpack.c.l.b16 %v5038
        %v5088 = vunpack.c.l.b16 %v5039
        %v5089 = vunpack.c.l.b16 %v5040
        %v5090 = vunpack.c.l.b16 %v5041
        %v5091 = vunpack.c.l.b16 %v5042
        %v5092 = vunpack.c.l.b16 %v5043
        %v5093 = vunpack.c.l.b16 %v5044
        %v5094 = vunpack.c.l.b16 %v5045
        %v5095 = vunpack.c.l.b16 %v5046
        %v5096 = vunpack.c.l.b16 %v5047
        %v5097 = vunpack.c.l.b16 %v5048
        %v5098 = vunpack.c.l.b16 %v5049
        %v5099 = vunpack.c.l.b16 %v5050
        %v5100 = vunpack.c.l.b16 %v5051
        %v5101 = vunpack.c.l.b16 %v5052
        %v5102 = vunpack.c.l.b16 %v5053
        %v5103 = vpack.c.b16 %v5088, %v5087
        %v5104 = vpack.c.b16 %v5090, %v5089
        %v5105 = vpack.c.b16 %v5092, %v5091
        %v5106 = vpack.c.b16 %v5094, %v5093
        %v5107 = vpack.c.b16 %v5096, %v5095
        %v5108 = vpack.c.b16 %v5098, %v5097
        %v5109 = vpack.c.b16 %v5100, %v5099
        %v5110 = vpack.c.b16 %v5102, %v5101
        %5119 = vmatprep.subr.bf16.mxu0 0
        %5120 = vmatpush1.bf16.msra.mxu0 %v5103
        %5121 = vmatprep.subr.bf16.mxu0 0
        %5122 = vmatpush1.bf16.msra.mxu0 %v5104
        %5123 = vmatprep.subr.bf16.mxu0 0
        %5124 = vmatpush1.bf16.msra.mxu0 %v5105
        %5125 = vmatprep.subr.bf16.mxu0 0
        %5126 = vmatpush1.bf16.msra.mxu0 %v5106
        %5127 = vmatprep.subr.bf16.mxu0 0
        %5128 = vmatpush1.bf16.msra.mxu0 %v5107
        %5129 = vmatprep.subr.bf16.mxu0 0
        %5130 = vmatpush1.bf16.msra.mxu0 %v5108
        %5131 = vmatprep.subr.bf16.mxu0 0
        %5132 = vmatpush1.bf16.msra.mxu0 %v5109
        %5133 = vmatprep.subr.bf16.mxu0 0
        %5134 = vmatpush1.bf16.msra.mxu0 %v5110
        %5135 = vmatprep.subr.bf16.mxu0 0
        %5136 = vmatpush1.bf16.msra.mxu0 0
        %5137 = vmatprep.subr.bf16.mxu0 0
        %5138 = vmatpush1.bf16.msra.mxu0 0
        %5139 = vmatprep.subr.bf16.mxu0 0
        %5140 = vmatpush1.bf16.msra.mxu0 0
        %5141 = vmatprep.subr.bf16.mxu0 0
        %5142 = vmatpush1.bf16.msra.mxu0 0
        %5143 = vmatprep.subr.bf16.mxu0 0
        %5144 = vmatpush1.bf16.msra.mxu0 0
        %5145 = vmatprep.subr.bf16.mxu0 0
        %5146 = vmatpush1.bf16.msra.mxu0 0
        %5147 = vmatprep.subr.bf16.mxu0 0
        %5148 = vmatpush1.bf16.msra.mxu0 0
        %5149 = vmatprep.subr.bf16.mxu0 0
        %5150 = vmatpush1.bf16.msra.mxu0 0
        %5151 = vmatprep.mubr.bf16.mxu0 0
        %5152 = vmatmul.mubr.bf16.gmra.mrb[0].mxu0 %v5059
        %v5153 = vpop.f32.mrb[0].mxu0
        %v5154 = vadd.f32 0.0, %v5153
        %v5155 = vpop.f32.mrb[0].mxu0
        %v5156 = vpop.f32.mrb[0].mxu0
        %v5157 = vadd.f32 0.0, %v5156
        %v5158 = vpop.f32.mrb[0].mxu0
        %5159 = vmatprep.mubr.bf16.mxu0 0
        %5160 = vmatmul.mubr.bf16.gmra.mrb[0].mxu0 %v5061
        %v5161 = vpop.f32.mrb[0].mxu0
        %v5162 = vadd.f32 0.0, %v5161
        %v5163 = vpop.f32.mrb[0].mxu0
        %v5164 = vpop.f32.mrb[0].mxu0
        %v5165 = vadd.f32 0.0, %v5164
        %v5166 = vpop.f32.mrb[0].mxu0
        %5167 = vmatprep.mubr.bf16.mxu0 0
        %5168 = vmatmul.mubr.bf16.gmra.mrb[0].mxu0 %v5063
        %v5169 = vpop.f32.mrb[0].mxu0
        %v5170 = vadd.f32 0.0, %v5169
        %v5171 = vpop.f32.mrb[0].mxu0
        %v5172 = vpop.f32.mrb[0].mxu0
        %v5173 = vadd.f32 0.0, %v5172
        %v5174 = vpop.f32.mrb[0].mxu0
        %5175 = vmatprep.mubr.bf16.mxu0 0
        %5176 = vmatmul.mubr.bf16.gmra.mrb[0].mxu0 %v5065
        %v5177 = vpop.f32.mrb[0].mxu0
        %v5178 = vadd.f32 0.0, %v5177
        %v5179 = vpop.f32.mrb[0].mxu0
        %v5180 = vpop.f32.mrb[0].mxu0
        %v5181 = vadd.f32 0.0, %v5180
        %v5182 = vpop.f32.mrb[0].mxu0
        %5183 = vmatprep.mubr.bf16.mxu0 0
        %5184 = vmatmul.mubr.bf16.gmra.mrb[0].mxu0 %v5064
        %v5185 = vpop.f32.mrb[0].mxu0
        %v5186 = vadd.f32 0.0, %v5185
        %v5187 = vpop.f32.mrb[0].mxu0
        %v5188 = vpop.f32.mrb[0].mxu0
        %v5189 = vpop.f32.mrb[0].mxu0
        %5190 = vdwg.mxu0
        %v5191 = vadd.f32 %v5028, %v5154
        %v5192 = vadd.f32 %v5029, %v5157
        %v5193 = vadd.f32 %v5030, %v5162
        %v5194 = vadd.f32 %v5031, %v5165
        %v5195 = vadd.f32 %v5032, %v5170
        %v5196 = vadd.f32 %v5033, %v5173
        %v5197 = vadd.f32 %v5034, %v5178
        %v5198 = vadd.f32 %v5035, %v5181
        %v5199 = vadd.f32 %v5036, %v5186
        %v5200 = vld [vmem:[%s605 + $0x90] sm:$0xc]
        %v5201 = vld [vmem:[%s605 + $0x94] sm:$0xf]
        %v5202 = vld [vmem:[%s605 + $0x98] sm:$0xf]
        %v5203 = vld [vmem:[%s605 + $0x9c] sm:$0xf]
        %v5204 = vld [vmem:[%s605 + $0xa0] sm:$0xf]
        %v5205 = vld [vmem:[%s605 + $0xa4] sm:$0xf]
        %v5206 = vld [vmem:[%s605 + $0xa8] sm:$0xf]
        %v5207 = vld [vmem:[%s605 + $0xac] sm:$0xf]
        %v5208 = vld [vmem:[%s605 + $0xb0] sm:$0xf]
        %v5209 = vld [vmem:[%s2855] sm:$0xf]
        %v5210 = vld [vmem:[%s2855 + $0x4] sm:$0xf]
        %v5211 = vld [vmem:[%s2855 + $0x8] sm:$0xf]
        %v5212 = vld [vmem:[%s2855 + $0xc] sm:$0xf]
        %v5213 = vld [vmem:[%s2855 + $0x10] sm:$0xf]
        %v5214 = vld [vmem:[%s2855 + $0x14] sm:$0xf]
        %v5215 = vld [vmem:[%s2855 + $0x18] sm:$0xf]
        %v5216 = vld [vmem:[%s2855 + $0x1c] sm:$0xf]
        %v5217 = vld [vmem:[%s2855 + $0x20] sm:$0xf]
        %v5218 = vld [vmem:[%s2855 + $0x24] sm:$0xf]
        %v5219 = vld [vmem:[%s2855 + $0x28] sm:$0xf]
        %v5220 = vld [vmem:[%s2855 + $0x2c] sm:$0xf]
        %v5221 = vld [vmem:[%s2855 + $0x30] sm:$0xf]
        %v5222 = vld [vmem:[%s2855 + $0x34] sm:$0xf]
        %v5223 = vld [vmem:[%s2855 + $0x38] sm:$0xf]
        %v5224 = vld [vmem:[%s2855 + $0x3c] sm:$0xf]
        %v5234 = vunpack.c.l.b16 %v5200
        %v5235 = vunpack.c.l.b16 %v5201
        %v5236 = vunpack.c.l.b16 %v5202
        %v5237 = vunpack.c.l.b16 %v5203
        %v5238 = vunpack.c.l.b16 %v5204
        %v5239 = vunpack.c.l.b16 %v5205
        %v5240 = vunpack.c.l.b16 %v5206
        %v5241 = vunpack.c.l.b16 %v5207
        %v5242 = vunpack.c.l.b16 %v5208
        %v5243 = vpack.c.b16 %v5235, %v5234
        %v5244 = vpack.c.b16 %v5237, %v5236
        %v5245 = vpack.c.b16 %v5239, %v5238
        %v5246 = vpack.c.b16 %v5241, %v5240
        %v5247 = vpack.c.b16 %v5242, %v5242
        %v5248 = vrot.slane %v5243, 2
        %v5249 = vrot.slane %v5244, 2
        %v5250 = vsel %vm2531, %v5248, %v5249
        %v5251 = vrot.slane %v5245, 2
        %v5252 = vsel %vm2531, %v5249, %v5251
        %v5253 = vrot.slane %v5246, 2
        %v5254 = vsel %vm2531, %v5251, %v5253
        %v5255 = vrot.slane %v5247, 2
        %v5256 = vsel %vm2531, %v5253, %v5255
        %v5278 = vunpack.c.l.b16 %v5209
        %v5279 = vunpack.c.l.b16 %v5210
        %v5280 = vunpack.c.l.b16 %v5211
        %v5281 = vunpack.c.l.b16 %v5212
        %v5282 = vunpack.c.l.b16 %v5213
        %v5283 = vunpack.c.l.b16 %v5214
        %v5284 = vunpack.c.l.b16 %v5215
        %v5285 = vunpack.c.l.b16 %v5216
        %v5286 = vunpack.c.l.b16 %v5217
        %v5287 = vunpack.c.l.b16 %v5218
        %v5288 = vunpack.c.l.b16 %v5219
        %v5289 = vunpack.c.l.b16 %v5220
        %v5290 = vunpack.c.l.b16 %v5221
        %v5291 = vunpack.c.l.b16 %v5222
        %v5292 = vunpack.c.l.b16 %v5223
        %v5293 = vunpack.c.l.b16 %v5224
        %v5294 = vpack.c.b16 %v5279, %v5278
        %v5295 = vpack.c.b16 %v5281, %v5280
        %v5296 = vpack.c.b16 %v5283, %v5282
        %v5297 = vpack.c.b16 %v5285, %v5284
        %v5298 = vpack.c.b16 %v5287, %v5286
        %v5299 = vpack.c.b16 %v5289, %v5288
        %v5300 = vpack.c.b16 %v5291, %v5290
        %v5301 = vpack.c.b16 %v5293, %v5292
        %5310 = vmatprep.subr.bf16.mxu0 0
        %5311 = vmatpush1.bf16.msra.mxu0 %v5294
        %5312 = vmatprep.subr.bf16.mxu0 0
        %5313 = vmatpush1.bf16.msra.mxu0 %v5295
        %5314 = vmatprep.subr.bf16.mxu0 0
        %5315 = vmatpush1.bf16.msra.mxu0 %v5296
        %5316 = vmatprep.subr.bf16.mxu0 0
        %5317 = vmatpush1.bf16.msra.mxu0 %v5297
        %5318 = vmatprep.subr.bf16.mxu0 0
        %5319 = vmatpush1.bf16.msra.mxu0 %v5298
        %5320 = vmatprep.subr.bf16.mxu0 0
        %5321 = vmatpush1.bf16.msra.mxu0 %v5299
        %5322 = vmatprep.subr.bf16.mxu0 0
        %5323 = vmatpush1.bf16.msra.mxu0 %v5300
        %5324 = vmatprep.subr.bf16.mxu0 0
        %5325 = vmatpush1.bf16.msra.mxu0 %v5301
        %5326 = vmatprep.subr.bf16.mxu0 0
        %5327 = vmatpush1.bf16.msra.mxu0 0
        %5328 = vmatprep.subr.bf16.mxu0 0
        %5329 = vmatpush1.bf16.msra.mxu0 0
        %5330 = vmatprep.subr.bf16.mxu0 0
        %5331 = vmatpush1.bf16.msra.mxu0 0
        %5332 = vmatprep.subr.bf16.mxu0 0
        %5333 = vmatpush1.bf16.msra.mxu0 0
        %5334 = vmatprep.subr.bf16.mxu0 0
        %5335 = vmatpush1.bf16.msra.mxu0 0
        %5336 = vmatprep.subr.bf16.mxu0 0
        %5337 = vmatpush1.bf16.msra.mxu0 0
        %5338 = vmatprep.subr.bf16.mxu0 0
        %5339 = vmatpush1.bf16.msra.mxu0 0
        %5340 = vmatprep.subr.bf16.mxu0 0
        %5341 = vmatpush1.bf16.msra.mxu0 0
        %5342 = vmatprep.mubr.bf16.mxu0 0
        %5343 = vmatmul.mubr.bf16.gmra.mrb[0].mxu0 %v5250
        %v5344 = vpop.f32.mrb[0].mxu0
        %v5345 = vadd.f32 0.0, %v5344
        %v5346 = vpop.f32.mrb[0].mxu0
        %v5347 = vpop.f32.mrb[0].mxu0
        %v5348 = vadd.f32 0.0, %v5347
        %v5349 = vpop.f32.mrb[0].mxu0
        %5350 = vmatprep.mubr.bf16.mxu0 0
        %5351 = vmatmul.mubr.bf16.gmra.mrb[0].mxu0 %v5252
        %v5352 = vpop.f32.mrb[0].mxu0
        %v5353 = vadd.f32 0.0, %v5352
        %v5354 = vpop.f32.mrb[0].mxu0
        %v5355 = vpop.f32.mrb[0].mxu0
        %v5356 = vadd.f32 0.0, %v5355
        %v5357 = vpop.f32.mrb[0].mxu0
        %5358 = vmatprep.mubr.bf16.mxu0 0
        %5359 = vmatmul.mubr.bf16.gmra.mrb[0].mxu0 %v5254
        %v5360 = vpop.f32.mrb[0].mxu0
        %v5361 = vadd.f32 0.0, %v5360
        %v5362 = vpop.f32.mrb[0].mxu0
        %v5363 = vpop.f32.mrb[0].mxu0
        %v5364 = vadd.f32 0.0, %v5363
        %v5365 = vpop.f32.mrb[0].mxu0
        %5366 = vmatprep.mubr.bf16.mxu0 0
        %5367 = vmatmul.mubr.bf16.gmra.mrb[0].mxu0 %v5256
        %v5368 = vpop.f32.mrb[0].mxu0
        %v5369 = vadd.f32 0.0, %v5368
        %v5370 = vpop.f32.mrb[0].mxu0
        %v5371 = vpop.f32.mrb[0].mxu0
        %v5372 = vadd.f32 0.0, %v5371
        %v5373 = vpop.f32.mrb[0].mxu0
        %5374 = vmatprep.mubr.bf16.mxu0 0
        %5375 = vmatmul.mubr.bf16.gmra.mrb[0].mxu0 %v5255
        %v5376 = vpop.f32.mrb[0].mxu0
        %v5377 = vadd.f32 0.0, %v5376
        %v5378 = vpop.f32.mrb[0].mxu0
        %v5379 = vpop.f32.mrb[0].mxu0
        %v5380 = vpop.f32.mrb[0].mxu0
        %5381 = vdwg.mxu0
        %v5382 = vadd.f32 %v5191, %v5345
        %v5383 = vadd.f32 %v5192, %v5348
        %v5384 = vadd.f32 %v5193, %v5353
        %v5385 = vadd.f32 %v5194, %v5356
        %v5386 = vadd.f32 %v5195, %v5361
        %v5387 = vadd.f32 %v5196, %v5364
        %v5388 = vadd.f32 %v5197, %v5369
        %v5389 = vadd.f32 %v5198, %v5372
        %v5390 = vadd.f32 %v5199, %v5377
        %v5391 = vld [vmem:[%s605 + $0x90] sm:$0xc]
        %v5392 = vld [vmem:[%s605 + $0x94] sm:$0xf]
        %v5393 = vld [vmem:[%s605 + $0x98] sm:$0xf]
        %v5394 = vld [vmem:[%s605 + $0x9c] sm:$0xf]
        %v5395 = vld [vmem:[%s605 + $0xa0] sm:$0xf]
        %v5396 = vld [vmem:[%s605 + $0xa4] sm:$0xf]
        %v5397 = vld [vmem:[%s605 + $0xa8] sm:$0xf]
        %v5398 = vld [vmem:[%s605 + $0xac] sm:$0xf]
        %v5399 = vld [vmem:[%s605 + $0xb0] sm:$0xf]
        %v5400 = vld [vmem:[%s605 + $0xb4] sm:$0x1]
        %v5401 = vld [vmem:[%s3246] sm:$0xf]
        %v5402 = vld [vmem:[%s3246 + $0x4] sm:$0xf]
        %v5403 = vld [vmem:[%s3246 + $0x8] sm:$0xf]
        %v5404 = vld [vmem:[%s3246 + $0xc] sm:$0xf]
        %v5405 = vld [vmem:[%s3246 + $0x10] sm:$0xf]
        %v5406 = vld [vmem:[%s3246 + $0x14] sm:$0xf]
        %v5407 = vld [vmem:[%s3246 + $0x18] sm:$0xf]
        %v5408 = vld [vmem:[%s3246 + $0x1c] sm:$0xf]
        %v5409 = vld [vmem:[%s3246 + $0x20] sm:$0xf]
        %v5410 = vld [vmem:[%s3246 + $0x24] sm:$0xf]
        %v5411 = vld [vmem:[%s3246 + $0x28] sm:$0xf]
        %v5412 = vld [vmem:[%s3246 + $0x2c] sm:$0xf]
        %v5413 = vld [vmem:[%s3246 + $0x30] sm:$0xf]
        %v5414 = vld [vmem:[%s3246 + $0x34] sm:$0xf]
        %v5415 = vld [vmem:[%s3246 + $0x38] sm:$0xf]
        %v5416 = vld [vmem:[%s3246 + $0x3c] sm:$0xf]
        %v5427 = vunpack.c.l.b16 %v5391
        %v5428 = vunpack.c.l.b16 %v5392
        %v5429 = vunpack.c.l.b16 %v5393
        %v5430 = vunpack.c.l.b16 %v5394
        %v5431 = vunpack.c.l.b16 %v5395
        %v5432 = vunpack.c.l.b16 %v5396
        %v5433 = vunpack.c.l.b16 %v5397
        %v5434 = vunpack.c.l.b16 %v5398
        %v5435 = vunpack.c.l.b16 %v5399
        %v5436 = vunpack.c.l.b16 %v5400
        %v5437 = vpack.c.b16 %v5428, %v5427
        %v5438 = vpack.c.b16 %v5430, %v5429
        %v5439 = vpack.c.b16 %v5432, %v5431
        %v5440 = vpack.c.b16 %v5434, %v5433
        %v5441 = vpack.c.b16 %v5436, %v5435
        %v5443 = vshrl.u32 %v5437, 16
        %v5445 = vrot.slane %v5443, 2
        %v5446 = vshll.u32 %v5437, 16
        %v5448 = vrot.slane %v5446, 3
        %v5449 = vor.u32 %v5445, %v5448
        %v5451 = vshrl.u32 %v5438, 16
        %v5453 = vrot.slane %v5451, 2
        %v5454 = vshll.u32 %v5438, 16
        %v5456 = vrot.slane %v5454, 3
        %v5457 = vor.u32 %v5453, %v5456
        %v5458 = vsel %vm3266, %v5449, %v5457
        %v5460 = vshrl.u32 %v5439, 16
        %v5462 = vrot.slane %v5460, 2
        %v5463 = vshll.u32 %v5439, 16
        %v5465 = vrot.slane %v5463, 3
        %v5466 = vor.u32 %v5462, %v5465
        %v5467 = vsel %vm3266, %v5457, %v5466
        %v5469 = vshrl.u32 %v5440, 16
        %v5471 = vrot.slane %v5469, 2
        %v5472 = vshll.u32 %v5440, 16
        %v5474 = vrot.slane %v5472, 3
        %v5475 = vor.u32 %v5471, %v5474
        %v5476 = vsel %vm3266, %v5466, %v5475
        %v5478 = vshrl.u32 %v5441, 16
        %v5480 = vrot.slane %v5478, 2
        %v5481 = vshll.u32 %v5441, 16
        %v5483 = vrot.slane %v5481, 3
        %v5484 = vor.u32 %v5480, %v5483
        %v5485 = vsel %vm3266, %v5475, %v5484
        %v5507 = vunpack.c.l.b16 %v5401
        %v5508 = vunpack.c.l.b16 %v5402
        %v5509 = vunpack.c.l.b16 %v5403
        %v5510 = vunpack.c.l.b16 %v5404
        %v5511 = vunpack.c.l.b16 %v5405
        %v5512 = vunpack.c.l.b16 %v5406
        %v5513 = vunpack.c.l.b16 %v5407
        %v5514 = vunpack.c.l.b16 %v5408
        %v5515 = vunpack.c.l.b16 %v5409
        %v5516 = vunpack.c.l.b16 %v5410
        %v5517 = vunpack.c.l.b16 %v5411
        %v5518 = vunpack.c.l.b16 %v5412
        %v5519 = vunpack.c.l.b16 %v5413
        %v5520 = vunpack.c.l.b16 %v5414
        %v5521 = vunpack.c.l.b16 %v5415
        %v5522 = vunpack.c.l.b16 %v5416
        %v5523 = vpack.c.b16 %v5508, %v5507
        %v5524 = vpack.c.b16 %v5510, %v5509
        %v5525 = vpack.c.b16 %v5512, %v5511
        %v5526 = vpack.c.b16 %v5514, %v5513
        %v5527 = vpack.c.b16 %v5516, %v5515
        %v5528 = vpack.c.b16 %v5518, %v5517
        %v5529 = vpack.c.b16 %v5520, %v5519
        %v5530 = vpack.c.b16 %v5522, %v5521
        %5539 = vmatprep.subr.bf16.mxu0 0
        %5540 = vmatpush1.bf16.msra.mxu0 %v5523
        %5541 = vmatprep.subr.bf16.mxu0 0
        %5542 = vmatpush1.bf16.msra.mxu0 %v5524
        %5543 = vmatprep.subr.bf16.mxu0 0
        %5544 = vmatpush1.bf16.msra.mxu0 %v5525
        %5545 = vmatprep.subr.bf16.mxu0 0
        %5546 = vmatpush1.bf16.msra.mxu0 %v5526
        %5547 = vmatprep.subr.bf16.mxu0 0
        %5548 = vmatpush1.bf16.msra.mxu0 %v5527
        %5549 = vmatprep.subr.bf16.mxu0 0
        %5550 = vmatpush1.bf16.msra.mxu0 %v5528
        %5551 = vmatprep.subr.bf16.mxu0 0
        %5552 = vmatpush1.bf16.msra.mxu0 %v5529
        %5553 = vmatprep.subr.bf16.mxu0 0
        %5554 = vmatpush1.bf16.msra.mxu0 %v5530
        %5555 = vmatprep.subr.bf16.mxu0 0
        %5556 = vmatpush1.bf16.msra.mxu0 0
        %5557 = vmatprep.subr.bf16.mxu0 0
        %5558 = vmatpush1.bf16.msra.mxu0 0
        %5559 = vmatprep.subr.bf16.mxu0 0
        %5560 = vmatpush1.bf16.msra.mxu0 0
        %5561 = vmatprep.subr.bf16.mxu0 0
        %5562 = vmatpush1.bf16.msra.mxu0 0
        %5563 = vmatprep.subr.bf16.mxu0 0
        %5564 = vmatpush1.bf16.msra.mxu0 0
        %5565 = vmatprep.subr.bf16.mxu0 0
        %5566 = vmatpush1.bf16.msra.mxu0 0
        %5567 = vmatprep.subr.bf16.mxu0 0
        %5568 = vmatpush1.bf16.msra.mxu0 0
        %5569 = vmatprep.subr.bf16.mxu0 0
        %5570 = vmatpush1.bf16.msra.mxu0 0
        %5571 = vmatprep.mubr.bf16.mxu0 0
        %5572 = vmatmul.mubr.bf16.gmra.mrb[0].mxu0 %v5458
        %v5573 = vpop.f32.mrb[0].mxu0
        %v5574 = vadd.f32 0.0, %v5573
        %v5575 = vpop.f32.mrb[0].mxu0
        %v5576 = vpop.f32.mrb[0].mxu0
        %v5577 = vadd.f32 0.0, %v5576
        %v5578 = vpop.f32.mrb[0].mxu0
        %5579 = vmatprep.mubr.bf16.mxu0 0
        %5580 = vmatmul.mubr.bf16.gmra.mrb[0].mxu0 %v5467
        %v5581 = vpop.f32.mrb[0].mxu0
        %v5582 = vadd.f32 0.0, %v5581
        %v5583 = vpop.f32.mrb[0].mxu0
        %v5584 = vpop.f32.mrb[0].mxu0
        %v5585 = vadd.f32 0.0, %v5584
        %v5586 = vpop.f32.mrb[0].mxu0
        %5587 = vmatprep.mubr.bf16.mxu0 0
        %5588 = vmatmul.mubr.bf16.gmra.mrb[0].mxu0 %v5476
        %v5589 = vpop.f32.mrb[0].mxu0
        %v5590 = vadd.f32 0.0, %v5589
        %v5591 = vpop.f32.mrb[0].mxu0
        %v5592 = vpop.f32.mrb[0].mxu0
        %v5593 = vadd.f32 0.0, %v5592
        %v5594 = vpop.f32.mrb[0].mxu0
        %5595 = vmatprep.mubr.bf16.mxu0 0
        %5596 = vmatmul.mubr.bf16.gmra.mrb[0].mxu0 %v5485
        %v5597 = vpop.f32.mrb[0].mxu0
        %v5598 = vadd.f32 0.0, %v5597
        %v5599 = vpop.f32.mrb[0].mxu0
        %v5600 = vpop.f32.mrb[0].mxu0
        %v5601 = vadd.f32 0.0, %v5600
        %v5602 = vpop.f32.mrb[0].mxu0
        %5603 = vmatprep.mubr.bf16.mxu0 0
        %5604 = vmatmul.mubr.bf16.gmra.mrb[0].mxu0 %v5484
        %v5605 = vpop.f32.mrb[0].mxu0
        %v5606 = vadd.f32 0.0, %v5605
        %v5607 = vpop.f32.mrb[0].mxu0
        %v5608 = vpop.f32.mrb[0].mxu0
        %v5609 = vpop.f32.mrb[0].mxu0
        %5610 = vdwg.mxu0
        %v5611 = vadd.f32 %v5382, %v5574
        %v5612 = vadd.f32 %v5383, %v5577
        %v5613 = vadd.f32 %v5384, %v5582
        %v5614 = vadd.f32 %v5385, %v5585
        %v5615 = vadd.f32 %v5386, %v5590
        %v5616 = vadd.f32 %v5387, %v5593
        %v5617 = vadd.f32 %v5388, %v5598
        %v5618 = vadd.f32 %v5389, %v5601
        %v5619 = vadd.f32 %v5390, %v5606
        %v5620 = vld [vmem:[%s605 + $0x90] sm:$0x8]
        %v5621 = vld [vmem:[%s3677] sm:$0xf]
        %v5622 = vld [vmem:[%s3677 + $0x4] sm:$0xf]
        %v5623 = vld [vmem:[%s3677 + $0x8] sm:$0xf]
        %v5624 = vld [vmem:[%s3677 + $0xc] sm:$0xf]
        %v5625 = vld [vmem:[%s3677 + $0x10] sm:$0xf]
        %v5626 = vld [vmem:[%s3677 + $0x14] sm:$0xf]
        %v5627 = vld [vmem:[%s3677 + $0x18] sm:$0xf]
        %v5628 = vld [vmem:[%s3677 + $0x1c] sm:$0xf]
        %v5629 = vld [vmem:[%s3677 + $0x20] sm:$0xf]
        %v5630 = vld [vmem:[%s3677 + $0x24] sm:$0xf]
        %v5631 = vld [vmem:[%s3677 + $0x28] sm:$0xf]
        %v5632 = vld [vmem:[%s3677 + $0x2c] sm:$0xf]
        %v5633 = vld [vmem:[%s3677 + $0x30] sm:$0xf]
        %v5634 = vld [vmem:[%s3677 + $0x34] sm:$0xf]
        %v5635 = vld [vmem:[%s3677 + $0x38] sm:$0xf]
        %v5636 = vld [vmem:[%s3677 + $0x3c] sm:$0xf]
        %v5638 = vunpack.c.l.b16 %v5620
        %v5639 = vpack.c.b16 %v5428, %v5638
        %v5640 = vrot.slane %v5639, 3
        %v5641 = vrot.slane %v5438, 3
        %v5642 = vsel %vm3697, %v5640, %v5641
        %v5643 = vrot.slane %v5439, 3
        %v5644 = vsel %vm3697, %v5641, %v5643
        %v5645 = vrot.slane %v5440, 3
        %v5646 = vsel %vm3697, %v5643, %v5645
        %v5647 = vrot.slane %v5441, 3
        %v5648 = vsel %vm3697, %v5645, %v5647
        %v5670 = vunpack.c.l.b16 %v5621
        %v5671 = vunpack.c.l.b16 %v5622
        %v5672 = vunpack.c.l.b16 %v5623
        %v5673 = vunpack.c.l.b16 %v5624
        %v5674 = vunpack.c.l.b16 %v5625
        %v5675 = vunpack.c.l.b16 %v5626
        %v5676 = vunpack.c.l.b16 %v5627
        %v5677 = vunpack.c.l.b16 %v5628
        %v5678 = vunpack.c.l.b16 %v5629
        %v5679 = vunpack.c.l.b16 %v5630
        %v5680 = vunpack.c.l.b16 %v5631
        %v5681 = vunpack.c.l.b16 %v5632
        %v5682 = vunpack.c.l.b16 %v5633
        %v5683 = vunpack.c.l.b16 %v5634
        %v5684 = vunpack.c.l.b16 %v5635
        %v5685 = vunpack.c.l.b16 %v5636
        %v5686 = vpack.c.b16 %v5671, %v5670
        %v5687 = vpack.c.b16 %v5673, %v5672
        %v5688 = vpack.c.b16 %v5675, %v5674
        %v5689 = vpack.c.b16 %v5677, %v5676
        %v5690 = vpack.c.b16 %v5679, %v5678
        %v5691 = vpack.c.b16 %v5681, %v5680
        %v5692 = vpack.c.b16 %v5683, %v5682
        %v5693 = vpack.c.b16 %v5685, %v5684
        %5702 = vmatprep.subr.bf16.mxu0 0
        %5703 = vmatpush1.bf16.msra.mxu0 %v5686
        %5704 = vmatprep.subr.bf16.mxu0 0
        %5705 = vmatpush1.bf16.msra.mxu0 %v5687
        %5706 = vmatprep.subr.bf16.mxu0 0
        %5707 = vmatpush1.bf16.msra.mxu0 %v5688
        %5708 = vmatprep.subr.bf16.mxu0 0
        %5709 = vmatpush1.bf16.msra.mxu0 %v5689
        %5710 = vmatprep.subr.bf16.mxu0 0
        %5711 = vmatpush1.bf16.msra.mxu0 %v5690
        %5712 = vmatprep.subr.bf16.mxu0 0
        %5713 = vmatpush1.bf16.msra.mxu0 %v5691
        %5714 = vmatprep.subr.bf16.mxu0 0
        %5715 = vmatpush1.bf16.msra.mxu0 %v5692
        %5716 = vmatprep.subr.bf16.mxu0 0
        %5717 = vmatpush1.bf16.msra.mxu0 %v5693
        %5718 = vmatprep.subr.bf16.mxu0 0
        %5719 = vmatpush1.bf16.msra.mxu0 0
        %5720 = vmatprep.subr.bf16.mxu0 0
        %5721 = vmatpush1.bf16.msra.mxu0 0
        %5722 = vmatprep.subr.bf16.mxu0 0
        %5723 = vmatpush1.bf16.msra.mxu0 0
        %5724 = vmatprep.subr.bf16.mxu0 0
        %5725 = vmatpush1.bf16.msra.mxu0 0
        %5726 = vmatprep.subr.bf16.mxu0 0
        %5727 = vmatpush1.bf16.msra.mxu0 0
        %5728 = vmatprep.subr.bf16.mxu0 0
        %5729 = vmatpush1.bf16.msra.mxu0 0
        %5730 = vmatprep.subr.bf16.mxu0 0
        %5731 = vmatpush1.bf16.msra.mxu0 0
        %5732 = vmatprep.subr.bf16.mxu0 0
        %5733 = vmatpush1.bf16.msra.mxu0 0
        %5734 = vmatprep.mubr.bf16.mxu0 0
        %5735 = vmatmul.mubr.bf16.gmra.mrb[0].mxu0 %v5642
        %v5736 = vpop.f32.mrb[0].mxu0
        %v5737 = vadd.f32 0.0, %v5736
        %v5738 = vpop.f32.mrb[0].mxu0
        %v5739 = vpop.f32.mrb[0].mxu0
        %v5740 = vadd.f32 0.0, %v5739
        %v5741 = vpop.f32.mrb[0].mxu0
        %5742 = vmatprep.mubr.bf16.mxu0 0
        %5743 = vmatmul.mubr.bf16.gmra.mrb[0].mxu0 %v5644
        %v5744 = vpop.f32.mrb[0].mxu0
        %v5745 = vadd.f32 0.0, %v5744
        %v5746 = vpop.f32.mrb[0].mxu0
        %v5747 = vpop.f32.mrb[0].mxu0
        %v5748 = vadd.f32 0.0, %v5747
        %v5749 = vpop.f32.mrb[0].mxu0
        %5750 = vmatprep.mubr.bf16.mxu0 0
        %5751 = vmatmul.mubr.bf16.gmra.mrb[0].mxu0 %v5646
        %v5752 = vpop.f32.mrb[0].mxu0
        %v5753 = vadd.f32 0.0, %v5752
        %v5754 = vpop.f32.mrb[0].mxu0
        %v5755 = vpop.f32.mrb[0].mxu0
        %v5756 = vadd.f32 0.0, %v5755
        %v5757 = vpop.f32.mrb[0].mxu0
        %5758 = vmatprep.mubr.bf16.mxu0 0
        %5759 = vmatmul.mubr.bf16.gmra.mrb[0].mxu0 %v5648
        %v5760 = vpop.f32.mrb[0].mxu0
        %v5761 = vadd.f32 0.0, %v5760
        %v5762 = vpop.f32.mrb[0].mxu0
        %v5763 = vpop.f32.mrb[0].mxu0
        %v5764 = vadd.f32 0.0, %v5763
        %v5765 = vpop.f32.mrb[0].mxu0
        %5766 = vmatprep.mubr.bf16.mxu0 0
        %5767 = vmatmul.mubr.bf16.gmra.mrb[0].mxu0 %v5647
        %v5768 = vpop.f32.mrb[0].mxu0
        %v5769 = vadd.f32 0.0, %v5768
        %v5770 = vpop.f32.mrb[0].mxu0
        %v5771 = vpop.f32.mrb[0].mxu0
        %v5772 = vpop.f32.mrb[0].mxu0
        %5773 = vdwg.mxu0
        %v5774 = vadd.f32 %v5611, %v5737
        %v5775 = vadd.f32 %v5612, %v5740
        %v5776 = vadd.f32 %v5613, %v5745
        %v5777 = vadd.f32 %v5614, %v5748
        %v5778 = vadd.f32 %v5615, %v5753
        %v5779 = vadd.f32 %v5616, %v5756
        %v5780 = vadd.f32 %v5617, %v5761
        %v5781 = vadd.f32 %v5618, %v5764
        %v5782 = vadd.f32 %v5619, %v5769
        %v5783 = vmul.f32 %v5774, %v3992
        %v5784 = vmul.f32 %v5775, %v3992
        %v5785 = vmul.f32 %v5776, %v3992
        %v5786 = vmul.f32 %v5777, %v3992
        %v5787 = vmul.f32 %v5778, %v3992
        %v5788 = vmul.f32 %v5779, %v3992
        %v5789 = vmul.f32 %v5780, %v3992
        %v5790 = vmul.f32 %v5781, %v3992
        %v5791 = vmul.f32 %v5782, %v3992
        %v5792 = vadd.f32 %v5783, %v4030
        %v5793 = vadd.f32 %v5784, %v4030
        %v5794 = vadd.f32 %v5785, %v4030
        %v5795 = vadd.f32 %v5786, %v4030
        %v5796 = vadd.f32 %v5787, %v4030
        %v5797 = vadd.f32 %v5788, %v4030
        %v5798 = vadd.f32 %v5789, %v4030
        %v5799 = vadd.f32 %v5790, %v4030
        %v5800 = vadd.f32 %v5791, %v4030
        %v5801 = vmax.f32 %v5792, 0.0
        %v5802 = vmax.f32 %v5793, 0.0
        %v5803 = vmax.f32 %v5794, 0.0
        %v5804 = vmax.f32 %v5795, 0.0
        %v5805 = vmax.f32 %v5796, 0.0
        %v5806 = vmax.f32 %v5797, 0.0
        %v5807 = vmax.f32 %v5798, 0.0
        %v5808 = vmax.f32 %v5799, 0.0
        %v5809 = vmax.f32 %v5800, 0.0
        %5810 = vst [vmem:[#allocation2 + $0x100] sm:$0xff] %v5801
        %5811 = vst [vmem:[#allocation2 + $0x108] sm:$0xff] %v5802
        %5812 = vst [vmem:[#allocation2 + $0x110] sm:$0xff] %v5803
        %5813 = vst [vmem:[#allocation2 + $0x118] sm:$0xff] %v5804
        %5814 = vst [vmem:[#allocation2 + $0x120] sm:$0xff] %v5805
        %5815 = vst [vmem:[#allocation2 + $0x128] sm:$0xff] %v5806
        %5816 = vst [vmem:[#allocation2 + $0x130] sm:$0xff] %v5807
        %5817 = vst [vmem:[#allocation2 + $0x138] sm:$0xff] %v5808
        %5818 = vst [vmem:[#allocation2 + $0x140] sm:$0xf] %v5809
        %vm5819 = vmand %vm2531, %vm3266
        %v5820 = vld [vmem:[#allocation3] sm:$0x3f]
        %v5821 = vsel %vm5819, 0, %v5820
        %5822 = vst [vmem:[#allocation3] sm:$0x3f] %v5821
        %vm5823 = vcmask 1042433
        %vm5824 = vsmask.f32 2310
        %vm5825 = vmand %vm5823, %vm5824
        %v5826 = vld [vmem:[#allocation3 + $0x8] sm:$0x6]
        %v5827 = vsel %vm5825, 0, %v5826
        %5828 = vst [vmem:[#allocation3 + $0x8] sm:$0x6] %v5827
        %vm5829 = vcmask 1047558
        %vm5830 = vsmask.f32 7450
        %vm5831 = vmand %vm5829, %vm5830
        %v5832 = vld [vmem:[#allocation3 + $0x8] sm:$0xc0]
        %v5833 = vsel %vm5831, 0, %v5832
        %5834 = vst [vmem:[#allocation3 + $0x8] sm:$0xc0] %v5833
        %vm5835 = vcmask 1044483
        %vm5836 = vsmask.f32 4366
        %vm5837 = vmand %vm5835, %vm5836
        %v5838 = vld [vmem:[#allocation3 + $0x10] sm:$0x18]
        %v5839 = vsel %vm5837, 0, %v5838
        %5840 = vst [vmem:[#allocation3 + $0x10] sm:$0x18] %v5839
        %vm5841 = vcmask 1041408
        %vm5842 = vsmask.f32 1282
        %vm5843 = vmand %vm5841, %vm5842
        %v5844 = vld [vmem:[#allocation3 + $0x18] sm:$0x3]
        %v5845 = vsel %vm5843, 0, %v5844
        %5846 = vst [vmem:[#allocation3 + $0x18] sm:$0x3] %v5845
        %vm5847 = vcmask 1046533
        %vm5848 = vsmask.f32 6422
        %vm5849 = vmand %vm5847, %vm5848
        %v5850 = vld [vmem:[#allocation3 + $0x18] sm:$0x60]
        %v5851 = vsel %vm5849, 0, %v5850
        %5852 = vst [vmem:[#allocation3 + $0x18] sm:$0x60] %v5851
        %vm5853 = vcmask 1043458
        %vm5854 = vsmask.f32 3338
        %vm5855 = vmand %vm5853, %vm5854
        %v5856 = vld [vmem:[#allocation3 + $0x20] sm:$0xc]
        %v5857 = vsel %vm5855, 0, %v5856
        %5858 = vst [vmem:[#allocation3 + $0x20] sm:$0xc] %v5857
        %vm5859 = vcmask 1047559
        %vm5860 = vsmask.f32 7966
        %vm5861 = vmand %vm5859, %vm5860
        %v5862 = vld [vmem:[#allocation3 + $0x20] sm:$0x80]
        %v5863 = vsel %vm5861, 0, %v5862
        %5864 = vst [vmem:[#allocation3 + $0x20] sm:$0x80] %v5863
        %vm5865 = vcmask 1040384
        %vm5866 = vsmask.f32 256
        %vm5867 = vmand %vm5865, %vm5866
        %v5868 = vld [vmem:[#allocation3 + $0x28] sm:$0x1]
        %v5869 = vsel %vm5867, 0, %v5868
        %5870 = vst [vmem:[#allocation3 + $0x28] sm:$0x1] %v5869
        %vm5871 = vcmask 1047556
        %vm5872 = vsmask.f32 7954
        %vm5873 = vmand %vm5871, %vm5872
        %v5874 = vld [vmem:[#allocation3 + $0x28] sm:$0xf0]
        %v5875 = vsel %vm5873, 0, %v5874
        %5876 = vst [vmem:[#allocation3 + $0x28] sm:$0xf0] %v5875
        %5877 = vst [vmem:[#allocation3 + $0x30] sm:$0x3] 0
        %5878 = vst [vmem:[#allocation3 + $0x30] sm:$0xfc] 0
        %5879 = vst [vmem:[#allocation3 + $0x38] sm:$0xff] 0
        %v5880 = vld [vmem:[#allocation2] ss:$2 sm:$0xff]
        %s5881 = scalar_lea.vmem [#allocation2], 1
        %v5882 = vld [vmem:[%s5881] ss:$2 sm:$0xff]
        %s5883 = scalar_lea.vmem [#allocation2], 18
        %v5884 = vld [vmem:[%s5883] ss:$2 sm:$0xff]
        %s5885 = scalar_lea.vmem [#allocation2], 19
        %v5886 = vld [vmem:[%s5885] ss:$2 sm:$0xff]
        %v5887 = vmax.f32 %v5880, %v5882
        %v5888 = vmax.f32 %v5884, %v5886
        %v5889 = vmax.f32 %v5887, %v5888
        %v5890 = vpack.c.bf16 %v5889, %v5889
        %v5892 = vshrl.u32 %v5890, 16
        %v5894 = vrot.slane %v5892, 2
        %v5895 = vshll.u32 %v5890, 16
        %v5897 = vrot.slane %v5895, 3
        %v5898 = vor.u32 %v5894, %v5897
        %vm5900 = vcmask 1047557
        %vm5901 = vsmask.f32 7958
        %vm5902 = vmand %vm5900, %vm5901
        %v5903 = vld [vmem:[#allocation3] sm:$0xe0]
        %v5904 = vsel %vm5902, %v5898, %v5903
        %5905 = vst [vmem:[#allocation3] sm:$0xe0] %v5904
        %vm5906 = vsmask.f32 1280
        %vm5907 = vmand %vm5841, %vm5906
        %v5908 = vld [vmem:[#allocation3 + $0x8] sm:$0x3]
        %v5909 = vsel %vm5907, %v5898, %v5908
        %5910 = vst [vmem:[#allocation3 + $0x8] sm:$0x3] %v5909
        %s5911 = scalar_lea.vmem [#allocation2], 36
        %v5912 = vld [vmem:[%s5911] ss:$2 sm:$0xff]
        %s5913 = scalar_lea.vmem [#allocation2], 37
        %v5914 = vld [vmem:[%s5913] ss:$2 sm:$0xff]
        %s5915 = scalar_lea.vmem [#allocation2], 54
        %v5916 = vld [vmem:[%s5915] ss:$2 sm:$0xff]
        %s5917 = scalar_lea.vmem [#allocation2], 55
        %v5918 = vld [vmem:[%s5917] ss:$2 sm:$0xff]
        %v5919 = vmax.f32 %v5912, %v5914
        %v5920 = vmax.f32 %v5916, %v5918
        %v5921 = vmax.f32 %v5919, %v5920
        %v5922 = vpack.c.bf16 %v5921, %v5921
        %v5924 = vshrl.u32 %v5922, 16
        %v5926 = vrot.slane %v5924, 5
        %v5927 = vshll.u32 %v5922, 16
        %v5929 = vrot.slane %v5927, 6
        %v5930 = vor.u32 %v5926, %v5929
        %vm5932 = vcmask 1046530
        %vm5933 = vsmask.f32 6410
        %vm5934 = vmand %vm5932, %vm5933
        %v5935 = vld [vmem:[#allocation3 + $0x8] sm:$0x7c]
        %v5936 = vsel %vm5934, %v5930, %v5935
        %5937 = vst [vmem:[#allocation3 + $0x8] sm:$0x7c] %v5936
        %s5938 = scalar_lea.vmem [#allocation2], 72
        %v5939 = vld [vmem:[%s5938] ss:$2 sm:$0xff]
        %s5940 = scalar_lea.vmem [#allocation2], 73
        %v5941 = vld [vmem:[%s5940] ss:$2 sm:$0xff]
        %s5942 = scalar_lea.vmem [#allocation2], 90
        %v5943 = vld [vmem:[%s5942] ss:$2 sm:$0xff]
        %s5944 = scalar_lea.vmem [#allocation2], 91
        %v5945 = vld [vmem:[%s5944] ss:$2 sm:$0xff]
        %v5946 = vmax.f32 %v5939, %v5941
        %v5947 = vmax.f32 %v5943, %v5945
        %v5948 = vmax.f32 %v5946, %v5947
        %v5949 = vpack.c.bf16 %v5948, %v5948
        %v5951 = vshll.u32 %v5949, 16
        %v5953 = vrot.slane %v5951, 1
        %v5954 = vshrl.u32 %v5949, 16
        %v5956 = vor.u32 %v5954, %v5953
        %v5959 = vld [vmem:[#allocation3 + $0x8] sm:$0x80]
        %v5960 = vsel %vm5861, %v5953, %v5959
        %5961 = vst [vmem:[#allocation3 + $0x8] sm:$0x80] %v5960
        %vm5962 = vcmask 1043456
        %vm5963 = vsmask.f32 3328
        %vm5964 = vmand %vm5962, %vm5963
        %v5965 = vld [vmem:[#allocation3 + $0x10] sm:$0xf]
        %v5966 = vsel %vm5964, %v5956, %v5965
        %5967 = vst [vmem:[#allocation3 + $0x10] sm:$0xf] %v5966
        %s5968 = scalar_lea.vmem [#allocation2], 108
        %v5969 = vld [vmem:[%s5968] ss:$2 sm:$0xff]
        %s5970 = scalar_lea.vmem [#allocation2], 109
        %v5971 = vld [vmem:[%s5970] ss:$2 sm:$0xff]
        %s5972 = scalar_lea.vmem [#allocation2], 126
        %v5973 = vld [vmem:[%s5972] ss:$2 sm:$0xff]
        %s5974 = scalar_lea.vmem [#allocation2], 127
        %v5975 = vld [vmem:[%s5974] ss:$2 sm:$0xff]
        %v5976 = vmax.f32 %v5969, %v5971
        %v5977 = vmax.f32 %v5973, %v5975
        %v5978 = vmax.f32 %v5976, %v5977
        %v5979 = vpack.c.bf16 %v5978, %v5978
        %v5981 = vshrl.u32 %v5979, 16
        %v5983 = vrot.slane %v5981, 3
        %v5984 = vshll.u32 %v5979, 16
        %v5986 = vrot.slane %v5984, 4
        %v5987 = vor.u32 %v5983, %v5986
        %v5990 = vld [vmem:[#allocation3 + $0x10] sm:$0xf0]
        %v5991 = vsel %vm5873, %v5987, %v5990
        %5992 = vst [vmem:[#allocation3 + $0x10] sm:$0xf0] %v5991
        %v5993 = vld [vmem:[#allocation3 + $0x18] sm:$0x1]
        %v5994 = vsel %vm5867, %v5983, %v5993
        %5995 = vst [vmem:[#allocation3 + $0x18] sm:$0x1] %v5994
        %s5996 = scalar_lea.vmem [#allocation2], 144
        %v5997 = vld [vmem:[%s5996] ss:$2 sm:$0xff]
        %s5998 = scalar_lea.vmem [#allocation2], 145
        %v5999 = vld [vmem:[%s5998] ss:$2 sm:$0xff]
        %s6000 = scalar_lea.vmem [#allocation2], 162
        %v6001 = vld [vmem:[%s6000] ss:$2 sm:$0xff]
        %s6002 = scalar_lea.vmem [#allocation2], 163
        %v6003 = vld [vmem:[%s6002] ss:$2 sm:$0xff]
        %v6004 = vmax.f32 %v5997, %v5999
        %v6005 = vmax.f32 %v6001, %v6003
        %v6006 = vmax.f32 %v6004, %v6005
        %v6007 = vpack.c.bf16 %v6006, %v6006
        %v6009 = vshrl.u32 %v6007, 16
        %v6011 = vrot.slane %v6009, 6
        %v6012 = vshll.u32 %v6007, 16
        %v6014 = vrot.slane %v6012, 7
        %v6015 = vor.u32 %v6011, %v6014
        %vm6017 = vcmask 1045505
        %vm6018 = vsmask.f32 5382
        %vm6019 = vmand %vm6017, %vm6018
        %v6020 = vld [vmem:[#allocation3 + $0x18] sm:$0x3e]
        %v6021 = vsel %vm6019, %v6015, %v6020
        %6022 = vst [vmem:[#allocation3 + $0x18] sm:$0x3e] %v6021
        %s6023 = scalar_lea.vmem [#allocation2], 180
        %v6024 = vld [vmem:[%s6023] ss:$2 sm:$0xff]
        %s6025 = scalar_lea.vmem [#allocation2], 181
        %v6026 = vld [vmem:[%s6025] ss:$2 sm:$0xff]
        %s6027 = scalar_lea.vmem [#allocation2], 198
        %v6028 = vld [vmem:[%s6027] ss:$2 sm:$0xff]
        %s6029 = scalar_lea.vmem [#allocation2], 199
        %v6030 = vld [vmem:[%s6029] ss:$2 sm:$0xff]
        %v6031 = vmax.f32 %v6024, %v6026
        %v6032 = vmax.f32 %v6028, %v6030
        %v6033 = vmax.f32 %v6031, %v6032
        %v6034 = vpack.c.bf16 %v6033, %v6033
        %v6036 = vshrl.u32 %v6034, 16
        %v6038 = vrot.slane %v6036, 1
        %v6039 = vshll.u32 %v6034, 16
        %v6041 = vrot.slane %v6039, 2
        %v6042 = vor.u32 %v6038, %v6041
        %vm6044 = vsmask.f32 7962
        %vm6045 = vmand %vm5829, %vm6044
        %v6046 = vld [vmem:[#allocation3 + $0x18] sm:$0xc0]
        %v6047 = vsel %vm6045, %v6042, %v6046
        %6048 = vst [vmem:[#allocation3 + $0x18] sm:$0xc0] %v6047
        %vm6049 = vcmask 1042432
        %vm6050 = vsmask.f32 2304
        %vm6051 = vmand %vm6049, %vm6050
        %v6052 = vld [vmem:[#allocation3 + $0x20] sm:$0x7]
        %v6053 = vsel %vm6051, %v6042, %v6052
        %6054 = vst [vmem:[#allocation3 + $0x20] sm:$0x7] %v6053
        %s6055 = scalar_lea.vmem [#allocation2], 216
        %v6056 = vld [vmem:[%s6055] ss:$2 sm:$0xff]
        %s6057 = scalar_lea.vmem [#allocation2], 217
        %v6058 = vld [vmem:[%s6057] ss:$2 sm:$0xff]
        %s6059 = scalar_lea.vmem [#allocation2], 234
        %v6060 = vld [vmem:[%s6059] ss:$2 sm:$0xff]
        %s6061 = scalar_lea.vmem [#allocation2], 235
        %v6062 = vld [vmem:[%s6061] ss:$2 sm:$0xff]
        %v6063 = vmax.f32 %v6056, %v6058
        %v6064 = vmax.f32 %v6060, %v6062
        %v6065 = vmax.f32 %v6063, %v6064
        %v6066 = vpack.c.bf16 %v6065, %v6065
        %v6068 = vshrl.u32 %v6066, 16
        %v6070 = vrot.slane %v6068, 4
        %v6071 = vshll.u32 %v6066, 16
        %v6073 = vrot.slane %v6071, 5
        %v6074 = vor.u32 %v6070, %v6073
        %vm6076 = vcmask 1047555
        %vm6077 = vsmask.f32 7438
        %vm6078 = vmand %vm6076, %vm6077
        %v6079 = vld [vmem:[#allocation3 + $0x20] sm:$0xf8]
        %v6080 = vsel %vm6078, %v6074, %v6079
        %6081 = vst [vmem:[#allocation3 + $0x20] sm:$0xf8] %v6080
        %s6082 = scalar_lea.vmem [#allocation2], 252
        %v6083 = vld [vmem:[%s6082] ss:$2 sm:$0xff]
        %s6084 = scalar_lea.vmem [#allocation2], 253
        %v6085 = vld [vmem:[%s6084] ss:$2 sm:$0xff]
        %s6086 = scalar_lea.vmem [#allocation2], 270
        %v6087 = vld [vmem:[%s6086] ss:$2 sm:$0xff]
        %s6088 = scalar_lea.vmem [#allocation2], 271
        %v6089 = vld [vmem:[%s6088] ss:$2 sm:$0xff]
        %v6090 = vmax.f32 %v6083, %v6085
        %v6091 = vmax.f32 %v6087, %v6089
        %v6092 = vmax.f32 %v6090, %v6091
        %v6093 = vpack.c.bf16 %v6092, %v6092
        %v6095 = vshrl.u32 %v6093, 16
        %v6097 = vrot.slane %v6095, 7
        %v6098 = vshll.u32 %v6093, 16
        %v6100 = vor.u32 %v6097, %v6098
        %vm6102 = vsmask.f32 4354
        %vm6103 = vmand %vm3697, %vm6102
        %v6104 = vld [vmem:[#allocation3 + $0x28] sm:$0x1f]
        %v6105 = vsel %vm6103, %v6100, %v6104
        %6106 = vst [vmem:[#allocation3 + $0x28] sm:$0x1f] %v6105
        %v6107 = vld [vmem:[%s5] sm:$0x1]
        %v6108 = vld [vmem:[%s6] sm:$0x1]
        %v6109 = vld [vmem:[#allocation3] sm:$0xff]
        %v6110 = vld [vmem:[#allocation3 + $0x8] sm:$0xff]
        %v6111 = vld [vmem:[#allocation3 + $0x10] sm:$0xff]
        %v6112 = vld [vmem:[#allocation3 + $0x18] sm:$0xff]
        %v6113 = vld [vmem:[#allocation3 + $0x20] sm:$0xff]
        %v6114 = vld [vmem:[#allocation3 + $0x28] sm:$0xff]
        %v6115 = vld [vmem:[#allocation3 + $0x30] sm:$0x3]
        %v6116 = vld [vmem:[%s4] sm:$0xf]
        %v6117 = vld [vmem:[%s4 + $0x4] sm:$0xf]
        %v6118 = vld [vmem:[%s4 + $0x8] sm:$0xf]
        %v6119 = vld [vmem:[%s4 + $0xc] sm:$0xf]
        %v6120 = vld [vmem:[%s4 + $0x10] sm:$0xf]
        %v6121 = vld [vmem:[%s4 + $0x14] sm:$0xf]
        %v6122 = vld [vmem:[%s4 + $0x18] sm:$0xf]
        %v6123 = vld [vmem:[%s4 + $0x1c] sm:$0xf]
        %v6124 = vld [vmem:[%s4 + $0x20] sm:$0xf]
        %v6125 = vld [vmem:[%s4 + $0x24] sm:$0xf]
        %v6126 = vld [vmem:[%s4 + $0x28] sm:$0xf]
        %v6127 = vld [vmem:[%s4 + $0x2c] sm:$0xf]
        %v6128 = vld [vmem:[%s4 + $0x30] sm:$0xf]
        %v6129 = vld [vmem:[%s4 + $0x34] sm:$0xf]
        %v6130 = vld [vmem:[%s4 + $0x38] sm:$0xf]
        %v6131 = vld [vmem:[%s4 + $0x3c] sm:$0xf]
        %v6132 = vld [vmem:[#allocation3 + $0x30] sm:$0x7]
        %s6133 = scalar_lea.vmem %s4, 64
        %v6134 = vld [vmem:[%s6133] sm:$0xf]
        %v6135 = vld [vmem:[%s6133 + $0x4] sm:$0xf]
        %v6136 = vld [vmem:[%s6133 + $0x8] sm:$0xf]
        %v6137 = vld [vmem:[%s6133 + $0xc] sm:$0xf]
        %v6138 = vld [vmem:[%s6133 + $0x10] sm:$0xf]
        %v6139 = vld [vmem:[%s6133 + $0x14] sm:$0xf]
        %v6140 = vld [vmem:[%s6133 + $0x18] sm:$0xf]
        %v6141 = vld [vmem:[%s6133 + $0x1c] sm:$0xf]
        %v6142 = vld [vmem:[%s6133 + $0x20] sm:$0xf]
        %v6143 = vld [vmem:[%s6133 + $0x24] sm:$0xf]
        %v6144 = vld [vmem:[%s6133 + $0x28] sm:$0xf]
        %v6145 = vld [vmem:[%s6133 + $0x2c] sm:$0xf]
        %v6146 = vld [vmem:[%s6133 + $0x30] sm:$0xf]
        %v6147 = vld [vmem:[%s6133 + $0x34] sm:$0xf]
        %v6148 = vld [vmem:[%s6133 + $0x38] sm:$0xf]
        %v6149 = vld [vmem:[%s6133 + $0x3c] sm:$0xf]
        %v6151 = vshrl.u32 %v6109, 16
        %v6153 = vshll.u32 %v6109, 16
        %v6155 = vrot.slane %v6153, 1
        %v6156 = vor.u32 %v6151, %v6155
        %v6158 = vshll.u32 %v6110, 16
        %v6160 = vrot.slane %v6158, 1
        %v6161 = vsel %vm761, %v6156, %v6160
        %v6162 = vshrl.u32 %v6110, 16
        %v6164 = vor.u32 %v6162, %v6160
        %v6166 = vshll.u32 %v6111, 16
        %v6168 = vrot.slane %v6166, 1
        %v6169 = vsel %vm761, %v6164, %v6168
        %v6170 = vshrl.u32 %v6111, 16
        %v6172 = vor.u32 %v6170, %v6168
        %v6174 = vshll.u32 %v6112, 16
        %v6176 = vrot.slane %v6174, 1
        %v6177 = vsel %vm761, %v6172, %v6176
        %v6178 = vshrl.u32 %v6112, 16
        %v6180 = vor.u32 %v6178, %v6176
        %v6182 = vshll.u32 %v6113, 16
        %v6184 = vrot.slane %v6182, 1
        %v6185 = vsel %vm761, %v6180, %v6184
        %v6186 = vshrl.u32 %v6113, 16
        %v6188 = vor.u32 %v6186, %v6184
        %v6190 = vshll.u32 %v6114, 16
        %v6192 = vrot.slane %v6190, 1
        %v6193 = vsel %vm761, %v6188, %v6192
        %v6194 = vshrl.u32 %v6114, 16
        %v6196 = vor.u32 %v6194, %v6192
        %v6198 = vshll.u32 %v6132, 16
        %v6200 = vrot.slane %v6198, 1
        %v6201 = vsel %vm761, %v6196, %v6200
        %v6202 = vshrl.u32 %v6132, 16
        %v6204 = vor.u32 %v6202, %v6200
        %v6228 = vunpack.c.l.b16 %v6134
        %v6229 = vunpack.c.l.b16 %v6135
        %v6230 = vunpack.c.l.b16 %v6136
        %v6231 = vunpack.c.l.b16 %v6137
        %v6232 = vunpack.c.l.b16 %v6138
        %v6233 = vunpack.c.l.b16 %v6139
        %v6234 = vunpack.c.l.b16 %v6140
        %v6235 = vunpack.c.l.b16 %v6141
        %v6236 = vunpack.c.l.b16 %v6142
        %v6237 = vunpack.c.l.b16 %v6143
        %v6238 = vunpack.c.l.b16 %v6144
        %v6239 = vunpack.c.l.b16 %v6145
        %v6240 = vunpack.c.l.b16 %v6146
        %v6241 = vunpack.c.l.b16 %v6147
        %v6242 = vunpack.c.l.b16 %v6148
        %v6243 = vunpack.c.l.b16 %v6149
        %v6244 = vpack.c.b16 %v6229, %v6228
        %v6245 = vpack.c.b16 %v6231, %v6230
        %v6246 = vpack.c.b16 %v6233, %v6232
        %v6247 = vpack.c.b16 %v6235, %v6234
        %v6248 = vpack.c.b16 %v6237, %v6236
        %v6249 = vpack.c.b16 %v6239, %v6238
        %v6250 = vpack.c.b16 %v6241, %v6240
        %v6251 = vpack.c.b16 %v6243, %v6242
        %6260 = vmatprep.subr.bf16.mxu0 0
        %6261 = vmatpush1.bf16.msra.mxu0 %v6244
        %6262 = vmatprep.subr.bf16.mxu0 0
        %6263 = vmatpush1.bf16.msra.mxu0 %v6245
        %6264 = vmatprep.subr.bf16.mxu0 0
        %6265 = vmatpush1.bf16.msra.mxu0 %v6246
        %6266 = vmatprep.subr.bf16.mxu0 0
        %6267 = vmatpush1.bf16.msra.mxu0 %v6247
        %6268 = vmatprep.subr.bf16.mxu0 0
        %6269 = vmatpush1.bf16.msra.mxu0 %v6248
        %6270 = vmatprep.subr.bf16.mxu0 0
        %6271 = vmatpush1.bf16.msra.mxu0 %v6249
        %6272 = vmatprep.subr.bf16.mxu0 0
        %6273 = vmatpush1.bf16.msra.mxu0 %v6250
        %6274 = vmatprep.subr.bf16.mxu0 0
        %6275 = vmatpush1.bf16.msra.mxu0 %v6251
        %6276 = vmatprep.subr.bf16.mxu0 0
        %6277 = vmatpush1.bf16.msra.mxu0 0
        %6278 = vmatprep.subr.bf16.mxu0 0
        %6279 = vmatpush1.bf16.msra.mxu0 0
        %6280 = vmatprep.subr.bf16.mxu0 0
        %6281 = vmatpush1.bf16.msra.mxu0 0
        %6282 = vmatprep.subr.bf16.mxu0 0
        %6283 = vmatpush1.bf16.msra.mxu0 0
        %6284 = vmatprep.subr.bf16.mxu0 0
        %6285 = vmatpush1.bf16.msra.mxu0 0
        %6286 = vmatprep.subr.bf16.mxu0 0
        %6287 = vmatpush1.bf16.msra.mxu0 0
        %6288 = vmatprep.subr.bf16.mxu0 0
        %6289 = vmatpush1.bf16.msra.mxu0 0
        %6290 = vmatprep.subr.bf16.mxu0 0
        %6291 = vmatpush1.bf16.msra.mxu0 0
        %6292 = vmatprep.mubr.bf16.mxu0 0
        %6293 = vmatmul.mubr.bf16.gmra.mrb[0].mxu0 %v6161
        %v6294 = vpop.f32.mrb[0].mxu0
        %v6295 = vadd.f32 0.0, %v6294
        %v6296 = vpop.f32.mrb[0].mxu0
        %v6297 = vpop.f32.mrb[0].mxu0
        %v6298 = vadd.f32 0.0, %v6297
        %v6299 = vpop.f32.mrb[0].mxu0
        %6300 = vmatprep.mubr.bf16.mxu0 0
        %6301 = vmatmul.mubr.bf16.gmra.mrb[0].mxu0 %v6169
        %v6302 = vpop.f32.mrb[0].mxu0
        %v6303 = vadd.f32 0.0, %v6302
        %v6304 = vpop.f32.mrb[0].mxu0
        %v6305 = vpop.f32.mrb[0].mxu0
        %v6306 = vadd.f32 0.0, %v6305
        %v6307 = vpop.f32.mrb[0].mxu0
        %6308 = vmatprep.mubr.bf16.mxu0 0
        %6309 = vmatmul.mubr.bf16.gmra.mrb[0].mxu0 %v6177
        %v6310 = vpop.f32.mrb[0].mxu0
        %v6311 = vadd.f32 0.0, %v6310
        %v6312 = vpop.f32.mrb[0].mxu0
        %v6313 = vpop.f32.mrb[0].mxu0
        %v6314 = vadd.f32 0.0, %v6313
        %v6315 = vpop.f32.mrb[0].mxu0
        %6316 = vmatprep.mubr.bf16.mxu0 0
        %6317 = vmatmul.mubr.bf16.gmra.mrb[0].mxu0 %v6185
        %v6318 = vpop.f32.mrb[0].mxu0
        %v6319 = vadd.f32 0.0, %v6318
        %v6320 = vpop.f32.mrb[0].mxu0
        %v6321 = vpop.f32.mrb[0].mxu0
        %v6322 = vadd.f32 0.0, %v6321
        %v6323 = vpop.f32.mrb[0].mxu0
        %6324 = vmatprep.mubr.bf16.mxu0 0
        %6325 = vmatmul.mubr.bf16.gmra.mrb[0].mxu0 %v6193
        %v6326 = vpop.f32.mrb[0].mxu0
        %v6327 = vadd.f32 0.0, %v6326
        %v6328 = vpop.f32.mrb[0].mxu0
        %v6329 = vpop.f32.mrb[0].mxu0
        %v6330 = vadd.f32 0.0, %v6329
        %v6331 = vpop.f32.mrb[0].mxu0
        %6332 = vmatprep.mubr.bf16.mxu0 0
        %6333 = vmatmul.mubr.bf16.gmra.mrb[0].mxu0 %v6201
        %v6334 = vpop.f32.mrb[0].mxu0
        %v6335 = vadd.f32 0.0, %v6334
        %v6336 = vpop.f32.mrb[0].mxu0
        %v6337 = vpop.f32.mrb[0].mxu0
        %v6338 = vadd.f32 0.0, %v6337
        %v6339 = vpop.f32.mrb[0].mxu0
        %6340 = vmatprep.mubr.bf16.mxu0 0
        %6341 = vmatmul.mubr.bf16.gmra.mrb[0].mxu0 %v6204
        %v6342 = vpop.f32.mrb[0].mxu0
        %v6343 = vadd.f32 0.0, %v6342
        %v6344 = vpop.f32.mrb[0].mxu0
        %v6345 = vpop.f32.mrb[0].mxu0
        %v6346 = vpop.f32.mrb[0].mxu0
        %6347 = vdwg.mxu0
        %v6364 = vunpack.c.l.b16 %v6116
        %v6365 = vunpack.c.l.b16 %v6117
        %v6366 = vunpack.c.l.b16 %v6118
        %v6367 = vunpack.c.l.b16 %v6119
        %v6368 = vunpack.c.l.b16 %v6120
        %v6369 = vunpack.c.l.b16 %v6121
        %v6370 = vunpack.c.l.b16 %v6122
        %v6371 = vunpack.c.l.b16 %v6123
        %v6372 = vunpack.c.l.b16 %v6124
        %v6373 = vunpack.c.l.b16 %v6125
        %v6374 = vunpack.c.l.b16 %v6126
        %v6375 = vunpack.c.l.b16 %v6127
        %v6376 = vunpack.c.l.b16 %v6128
        %v6377 = vunpack.c.l.b16 %v6129
        %v6378 = vunpack.c.l.b16 %v6130
        %v6379 = vunpack.c.l.b16 %v6131
        %v6380 = vpack.c.b16 %v6365, %v6364
        %v6381 = vpack.c.b16 %v6367, %v6366
        %v6382 = vpack.c.b16 %v6369, %v6368
        %v6383 = vpack.c.b16 %v6371, %v6370
        %v6384 = vpack.c.b16 %v6373, %v6372
        %v6385 = vpack.c.b16 %v6375, %v6374
        %v6386 = vpack.c.b16 %v6377, %v6376
        %v6387 = vpack.c.b16 %v6379, %v6378
        %6396 = vmatprep.subr.bf16.mxu0 0
        %6397 = vmatpush1.bf16.msra.mxu0 %v6380
        %6398 = vmatprep.subr.bf16.mxu0 0
        %6399 = vmatpush1.bf16.msra.mxu0 %v6381
        %6400 = vmatprep.subr.bf16.mxu0 0
        %6401 = vmatpush1.bf16.msra.mxu0 %v6382
        %6402 = vmatprep.subr.bf16.mxu0 0
        %6403 = vmatpush1.bf16.msra.mxu0 %v6383
        %6404 = vmatprep.subr.bf16.mxu0 0
        %6405 = vmatpush1.bf16.msra.mxu0 %v6384
        %6406 = vmatprep.subr.bf16.mxu0 0
        %6407 = vmatpush1.bf16.msra.mxu0 %v6385
        %6408 = vmatprep.subr.bf16.mxu0 0
        %6409 = vmatpush1.bf16.msra.mxu0 %v6386
        %6410 = vmatprep.subr.bf16.mxu0 0
        %6411 = vmatpush1.bf16.msra.mxu0 %v6387
        %6412 = vmatprep.subr.bf16.mxu0 0
        %6413 = vmatpush1.bf16.msra.mxu0 0
        %6414 = vmatprep.subr.bf16.mxu0 0
        %6415 = vmatpush1.bf16.msra.mxu0 0
        %6416 = vmatprep.subr.bf16.mxu0 0
        %6417 = vmatpush1.bf16.msra.mxu0 0
        %6418 = vmatprep.subr.bf16.mxu0 0
        %6419 = vmatpush1.bf16.msra.mxu0 0
        %6420 = vmatprep.subr.bf16.mxu0 0
        %6421 = vmatpush1.bf16.msra.mxu0 0
        %6422 = vmatprep.subr.bf16.mxu0 0
        %6423 = vmatpush1.bf16.msra.mxu0 0
        %6424 = vmatprep.subr.bf16.mxu0 0
        %6425 = vmatpush1.bf16.msra.mxu0 0
        %6426 = vmatprep.subr.bf16.mxu0 0
        %6427 = vmatpush1.bf16.msra.mxu0 0
        %6428 = vmatprep.mubr.bf16.mxu0 0
        %6429 = vmatmul.mubr.bf16.gmra.mrb[0].mxu0 %v6109
        %v6430 = vpop.f32.mrb[0].mxu0
        %v6431 = vadd.f32 %v6295, %v6430
        %v6432 = vpop.f32.mrb[0].mxu0
        %v6433 = vpop.f32.mrb[0].mxu0
        %v6434 = vadd.f32 %v6298, %v6433
        %v6435 = vpop.f32.mrb[0].mxu0
        %6436 = vmatprep.mubr.bf16.mxu0 0
        %6437 = vmatmul.mubr.bf16.gmra.mrb[0].mxu0 %v6110
        %v6438 = vpop.f32.mrb[0].mxu0
        %v6439 = vadd.f32 %v6303, %v6438
        %v6440 = vpop.f32.mrb[0].mxu0
        %v6441 = vpop.f32.mrb[0].mxu0
        %v6442 = vadd.f32 %v6306, %v6441
        %v6443 = vpop.f32.mrb[0].mxu0
        %6444 = vmatprep.mubr.bf16.mxu0 0
        %6445 = vmatmul.mubr.bf16.gmra.mrb[0].mxu0 %v6111
        %v6446 = vpop.f32.mrb[0].mxu0
        %v6447 = vadd.f32 %v6311, %v6446
        %v6448 = vpop.f32.mrb[0].mxu0
        %v6449 = vpop.f32.mrb[0].mxu0
        %v6450 = vadd.f32 %v6314, %v6449
        %v6451 = vpop.f32.mrb[0].mxu0
        %6452 = vmatprep.mubr.bf16.mxu0 0
        %6453 = vmatmul.mubr.bf16.gmra.mrb[0].mxu0 %v6112
        %v6454 = vpop.f32.mrb[0].mxu0
        %v6455 = vadd.f32 %v6319, %v6454
        %v6456 = vpop.f32.mrb[0].mxu0
        %v6457 = vpop.f32.mrb[0].mxu0
        %v6458 = vadd.f32 %v6322, %v6457
        %v6459 = vpop.f32.mrb[0].mxu0
        %6460 = vmatprep.mubr.bf16.mxu0 0
        %6461 = vmatmul.mubr.bf16.gmra.mrb[0].mxu0 %v6113
        %v6462 = vpop.f32.mrb[0].mxu0
        %v6463 = vadd.f32 %v6327, %v6462
        %v6464 = vpop.f32.mrb[0].mxu0
        %v6465 = vpop.f32.mrb[0].mxu0
        %v6466 = vadd.f32 %v6330, %v6465
        %v6467 = vpop.f32.mrb[0].mxu0
        %6468 = vmatprep.mubr.bf16.mxu0 0
        %6469 = vmatmul.mubr.bf16.gmra.mrb[0].mxu0 %v6114
        %v6470 = vpop.f32.mrb[0].mxu0
        %v6471 = vadd.f32 %v6335, %v6470
        %v6472 = vpop.f32.mrb[0].mxu0
        %v6473 = vpop.f32.mrb[0].mxu0
        %v6474 = vadd.f32 %v6338, %v6473
        %v6475 = vpop.f32.mrb[0].mxu0
        %6476 = vmatprep.mubr.bf16.mxu0 0
        %6477 = vmatmul.mubr.bf16.gmra.mrb[0].mxu0 %v6115
        %v6478 = vpop.f32.mrb[0].mxu0
        %v6479 = vadd.f32 %v6343, %v6478
        %v6480 = vpop.f32.mrb[0].mxu0
        %v6481 = vpop.f32.mrb[0].mxu0
        %v6482 = vpop.f32.mrb[0].mxu0
        %6483 = vdwg.mxu0
        %v6484 = vld [vmem:[#allocation3] sm:$0xfe]
        %s6485 = scalar_lea.vmem %s4, 128
        %v6486 = vld [vmem:[%s6485] sm:$0xf]
        %v6487 = vld [vmem:[%s6485 + $0x4] sm:$0xf]
        %v6488 = vld [vmem:[%s6485 + $0x8] sm:$0xf]
        %v6489 = vld [vmem:[%s6485 + $0xc] sm:$0xf]
        %v6490 = vld [vmem:[%s6485 + $0x10] sm:$0xf]
        %v6491 = vld [vmem:[%s6485 + $0x14] sm:$0xf]
        %v6492 = vld [vmem:[%s6485 + $0x18] sm:$0xf]
        %v6493 = vld [vmem:[%s6485 + $0x1c] sm:$0xf]
        %v6494 = vld [vmem:[%s6485 + $0x20] sm:$0xf]
        %v6495 = vld [vmem:[%s6485 + $0x24] sm:$0xf]
        %v6496 = vld [vmem:[%s6485 + $0x28] sm:$0xf]
        %v6497 = vld [vmem:[%s6485 + $0x2c] sm:$0xf]
        %v6498 = vld [vmem:[%s6485 + $0x30] sm:$0xf]
        %v6499 = vld [vmem:[%s6485 + $0x34] sm:$0xf]
        %v6500 = vld [vmem:[%s6485 + $0x38] sm:$0xf]
        %v6501 = vld [vmem:[%s6485 + $0x3c] sm:$0xf]
        %v6509 = vrot.slane %v6484, 1
        %v6510 = vrot.slane %v6110, 1
        %v6511 = vsel %vm1365, %v6509, %v6510
        %v6512 = vrot.slane %v6111, 1
        %v6513 = vsel %vm1365, %v6510, %v6512
        %v6514 = vrot.slane %v6112, 1
        %v6515 = vsel %vm1365, %v6512, %v6514
        %v6516 = vrot.slane %v6113, 1
        %v6517 = vsel %vm1365, %v6514, %v6516
        %v6518 = vrot.slane %v6114, 1
        %v6519 = vsel %vm1365, %v6516, %v6518
        %v6520 = vrot.slane %v6132, 1
        %v6521 = vsel %vm1365, %v6518, %v6520
        %v6545 = vunpack.c.l.b16 %v6486
        %v6546 = vunpack.c.l.b16 %v6487
        %v6547 = vunpack.c.l.b16 %v6488
        %v6548 = vunpack.c.l.b16 %v6489
        %v6549 = vunpack.c.l.b16 %v6490
        %v6550 = vunpack.c.l.b16 %v6491
        %v6551 = vunpack.c.l.b16 %v6492
        %v6552 = vunpack.c.l.b16 %v6493
        %v6553 = vunpack.c.l.b16 %v6494
        %v6554 = vunpack.c.l.b16 %v6495
        %v6555 = vunpack.c.l.b16 %v6496
        %v6556 = vunpack.c.l.b16 %v6497
        %v6557 = vunpack.c.l.b16 %v6498
        %v6558 = vunpack.c.l.b16 %v6499
        %v6559 = vunpack.c.l.b16 %v6500
        %v6560 = vunpack.c.l.b16 %v6501
        %v6561 = vpack.c.b16 %v6546, %v6545
        %v6562 = vpack.c.b16 %v6548, %v6547
        %v6563 = vpack.c.b16 %v6550, %v6549
        %v6564 = vpack.c.b16 %v6552, %v6551
        %v6565 = vpack.c.b16 %v6554, %v6553
        %v6566 = vpack.c.b16 %v6556, %v6555
        %v6567 = vpack.c.b16 %v6558, %v6557
        %v6568 = vpack.c.b16 %v6560, %v6559
        %6577 = vmatprep.subr.bf16.mxu0 0
        %6578 = vmatpush1.bf16.msra.mxu0 %v6561
        %6579 = vmatprep.subr.bf16.mxu0 0
        %6580 = vmatpush1.bf16.msra.mxu0 %v6562
        %6581 = vmatprep.subr.bf16.mxu0 0
        %6582 = vmatpush1.bf16.msra.mxu0 %v6563
        %6583 = vmatprep.subr.bf16.mxu0 0
        %6584 = vmatpush1.bf16.msra.mxu0 %v6564
        %6585 = vmatprep.subr.bf16.mxu0 0
        %6586 = vmatpush1.bf16.msra.mxu0 %v6565
        %6587 = vmatprep.subr.bf16.mxu0 0
        %6588 = vmatpush1.bf16.msra.mxu0 %v6566
        %6589 = vmatprep.subr.bf16.mxu0 0
        %6590 = vmatpush1.bf16.msra.mxu0 %v6567
        %6591 = vmatprep.subr.bf16.mxu0 0
        %6592 = vmatpush1.bf16.msra.mxu0 %v6568
        %6593 = vmatprep.subr.bf16.mxu0 0
        %6594 = vmatpush1.bf16.msra.mxu0 0
        %6595 = vmatprep.subr.bf16.mxu0 0
        %6596 = vmatpush1.bf16.msra.mxu0 0
        %6597 = vmatprep.subr.bf16.mxu0 0
        %6598 = vmatpush1.bf16.msra.mxu0 0
        %6599 = vmatprep.subr.bf16.mxu0 0
        %6600 = vmatpush1.bf16.msra.mxu0 0
        %6601 = vmatprep.subr.bf16.mxu0 0
        %6602 = vmatpush1.bf16.msra.mxu0 0
        %6603 = vmatprep.subr.bf16.mxu0 0
        %6604 = vmatpush1.bf16.msra.mxu0 0
        %6605 = vmatprep.subr.bf16.mxu0 0
        %6606 = vmatpush1.bf16.msra.mxu0 0
        %6607 = vmatprep.subr.bf16.mxu0 0
        %6608 = vmatpush1.bf16.msra.mxu0 0
        %6609 = vmatprep.mubr.bf16.mxu0 0
        %6610 = vmatmul.mubr.bf16.gmra.mrb[0].mxu0 %v6511
        %v6611 = vpop.f32.mrb[0].mxu0
        %v6612 = vadd.f32 0.0, %v6611
        %v6613 = vpop.f32.mrb[0].mxu0
        %v6614 = vpop.f32.mrb[0].mxu0
        %v6615 = vadd.f32 0.0, %v6614
        %v6616 = vpop.f32.mrb[0].mxu0
        %6617 = vmatprep.mubr.bf16.mxu0 0
        %6618 = vmatmul.mubr.bf16.gmra.mrb[0].mxu0 %v6513
        %v6619 = vpop.f32.mrb[0].mxu0
        %v6620 = vadd.f32 0.0, %v6619
        %v6621 = vpop.f32.mrb[0].mxu0
        %v6622 = vpop.f32.mrb[0].mxu0
        %v6623 = vadd.f32 0.0, %v6622
        %v6624 = vpop.f32.mrb[0].mxu0
        %6625 = vmatprep.mubr.bf16.mxu0 0
        %6626 = vmatmul.mubr.bf16.gmra.mrb[0].mxu0 %v6515
        %v6627 = vpop.f32.mrb[0].mxu0
        %v6628 = vadd.f32 0.0, %v6627
        %v6629 = vpop.f32.mrb[0].mxu0
        %v6630 = vpop.f32.mrb[0].mxu0
        %v6631 = vadd.f32 0.0, %v6630
        %v6632 = vpop.f32.mrb[0].mxu0
        %6633 = vmatprep.mubr.bf16.mxu0 0
        %6634 = vmatmul.mubr.bf16.gmra.mrb[0].mxu0 %v6517
        %v6635 = vpop.f32.mrb[0].mxu0
        %v6636 = vadd.f32 0.0, %v6635
        %v6637 = vpop.f32.mrb[0].mxu0
        %v6638 = vpop.f32.mrb[0].mxu0
        %v6639 = vadd.f32 0.0, %v6638
        %v6640 = vpop.f32.mrb[0].mxu0
        %6641 = vmatprep.mubr.bf16.mxu0 0
        %6642 = vmatmul.mubr.bf16.gmra.mrb[0].mxu0 %v6519
        %v6643 = vpop.f32.mrb[0].mxu0
        %v6644 = vadd.f32 0.0, %v6643
        %v6645 = vpop.f32.mrb[0].mxu0
        %v6646 = vpop.f32.mrb[0].mxu0
        %v6647 = vadd.f32 0.0, %v6646
        %v6648 = vpop.f32.mrb[0].mxu0
        %6649 = vmatprep.mubr.bf16.mxu0 0
        %6650 = vmatmul.mubr.bf16.gmra.mrb[0].mxu0 %v6521
        %v6651 = vpop.f32.mrb[0].mxu0
        %v6652 = vadd.f32 0.0, %v6651
        %v6653 = vpop.f32.mrb[0].mxu0
        %v6654 = vpop.f32.mrb[0].mxu0
        %v6655 = vadd.f32 0.0, %v6654
        %v6656 = vpop.f32.mrb[0].mxu0
        %6657 = vmatprep.mubr.bf16.mxu0 0
        %6658 = vmatmul.mubr.bf16.gmra.mrb[0].mxu0 %v6520
        %v6659 = vpop.f32.mrb[0].mxu0
        %v6660 = vadd.f32 0.0, %v6659
        %v6661 = vpop.f32.mrb[0].mxu0
        %v6662 = vpop.f32.mrb[0].mxu0
        %v6663 = vpop.f32.mrb[0].mxu0
        %6664 = vdwg.mxu0
        %v6665 = vadd.f32 %v6431, %v6612
        %v6666 = vadd.f32 %v6434, %v6615
        %v6667 = vadd.f32 %v6439, %v6620
        %v6668 = vadd.f32 %v6442, %v6623
        %v6669 = vadd.f32 %v6447, %v6628
        %v6670 = vadd.f32 %v6450, %v6631
        %v6671 = vadd.f32 %v6455, %v6636
        %v6672 = vadd.f32 %v6458, %v6639
        %v6673 = vadd.f32 %v6463, %v6644
        %v6674 = vadd.f32 %v6466, %v6647
        %v6675 = vadd.f32 %v6471, %v6652
        %v6676 = vadd.f32 %v6474, %v6655
        %v6677 = vadd.f32 %v6479, %v6660
        %v6678 = vld [vmem:[#allocation3] sm:$0xe0]
        %v6679 = vld [vmem:[#allocation3 + $0x30] sm:$0x7f]
        %s6680 = scalar_lea.vmem %s4, 192
        %v6681 = vld [vmem:[%s6680] sm:$0xf]
        %v6682 = vld [vmem:[%s6680 + $0x4] sm:$0xf]
        %v6683 = vld [vmem:[%s6680 + $0x8] sm:$0xf]
        %v6684 = vld [vmem:[%s6680 + $0xc] sm:$0xf]
        %v6685 = vld [vmem:[%s6680 + $0x10] sm:$0xf]
        %v6686 = vld [vmem:[%s6680 + $0x14] sm:$0xf]
        %v6687 = vld [vmem:[%s6680 + $0x18] sm:$0xf]
        %v6688 = vld [vmem:[%s6680 + $0x1c] sm:$0xf]
        %v6689 = vld [vmem:[%s6680 + $0x20] sm:$0xf]
        %v6690 = vld [vmem:[%s6680 + $0x24] sm:$0xf]
        %v6691 = vld [vmem:[%s6680 + $0x28] sm:$0xf]
        %v6692 = vld [vmem:[%s6680 + $0x2c] sm:$0xf]
        %v6693 = vld [vmem:[%s6680 + $0x30] sm:$0xf]
        %v6694 = vld [vmem:[%s6680 + $0x34] sm:$0xf]
        %v6695 = vld [vmem:[%s6680 + $0x38] sm:$0xf]
        %v6696 = vld [vmem:[%s6680 + $0x3c] sm:$0xf]
        %v6699 = vrot.slane %v6678, 5
        %v6700 = vrot.slane %v6110, 5
        %v6701 = vsel %vm6049, %v6699, %v6700
        %v6702 = vrot.slane %v6111, 5
        %v6703 = vsel %vm6049, %v6700, %v6702
        %v6704 = vrot.slane %v6112, 5
        %v6705 = vsel %vm6049, %v6702, %v6704
        %v6706 = vrot.slane %v6113, 5
        %v6707 = vsel %vm6049, %v6704, %v6706
        %v6708 = vrot.slane %v6114, 5
        %v6709 = vsel %vm6049, %v6706, %v6708
        %v6710 = vrot.slane %v6679, 5
        %v6711 = vsel %vm6049, %v6708, %v6710
        %v6735 = vunpack.c.l.b16 %v6681
        %v6736 = vunpack.c.l.b16 %v6682
        %v6737 = vunpack.c.l.b16 %v6683
        %v6738 = vunpack.c.l.b16 %v6684
        %v6739 = vunpack.c.l.b16 %v6685
        %v6740 = vunpack.c.l.b16 %v6686
        %v6741 = vunpack.c.l.b16 %v6687
        %v6742 = vunpack.c.l.b16 %v6688
        %v6743 = vunpack.c.l.b16 %v6689
        %v6744 = vunpack.c.l.b16 %v6690
        %v6745 = vunpack.c.l.b16 %v6691
        %v6746 = vunpack.c.l.b16 %v6692
        %v6747 = vunpack.c.l.b16 %v6693
        %v6748 = vunpack.c.l.b16 %v6694
        %v6749 = vunpack.c.l.b16 %v6695
        %v6750 = vunpack.c.l.b16 %v6696
        %v6751 = vpack.c.b16 %v6736, %v6735
        %v6752 = vpack.c.b16 %v6738, %v6737
        %v6753 = vpack.c.b16 %v6740, %v6739
        %v6754 = vpack.c.b16 %v6742, %v6741
        %v6755 = vpack.c.b16 %v6744, %v6743
        %v6756 = vpack.c.b16 %v6746, %v6745
        %v6757 = vpack.c.b16 %v6748, %v6747
        %v6758 = vpack.c.b16 %v6750, %v6749
        %6767 = vmatprep.subr.bf16.mxu0 0
        %6768 = vmatpush1.bf16.msra.mxu0 %v6751
        %6769 = vmatprep.subr.bf16.mxu0 0
        %6770 = vmatpush1.bf16.msra.mxu0 %v6752
        %6771 = vmatprep.subr.bf16.mxu0 0
        %6772 = vmatpush1.bf16.msra.mxu0 %v6753
        %6773 = vmatprep.subr.bf16.mxu0 0
        %6774 = vmatpush1.bf16.msra.mxu0 %v6754
        %6775 = vmatprep.subr.bf16.mxu0 0
        %6776 = vmatpush1.bf16.msra.mxu0 %v6755
        %6777 = vmatprep.subr.bf16.mxu0 0
        %6778 = vmatpush1.bf16.msra.mxu0 %v6756
        %6779 = vmatprep.subr.bf16.mxu0 0
        %6780 = vmatpush1.bf16.msra.mxu0 %v6757
        %6781 = vmatprep.subr.bf16.mxu0 0
        %6782 = vmatpush1.bf16.msra.mxu0 %v6758
        %6783 = vmatprep.subr.bf16.mxu0 0
        %6784 = vmatpush1.bf16.msra.mxu0 0
        %6785 = vmatprep.subr.bf16.mxu0 0
        %6786 = vmatpush1.bf16.msra.mxu0 0
        %6787 = vmatprep.subr.bf16.mxu0 0
        %6788 = vmatpush1.bf16.msra.mxu0 0
        %6789 = vmatprep.subr.bf16.mxu0 0
        %6790 = vmatpush1.bf16.msra.mxu0 0
        %6791 = vmatprep.subr.bf16.mxu0 0
        %6792 = vmatpush1.bf16.msra.mxu0 0
        %6793 = vmatprep.subr.bf16.mxu0 0
        %6794 = vmatpush1.bf16.msra.mxu0 0
        %6795 = vmatprep.subr.bf16.mxu0 0
        %6796 = vmatpush1.bf16.msra.mxu0 0
        %6797 = vmatprep.subr.bf16.mxu0 0
        %6798 = vmatpush1.bf16.msra.mxu0 0
        %6799 = vmatprep.mubr.bf16.mxu0 0
        %6800 = vmatmul.mubr.bf16.gmra.mrb[0].mxu0 %v6701
        %v6801 = vpop.f32.mrb[0].mxu0
        %v6802 = vadd.f32 0.0, %v6801
        %v6803 = vpop.f32.mrb[0].mxu0
        %v6804 = vpop.f32.mrb[0].mxu0
        %v6805 = vadd.f32 0.0, %v6804
        %v6806 = vpop.f32.mrb[0].mxu0
        %6807 = vmatprep.mubr.bf16.mxu0 0
        %6808 = vmatmul.mubr.bf16.gmra.mrb[0].mxu0 %v6703
        %v6809 = vpop.f32.mrb[0].mxu0
        %v6810 = vadd.f32 0.0, %v6809
        %v6811 = vpop.f32.mrb[0].mxu0
        %v6812 = vpop.f32.mrb[0].mxu0
        %v6813 = vadd.f32 0.0, %v6812
        %v6814 = vpop.f32.mrb[0].mxu0
        %6815 = vmatprep.mubr.bf16.mxu0 0
        %6816 = vmatmul.mubr.bf16.gmra.mrb[0].mxu0 %v6705
        %v6817 = vpop.f32.mrb[0].mxu0
        %v6818 = vadd.f32 0.0, %v6817
        %v6819 = vpop.f32.mrb[0].mxu0
        %v6820 = vpop.f32.mrb[0].mxu0
        %v6821 = vadd.f32 0.0, %v6820
        %v6822 = vpop.f32.mrb[0].mxu0
        %6823 = vmatprep.mubr.bf16.mxu0 0
        %6824 = vmatmul.mubr.bf16.gmra.mrb[0].mxu0 %v6707
        %v6825 = vpop.f32.mrb[0].mxu0
        %v6826 = vadd.f32 0.0, %v6825
        %v6827 = vpop.f32.mrb[0].mxu0
        %v6828 = vpop.f32.mrb[0].mxu0
        %v6829 = vadd.f32 0.0, %v6828
        %v6830 = vpop.f32.mrb[0].mxu0
        %6831 = vmatprep.mubr.bf16.mxu0 0
        %6832 = vmatmul.mubr.bf16.gmra.mrb[0].mxu0 %v6709
        %v6833 = vpop.f32.mrb[0].mxu0
        %v6834 = vadd.f32 0.0, %v6833
        %v6835 = vpop.f32.mrb[0].mxu0
        %v6836 = vpop.f32.mrb[0].mxu0
        %v6837 = vadd.f32 0.0, %v6836
        %v6838 = vpop.f32.mrb[0].mxu0
        %6839 = vmatprep.mubr.bf16.mxu0 0
        %6840 = vmatmul.mubr.bf16.gmra.mrb[0].mxu0 %v6711
        %v6841 = vpop.f32.mrb[0].mxu0
        %v6842 = vadd.f32 0.0, %v6841
        %v6843 = vpop.f32.mrb[0].mxu0
        %v6844 = vpop.f32.mrb[0].mxu0
        %v6845 = vadd.f32 0.0, %v6844
        %v6846 = vpop.f32.mrb[0].mxu0
        %6847 = vmatprep.mubr.bf16.mxu0 0
        %6848 = vmatmul.mubr.bf16.gmra.mrb[0].mxu0 %v6710
        %v6849 = vpop.f32.mrb[0].mxu0
        %v6850 = vadd.f32 0.0, %v6849
        %v6851 = vpop.f32.mrb[0].mxu0
        %v6852 = vpop.f32.mrb[0].mxu0
        %v6853 = vpop.f32.mrb[0].mxu0
        %6854 = vdwg.mxu0
        %v6855 = vadd.f32 %v6665, %v6802
        %v6856 = vadd.f32 %v6666, %v6805
        %v6857 = vadd.f32 %v6667, %v6810
        %v6858 = vadd.f32 %v6668, %v6813
        %v6859 = vadd.f32 %v6669, %v6818
        %v6860 = vadd.f32 %v6670, %v6821
        %v6861 = vadd.f32 %v6671, %v6826
        %v6862 = vadd.f32 %v6672, %v6829
        %v6863 = vadd.f32 %v6673, %v6834
        %v6864 = vadd.f32 %v6674, %v6837
        %v6865 = vadd.f32 %v6675, %v6842
        %v6866 = vadd.f32 %v6676, %v6845
        %v6867 = vadd.f32 %v6677, %v6850
        %v6868 = vld [vmem:[#allocation3 + $0x30] sm:$0xff]
        %s6869 = scalar_lea.vmem %s4, 256
        %v6870 = vld [vmem:[%s6869] sm:$0xf]
        %v6871 = vld [vmem:[%s6869 + $0x4] sm:$0xf]
        %v6872 = vld [vmem:[%s6869 + $0x8] sm:$0xf]
        %v6873 = vld [vmem:[%s6869 + $0xc] sm:$0xf]
        %v6874 = vld [vmem:[%s6869 + $0x10] sm:$0xf]
        %v6875 = vld [vmem:[%s6869 + $0x14] sm:$0xf]
        %v6876 = vld [vmem:[%s6869 + $0x18] sm:$0xf]
        %v6877 = vld [vmem:[%s6869 + $0x1c] sm:$0xf]
        %v6878 = vld [vmem:[%s6869 + $0x20] sm:$0xf]
        %v6879 = vld [vmem:[%s6869 + $0x24] sm:$0xf]
        %v6880 = vld [vmem:[%s6869 + $0x28] sm:$0xf]
        %v6881 = vld [vmem:[%s6869 + $0x2c] sm:$0xf]
        %v6882 = vld [vmem:[%s6869 + $0x30] sm:$0xf]
        %v6883 = vld [vmem:[%s6869 + $0x34] sm:$0xf]
        %v6884 = vld [vmem:[%s6869 + $0x38] sm:$0xf]
        %v6885 = vld [vmem:[%s6869 + $0x3c] sm:$0xf]
        %v6887 = vshrl.u32 %v6678, 16
        %v6889 = vrot.slane %v6887, 5
        %v6890 = vshll.u32 %v6678, 16
        %v6892 = vrot.slane %v6890, 6
        %v6893 = vor.u32 %v6889, %v6892
        %v6894 = vrot.slane %v6162, 5
        %v6895 = vrot.slane %v6158, 6
        %v6896 = vor.u32 %v6894, %v6895
        %v6897 = vsel %vm6050, %v6893, %v6896
        %v6898 = vrot.slane %v6170, 5
        %v6899 = vrot.slane %v6166, 6
        %v6900 = vor.u32 %v6898, %v6899
        %v6901 = vsel %vm6050, %v6896, %v6900
        %v6902 = vrot.slane %v6178, 5
        %v6903 = vrot.slane %v6174, 6
        %v6904 = vor.u32 %v6902, %v6903
        %v6905 = vsel %vm6050, %v6900, %v6904
        %v6906 = vrot.slane %v6186, 5
        %v6907 = vrot.slane %v6182, 6
        %v6908 = vor.u32 %v6906, %v6907
        %v6909 = vsel %vm6050, %v6904, %v6908
        %v6910 = vrot.slane %v6194, 5
        %v6911 = vrot.slane %v6190, 6
        %v6912 = vor.u32 %v6910, %v6911
        %v6913 = vsel %vm6050, %v6908, %v6912
        %v6915 = vshrl.u32 %v6868, 16
        %v6917 = vrot.slane %v6915, 5
        %v6918 = vshll.u32 %v6868, 16
        %v6920 = vrot.slane %v6918, 6
        %v6921 = vor.u32 %v6917, %v6920
        %v6922 = vsel %vm6050, %v6912, %v6921
        %v6946 = vunpack.c.l.b16 %v6870
        %v6947 = vunpack.c.l.b16 %v6871
        %v6948 = vunpack.c.l.b16 %v6872
        %v6949 = vunpack.c.l.b16 %v6873
        %v6950 = vunpack.c.l.b16 %v6874
        %v6951 = vunpack.c.l.b16 %v6875
        %v6952 = vunpack.c.l.b16 %v6876
        %v6953 = vunpack.c.l.b16 %v6877
        %v6954 = vunpack.c.l.b16 %v6878
        %v6955 = vunpack.c.l.b16 %v6879
        %v6956 = vunpack.c.l.b16 %v6880
        %v6957 = vunpack.c.l.b16 %v6881
        %v6958 = vunpack.c.l.b16 %v6882
        %v6959 = vunpack.c.l.b16 %v6883
        %v6960 = vunpack.c.l.b16 %v6884
        %v6961 = vunpack.c.l.b16 %v6885
        %v6962 = vpack.c.b16 %v6947, %v6946
        %v6963 = vpack.c.b16 %v6949, %v6948
        %v6964 = vpack.c.b16 %v6951, %v6950
        %v6965 = vpack.c.b16 %v6953, %v6952
        %v6966 = vpack.c.b16 %v6955, %v6954
        %v6967 = vpack.c.b16 %v6957, %v6956
        %v6968 = vpack.c.b16 %v6959, %v6958
        %v6969 = vpack.c.b16 %v6961, %v6960
        %6978 = vmatprep.subr.bf16.mxu0 0
        %6979 = vmatpush1.bf16.msra.mxu0 %v6962
        %6980 = vmatprep.subr.bf16.mxu0 0
        %6981 = vmatpush1.bf16.msra.mxu0 %v6963
        %6982 = vmatprep.subr.bf16.mxu0 0
        %6983 = vmatpush1.bf16.msra.mxu0 %v6964
        %6984 = vmatprep.subr.bf16.mxu0 0
        %6985 = vmatpush1.bf16.msra.mxu0 %v6965
        %6986 = vmatprep.subr.bf16.mxu0 0
        %6987 = vmatpush1.bf16.msra.mxu0 %v6966
        %6988 = vmatprep.subr.bf16.mxu0 0
        %6989 = vmatpush1.bf16.msra.mxu0 %v6967
        %6990 = vmatprep.subr.bf16.mxu0 0
        %6991 = vmatpush1.bf16.msra.mxu0 %v6968
        %6992 = vmatprep.subr.bf16.mxu0 0
        %6993 = vmatpush1.bf16.msra.mxu0 %v6969
        %6994 = vmatprep.subr.bf16.mxu0 0
        %6995 = vmatpush1.bf16.msra.mxu0 0
        %6996 = vmatprep.subr.bf16.mxu0 0
        %6997 = vmatpush1.bf16.msra.mxu0 0
        %6998 = vmatprep.subr.bf16.mxu0 0
        %6999 = vmatpush1.bf16.msra.mxu0 0
        %7000 = vmatprep.subr.bf16.mxu0 0
        %7001 = vmatpush1.bf16.msra.mxu0 0
        %7002 = vmatprep.subr.bf16.mxu0 0
        %7003 = vmatpush1.bf16.msra.mxu0 0
        %7004 = vmatprep.subr.bf16.mxu0 0
        %7005 = vmatpush1.bf16.msra.mxu0 0
        %7006 = vmatprep.subr.bf16.mxu0 0
        %7007 = vmatpush1.bf16.msra.mxu0 0
        %7008 = vmatprep.subr.bf16.mxu0 0
        %7009 = vmatpush1.bf16.msra.mxu0 0
        %7010 = vmatprep.mubr.bf16.mxu0 0
        %7011 = vmatmul.mubr.bf16.gmra.mrb[0].mxu0 %v6897
        %v7012 = vpop.f32.mrb[0].mxu0
        %v7013 = vadd.f32 0.0, %v7012
        %v7014 = vpop.f32.mrb[0].mxu0
        %v7015 = vpop.f32.mrb[0].mxu0
        %v7016 = vadd.f32 0.0, %v7015
        %v7017 = vpop.f32.mrb[0].mxu0
        %7018 = vmatprep.mubr.bf16.mxu0 0
        %7019 = vmatmul.mubr.bf16.gmra.mrb[0].mxu0 %v6901
        %v7020 = vpop.f32.mrb[0].mxu0
        %v7021 = vadd.f32 0.0, %v7020
        %v7022 = vpop.f32.mrb[0].mxu0
        %v7023 = vpop.f32.mrb[0].mxu0
        %v7024 = vadd.f32 0.0, %v7023
        %v7025 = vpop.f32.mrb[0].mxu0
        %7026 = vmatprep.mubr.bf16.mxu0 0
        %7027 = vmatmul.mubr.bf16.gmra.mrb[0].mxu0 %v6905
        %v7028 = vpop.f32.mrb[0].mxu0
        %v7029 = vadd.f32 0.0, %v7028
        %v7030 = vpop.f32.mrb[0].mxu0
        %v7031 = vpop.f32.mrb[0].mxu0
        %v7032 = vadd.f32 0.0, %v7031
        %v7033 = vpop.f32.mrb[0].mxu0
        %7034 = vmatprep.mubr.bf16.mxu0 0
        %7035 = vmatmul.mubr.bf16.gmra.mrb[0].mxu0 %v6909
        %v7036 = vpop.f32.mrb[0].mxu0
        %v7037 = vadd.f32 0.0, %v7036
        %v7038 = vpop.f32.mrb[0].mxu0
        %v7039 = vpop.f32.mrb[0].mxu0
        %v7040 = vadd.f32 0.0, %v7039
        %v7041 = vpop.f32.mrb[0].mxu0
        %7042 = vmatprep.mubr.bf16.mxu0 0
        %7043 = vmatmul.mubr.bf16.gmra.mrb[0].mxu0 %v6913
        %v7044 = vpop.f32.mrb[0].mxu0
        %v7045 = vadd.f32 0.0, %v7044
        %v7046 = vpop.f32.mrb[0].mxu0
        %v7047 = vpop.f32.mrb[0].mxu0
        %v7048 = vadd.f32 0.0, %v7047
        %v7049 = vpop.f32.mrb[0].mxu0
        %7050 = vmatprep.mubr.bf16.mxu0 0
        %7051 = vmatmul.mubr.bf16.gmra.mrb[0].mxu0 %v6922
        %v7052 = vpop.f32.mrb[0].mxu0
        %v7053 = vadd.f32 0.0, %v7052
        %v7054 = vpop.f32.mrb[0].mxu0
        %v7055 = vpop.f32.mrb[0].mxu0
        %v7056 = vadd.f32 0.0, %v7055
        %v7057 = vpop.f32.mrb[0].mxu0
        %7058 = vmatprep.mubr.bf16.mxu0 0
        %7059 = vmatmul.mubr.bf16.gmra.mrb[0].mxu0 %v6921
        %v7060 = vpop.f32.mrb[0].mxu0
        %v7061 = vadd.f32 0.0, %v7060
        %v7062 = vpop.f32.mrb[0].mxu0
        %v7063 = vpop.f32.mrb[0].mxu0
        %v7064 = vpop.f32.mrb[0].mxu0
        %7065 = vdwg.mxu0
        %v7066 = vadd.f32 %v6855, %v7013
        %v7067 = vadd.f32 %v6856, %v7016
        %v7068 = vadd.f32 %v6857, %v7021
        %v7069 = vadd.f32 %v6858, %v7024
        %v7070 = vadd.f32 %v6859, %v7029
        %v7071 = vadd.f32 %v6860, %v7032
        %v7072 = vadd.f32 %v6861, %v7037
        %v7073 = vadd.f32 %v6862, %v7040
        %v7074 = vadd.f32 %v6863, %v7045
        %v7075 = vadd.f32 %v6864, %v7048
        %v7076 = vadd.f32 %v6865, %v7053
        %v7077 = vadd.f32 %v6866, %v7056
        %v7078 = vadd.f32 %v6867, %v7061
        %v7079 = vld [vmem:[#allocation3] sm:$0xc0]
        %s7080 = scalar_lea.vmem %s4, 320
        %v7081 = vld [vmem:[%s7080] sm:$0xf]
        %v7082 = vld [vmem:[%s7080 + $0x4] sm:$0xf]
        %v7083 = vld [vmem:[%s7080 + $0x8] sm:$0xf]
        %v7084 = vld [vmem:[%s7080 + $0xc] sm:$0xf]
        %v7085 = vld [vmem:[%s7080 + $0x10] sm:$0xf]
        %v7086 = vld [vmem:[%s7080 + $0x14] sm:$0xf]
        %v7087 = vld [vmem:[%s7080 + $0x18] sm:$0xf]
        %v7088 = vld [vmem:[%s7080 + $0x1c] sm:$0xf]
        %v7089 = vld [vmem:[%s7080 + $0x20] sm:$0xf]
        %v7090 = vld [vmem:[%s7080 + $0x24] sm:$0xf]
        %v7091 = vld [vmem:[%s7080 + $0x28] sm:$0xf]
        %v7092 = vld [vmem:[%s7080 + $0x2c] sm:$0xf]
        %v7093 = vld [vmem:[%s7080 + $0x30] sm:$0xf]
        %v7094 = vld [vmem:[%s7080 + $0x34] sm:$0xf]
        %v7095 = vld [vmem:[%s7080 + $0x38] sm:$0xf]
        %v7096 = vld [vmem:[%s7080 + $0x3c] sm:$0xf]
        %v7099 = vrot.slane %v7079, 6
        %v7100 = vrot.slane %v6110, 6
        %v7101 = vsel %vm5841, %v7099, %v7100
        %v7102 = vrot.slane %v6111, 6
        %v7103 = vsel %vm5841, %v7100, %v7102
        %v7104 = vrot.slane %v6112, 6
        %v7105 = vsel %vm5841, %v7102, %v7104
        %v7106 = vrot.slane %v6113, 6
        %v7107 = vsel %vm5841, %v7104, %v7106
        %v7108 = vrot.slane %v6114, 6
        %v7109 = vsel %vm5841, %v7106, %v7108
        %v7110 = vrot.slane %v6868, 6
        %v7111 = vsel %vm5841, %v7108, %v7110
        %v7135 = vunpack.c.l.b16 %v7081
        %v7136 = vunpack.c.l.b16 %v7082
        %v7137 = vunpack.c.l.b16 %v7083
        %v7138 = vunpack.c.l.b16 %v7084
        %v7139 = vunpack.c.l.b16 %v7085
        %v7140 = vunpack.c.l.b16 %v7086
        %v7141 = vunpack.c.l.b16 %v7087
        %v7142 = vunpack.c.l.b16 %v7088
        %v7143 = vunpack.c.l.b16 %v7089
        %v7144 = vunpack.c.l.b16 %v7090
        %v7145 = vunpack.c.l.b16 %v7091
        %v7146 = vunpack.c.l.b16 %v7092
        %v7147 = vunpack.c.l.b16 %v7093
        %v7148 = vunpack.c.l.b16 %v7094
        %v7149 = vunpack.c.l.b16 %v7095
        %v7150 = vunpack.c.l.b16 %v7096
        %v7151 = vpack.c.b16 %v7136, %v7135
        %v7152 = vpack.c.b16 %v7138, %v7137
        %v7153 = vpack.c.b16 %v7140, %v7139
        %v7154 = vpack.c.b16 %v7142, %v7141
        %v7155 = vpack.c.b16 %v7144, %v7143
        %v7156 = vpack.c.b16 %v7146, %v7145
        %v7157 = vpack.c.b16 %v7148, %v7147
        %v7158 = vpack.c.b16 %v7150, %v7149
        %7167 = vmatprep.subr.bf16.mxu0 0
        %7168 = vmatpush1.bf16.msra.mxu0 %v7151
        %7169 = vmatprep.subr.bf16.mxu0 0
        %7170 = vmatpush1.bf16.msra.mxu0 %v7152
        %7171 = vmatprep.subr.bf16.mxu0 0
        %7172 = vmatpush1.bf16.msra.mxu0 %v7153
        %7173 = vmatprep.subr.bf16.mxu0 0
        %7174 = vmatpush1.bf16.msra.mxu0 %v7154
        %7175 = vmatprep.subr.bf16.mxu0 0
        %7176 = vmatpush1.bf16.msra.mxu0 %v7155
        %7177 = vmatprep.subr.bf16.mxu0 0
        %7178 = vmatpush1.bf16.msra.mxu0 %v7156
        %7179 = vmatprep.subr.bf16.mxu0 0
        %7180 = vmatpush1.bf16.msra.mxu0 %v7157
        %7181 = vmatprep.subr.bf16.mxu0 0
        %7182 = vmatpush1.bf16.msra.mxu0 %v7158
        %7183 = vmatprep.subr.bf16.mxu0 0
        %7184 = vmatpush1.bf16.msra.mxu0 0
        %7185 = vmatprep.subr.bf16.mxu0 0
        %7186 = vmatpush1.bf16.msra.mxu0 0
        %7187 = vmatprep.subr.bf16.mxu0 0
        %7188 = vmatpush1.bf16.msra.mxu0 0
        %7189 = vmatprep.subr.bf16.mxu0 0
        %7190 = vmatpush1.bf16.msra.mxu0 0
        %7191 = vmatprep.subr.bf16.mxu0 0
        %7192 = vmatpush1.bf16.msra.mxu0 0
        %7193 = vmatprep.subr.bf16.mxu0 0
        %7194 = vmatpush1.bf16.msra.mxu0 0
        %7195 = vmatprep.subr.bf16.mxu0 0
        %7196 = vmatpush1.bf16.msra.mxu0 0
        %7197 = vmatprep.subr.bf16.mxu0 0
        %7198 = vmatpush1.bf16.msra.mxu0 0
        %7199 = vmatprep.mubr.bf16.mxu0 0
        %7200 = vmatmul.mubr.bf16.gmra.mrb[0].mxu0 %v7101
        %v7201 = vpop.f32.mrb[0].mxu0
        %v7202 = vadd.f32 0.0, %v7201
        %v7203 = vpop.f32.mrb[0].mxu0
        %v7204 = vpop.f32.mrb[0].mxu0
        %v7205 = vadd.f32 0.0, %v7204
        %v7206 = vpop.f32.mrb[0].mxu0
        %7207 = vmatprep.mubr.bf16.mxu0 0
        %7208 = vmatmul.mubr.bf16.gmra.mrb[0].mxu0 %v7103
        %v7209 = vpop.f32.mrb[0].mxu0
        %v7210 = vadd.f32 0.0, %v7209
        %v7211 = vpop.f32.mrb[0].mxu0
        %v7212 = vpop.f32.mrb[0].mxu0
        %v7213 = vadd.f32 0.0, %v7212
        %v7214 = vpop.f32.mrb[0].mxu0
        %7215 = vmatprep.mubr.bf16.mxu0 0
        %7216 = vmatmul.mubr.bf16.gmra.mrb[0].mxu0 %v7105
        %v7217 = vpop.f32.mrb[0].mxu0
        %v7218 = vadd.f32 0.0, %v7217
        %v7219 = vpop.f32.mrb[0].mxu0
        %v7220 = vpop.f32.mrb[0].mxu0
        %v7221 = vadd.f32 0.0, %v7220
        %v7222 = vpop.f32.mrb[0].mxu0
        %7223 = vmatprep.mubr.bf16.mxu0 0
        %7224 = vmatmul.mubr.bf16.gmra.mrb[0].mxu0 %v7107
        %v7225 = vpop.f32.mrb[0].mxu0
        %v7226 = vadd.f32 0.0, %v7225
        %v7227 = vpop.f32.mrb[0].mxu0
        %v7228 = vpop.f32.mrb[0].mxu0
        %v7229 = vadd.f32 0.0, %v7228
        %v7230 = vpop.f32.mrb[0].mxu0
        %7231 = vmatprep.mubr.bf16.mxu0 0
        %7232 = vmatmul.mubr.bf16.gmra.mrb[0].mxu0 %v7109
        %v7233 = vpop.f32.mrb[0].mxu0
        %v7234 = vadd.f32 0.0, %v7233
        %v7235 = vpop.f32.mrb[0].mxu0
        %v7236 = vpop.f32.mrb[0].mxu0
        %v7237 = vadd.f32 0.0, %v7236
        %v7238 = vpop.f32.mrb[0].mxu0
        %7239 = vmatprep.mubr.bf16.mxu0 0
        %7240 = vmatmul.mubr.bf16.gmra.mrb[0].mxu0 %v7111
        %v7241 = vpop.f32.mrb[0].mxu0
        %v7242 = vadd.f32 0.0, %v7241
        %v7243 = vpop.f32.mrb[0].mxu0
        %v7244 = vpop.f32.mrb[0].mxu0
        %v7245 = vadd.f32 0.0, %v7244
        %v7246 = vpop.f32.mrb[0].mxu0
        %7247 = vmatprep.mubr.bf16.mxu0 0
        %7248 = vmatmul.mubr.bf16.gmra.mrb[0].mxu0 %v7110
        %v7249 = vpop.f32.mrb[0].mxu0
        %v7250 = vadd.f32 0.0, %v7249
        %v7251 = vpop.f32.mrb[0].mxu0
        %v7252 = vpop.f32.mrb[0].mxu0
        %v7253 = vpop.f32.mrb[0].mxu0
        %7254 = vdwg.mxu0
        %v7255 = vadd.f32 %v7066, %v7202
        %v7256 = vadd.f32 %v7067, %v7205
        %v7257 = vadd.f32 %v7068, %v7210
        %v7258 = vadd.f32 %v7069, %v7213
        %v7259 = vadd.f32 %v7070, %v7218
        %v7260 = vadd.f32 %v7071, %v7221
        %v7261 = vadd.f32 %v7072, %v7226
        %v7262 = vadd.f32 %v7073, %v7229
        %v7263 = vadd.f32 %v7074, %v7234
        %v7264 = vadd.f32 %v7075, %v7237
        %v7265 = vadd.f32 %v7076, %v7242
        %v7266 = vadd.f32 %v7077, %v7245
        %v7267 = vadd.f32 %v7078, %v7250
        %v7268 = vld [vmem:[#allocation3 + $0x8] sm:$0xfc]
        %v7269 = vld [vmem:[#allocation3 + $0x10] sm:$0xff]
        %v7270 = vld [vmem:[#allocation3 + $0x18] sm:$0xff]
        %v7271 = vld [vmem:[#allocation3 + $0x20] sm:$0xff]
        %v7272 = vld [vmem:[#allocation3 + $0x28] sm:$0xff]
        %v7273 = vld [vmem:[#allocation3 + $0x30] sm:$0xff]
        %v7274 = vld [vmem:[#allocation3 + $0x38] sm:$0xf]
        %s7275 = scalar_lea.vmem %s4, 384
        %v7276 = vld [vmem:[%s7275] sm:$0xf]
        %v7277 = vld [vmem:[%s7275 + $0x4] sm:$0xf]
        %v7278 = vld [vmem:[%s7275 + $0x8] sm:$0xf]
        %v7279 = vld [vmem:[%s7275 + $0xc] sm:$0xf]
        %v7280 = vld [vmem:[%s7275 + $0x10] sm:$0xf]
        %v7281 = vld [vmem:[%s7275 + $0x14] sm:$0xf]
        %v7282 = vld [vmem:[%s7275 + $0x18] sm:$0xf]
        %v7283 = vld [vmem:[%s7275 + $0x1c] sm:$0xf]
        %v7284 = vld [vmem:[%s7275 + $0x20] sm:$0xf]
        %v7285 = vld [vmem:[%s7275 + $0x24] sm:$0xf]
        %v7286 = vld [vmem:[%s7275 + $0x28] sm:$0xf]
        %v7287 = vld [vmem:[%s7275 + $0x2c] sm:$0xf]
        %v7288 = vld [vmem:[%s7275 + $0x30] sm:$0xf]
        %v7289 = vld [vmem:[%s7275 + $0x34] sm:$0xf]
        %v7290 = vld [vmem:[%s7275 + $0x38] sm:$0xf]
        %v7291 = vld [vmem:[%s7275 + $0x3c] sm:$0xf]
        %v7299 = vrot.slane %v7268, 2
        %v7300 = vrot.slane %v7269, 2
        %v7301 = vsel %vm2531, %v7299, %v7300
        %v7302 = vrot.slane %v7270, 2
        %v7303 = vsel %vm2531, %v7300, %v7302
        %v7304 = vrot.slane %v7271, 2
        %v7305 = vsel %vm2531, %v7302, %v7304
        %v7306 = vrot.slane %v7272, 2
        %v7307 = vsel %vm2531, %v7304, %v7306
        %v7308 = vrot.slane %v7273, 2
        %v7309 = vsel %vm2531, %v7306, %v7308
        %v7310 = vrot.slane %v7274, 2
        %v7311 = vsel %vm2531, %v7308, %v7310
        %v7335 = vunpack.c.l.b16 %v7276
        %v7336 = vunpack.c.l.b16 %v7277
        %v7337 = vunpack.c.l.b16 %v7278
        %v7338 = vunpack.c.l.b16 %v7279
        %v7339 = vunpack.c.l.b16 %v7280
        %v7340 = vunpack.c.l.b16 %v7281
        %v7341 = vunpack.c.l.b16 %v7282
        %v7342 = vunpack.c.l.b16 %v7283
        %v7343 = vunpack.c.l.b16 %v7284
        %v7344 = vunpack.c.l.b16 %v7285
        %v7345 = vunpack.c.l.b16 %v7286
        %v7346 = vunpack.c.l.b16 %v7287
        %v7347 = vunpack.c.l.b16 %v7288
        %v7348 = vunpack.c.l.b16 %v7289
        %v7349 = vunpack.c.l.b16 %v7290
        %v7350 = vunpack.c.l.b16 %v7291
        %v7351 = vpack.c.b16 %v7336, %v7335
        %v7352 = vpack.c.b16 %v7338, %v7337
        %v7353 = vpack.c.b16 %v7340, %v7339
        %v7354 = vpack.c.b16 %v7342, %v7341
        %v7355 = vpack.c.b16 %v7344, %v7343
        %v7356 = vpack.c.b16 %v7346, %v7345
        %v7357 = vpack.c.b16 %v7348, %v7347
        %v7358 = vpack.c.b16 %v7350, %v7349
        %7367 = vmatprep.subr.bf16.mxu0 0
        %7368 = vmatpush1.bf16.msra.mxu0 %v7351
        %7369 = vmatprep.subr.bf16.mxu0 0
        %7370 = vmatpush1.bf16.msra.mxu0 %v7352
        %7371 = vmatprep.subr.bf16.mxu0 0
        %7372 = vmatpush1.bf16.msra.mxu0 %v7353
        %7373 = vmatprep.subr.bf16.mxu0 0
        %7374 = vmatpush1.bf16.msra.mxu0 %v7354
        %7375 = vmatprep.subr.bf16.mxu0 0
        %7376 = vmatpush1.bf16.msra.mxu0 %v7355
        %7377 = vmatprep.subr.bf16.mxu0 0
        %7378 = vmatpush1.bf16.msra.mxu0 %v7356
        %7379 = vmatprep.subr.bf16.mxu0 0
        %7380 = vmatpush1.bf16.msra.mxu0 %v7357
        %7381 = vmatprep.subr.bf16.mxu0 0
        %7382 = vmatpush1.bf16.msra.mxu0 %v7358
        %7383 = vmatprep.subr.bf16.mxu0 0
        %7384 = vmatpush1.bf16.msra.mxu0 0
        %7385 = vmatprep.subr.bf16.mxu0 0
        %7386 = vmatpush1.bf16.msra.mxu0 0
        %7387 = vmatprep.subr.bf16.mxu0 0
        %7388 = vmatpush1.bf16.msra.mxu0 0
        %7389 = vmatprep.subr.bf16.mxu0 0
        %7390 = vmatpush1.bf16.msra.mxu0 0
        %7391 = vmatprep.subr.bf16.mxu0 0
        %7392 = vmatpush1.bf16.msra.mxu0 0
        %7393 = vmatprep.subr.bf16.mxu0 0
        %7394 = vmatpush1.bf16.msra.mxu0 0
        %7395 = vmatprep.subr.bf16.mxu0 0
        %7396 = vmatpush1.bf16.msra.mxu0 0
        %7397 = vmatprep.subr.bf16.mxu0 0
        %7398 = vmatpush1.bf16.msra.mxu0 0
        %7399 = vmatprep.mubr.bf16.mxu0 0
        %7400 = vmatmul.mubr.bf16.gmra.mrb[0].mxu0 %v7301
        %v7401 = vpop.f32.mrb[0].mxu0
        %v7402 = vadd.f32 0.0, %v7401
        %v7403 = vpop.f32.mrb[0].mxu0
        %v7404 = vpop.f32.mrb[0].mxu0
        %v7405 = vadd.f32 0.0, %v7404
        %v7406 = vpop.f32.mrb[0].mxu0
        %7407 = vmatprep.mubr.bf16.mxu0 0
        %7408 = vmatmul.mubr.bf16.gmra.mrb[0].mxu0 %v7303
        %v7409 = vpop.f32.mrb[0].mxu0
        %v7410 = vadd.f32 0.0, %v7409
        %v7411 = vpop.f32.mrb[0].mxu0
        %v7412 = vpop.f32.mrb[0].mxu0
        %v7413 = vadd.f32 0.0, %v7412
        %v7414 = vpop.f32.mrb[0].mxu0
        %7415 = vmatprep.mubr.bf16.mxu0 0
        %7416 = vmatmul.mubr.bf16.gmra.mrb[0].mxu0 %v7305
        %v7417 = vpop.f32.mrb[0].mxu0
        %v7418 = vadd.f32 0.0, %v7417
        %v7419 = vpop.f32.mrb[0].mxu0
        %v7420 = vpop.f32.mrb[0].mxu0
        %v7421 = vadd.f32 0.0, %v7420
        %v7422 = vpop.f32.mrb[0].mxu0
        %7423 = vmatprep.mubr.bf16.mxu0 0
        %7424 = vmatmul.mubr.bf16.gmra.mrb[0].mxu0 %v7307
        %v7425 = vpop.f32.mrb[0].mxu0
        %v7426 = vadd.f32 0.0, %v7425
        %v7427 = vpop.f32.mrb[0].mxu0
        %v7428 = vpop.f32.mrb[0].mxu0
        %v7429 = vadd.f32 0.0, %v7428
        %v7430 = vpop.f32.mrb[0].mxu0
        %7431 = vmatprep.mubr.bf16.mxu0 0
        %7432 = vmatmul.mubr.bf16.gmra.mrb[0].mxu0 %v7309
        %v7433 = vpop.f32.mrb[0].mxu0
        %v7434 = vadd.f32 0.0, %v7433
        %v7435 = vpop.f32.mrb[0].mxu0
        %v7436 = vpop.f32.mrb[0].mxu0
        %v7437 = vadd.f32 0.0, %v7436
        %v7438 = vpop.f32.mrb[0].mxu0
        %7439 = vmatprep.mubr.bf16.mxu0 0
        %7440 = vmatmul.mubr.bf16.gmra.mrb[0].mxu0 %v7311
        %v7441 = vpop.f32.mrb[0].mxu0
        %v7442 = vadd.f32 0.0, %v7441
        %v7443 = vpop.f32.mrb[0].mxu0
        %v7444 = vpop.f32.mrb[0].mxu0
        %v7445 = vadd.f32 0.0, %v7444
        %v7446 = vpop.f32.mrb[0].mxu0
        %7447 = vmatprep.mubr.bf16.mxu0 0
        %7448 = vmatmul.mubr.bf16.gmra.mrb[0].mxu0 %v7310
        %v7449 = vpop.f32.mrb[0].mxu0
        %v7450 = vadd.f32 0.0, %v7449
        %v7451 = vpop.f32.mrb[0].mxu0
        %v7452 = vpop.f32.mrb[0].mxu0
        %v7453 = vpop.f32.mrb[0].mxu0
        %7454 = vdwg.mxu0
        %v7455 = vadd.f32 %v7255, %v7402
        %v7456 = vadd.f32 %v7256, %v7405
        %v7457 = vadd.f32 %v7257, %v7410
        %v7458 = vadd.f32 %v7258, %v7413
        %v7459 = vadd.f32 %v7259, %v7418
        %v7460 = vadd.f32 %v7260, %v7421
        %v7461 = vadd.f32 %v7261, %v7426
        %v7462 = vadd.f32 %v7262, %v7429
        %v7463 = vadd.f32 %v7263, %v7434
        %v7464 = vadd.f32 %v7264, %v7437
        %v7465 = vadd.f32 %v7265, %v7442
        %v7466 = vadd.f32 %v7266, %v7445
        %v7467 = vadd.f32 %v7267, %v7450
        %v7468 = vld [vmem:[#allocation3 + $0x38] sm:$0x1f]
        %s7469 = scalar_lea.vmem %s4, 448
        %v7470 = vld [vmem:[%s7469] sm:$0xf]
        %v7471 = vld [vmem:[%s7469 + $0x4] sm:$0xf]
        %v7472 = vld [vmem:[%s7469 + $0x8] sm:$0xf]
        %v7473 = vld [vmem:[%s7469 + $0xc] sm:$0xf]
        %v7474 = vld [vmem:[%s7469 + $0x10] sm:$0xf]
        %v7475 = vld [vmem:[%s7469 + $0x14] sm:$0xf]
        %v7476 = vld [vmem:[%s7469 + $0x18] sm:$0xf]
        %v7477 = vld [vmem:[%s7469 + $0x1c] sm:$0xf]
        %v7478 = vld [vmem:[%s7469 + $0x20] sm:$0xf]
        %v7479 = vld [vmem:[%s7469 + $0x24] sm:$0xf]
        %v7480 = vld [vmem:[%s7469 + $0x28] sm:$0xf]
        %v7481 = vld [vmem:[%s7469 + $0x2c] sm:$0xf]
        %v7482 = vld [vmem:[%s7469 + $0x30] sm:$0xf]
        %v7483 = vld [vmem:[%s7469 + $0x34] sm:$0xf]
        %v7484 = vld [vmem:[%s7469 + $0x38] sm:$0xf]
        %v7485 = vld [vmem:[%s7469 + $0x3c] sm:$0xf]
        %v7487 = vshrl.u32 %v7268, 16
        %v7489 = vrot.slane %v7487, 2
        %v7490 = vshll.u32 %v7268, 16
        %v7492 = vrot.slane %v7490, 3
        %v7493 = vor.u32 %v7489, %v7492
        %v7495 = vshrl.u32 %v7269, 16
        %v7497 = vrot.slane %v7495, 2
        %v7498 = vshll.u32 %v7269, 16
        %v7500 = vrot.slane %v7498, 3
        %v7501 = vor.u32 %v7497, %v7500
        %v7502 = vsel %vm3266, %v7493, %v7501
        %v7504 = vshrl.u32 %v7270, 16
        %v7506 = vrot.slane %v7504, 2
        %v7507 = vshll.u32 %v7270, 16
        %v7509 = vrot.slane %v7507, 3
        %v7510 = vor.u32 %v7506, %v7509
        %v7511 = vsel %vm3266, %v7501, %v7510
        %v7513 = vshrl.u32 %v7271, 16
        %v7515 = vrot.slane %v7513, 2
        %v7516 = vshll.u32 %v7271, 16
        %v7518 = vrot.slane %v7516, 3
        %v7519 = vor.u32 %v7515, %v7518
        %v7520 = vsel %vm3266, %v7510, %v7519
        %v7522 = vshrl.u32 %v7272, 16
        %v7524 = vrot.slane %v7522, 2
        %v7525 = vshll.u32 %v7272, 16
        %v7527 = vrot.slane %v7525, 3
        %v7528 = vor.u32 %v7524, %v7527
        %v7529 = vsel %vm3266, %v7519, %v7528
        %v7531 = vshrl.u32 %v7273, 16
        %v7533 = vrot.slane %v7531, 2
        %v7534 = vshll.u32 %v7273, 16
        %v7536 = vrot.slane %v7534, 3
        %v7537 = vor.u32 %v7533, %v7536
        %v7538 = vsel %vm3266, %v7528, %v7537
        %v7540 = vshrl.u32 %v7468, 16
        %v7542 = vrot.slane %v7540, 2
        %v7543 = vshll.u32 %v7468, 16
        %v7545 = vrot.slane %v7543, 3
        %v7546 = vor.u32 %v7542, %v7545
        %v7547 = vsel %vm3266, %v7537, %v7546
        %v7571 = vunpack.c.l.b16 %v7470
        %v7572 = vunpack.c.l.b16 %v7471
        %v7573 = vunpack.c.l.b16 %v7472
        %v7574 = vunpack.c.l.b16 %v7473
        %v7575 = vunpack.c.l.b16 %v7474
        %v7576 = vunpack.c.l.b16 %v7475
        %v7577 = vunpack.c.l.b16 %v7476
        %v7578 = vunpack.c.l.b16 %v7477
        %v7579 = vunpack.c.l.b16 %v7478
        %v7580 = vunpack.c.l.b16 %v7479
        %v7581 = vunpack.c.l.b16 %v7480
        %v7582 = vunpack.c.l.b16 %v7481
        %v7583 = vunpack.c.l.b16 %v7482
        %v7584 = vunpack.c.l.b16 %v7483
        %v7585 = vunpack.c.l.b16 %v7484
        %v7586 = vunpack.c.l.b16 %v7485
        %v7587 = vpack.c.b16 %v7572, %v7571
        %v7588 = vpack.c.b16 %v7574, %v7573
        %v7589 = vpack.c.b16 %v7576, %v7575
        %v7590 = vpack.c.b16 %v7578, %v7577
        %v7591 = vpack.c.b16 %v7580, %v7579
        %v7592 = vpack.c.b16 %v7582, %v7581
        %v7593 = vpack.c.b16 %v7584, %v7583
        %v7594 = vpack.c.b16 %v7586, %v7585
        %7603 = vmatprep.subr.bf16.mxu0 0
        %7604 = vmatpush1.bf16.msra.mxu0 %v7587
        %7605 = vmatprep.subr.bf16.mxu0 0
        %7606 = vmatpush1.bf16.msra.mxu0 %v7588
        %7607 = vmatprep.subr.bf16.mxu0 0
        %7608 = vmatpush1.bf16.msra.mxu0 %v7589
        %7609 = vmatprep.subr.bf16.mxu0 0
        %7610 = vmatpush1.bf16.msra.mxu0 %v7590
        %7611 = vmatprep.subr.bf16.mxu0 0
        %7612 = vmatpush1.bf16.msra.mxu0 %v7591
        %7613 = vmatprep.subr.bf16.mxu0 0
        %7614 = vmatpush1.bf16.msra.mxu0 %v7592
        %7615 = vmatprep.subr.bf16.mxu0 0
        %7616 = vmatpush1.bf16.msra.mxu0 %v7593
        %7617 = vmatprep.subr.bf16.mxu0 0
        %7618 = vmatpush1.bf16.msra.mxu0 %v7594
        %7619 = vmatprep.subr.bf16.mxu0 0
        %7620 = vmatpush1.bf16.msra.mxu0 0
        %7621 = vmatprep.subr.bf16.mxu0 0
        %7622 = vmatpush1.bf16.msra.mxu0 0
        %7623 = vmatprep.subr.bf16.mxu0 0
        %7624 = vmatpush1.bf16.msra.mxu0 0
        %7625 = vmatprep.subr.bf16.mxu0 0
        %7626 = vmatpush1.bf16.msra.mxu0 0
        %7627 = vmatprep.subr.bf16.mxu0 0
        %7628 = vmatpush1.bf16.msra.mxu0 0
        %7629 = vmatprep.subr.bf16.mxu0 0
        %7630 = vmatpush1.bf16.msra.mxu0 0
        %7631 = vmatprep.subr.bf16.mxu0 0
        %7632 = vmatpush1.bf16.msra.mxu0 0
        %7633 = vmatprep.subr.bf16.mxu0 0
        %7634 = vmatpush1.bf16.msra.mxu0 0
        %7635 = vmatprep.mubr.bf16.mxu0 0
        %7636 = vmatmul.mubr.bf16.gmra.mrb[0].mxu0 %v7502
        %v7637 = vpop.f32.mrb[0].mxu0
        %v7638 = vadd.f32 0.0, %v7637
        %v7639 = vpop.f32.mrb[0].mxu0
        %v7640 = vpop.f32.mrb[0].mxu0
        %v7641 = vadd.f32 0.0, %v7640
        %v7642 = vpop.f32.mrb[0].mxu0
        %7643 = vmatprep.mubr.bf16.mxu0 0
        %7644 = vmatmul.mubr.bf16.gmra.mrb[0].mxu0 %v7511
        %v7645 = vpop.f32.mrb[0].mxu0
        %v7646 = vadd.f32 0.0, %v7645
        %v7647 = vpop.f32.mrb[0].mxu0
        %v7648 = vpop.f32.mrb[0].mxu0
        %v7649 = vadd.f32 0.0, %v7648
        %v7650 = vpop.f32.mrb[0].mxu0
        %7651 = vmatprep.mubr.bf16.mxu0 0
        %7652 = vmatmul.mubr.bf16.gmra.mrb[0].mxu0 %v7520
        %v7653 = vpop.f32.mrb[0].mxu0
        %v7654 = vadd.f32 0.0, %v7653
        %v7655 = vpop.f32.mrb[0].mxu0
        %v7656 = vpop.f32.mrb[0].mxu0
        %v7657 = vadd.f32 0.0, %v7656
        %v7658 = vpop.f32.mrb[0].mxu0
        %7659 = vmatprep.mubr.bf16.mxu0 0
        %7660 = vmatmul.mubr.bf16.gmra.mrb[0].mxu0 %v7529
        %v7661 = vpop.f32.mrb[0].mxu0
        %v7662 = vadd.f32 0.0, %v7661
        %v7663 = vpop.f32.mrb[0].mxu0
        %v7664 = vpop.f32.mrb[0].mxu0
        %v7665 = vadd.f32 0.0, %v7664
        %v7666 = vpop.f32.mrb[0].mxu0
        %7667 = vmatprep.mubr.bf16.mxu0 0
        %7668 = vmatmul.mubr.bf16.gmra.mrb[0].mxu0 %v7538
        %v7669 = vpop.f32.mrb[0].mxu0
        %v7670 = vadd.f32 0.0, %v7669
        %v7671 = vpop.f32.mrb[0].mxu0
        %v7672 = vpop.f32.mrb[0].mxu0
        %v7673 = vadd.f32 0.0, %v7672
        %v7674 = vpop.f32.mrb[0].mxu0
        %7675 = vmatprep.mubr.bf16.mxu0 0
        %7676 = vmatmul.mubr.bf16.gmra.mrb[0].mxu0 %v7547
        %v7677 = vpop.f32.mrb[0].mxu0
        %v7678 = vadd.f32 0.0, %v7677
        %v7679 = vpop.f32.mrb[0].mxu0
        %v7680 = vpop.f32.mrb[0].mxu0
        %v7681 = vadd.f32 0.0, %v7680
        %v7682 = vpop.f32.mrb[0].mxu0
        %7683 = vmatprep.mubr.bf16.mxu0 0
        %7684 = vmatmul.mubr.bf16.gmra.mrb[0].mxu0 %v7546
        %v7685 = vpop.f32.mrb[0].mxu0
        %v7686 = vadd.f32 0.0, %v7685
        %v7687 = vpop.f32.mrb[0].mxu0
        %v7688 = vpop.f32.mrb[0].mxu0
        %v7689 = vpop.f32.mrb[0].mxu0
        %7690 = vdwg.mxu0
        %v7691 = vadd.f32 %v7455, %v7638
        %v7692 = vadd.f32 %v7456, %v7641
        %v7693 = vadd.f32 %v7457, %v7646
        %v7694 = vadd.f32 %v7458, %v7649
        %v7695 = vadd.f32 %v7459, %v7654
        %v7696 = vadd.f32 %v7460, %v7657
        %v7697 = vadd.f32 %v7461, %v7662
        %v7698 = vadd.f32 %v7462, %v7665
        %v7699 = vadd.f32 %v7463, %v7670
        %v7700 = vadd.f32 %v7464, %v7673
        %v7701 = vadd.f32 %v7465, %v7678
        %v7702 = vadd.f32 %v7466, %v7681
        %v7703 = vadd.f32 %v7467, %v7686
        %v7704 = vld [vmem:[#allocation3 + $0x8] sm:$0xf8]
        %s7705 = scalar_lea.vmem %s4, 512
        %v7706 = vld [vmem:[%s7705] sm:$0xf]
        %v7707 = vld [vmem:[%s7705 + $0x4] sm:$0xf]
        %v7708 = vld [vmem:[%s7705 + $0x8] sm:$0xf]
        %v7709 = vld [vmem:[%s7705 + $0xc] sm:$0xf]
        %v7710 = vld [vmem:[%s7705 + $0x10] sm:$0xf]
        %v7711 = vld [vmem:[%s7705 + $0x14] sm:$0xf]
        %v7712 = vld [vmem:[%s7705 + $0x18] sm:$0xf]
        %v7713 = vld [vmem:[%s7705 + $0x1c] sm:$0xf]
        %v7714 = vld [vmem:[%s7705 + $0x20] sm:$0xf]
        %v7715 = vld [vmem:[%s7705 + $0x24] sm:$0xf]
        %v7716 = vld [vmem:[%s7705 + $0x28] sm:$0xf]
        %v7717 = vld [vmem:[%s7705 + $0x2c] sm:$0xf]
        %v7718 = vld [vmem:[%s7705 + $0x30] sm:$0xf]
        %v7719 = vld [vmem:[%s7705 + $0x34] sm:$0xf]
        %v7720 = vld [vmem:[%s7705 + $0x38] sm:$0xf]
        %v7721 = vld [vmem:[%s7705 + $0x3c] sm:$0xf]
        %v7724 = vrot.slane %v7704, 3
        %v7725 = vrot.slane %v7269, 3
        %v7726 = vsel %vm3697, %v7724, %v7725
        %v7727 = vrot.slane %v7270, 3
        %v7728 = vsel %vm3697, %v7725, %v7727
        %v7729 = vrot.slane %v7271, 3
        %v7730 = vsel %vm3697, %v7727, %v7729
        %v7731 = vrot.slane %v7272, 3
        %v7732 = vsel %vm3697, %v7729, %v7731
        %v7733 = vrot.slane %v7273, 3
        %v7734 = vsel %vm3697, %v7731, %v7733
        %v7735 = vrot.slane %v7468, 3
        %v7736 = vsel %vm3697, %v7733, %v7735
        %v7760 = vunpack.c.l.b16 %v7706
        %v7761 = vunpack.c.l.b16 %v7707
        %v7762 = vunpack.c.l.b16 %v7708
        %v7763 = vunpack.c.l.b16 %v7709
        %v7764 = vunpack.c.l.b16 %v7710
        %v7765 = vunpack.c.l.b16 %v7711
        %v7766 = vunpack.c.l.b16 %v7712
        %v7767 = vunpack.c.l.b16 %v7713
        %v7768 = vunpack.c.l.b16 %v7714
        %v7769 = vunpack.c.l.b16 %v7715
        %v7770 = vunpack.c.l.b16 %v7716
        %v7771 = vunpack.c.l.b16 %v7717
        %v7772 = vunpack.c.l.b16 %v7718
        %v7773 = vunpack.c.l.b16 %v7719
        %v7774 = vunpack.c.l.b16 %v7720
        %v7775 = vunpack.c.l.b16 %v7721
        %v7776 = vpack.c.b16 %v7761, %v7760
        %v7777 = vpack.c.b16 %v7763, %v7762
        %v7778 = vpack.c.b16 %v7765, %v7764
        %v7779 = vpack.c.b16 %v7767, %v7766
        %v7780 = vpack.c.b16 %v7769, %v7768
        %v7781 = vpack.c.b16 %v7771, %v7770
        %v7782 = vpack.c.b16 %v7773, %v7772
        %v7783 = vpack.c.b16 %v7775, %v7774
        %7792 = vmatprep.subr.bf16.mxu0 0
        %7793 = vmatpush1.bf16.msra.mxu0 %v7776
        %7794 = vmatprep.subr.bf16.mxu0 0
        %7795 = vmatpush1.bf16.msra.mxu0 %v7777
        %7796 = vmatprep.subr.bf16.mxu0 0
        %7797 = vmatpush1.bf16.msra.mxu0 %v7778
        %7798 = vmatprep.subr.bf16.mxu0 0
        %7799 = vmatpush1.bf16.msra.mxu0 %v7779
        %7800 = vmatprep.subr.bf16.mxu0 0
        %7801 = vmatpush1.bf16.msra.mxu0 %v7780
        %7802 = vmatprep.subr.bf16.mxu0 0
        %7803 = vmatpush1.bf16.msra.mxu0 %v7781
        %7804 = vmatprep.subr.bf16.mxu0 0
        %7805 = vmatpush1.bf16.msra.mxu0 %v7782
        %7806 = vmatprep.subr.bf16.mxu0 0
        %7807 = vmatpush1.bf16.msra.mxu0 %v7783
        %7808 = vmatprep.subr.bf16.mxu0 0
        %7809 = vmatpush1.bf16.msra.mxu0 0
        %7810 = vmatprep.subr.bf16.mxu0 0
        %7811 = vmatpush1.bf16.msra.mxu0 0
        %7812 = vmatprep.subr.bf16.mxu0 0
        %7813 = vmatpush1.bf16.msra.mxu0 0
        %7814 = vmatprep.subr.bf16.mxu0 0
        %7815 = vmatpush1.bf16.msra.mxu0 0
        %7816 = vmatprep.subr.bf16.mxu0 0
        %7817 = vmatpush1.bf16.msra.mxu0 0
        %7818 = vmatprep.subr.bf16.mxu0 0
        %7819 = vmatpush1.bf16.msra.mxu0 0
        %7820 = vmatprep.subr.bf16.mxu0 0
        %7821 = vmatpush1.bf16.msra.mxu0 0
        %7822 = vmatprep.subr.bf16.mxu0 0
        %7823 = vmatpush1.bf16.msra.mxu0 0
        %7824 = vmatprep.mubr.bf16.mxu0 0
        %7825 = vmatmul.mubr.bf16.gmra.mrb[0].mxu0 %v7726
        %v7826 = vpop.f32.mrb[0].mxu0
        %v7827 = vadd.f32 0.0, %v7826
        %v7828 = vpop.f32.mrb[0].mxu0
        %v7829 = vpop.f32.mrb[0].mxu0
        %v7830 = vadd.f32 0.0, %v7829
        %v7831 = vpop.f32.mrb[0].mxu0
        %7832 = vmatprep.mubr.bf16.mxu0 0
        %7833 = vmatmul.mubr.bf16.gmra.mrb[0].mxu0 %v7728
        %v7834 = vpop.f32.mrb[0].mxu0
        %v7835 = vadd.f32 0.0, %v7834
        %v7836 = vpop.f32.mrb[0].mxu0
        %v7837 = vpop.f32.mrb[0].mxu0
        %v7838 = vadd.f32 0.0, %v7837
        %v7839 = vpop.f32.mrb[0].mxu0
        %7840 = vmatprep.mubr.bf16.mxu0 0
        %7841 = vmatmul.mubr.bf16.gmra.mrb[0].mxu0 %v7730
        %v7842 = vpop.f32.mrb[0].mxu0
        %v7843 = vadd.f32 0.0, %v7842
        %v7844 = vpop.f32.mrb[0].mxu0
        %v7845 = vpop.f32.mrb[0].mxu0
        %v7846 = vadd.f32 0.0, %v7845
        %v7847 = vpop.f32.mrb[0].mxu0
        %7848 = vmatprep.mubr.bf16.mxu0 0
        %7849 = vmatmul.mubr.bf16.gmra.mrb[0].mxu0 %v7732
        %v7850 = vpop.f32.mrb[0].mxu0
        %v7851 = vadd.f32 0.0, %v7850
        %v7852 = vpop.f32.mrb[0].mxu0
        %v7853 = vpop.f32.mrb[0].mxu0
        %v7854 = vadd.f32 0.0, %v7853
        %v7855 = vpop.f32.mrb[0].mxu0
        %7856 = vmatprep.mubr.bf16.mxu0 0
        %7857 = vmatmul.mubr.bf16.gmra.mrb[0].mxu0 %v7734
        %v7858 = vpop.f32.mrb[0].mxu0
        %v7859 = vadd.f32 0.0, %v7858
        %v7860 = vpop.f32.mrb[0].mxu0
        %v7861 = vpop.f32.mrb[0].mxu0
        %v7862 = vadd.f32 0.0, %v7861
        %v7863 = vpop.f32.mrb[0].mxu0
        %7864 = vmatprep.mubr.bf16.mxu0 0
        %7865 = vmatmul.mubr.bf16.gmra.mrb[0].mxu0 %v7736
        %v7866 = vpop.f32.mrb[0].mxu0
        %v7867 = vadd.f32 0.0, %v7866
        %v7868 = vpop.f32.mrb[0].mxu0
        %v7869 = vpop.f32.mrb[0].mxu0
        %v7870 = vadd.f32 0.0, %v7869
        %v7871 = vpop.f32.mrb[0].mxu0
        %7872 = vmatprep.mubr.bf16.mxu0 0
        %7873 = vmatmul.mubr.bf16.gmra.mrb[0].mxu0 %v7735
        %v7874 = vpop.f32.mrb[0].mxu0
        %v7875 = vadd.f32 0.0, %v7874
        %v7876 = vpop.f32.mrb[0].mxu0
        %v7877 = vpop.f32.mrb[0].mxu0
        %v7878 = vpop.f32.mrb[0].mxu0
        %7879 = vdwg.mxu0
        %v7880 = vadd.f32 %v7691, %v7827
        %v7881 = vadd.f32 %v7692, %v7830
        %v7882 = vadd.f32 %v7693, %v7835
        %v7883 = vadd.f32 %v7694, %v7838
        %v7884 = vadd.f32 %v7695, %v7843
        %v7885 = vadd.f32 %v7696, %v7846
        %v7886 = vadd.f32 %v7697, %v7851
        %v7887 = vadd.f32 %v7698, %v7854
        %v7888 = vadd.f32 %v7699, %v7859
        %v7889 = vadd.f32 %v7700, %v7862
        %v7890 = vadd.f32 %v7701, %v7867
        %v7891 = vadd.f32 %v7702, %v7870
        %v7892 = vadd.f32 %v7703, %v7875
        %v7894 = vlaneseq
        %v7895 = vshrl.u32 %v7894, 7
        %v7896 = vsub.s32 0, %v7895
        %v7897 = vrot.slane %v6107, %v7896
        %v7899 = vmul.f32 %v7880, %v7897
        %v7900 = vmul.f32 %v7881, %v7897
        %v7901 = vmul.f32 %v7882, %v7897
        %v7902 = vmul.f32 %v7883, %v7897
        %v7903 = vmul.f32 %v7884, %v7897
        %v7904 = vmul.f32 %v7885, %v7897
        %v7905 = vmul.f32 %v7886, %v7897
        %v7906 = vmul.f32 %v7887, %v7897
        %v7907 = vmul.f32 %v7888, %v7897
        %v7908 = vmul.f32 %v7889, %v7897
        %v7909 = vmul.f32 %v7890, %v7897
        %v7910 = vmul.f32 %v7891, %v7897
        %v7911 = vmul.f32 %v7892, %v7897
        %v7913 = vlaneseq
        %v7914 = vshrl.u32 %v7913, 7
        %v7915 = vsub.s32 0, %v7914
        %v7916 = vrot.slane %v6108, %v7915
        %v7918 = vadd.f32 %v7899, %v7916
        %v7919 = vadd.f32 %v7900, %v7916
        %v7920 = vadd.f32 %v7901, %v7916
        %v7921 = vadd.f32 %v7902, %v7916
        %v7922 = vadd.f32 %v7903, %v7916
        %v7923 = vadd.f32 %v7904, %v7916
        %v7924 = vadd.f32 %v7905, %v7916
        %v7925 = vadd.f32 %v7906, %v7916
        %v7926 = vadd.f32 %v7907, %v7916
        %v7927 = vadd.f32 %v7908, %v7916
        %v7928 = vadd.f32 %v7909, %v7916
        %v7929 = vadd.f32 %v7910, %v7916
        %v7930 = vadd.f32 %v7911, %v7916
        %v7931 = vmax.f32 %v7918, 0.0
        %v7932 = vmax.f32 %v7919, 0.0
        %v7933 = vmax.f32 %v7920, 0.0
        %v7934 = vmax.f32 %v7921, 0.0
        %v7935 = vmax.f32 %v7922, 0.0
        %v7936 = vmax.f32 %v7923, 0.0
        %v7937 = vmax.f32 %v7924, 0.0
        %v7938 = vmax.f32 %v7925, 0.0
        %v7939 = vmax.f32 %v7926, 0.0
        %v7940 = vmax.f32 %v7927, 0.0
        %v7941 = vmax.f32 %v7928, 0.0
        %v7942 = vmax.f32 %v7929, 0.0
        %v7943 = vmax.f32 %v7930, 0.0
        %7944 = vst [vmem:[#allocation4] sm:$0xff] %v7931
        %7945 = vst [vmem:[#allocation4 + $0x8] sm:$0xff] %v7932
        %7946 = vst [vmem:[#allocation4 + $0x10] sm:$0xff] %v7933
        %7947 = vst [vmem:[#allocation4 + $0x18] sm:$0xff] %v7934
        %7948 = vst [vmem:[#allocation4 + $0x20] sm:$0xff] %v7935
        %7949 = vst [vmem:[#allocation4 + $0x28] sm:$0xff] %v7936
        %7950 = vst [vmem:[#allocation4 + $0x30] sm:$0xff] %v7937
        %7951 = vst [vmem:[#allocation4 + $0x38] sm:$0xff] %v7938
        %7952 = vst [vmem:[#allocation4 + $0x40] sm:$0xff] %v7939
        %7953 = vst [vmem:[#allocation4 + $0x48] sm:$0xff] %v7940
        %7954 = vst [vmem:[#allocation4 + $0x50] sm:$0xff] %v7941
        %7955 = vst [vmem:[#allocation4 + $0x58] sm:$0xff] %v7942
        %7956 = vst [vmem:[#allocation4 + $0x60] sm:$0xf] %v7943
        %v7957 = vld [vmem:[#allocation5] sm:$0xf]
        %v7958 = vsel %vm5964, 0, %v7957
        %7959 = vst [vmem:[#allocation5] sm:$0xf] %v7958
        %v7960 = vld [vmem:[#allocation5] sm:$0x60]
        %v7961 = vsel %vm5849, 0, %v7960
        %7962 = vst [vmem:[#allocation5] sm:$0x60] %v7961
        %v7963 = vld [vmem:[#allocation5 + $0x8] sm:$0x3]
        %v7964 = vsel %vm5843, 0, %v7963
        %7965 = vst [vmem:[#allocation5 + $0x8] sm:$0x3] %v7964
        %v7966 = vld [vmem:[#allocation5 + $0x8] sm:$0x18]
        %v7967 = vsel %vm5837, 0, %v7966
        %7968 = vst [vmem:[#allocation5 + $0x8] sm:$0x18] %v7967
        %v7969 = vld [vmem:[#allocation5 + $0x8] sm:$0xc0]
        %v7970 = vsel %vm6045, 0, %v7969
        %7971 = vst [vmem:[#allocation5 + $0x8] sm:$0xc0] %v7970
        %7972 = vst [vmem:[#allocation5 + $0x10] sm:$0x3] 0
        %7973 = vst [vmem:[#allocation5 + $0x10] sm:$0xfc] 0
        %7974 = vst [vmem:[#allocation5 + $0x18] sm:$0xff] 0
        %v7975 = vld [vmem:[#allocation4] ss:$2 sm:$0xf]
        %s7976 = scalar_lea.vmem [#allocation4], 1
        %v7977 = vld [vmem:[%s7976] ss:$2 sm:$0xf]
        %s7978 = scalar_lea.vmem [#allocation4], 10
        %v7979 = vld [vmem:[%s7978] ss:$2 sm:$0xf]
        %s7980 = scalar_lea.vmem [#allocation4], 11
        %v7981 = vld [vmem:[%s7980] ss:$2 sm:$0xf]
        %v7982 = vmax.f32 %v7975, %v7977
        %v7983 = vmax.f32 %v7979, %v7981
        %v7984 = vmax.f32 %v7982, %v7983
        %v7985 = vpack.c.bf16 %v7984, %v7984
        %v7987 = vshrl.u32 %v7985, 16
        %v7989 = vrot.slane %v7987, 4
        %v7990 = vshll.u32 %v7985, 16
        %v7992 = vrot.slane %v7990, 5
        %v7993 = vor.u32 %v7989, %v7992
        %vm7995 = vcmask 1045507
        %vm7996 = vsmask.f32 5390
        %vm7997 = vmand %vm7995, %vm7996
        %v7998 = vld [vmem:[#allocation5] sm:$0x38]
        %v7999 = vsel %vm7997, %v7993, %v7998
        %8000 = vst [vmem:[#allocation5] sm:$0x38] %v7999
        %s8001 = scalar_lea.vmem [#allocation4], 20
        %v8002 = vld [vmem:[%s8001] ss:$2 sm:$0xf]
        %s8003 = scalar_lea.vmem [#allocation4], 21
        %v8004 = vld [vmem:[%s8003] ss:$2 sm:$0xf]
        %s8005 = scalar_lea.vmem [#allocation4], 30
        %v8006 = vld [vmem:[%s8005] ss:$2 sm:$0xf]
        %s8007 = scalar_lea.vmem [#allocation4], 31
        %v8008 = vld [vmem:[%s8007] ss:$2 sm:$0xf]
        %v8009 = vmax.f32 %v8002, %v8004
        %v8010 = vmax.f32 %v8006, %v8008
        %v8011 = vmax.f32 %v8009, %v8010
        %v8012 = vpack.c.bf16 %v8011, %v8011
        %v8014 = vshrl.u32 %v8012, 16
        %v8016 = vrot.slane %v8014, 1
        %v8017 = vshll.u32 %v8012, 16
        %v8019 = vrot.slane %v8017, 2
        %v8020 = vor.u32 %v8016, %v8019
        %v8023 = vld [vmem:[#allocation5] sm:$0xc0]
        %v8024 = vsel %vm6045, %v8020, %v8023
        %8025 = vst [vmem:[#allocation5] sm:$0xc0] %v8024
        %v8026 = vld [vmem:[#allocation5 + $0x8] sm:$0x1]
        %v8027 = vsel %vm5867, %v8016, %v8026
        %8028 = vst [vmem:[#allocation5 + $0x8] sm:$0x1] %v8027
        %s8029 = scalar_lea.vmem [#allocation4], 40
        %v8030 = vld [vmem:[%s8029] ss:$2 sm:$0xf]
        %s8031 = scalar_lea.vmem [#allocation4], 41
        %v8032 = vld [vmem:[%s8031] ss:$2 sm:$0xf]
        %s8033 = scalar_lea.vmem [#allocation4], 50
        %v8034 = vld [vmem:[%s8033] ss:$2 sm:$0xf]
        %s8035 = scalar_lea.vmem [#allocation4], 51
        %v8036 = vld [vmem:[%s8035] ss:$2 sm:$0xf]
        %v8037 = vmax.f32 %v8030, %v8032
        %v8038 = vmax.f32 %v8034, %v8036
        %v8039 = vmax.f32 %v8037, %v8038
        %v8040 = vpack.c.bf16 %v8039, %v8039
        %v8042 = vshrl.u32 %v8040, 16
        %v8044 = vrot.slane %v8042, 6
        %v8045 = vshll.u32 %v8040, 16
        %v8047 = vrot.slane %v8045, 7
        %v8048 = vor.u32 %v8044, %v8047
        %vm8050 = vcmask 1043457
        %vm8051 = vsmask.f32 3334
        %vm8052 = vmand %vm8050, %vm8051
        %v8053 = vld [vmem:[#allocation5 + $0x8] sm:$0xe]
        %v8054 = vsel %vm8052, %v8048, %v8053
        %8055 = vst [vmem:[#allocation5 + $0x8] sm:$0xe] %v8054
        %s8056 = scalar_lea.vmem [#allocation4], 60
        %v8057 = vld [vmem:[%s8056] ss:$2 sm:$0xf]
        %s8058 = scalar_lea.vmem [#allocation4], 61
        %v8059 = vld [vmem:[%s8058] ss:$2 sm:$0xf]
        %s8060 = scalar_lea.vmem [#allocation4], 70
        %v8061 = vld [vmem:[%s8060] ss:$2 sm:$0xf]
        %s8062 = scalar_lea.vmem [#allocation4], 71
        %v8063 = vld [vmem:[%s8062] ss:$2 sm:$0xf]
        %v8064 = vmax.f32 %v8057, %v8059
        %v8065 = vmax.f32 %v8061, %v8063
        %v8066 = vmax.f32 %v8064, %v8065
        %v8067 = vpack.c.bf16 %v8066, %v8066
        %v8069 = vshrl.u32 %v8067, 16
        %v8071 = vrot.slane %v8069, 3
        %v8072 = vshll.u32 %v8067, 16
        %v8074 = vrot.slane %v8072, 4
        %v8075 = vor.u32 %v8071, %v8074
        %vm8077 = vcmask 1046532
        %vm8078 = vsmask.f32 6418
        %vm8079 = vmand %vm8077, %vm8078
        %v8080 = vld [vmem:[#allocation5 + $0x8] sm:$0x70]
        %v8081 = vsel %vm8079, %v8075, %v8080
        %8082 = vst [vmem:[#allocation5 + $0x8] sm:$0x70] %v8081
        %v8083 = vld [vmem:[%s8] sm:$0x1]
        %v8084 = vld [vmem:[%s9] sm:$0x1]
        %v8085 = vld [vmem:[#allocation5] sm:$0xff]
        %v8086 = vld [vmem:[#allocation5 + $0x8] sm:$0xff]
        %v8087 = vld [vmem:[#allocation5 + $0x10] sm:$0x3]
        %v8088 = vld [vmem:[%s7] sm:$0xf]
        %v8089 = vld [vmem:[%s7 + $0x4] sm:$0xf]
        %v8090 = vld [vmem:[%s7 + $0x8] sm:$0xf]
        %v8091 = vld [vmem:[%s7 + $0xc] sm:$0xf]
        %v8092 = vld [vmem:[%s7 + $0x10] sm:$0xf]
        %v8093 = vld [vmem:[%s7 + $0x14] sm:$0xf]
        %v8094 = vld [vmem:[%s7 + $0x18] sm:$0xf]
        %v8095 = vld [vmem:[%s7 + $0x1c] sm:$0xf]
        %v8096 = vld [vmem:[%s7 + $0x20] sm:$0xf]
        %v8097 = vld [vmem:[%s7 + $0x24] sm:$0xf]
        %v8098 = vld [vmem:[%s7 + $0x28] sm:$0xf]
        %v8099 = vld [vmem:[%s7 + $0x2c] sm:$0xf]
        %v8100 = vld [vmem:[%s7 + $0x30] sm:$0xf]
        %v8101 = vld [vmem:[%s7 + $0x34] sm:$0xf]
        %v8102 = vld [vmem:[%s7 + $0x38] sm:$0xf]
        %v8103 = vld [vmem:[%s7 + $0x3c] sm:$0xf]
        %v8104 = vld [vmem:[#allocation5 + $0x10] sm:$0x7]
        %s8105 = scalar_lea.vmem %s7, 64
        %v8106 = vld [vmem:[%s8105] sm:$0xf]
        %v8107 = vld [vmem:[%s8105 + $0x4] sm:$0xf]
        %v8108 = vld [vmem:[%s8105 + $0x8] sm:$0xf]
        %v8109 = vld [vmem:[%s8105 + $0xc] sm:$0xf]
        %v8110 = vld [vmem:[%s8105 + $0x10] sm:$0xf]
        %v8111 = vld [vmem:[%s8105 + $0x14] sm:$0xf]
        %v8112 = vld [vmem:[%s8105 + $0x18] sm:$0xf]
        %v8113 = vld [vmem:[%s8105 + $0x1c] sm:$0xf]
        %v8114 = vld [vmem:[%s8105 + $0x20] sm:$0xf]
        %v8115 = vld [vmem:[%s8105 + $0x24] sm:$0xf]
        %v8116 = vld [vmem:[%s8105 + $0x28] sm:$0xf]
        %v8117 = vld [vmem:[%s8105 + $0x2c] sm:$0xf]
        %v8118 = vld [vmem:[%s8105 + $0x30] sm:$0xf]
        %v8119 = vld [vmem:[%s8105 + $0x34] sm:$0xf]
        %v8120 = vld [vmem:[%s8105 + $0x38] sm:$0xf]
        %v8121 = vld [vmem:[%s8105 + $0x3c] sm:$0xf]
        %v8123 = vshrl.u32 %v8085, 16
        %v8125 = vshll.u32 %v8085, 16
        %v8127 = vrot.slane %v8125, 1
        %v8128 = vor.u32 %v8123, %v8127
        %v8130 = vshll.u32 %v8086, 16
        %v8132 = vrot.slane %v8130, 1
        %v8133 = vsel %vm761, %v8128, %v8132
        %v8134 = vshrl.u32 %v8086, 16
        %v8136 = vor.u32 %v8134, %v8132
        %v8138 = vshll.u32 %v8104, 16
        %v8140 = vrot.slane %v8138, 1
        %v8141 = vsel %vm761, %v8136, %v8140
        %v8142 = vshrl.u32 %v8104, 16
        %v8144 = vor.u32 %v8142, %v8140
        %v8164 = vunpack.c.l.b16 %v8106
        %v8165 = vunpack.c.l.b16 %v8107
        %v8166 = vunpack.c.l.b16 %v8108
        %v8167 = vunpack.c.l.b16 %v8109
        %v8168 = vunpack.c.l.b16 %v8110
        %v8169 = vunpack.c.l.b16 %v8111
        %v8170 = vunpack.c.l.b16 %v8112
        %v8171 = vunpack.c.l.b16 %v8113
        %v8172 = vunpack.c.l.b16 %v8114
        %v8173 = vunpack.c.l.b16 %v8115
        %v8174 = vunpack.c.l.b16 %v8116
        %v8175 = vunpack.c.l.b16 %v8117
        %v8176 = vunpack.c.l.b16 %v8118
        %v8177 = vunpack.c.l.b16 %v8119
        %v8178 = vunpack.c.l.b16 %v8120
        %v8179 = vunpack.c.l.b16 %v8121
        %v8180 = vpack.c.b16 %v8165, %v8164
        %v8181 = vpack.c.b16 %v8167, %v8166
        %v8182 = vpack.c.b16 %v8169, %v8168
        %v8183 = vpack.c.b16 %v8171, %v8170
        %v8184 = vpack.c.b16 %v8173, %v8172
        %v8185 = vpack.c.b16 %v8175, %v8174
        %v8186 = vpack.c.b16 %v8177, %v8176
        %v8187 = vpack.c.b16 %v8179, %v8178
        %8196 = vmatprep.subr.bf16.mxu0 0
        %8197 = vmatpush1.bf16.msra.mxu0 %v8180
        %8198 = vmatprep.subr.bf16.mxu0 0
        %8199 = vmatpush1.bf16.msra.mxu0 %v8181
        %8200 = vmatprep.subr.bf16.mxu0 0
        %8201 = vmatpush1.bf16.msra.mxu0 %v8182
        %8202 = vmatprep.subr.bf16.mxu0 0
        %8203 = vmatpush1.bf16.msra.mxu0 %v8183
        %8204 = vmatprep.subr.bf16.mxu0 0
        %8205 = vmatpush1.bf16.msra.mxu0 %v8184
        %8206 = vmatprep.subr.bf16.mxu0 0
        %8207 = vmatpush1.bf16.msra.mxu0 %v8185
        %8208 = vmatprep.subr.bf16.mxu0 0
        %8209 = vmatpush1.bf16.msra.mxu0 %v8186
        %8210 = vmatprep.subr.bf16.mxu0 0
        %8211 = vmatpush1.bf16.msra.mxu0 %v8187
        %8212 = vmatprep.subr.bf16.mxu0 0
        %8213 = vmatpush1.bf16.msra.mxu0 0
        %8214 = vmatprep.subr.bf16.mxu0 0
        %8215 = vmatpush1.bf16.msra.mxu0 0
        %8216 = vmatprep.subr.bf16.mxu0 0
        %8217 = vmatpush1.bf16.msra.mxu0 0
        %8218 = vmatprep.subr.bf16.mxu0 0
        %8219 = vmatpush1.bf16.msra.mxu0 0
        %8220 = vmatprep.subr.bf16.mxu0 0
        %8221 = vmatpush1.bf16.msra.mxu0 0
        %8222 = vmatprep.subr.bf16.mxu0 0
        %8223 = vmatpush1.bf16.msra.mxu0 0
        %8224 = vmatprep.subr.bf16.mxu0 0
        %8225 = vmatpush1.bf16.msra.mxu0 0
        %8226 = vmatprep.subr.bf16.mxu0 0
        %8227 = vmatpush1.bf16.msra.mxu0 0
        %8228 = vmatprep.mubr.bf16.mxu0 0
        %8229 = vmatmul.mubr.bf16.gmra.mrb[0].mxu0 %v8133
        %v8230 = vpop.f32.mrb[0].mxu0
        %v8231 = vadd.f32 0.0, %v8230
        %v8232 = vpop.f32.mrb[0].mxu0
        %v8233 = vpop.f32.mrb[0].mxu0
        %v8234 = vadd.f32 0.0, %v8233
        %v8235 = vpop.f32.mrb[0].mxu0
        %8236 = vmatprep.mubr.bf16.mxu0 0
        %8237 = vmatmul.mubr.bf16.gmra.mrb[0].mxu0 %v8141
        %v8238 = vpop.f32.mrb[0].mxu0
        %v8239 = vadd.f32 0.0, %v8238
        %v8240 = vpop.f32.mrb[0].mxu0
        %v8241 = vpop.f32.mrb[0].mxu0
        %v8242 = vadd.f32 0.0, %v8241
        %v8243 = vpop.f32.mrb[0].mxu0
        %8244 = vmatprep.mubr.bf16.mxu0 0
        %8245 = vmatmul.mubr.bf16.gmra.mrb[0].mxu0 %v8144
        %v8246 = vpop.f32.mrb[0].mxu0
        %v8247 = vadd.f32 0.0, %v8246
        %v8248 = vpop.f32.mrb[0].mxu0
        %v8249 = vpop.f32.mrb[0].mxu0
        %v8250 = vpop.f32.mrb[0].mxu0
        %8251 = vdwg.mxu0
        %v8268 = vunpack.c.l.b16 %v8088
        %v8269 = vunpack.c.l.b16 %v8089
        %v8270 = vunpack.c.l.b16 %v8090
        %v8271 = vunpack.c.l.b16 %v8091
        %v8272 = vunpack.c.l.b16 %v8092
        %v8273 = vunpack.c.l.b16 %v8093
        %v8274 = vunpack.c.l.b16 %v8094
        %v8275 = vunpack.c.l.b16 %v8095
        %v8276 = vunpack.c.l.b16 %v8096
        %v8277 = vunpack.c.l.b16 %v8097
        %v8278 = vunpack.c.l.b16 %v8098
        %v8279 = vunpack.c.l.b16 %v8099
        %v8280 = vunpack.c.l.b16 %v8100
        %v8281 = vunpack.c.l.b16 %v8101
        %v8282 = vunpack.c.l.b16 %v8102
        %v8283 = vunpack.c.l.b16 %v8103
        %v8284 = vpack.c.b16 %v8269, %v8268
        %v8285 = vpack.c.b16 %v8271, %v8270
        %v8286 = vpack.c.b16 %v8273, %v8272
        %v8287 = vpack.c.b16 %v8275, %v8274
        %v8288 = vpack.c.b16 %v8277, %v8276
        %v8289 = vpack.c.b16 %v8279, %v8278
        %v8290 = vpack.c.b16 %v8281, %v8280
        %v8291 = vpack.c.b16 %v8283, %v8282
        %8300 = vmatprep.subr.bf16.mxu0 0
        %8301 = vmatpush1.bf16.msra.mxu0 %v8284
        %8302 = vmatprep.subr.bf16.mxu0 0
        %8303 = vmatpush1.bf16.msra.mxu0 %v8285
        %8304 = vmatprep.subr.bf16.mxu0 0
        %8305 = vmatpush1.bf16.msra.mxu0 %v8286
        %8306 = vmatprep.subr.bf16.mxu0 0
        %8307 = vmatpush1.bf16.msra.mxu0 %v8287
        %8308 = vmatprep.subr.bf16.mxu0 0
        %8309 = vmatpush1.bf16.msra.mxu0 %v8288
        %8310 = vmatprep.subr.bf16.mxu0 0
        %8311 = vmatpush1.bf16.msra.mxu0 %v8289
        %8312 = vmatprep.subr.bf16.mxu0 0
        %8313 = vmatpush1.bf16.msra.mxu0 %v8290
        %8314 = vmatprep.subr.bf16.mxu0 0
        %8315 = vmatpush1.bf16.msra.mxu0 %v8291
        %8316 = vmatprep.subr.bf16.mxu0 0
        %8317 = vmatpush1.bf16.msra.mxu0 0
        %8318 = vmatprep.subr.bf16.mxu0 0
        %8319 = vmatpush1.bf16.msra.mxu0 0
        %8320 = vmatprep.subr.bf16.mxu0 0
        %8321 = vmatpush1.bf16.msra.mxu0 0
        %8322 = vmatprep.subr.bf16.mxu0 0
        %8323 = vmatpush1.bf16.msra.mxu0 0
        %8324 = vmatprep.subr.bf16.mxu0 0
        %8325 = vmatpush1.bf16.msra.mxu0 0
        %8326 = vmatprep.subr.bf16.mxu0 0
        %8327 = vmatpush1.bf16.msra.mxu0 0
        %8328 = vmatprep.subr.bf16.mxu0 0
        %8329 = vmatpush1.bf16.msra.mxu0 0
        %8330 = vmatprep.subr.bf16.mxu0 0
        %8331 = vmatpush1.bf16.msra.mxu0 0
        %8332 = vmatprep.mubr.bf16.mxu0 0
        %8333 = vmatmul.mubr.bf16.gmra.mrb[0].mxu0 %v8085
        %v8334 = vpop.f32.mrb[0].mxu0
        %v8335 = vadd.f32 %v8231, %v8334
        %v8336 = vpop.f32.mrb[0].mxu0
        %v8337 = vpop.f32.mrb[0].mxu0
        %v8338 = vadd.f32 %v8234, %v8337
        %v8339 = vpop.f32.mrb[0].mxu0
        %8340 = vmatprep.mubr.bf16.mxu0 0
        %8341 = vmatmul.mubr.bf16.gmra.mrb[0].mxu0 %v8086
        %v8342 = vpop.f32.mrb[0].mxu0
        %v8343 = vadd.f32 %v8239, %v8342
        %v8344 = vpop.f32.mrb[0].mxu0
        %v8345 = vpop.f32.mrb[0].mxu0
        %v8346 = vadd.f32 %v8242, %v8345
        %v8347 = vpop.f32.mrb[0].mxu0
        %8348 = vmatprep.mubr.bf16.mxu0 0
        %8349 = vmatmul.mubr.bf16.gmra.mrb[0].mxu0 %v8087
        %v8350 = vpop.f32.mrb[0].mxu0
        %v8351 = vadd.f32 %v8247, %v8350
        %v8352 = vpop.f32.mrb[0].mxu0
        %v8353 = vpop.f32.mrb[0].mxu0
        %v8354 = vpop.f32.mrb[0].mxu0
        %8355 = vdwg.mxu0
        %v8356 = vld [vmem:[#allocation5] sm:$0xfe]
        %s8357 = scalar_lea.vmem %s7, 128
        %v8358 = vld [vmem:[%s8357] sm:$0xf]
        %v8359 = vld [vmem:[%s8357 + $0x4] sm:$0xf]
        %v8360 = vld [vmem:[%s8357 + $0x8] sm:$0xf]
        %v8361 = vld [vmem:[%s8357 + $0xc] sm:$0xf]
        %v8362 = vld [vmem:[%s8357 + $0x10] sm:$0xf]
        %v8363 = vld [vmem:[%s8357 + $0x14] sm:$0xf]
        %v8364 = vld [vmem:[%s8357 + $0x18] sm:$0xf]
        %v8365 = vld [vmem:[%s8357 + $0x1c] sm:$0xf]
        %v8366 = vld [vmem:[%s8357 + $0x20] sm:$0xf]
        %v8367 = vld [vmem:[%s8357 + $0x24] sm:$0xf]
        %v8368 = vld [vmem:[%s8357 + $0x28] sm:$0xf]
        %v8369 = vld [vmem:[%s8357 + $0x2c] sm:$0xf]
        %v8370 = vld [vmem:[%s8357 + $0x30] sm:$0xf]
        %v8371 = vld [vmem:[%s8357 + $0x34] sm:$0xf]
        %v8372 = vld [vmem:[%s8357 + $0x38] sm:$0xf]
        %v8373 = vld [vmem:[%s8357 + $0x3c] sm:$0xf]
        %v8377 = vrot.slane %v8356, 1
        %v8378 = vrot.slane %v8086, 1
        %v8379 = vsel %vm1365, %v8377, %v8378
        %v8380 = vrot.slane %v8104, 1
        %v8381 = vsel %vm1365, %v8378, %v8380
        %v8401 = vunpack.c.l.b16 %v8358
        %v8402 = vunpack.c.l.b16 %v8359
        %v8403 = vunpack.c.l.b16 %v8360
        %v8404 = vunpack.c.l.b16 %v8361
        %v8405 = vunpack.c.l.b16 %v8362
        %v8406 = vunpack.c.l.b16 %v8363
        %v8407 = vunpack.c.l.b16 %v8364
        %v8408 = vunpack.c.l.b16 %v8365
        %v8409 = vunpack.c.l.b16 %v8366
        %v8410 = vunpack.c.l.b16 %v8367
        %v8411 = vunpack.c.l.b16 %v8368
        %v8412 = vunpack.c.l.b16 %v8369
        %v8413 = vunpack.c.l.b16 %v8370
        %v8414 = vunpack.c.l.b16 %v8371
        %v8415 = vunpack.c.l.b16 %v8372
        %v8416 = vunpack.c.l.b16 %v8373
        %v8417 = vpack.c.b16 %v8402, %v8401
        %v8418 = vpack.c.b16 %v8404, %v8403
        %v8419 = vpack.c.b16 %v8406, %v8405
        %v8420 = vpack.c.b16 %v8408, %v8407
        %v8421 = vpack.c.b16 %v8410, %v8409
        %v8422 = vpack.c.b16 %v8412, %v8411
        %v8423 = vpack.c.b16 %v8414, %v8413
        %v8424 = vpack.c.b16 %v8416, %v8415
        %8433 = vmatprep.subr.bf16.mxu0 0
        %8434 = vmatpush1.bf16.msra.mxu0 %v8417
        %8435 = vmatprep.subr.bf16.mxu0 0
        %8436 = vmatpush1.bf16.msra.mxu0 %v8418
        %8437 = vmatprep.subr.bf16.mxu0 0
        %8438 = vmatpush1.bf16.msra.mxu0 %v8419
        %8439 = vmatprep.subr.bf16.mxu0 0
        %8440 = vmatpush1.bf16.msra.mxu0 %v8420
        %8441 = vmatprep.subr.bf16.mxu0 0
        %8442 = vmatpush1.bf16.msra.mxu0 %v8421
        %8443 = vmatprep.subr.bf16.mxu0 0
        %8444 = vmatpush1.bf16.msra.mxu0 %v8422
        %8445 = vmatprep.subr.bf16.mxu0 0
        %8446 = vmatpush1.bf16.msra.mxu0 %v8423
        %8447 = vmatprep.subr.bf16.mxu0 0
        %8448 = vmatpush1.bf16.msra.mxu0 %v8424
        %8449 = vmatprep.subr.bf16.mxu0 0
        %8450 = vmatpush1.bf16.msra.mxu0 0
        %8451 = vmatprep.subr.bf16.mxu0 0
        %8452 = vmatpush1.bf16.msra.mxu0 0
        %8453 = vmatprep.subr.bf16.mxu0 0
        %8454 = vmatpush1.bf16.msra.mxu0 0
        %8455 = vmatprep.subr.bf16.mxu0 0
        %8456 = vmatpush1.bf16.msra.mxu0 0
        %8457 = vmatprep.subr.bf16.mxu0 0
        %8458 = vmatpush1.bf16.msra.mxu0 0
        %8459 = vmatprep.subr.bf16.mxu0 0
        %8460 = vmatpush1.bf16.msra.mxu0 0
        %8461 = vmatprep.subr.bf16.mxu0 0
        %8462 = vmatpush1.bf16.msra.mxu0 0
        %8463 = vmatprep.subr.bf16.mxu0 0
        %8464 = vmatpush1.bf16.msra.mxu0 0
        %8465 = vmatprep.mubr.bf16.mxu0 0
        %8466 = vmatmul.mubr.bf16.gmra.mrb[0].mxu0 %v8379
        %v8467 = vpop.f32.mrb[0].mxu0
        %v8468 = vadd.f32 0.0, %v8467
        %v8469 = vpop.f32.mrb[0].mxu0
        %v8470 = vpop.f32.mrb[0].mxu0
        %v8471 = vadd.f32 0.0, %v8470
        %v8472 = vpop.f32.mrb[0].mxu0
        %8473 = vmatprep.mubr.bf16.mxu0 0
        %8474 = vmatmul.mubr.bf16.gmra.mrb[0].mxu0 %v8381
        %v8475 = vpop.f32.mrb[0].mxu0
        %v8476 = vadd.f32 0.0, %v8475
        %v8477 = vpop.f32.mrb[0].mxu0
        %v8478 = vpop.f32.mrb[0].mxu0
        %v8479 = vadd.f32 0.0, %v8478
        %v8480 = vpop.f32.mrb[0].mxu0
        %8481 = vmatprep.mubr.bf16.mxu0 0
        %8482 = vmatmul.mubr.bf16.gmra.mrb[0].mxu0 %v8380
        %v8483 = vpop.f32.mrb[0].mxu0
        %v8484 = vadd.f32 0.0, %v8483
        %v8485 = vpop.f32.mrb[0].mxu0
        %v8486 = vpop.f32.mrb[0].mxu0
        %v8487 = vpop.f32.mrb[0].mxu0
        %8488 = vdwg.mxu0
        %v8489 = vadd.f32 %v8335, %v8468
        %v8490 = vadd.f32 %v8338, %v8471
        %v8491 = vadd.f32 %v8343, %v8476
        %v8492 = vadd.f32 %v8346, %v8479
        %v8493 = vadd.f32 %v8351, %v8484
        %v8494 = vld [vmem:[#allocation5] sm:$0xf8]
        %v8495 = vld [vmem:[#allocation5 + $0x10] sm:$0x1f]
        %s8496 = scalar_lea.vmem %s7, 192
        %v8497 = vld [vmem:[%s8496] sm:$0xf]
        %v8498 = vld [vmem:[%s8496 + $0x4] sm:$0xf]
        %v8499 = vld [vmem:[%s8496 + $0x8] sm:$0xf]
        %v8500 = vld [vmem:[%s8496 + $0xc] sm:$0xf]
        %v8501 = vld [vmem:[%s8496 + $0x10] sm:$0xf]
        %v8502 = vld [vmem:[%s8496 + $0x14] sm:$0xf]
        %v8503 = vld [vmem:[%s8496 + $0x18] sm:$0xf]
        %v8504 = vld [vmem:[%s8496 + $0x1c] sm:$0xf]
        %v8505 = vld [vmem:[%s8496 + $0x20] sm:$0xf]
        %v8506 = vld [vmem:[%s8496 + $0x24] sm:$0xf]
        %v8507 = vld [vmem:[%s8496 + $0x28] sm:$0xf]
        %v8508 = vld [vmem:[%s8496 + $0x2c] sm:$0xf]
        %v8509 = vld [vmem:[%s8496 + $0x30] sm:$0xf]
        %v8510 = vld [vmem:[%s8496 + $0x34] sm:$0xf]
        %v8511 = vld [vmem:[%s8496 + $0x38] sm:$0xf]
        %v8512 = vld [vmem:[%s8496 + $0x3c] sm:$0xf]
        %v8515 = vrot.slane %v8494, 3
        %v8516 = vrot.slane %v8086, 3
        %v8517 = vsel %vm3697, %v8515, %v8516
        %v8518 = vrot.slane %v8495, 3
        %v8519 = vsel %vm3697, %v8516, %v8518
        %v8539 = vunpack.c.l.b16 %v8497
        %v8540 = vunpack.c.l.b16 %v8498
        %v8541 = vunpack.c.l.b16 %v8499
        %v8542 = vunpack.c.l.b16 %v8500
        %v8543 = vunpack.c.l.b16 %v8501
        %v8544 = vunpack.c.l.b16 %v8502
        %v8545 = vunpack.c.l.b16 %v8503
        %v8546 = vunpack.c.l.b16 %v8504
        %v8547 = vunpack.c.l.b16 %v8505
        %v8548 = vunpack.c.l.b16 %v8506
        %v8549 = vunpack.c.l.b16 %v8507
        %v8550 = vunpack.c.l.b16 %v8508
        %v8551 = vunpack.c.l.b16 %v8509
        %v8552 = vunpack.c.l.b16 %v8510
        %v8553 = vunpack.c.l.b16 %v8511
        %v8554 = vunpack.c.l.b16 %v8512
        %v8555 = vpack.c.b16 %v8540, %v8539
        %v8556 = vpack.c.b16 %v8542, %v8541
        %v8557 = vpack.c.b16 %v8544, %v8543
        %v8558 = vpack.c.b16 %v8546, %v8545
        %v8559 = vpack.c.b16 %v8548, %v8547
        %v8560 = vpack.c.b16 %v8550, %v8549
        %v8561 = vpack.c.b16 %v8552, %v8551
        %v8562 = vpack.c.b16 %v8554, %v8553
        %8571 = vmatprep.subr.bf16.mxu0 0
        %8572 = vmatpush1.bf16.msra.mxu0 %v8555
        %8573 = vmatprep.subr.bf16.mxu0 0
        %8574 = vmatpush1.bf16.msra.mxu0 %v8556
        %8575 = vmatprep.subr.bf16.mxu0 0
        %8576 = vmatpush1.bf16.msra.mxu0 %v8557
        %8577 = vmatprep.subr.bf16.mxu0 0
        %8578 = vmatpush1.bf16.msra.mxu0 %v8558
        %8579 = vmatprep.subr.bf16.mxu0 0
        %8580 = vmatpush1.bf16.msra.mxu0 %v8559
        %8581 = vmatprep.subr.bf16.mxu0 0
        %8582 = vmatpush1.bf16.msra.mxu0 %v8560
        %8583 = vmatprep.subr.bf16.mxu0 0
        %8584 = vmatpush1.bf16.msra.mxu0 %v8561
        %8585 = vmatprep.subr.bf16.mxu0 0
        %8586 = vmatpush1.bf16.msra.mxu0 %v8562
        %8587 = vmatprep.subr.bf16.mxu0 0
        %8588 = vmatpush1.bf16.msra.mxu0 0
        %8589 = vmatprep.subr.bf16.mxu0 0
        %8590 = vmatpush1.bf16.msra.mxu0 0
        %8591 = vmatprep.subr.bf16.mxu0 0
        %8592 = vmatpush1.bf16.msra.mxu0 0
        %8593 = vmatprep.subr.bf16.mxu0 0
        %8594 = vmatpush1.bf16.msra.mxu0 0
        %8595 = vmatprep.subr.bf16.mxu0 0
        %8596 = vmatpush1.bf16.msra.mxu0 0
        %8597 = vmatprep.subr.bf16.mxu0 0
        %8598 = vmatpush1.bf16.msra.mxu0 0
        %8599 = vmatprep.subr.bf16.mxu0 0
        %8600 = vmatpush1.bf16.msra.mxu0 0
        %8601 = vmatprep.subr.bf16.mxu0 0
        %8602 = vmatpush1.bf16.msra.mxu0 0
        %8603 = vmatprep.mubr.bf16.mxu0 0
        %8604 = vmatmul.mubr.bf16.gmra.mrb[0].mxu0 %v8517
        %v8605 = vpop.f32.mrb[0].mxu0
        %v8606 = vadd.f32 0.0, %v8605
        %v8607 = vpop.f32.mrb[0].mxu0
        %v8608 = vpop.f32.mrb[0].mxu0
        %v8609 = vadd.f32 0.0, %v8608
        %v8610 = vpop.f32.mrb[0].mxu0
        %8611 = vmatprep.mubr.bf16.mxu0 0
        %8612 = vmatmul.mubr.bf16.gmra.mrb[0].mxu0 %v8519
        %v8613 = vpop.f32.mrb[0].mxu0
        %v8614 = vadd.f32 0.0, %v8613
        %v8615 = vpop.f32.mrb[0].mxu0
        %v8616 = vpop.f32.mrb[0].mxu0
        %v8617 = vadd.f32 0.0, %v8616
        %v8618 = vpop.f32.mrb[0].mxu0
        %8619 = vmatprep.mubr.bf16.mxu0 0
        %8620 = vmatmul.mubr.bf16.gmra.mrb[0].mxu0 %v8518
        %v8621 = vpop.f32.mrb[0].mxu0
        %v8622 = vadd.f32 0.0, %v8621
        %v8623 = vpop.f32.mrb[0].mxu0
        %v8624 = vpop.f32.mrb[0].mxu0
        %v8625 = vpop.f32.mrb[0].mxu0
        %8626 = vdwg.mxu0
        %v8627 = vadd.f32 %v8489, %v8606
        %v8628 = vadd.f32 %v8490, %v8609
        %v8629 = vadd.f32 %v8491, %v8614
        %v8630 = vadd.f32 %v8492, %v8617
        %v8631 = vadd.f32 %v8493, %v8622
        %v8632 = vld [vmem:[#allocation5 + $0x10] sm:$0x3f]
        %s8633 = scalar_lea.vmem %s7, 256
        %v8634 = vld [vmem:[%s8633] sm:$0xf]
        %v8635 = vld [vmem:[%s8633 + $0x4] sm:$0xf]
        %v8636 = vld [vmem:[%s8633 + $0x8] sm:$0xf]
        %v8637 = vld [vmem:[%s8633 + $0xc] sm:$0xf]
        %v8638 = vld [vmem:[%s8633 + $0x10] sm:$0xf]
        %v8639 = vld [vmem:[%s8633 + $0x14] sm:$0xf]
        %v8640 = vld [vmem:[%s8633 + $0x18] sm:$0xf]
        %v8641 = vld [vmem:[%s8633 + $0x1c] sm:$0xf]
        %v8642 = vld [vmem:[%s8633 + $0x20] sm:$0xf]
        %v8643 = vld [vmem:[%s8633 + $0x24] sm:$0xf]
        %v8644 = vld [vmem:[%s8633 + $0x28] sm:$0xf]
        %v8645 = vld [vmem:[%s8633 + $0x2c] sm:$0xf]
        %v8646 = vld [vmem:[%s8633 + $0x30] sm:$0xf]
        %v8647 = vld [vmem:[%s8633 + $0x34] sm:$0xf]
        %v8648 = vld [vmem:[%s8633 + $0x38] sm:$0xf]
        %v8649 = vld [vmem:[%s8633 + $0x3c] sm:$0xf]
        %vm8650 = vsmask.f32 4352
        %v8652 = vshrl.u32 %v8494, 16
        %v8654 = vrot.slane %v8652, 3
        %v8655 = vshll.u32 %v8494, 16
        %v8657 = vrot.slane %v8655, 4
        %v8658 = vor.u32 %v8654, %v8657
        %v8659 = vrot.slane %v8134, 3
        %v8660 = vrot.slane %v8130, 4
        %v8661 = vor.u32 %v8659, %v8660
        %v8662 = vsel %vm8650, %v8658, %v8661
        %v8664 = vshrl.u32 %v8632, 16
        %v8666 = vrot.slane %v8664, 3
        %v8667 = vshll.u32 %v8632, 16
        %v8669 = vrot.slane %v8667, 4
        %v8670 = vor.u32 %v8666, %v8669
        %v8671 = vsel %vm8650, %v8661, %v8670
        %v8691 = vunpack.c.l.b16 %v8634
        %v8692 = vunpack.c.l.b16 %v8635
        %v8693 = vunpack.c.l.b16 %v8636
        %v8694 = vunpack.c.l.b16 %v8637
        %v8695 = vunpack.c.l.b16 %v8638
        %v8696 = vunpack.c.l.b16 %v8639
        %v8697 = vunpack.c.l.b16 %v8640
        %v8698 = vunpack.c.l.b16 %v8641
        %v8699 = vunpack.c.l.b16 %v8642
        %v8700 = vunpack.c.l.b16 %v8643
        %v8701 = vunpack.c.l.b16 %v8644
        %v8702 = vunpack.c.l.b16 %v8645
        %v8703 = vunpack.c.l.b16 %v8646
        %v8704 = vunpack.c.l.b16 %v8647
        %v8705 = vunpack.c.l.b16 %v8648
        %v8706 = vunpack.c.l.b16 %v8649
        %v8707 = vpack.c.b16 %v8692, %v8691
        %v8708 = vpack.c.b16 %v8694, %v8693
        %v8709 = vpack.c.b16 %v8696, %v8695
        %v8710 = vpack.c.b16 %v8698, %v8697
        %v8711 = vpack.c.b16 %v8700, %v8699
        %v8712 = vpack.c.b16 %v8702, %v8701
        %v8713 = vpack.c.b16 %v8704, %v8703
        %v8714 = vpack.c.b16 %v8706, %v8705
        %8723 = vmatprep.subr.bf16.mxu0 0
        %8724 = vmatpush1.bf16.msra.mxu0 %v8707
        %8725 = vmatprep.subr.bf16.mxu0 0
        %8726 = vmatpush1.bf16.msra.mxu0 %v8708
        %8727 = vmatprep.subr.bf16.mxu0 0
        %8728 = vmatpush1.bf16.msra.mxu0 %v8709
        %8729 = vmatprep.subr.bf16.mxu0 0
        %8730 = vmatpush1.bf16.msra.mxu0 %v8710
        %8731 = vmatprep.subr.bf16.mxu0 0
        %8732 = vmatpush1.bf16.msra.mxu0 %v8711
        %8733 = vmatprep.subr.bf16.mxu0 0
        %8734 = vmatpush1.bf16.msra.mxu0 %v8712
        %8735 = vmatprep.subr.bf16.mxu0 0
        %8736 = vmatpush1.bf16.msra.mxu0 %v8713
        %8737 = vmatprep.subr.bf16.mxu0 0
        %8738 = vmatpush1.bf16.msra.mxu0 %v8714
        %8739 = vmatprep.subr.bf16.mxu0 0
        %8740 = vmatpush1.bf16.msra.mxu0 0
        %8741 = vmatprep.subr.bf16.mxu0 0
        %8742 = vmatpush1.bf16.msra.mxu0 0
        %8743 = vmatprep.subr.bf16.mxu0 0
        %8744 = vmatpush1.bf16.msra.mxu0 0
        %8745 = vmatprep.subr.bf16.mxu0 0
        %8746 = vmatpush1.bf16.msra.mxu0 0
        %8747 = vmatprep.subr.bf16.mxu0 0
        %8748 = vmatpush1.bf16.msra.mxu0 0
        %8749 = vmatprep.subr.bf16.mxu0 0
        %8750 = vmatpush1.bf16.msra.mxu0 0
        %8751 = vmatprep.subr.bf16.mxu0 0
        %8752 = vmatpush1.bf16.msra.mxu0 0
        %8753 = vmatprep.subr.bf16.mxu0 0
        %8754 = vmatpush1.bf16.msra.mxu0 0
        %8755 = vmatprep.mubr.bf16.mxu0 0
        %8756 = vmatmul.mubr.bf16.gmra.mrb[0].mxu0 %v8662
        %v8757 = vpop.f32.mrb[0].mxu0
        %v8758 = vadd.f32 0.0, %v8757
        %v8759 = vpop.f32.mrb[0].mxu0
        %v8760 = vpop.f32.mrb[0].mxu0
        %v8761 = vadd.f32 0.0, %v8760
        %v8762 = vpop.f32.mrb[0].mxu0
        %8763 = vmatprep.mubr.bf16.mxu0 0
        %8764 = vmatmul.mubr.bf16.gmra.mrb[0].mxu0 %v8671
        %v8765 = vpop.f32.mrb[0].mxu0
        %v8766 = vadd.f32 0.0, %v8765
        %v8767 = vpop.f32.mrb[0].mxu0
        %v8768 = vpop.f32.mrb[0].mxu0
        %v8769 = vadd.f32 0.0, %v8768
        %v8770 = vpop.f32.mrb[0].mxu0
        %8771 = vmatprep.mubr.bf16.mxu0 0
        %8772 = vmatmul.mubr.bf16.gmra.mrb[0].mxu0 %v8670
        %v8773 = vpop.f32.mrb[0].mxu0
        %v8774 = vadd.f32 0.0, %v8773
        %v8775 = vpop.f32.mrb[0].mxu0
        %v8776 = vpop.f32.mrb[0].mxu0
        %v8777 = vpop.f32.mrb[0].mxu0
        %8778 = vdwg.mxu0
        %v8779 = vadd.f32 %v8627, %v8758
        %v8780 = vadd.f32 %v8628, %v8761
        %v8781 = vadd.f32 %v8629, %v8766
        %v8782 = vadd.f32 %v8630, %v8769
        %v8783 = vadd.f32 %v8631, %v8774
        %v8784 = vld [vmem:[#allocation5] sm:$0xf0]
        %s8785 = scalar_lea.vmem %s7, 320
        %v8786 = vld [vmem:[%s8785] sm:$0xf]
        %v8787 = vld [vmem:[%s8785 + $0x4] sm:$0xf]
        %v8788 = vld [vmem:[%s8785 + $0x8] sm:$0xf]
        %v8789 = vld [vmem:[%s8785 + $0xc] sm:$0xf]
        %v8790 = vld [vmem:[%s8785 + $0x10] sm:$0xf]
        %v8791 = vld [vmem:[%s8785 + $0x14] sm:$0xf]
        %v8792 = vld [vmem:[%s8785 + $0x18] sm:$0xf]
        %v8793 = vld [vmem:[%s8785 + $0x1c] sm:$0xf]
        %v8794 = vld [vmem:[%s8785 + $0x20] sm:$0xf]
        %v8795 = vld [vmem:[%s8785 + $0x24] sm:$0xf]
        %v8796 = vld [vmem:[%s8785 + $0x28] sm:$0xf]
        %v8797 = vld [vmem:[%s8785 + $0x2c] sm:$0xf]
        %v8798 = vld [vmem:[%s8785 + $0x30] sm:$0xf]
        %v8799 = vld [vmem:[%s8785 + $0x34] sm:$0xf]
        %v8800 = vld [vmem:[%s8785 + $0x38] sm:$0xf]
        %v8801 = vld [vmem:[%s8785 + $0x3c] sm:$0xf]
        %v8804 = vrot.slane %v8784, 4
        %v8805 = vrot.slane %v8086, 4
        %v8806 = vsel %vm5962, %v8804, %v8805
        %v8807 = vrot.slane %v8632, 4
        %v8808 = vsel %vm5962, %v8805, %v8807
        %v8828 = vunpack.c.l.b16 %v8786
        %v8829 = vunpack.c.l.b16 %v8787
        %v8830 = vunpack.c.l.b16 %v8788
        %v8831 = vunpack.c.l.b16 %v8789
        %v8832 = vunpack.c.l.b16 %v8790
        %v8833 = vunpack.c.l.b16 %v8791
        %v8834 = vunpack.c.l.b16 %v8792
        %v8835 = vunpack.c.l.b16 %v8793
        %v8836 = vunpack.c.l.b16 %v8794
        %v8837 = vunpack.c.l.b16 %v8795
        %v8838 = vunpack.c.l.b16 %v8796
        %v8839 = vunpack.c.l.b16 %v8797
        %v8840 = vunpack.c.l.b16 %v8798
        %v8841 = vunpack.c.l.b16 %v8799
        %v8842 = vunpack.c.l.b16 %v8800
        %v8843 = vunpack.c.l.b16 %v8801
        %v8844 = vpack.c.b16 %v8829, %v8828
        %v8845 = vpack.c.b16 %v8831, %v8830
        %v8846 = vpack.c.b16 %v8833, %v8832
        %v8847 = vpack.c.b16 %v8835, %v8834
        %v8848 = vpack.c.b16 %v8837, %v8836
        %v8849 = vpack.c.b16 %v8839, %v8838
        %v8850 = vpack.c.b16 %v8841, %v8840
        %v8851 = vpack.c.b16 %v8843, %v8842
        %8860 = vmatprep.subr.bf16.mxu0 0
        %8861 = vmatpush1.bf16.msra.mxu0 %v8844
        %8862 = vmatprep.subr.bf16.mxu0 0
        %8863 = vmatpush1.bf16.msra.mxu0 %v8845
        %8864 = vmatprep.subr.bf16.mxu0 0
        %8865 = vmatpush1.bf16.msra.mxu0 %v8846
        %8866 = vmatprep.subr.bf16.mxu0 0
        %8867 = vmatpush1.bf16.msra.mxu0 %v8847
        %8868 = vmatprep.subr.bf16.mxu0 0
        %8869 = vmatpush1.bf16.msra.mxu0 %v8848
        %8870 = vmatprep.subr.bf16.mxu0 0
        %8871 = vmatpush1.bf16.msra.mxu0 %v8849
        %8872 = vmatprep.subr.bf16.mxu0 0
        %8873 = vmatpush1.bf16.msra.mxu0 %v8850
        %8874 = vmatprep.subr.bf16.mxu0 0
        %8875 = vmatpush1.bf16.msra.mxu0 %v8851
        %8876 = vmatprep.subr.bf16.mxu0 0
        %8877 = vmatpush1.bf16.msra.mxu0 0
        %8878 = vmatprep.subr.bf16.mxu0 0
        %8879 = vmatpush1.bf16.msra.mxu0 0
        %8880 = vmatprep.subr.bf16.mxu0 0
        %8881 = vmatpush1.bf16.msra.mxu0 0
        %8882 = vmatprep.subr.bf16.mxu0 0
        %8883 = vmatpush1.bf16.msra.mxu0 0
        %8884 = vmatprep.subr.bf16.mxu0 0
        %8885 = vmatpush1.bf16.msra.mxu0 0
        %8886 = vmatprep.subr.bf16.mxu0 0
        %8887 = vmatpush1.bf16.msra.mxu0 0
        %8888 = vmatprep.subr.bf16.mxu0 0
        %8889 = vmatpush1.bf16.msra.mxu0 0
        %8890 = vmatprep.subr.bf16.mxu0 0
        %8891 = vmatpush1.bf16.msra.mxu0 0
        %8892 = vmatprep.mubr.bf16.mxu0 0
        %8893 = vmatmul.mubr.bf16.gmra.mrb[0].mxu0 %v8806
        %v8894 = vpop.f32.mrb[0].mxu0
        %v8895 = vadd.f32 0.0, %v8894
        %v8896 = vpop.f32.mrb[0].mxu0
        %v8897 = vpop.f32.mrb[0].mxu0
        %v8898 = vadd.f32 0.0, %v8897
        %v8899 = vpop.f32.mrb[0].mxu0
        %8900 = vmatprep.mubr.bf16.mxu0 0
        %8901 = vmatmul.mubr.bf16.gmra.mrb[0].mxu0 %v8808
        %v8902 = vpop.f32.mrb[0].mxu0
        %v8903 = vadd.f32 0.0, %v8902
        %v8904 = vpop.f32.mrb[0].mxu0
        %v8905 = vpop.f32.mrb[0].mxu0
        %v8906 = vadd.f32 0.0, %v8905
        %v8907 = vpop.f32.mrb[0].mxu0
        %8908 = vmatprep.mubr.bf16.mxu0 0
        %8909 = vmatmul.mubr.bf16.gmra.mrb[0].mxu0 %v8807
        %v8910 = vpop.f32.mrb[0].mxu0
        %v8911 = vadd.f32 0.0, %v8910
        %v8912 = vpop.f32.mrb[0].mxu0
        %v8913 = vpop.f32.mrb[0].mxu0
        %v8914 = vpop.f32.mrb[0].mxu0
        %8915 = vdwg.mxu0
        %v8916 = vadd.f32 %v8779, %v8895
        %v8917 = vadd.f32 %v8780, %v8898
        %v8918 = vadd.f32 %v8781, %v8903
        %v8919 = vadd.f32 %v8782, %v8906
        %v8920 = vadd.f32 %v8783, %v8911
        %v8921 = vld [vmem:[#allocation5] sm:$0xc0]
        %v8922 = vld [vmem:[#allocation5 + $0x10] sm:$0xff]
        %s8923 = scalar_lea.vmem %s7, 384
        %v8924 = vld [vmem:[%s8923] sm:$0xf]
        %v8925 = vld [vmem:[%s8923 + $0x4] sm:$0xf]
        %v8926 = vld [vmem:[%s8923 + $0x8] sm:$0xf]
        %v8927 = vld [vmem:[%s8923 + $0xc] sm:$0xf]
        %v8928 = vld [vmem:[%s8923 + $0x10] sm:$0xf]
        %v8929 = vld [vmem:[%s8923 + $0x14] sm:$0xf]
        %v8930 = vld [vmem:[%s8923 + $0x18] sm:$0xf]
        %v8931 = vld [vmem:[%s8923 + $0x1c] sm:$0xf]
        %v8932 = vld [vmem:[%s8923 + $0x20] sm:$0xf]
        %v8933 = vld [vmem:[%s8923 + $0x24] sm:$0xf]
        %v8934 = vld [vmem:[%s8923 + $0x28] sm:$0xf]
        %v8935 = vld [vmem:[%s8923 + $0x2c] sm:$0xf]
        %v8936 = vld [vmem:[%s8923 + $0x30] sm:$0xf]
        %v8937 = vld [vmem:[%s8923 + $0x34] sm:$0xf]
        %v8938 = vld [vmem:[%s8923 + $0x38] sm:$0xf]
        %v8939 = vld [vmem:[%s8923 + $0x3c] sm:$0xf]
        %v8942 = vrot.slane %v8921, 6
        %v8943 = vrot.slane %v8086, 6
        %v8944 = vsel %vm5841, %v8942, %v8943
        %v8945 = vrot.slane %v8922, 6
        %v8946 = vsel %vm5841, %v8943, %v8945
        %v8966 = vunpack.c.l.b16 %v8924
        %v8967 = vunpack.c.l.b16 %v8925
        %v8968 = vunpack.c.l.b16 %v8926
        %v8969 = vunpack.c.l.b16 %v8927
        %v8970 = vunpack.c.l.b16 %v8928
        %v8971 = vunpack.c.l.b16 %v8929
        %v8972 = vunpack.c.l.b16 %v8930
        %v8973 = vunpack.c.l.b16 %v8931
        %v8974 = vunpack.c.l.b16 %v8932
        %v8975 = vunpack.c.l.b16 %v8933
        %v8976 = vunpack.c.l.b16 %v8934
        %v8977 = vunpack.c.l.b16 %v8935
        %v8978 = vunpack.c.l.b16 %v8936
        %v8979 = vunpack.c.l.b16 %v8937
        %v8980 = vunpack.c.l.b16 %v8938
        %v8981 = vunpack.c.l.b16 %v8939
        %v8982 = vpack.c.b16 %v8967, %v8966
        %v8983 = vpack.c.b16 %v8969, %v8968
        %v8984 = vpack.c.b16 %v8971, %v8970
        %v8985 = vpack.c.b16 %v8973, %v8972
        %v8986 = vpack.c.b16 %v8975, %v8974
        %v8987 = vpack.c.b16 %v8977, %v8976
        %v8988 = vpack.c.b16 %v8979, %v8978
        %v8989 = vpack.c.b16 %v8981, %v8980
        %8998 = vmatprep.subr.bf16.mxu0 0
        %8999 = vmatpush1.bf16.msra.mxu0 %v8982
        %9000 = vmatprep.subr.bf16.mxu0 0
        %9001 = vmatpush1.bf16.msra.mxu0 %v8983
        %9002 = vmatprep.subr.bf16.mxu0 0
        %9003 = vmatpush1.bf16.msra.mxu0 %v8984
        %9004 = vmatprep.subr.bf16.mxu0 0
        %9005 = vmatpush1.bf16.msra.mxu0 %v8985
        %9006 = vmatprep.subr.bf16.mxu0 0
        %9007 = vmatpush1.bf16.msra.mxu0 %v8986
        %9008 = vmatprep.subr.bf16.mxu0 0
        %9009 = vmatpush1.bf16.msra.mxu0 %v8987
        %9010 = vmatprep.subr.bf16.mxu0 0
        %9011 = vmatpush1.bf16.msra.mxu0 %v8988
        %9012 = vmatprep.subr.bf16.mxu0 0
        %9013 = vmatpush1.bf16.msra.mxu0 %v8989
        %9014 = vmatprep.subr.bf16.mxu0 0
        %9015 = vmatpush1.bf16.msra.mxu0 0
        %9016 = vmatprep.subr.bf16.mxu0 0
        %9017 = vmatpush1.bf16.msra.mxu0 0
        %9018 = vmatprep.subr.bf16.mxu0 0
        %9019 = vmatpush1.bf16.msra.mxu0 0
        %9020 = vmatprep.subr.bf16.mxu0 0
        %9021 = vmatpush1.bf16.msra.mxu0 0
        %9022 = vmatprep.subr.bf16.mxu0 0
        %9023 = vmatpush1.bf16.msra.mxu0 0
        %9024 = vmatprep.subr.bf16.mxu0 0
        %9025 = vmatpush1.bf16.msra.mxu0 0
        %9026 = vmatprep.subr.bf16.mxu0 0
        %9027 = vmatpush1.bf16.msra.mxu0 0
        %9028 = vmatprep.subr.bf16.mxu0 0
        %9029 = vmatpush1.bf16.msra.mxu0 0
        %9030 = vmatprep.mubr.bf16.mxu0 0
        %9031 = vmatmul.mubr.bf16.gmra.mrb[0].mxu0 %v8944
        %v9032 = vpop.f32.mrb[0].mxu0
        %v9033 = vadd.f32 0.0, %v9032
        %v9034 = vpop.f32.mrb[0].mxu0
        %v9035 = vpop.f32.mrb[0].mxu0
        %v9036 = vadd.f32 0.0, %v9035
        %v9037 = vpop.f32.mrb[0].mxu0
        %9038 = vmatprep.mubr.bf16.mxu0 0
        %9039 = vmatmul.mubr.bf16.gmra.mrb[0].mxu0 %v8946
        %v9040 = vpop.f32.mrb[0].mxu0
        %v9041 = vadd.f32 0.0, %v9040
        %v9042 = vpop.f32.mrb[0].mxu0
        %v9043 = vpop.f32.mrb[0].mxu0
        %v9044 = vadd.f32 0.0, %v9043
        %v9045 = vpop.f32.mrb[0].mxu0
        %9046 = vmatprep.mubr.bf16.mxu0 0
        %9047 = vmatmul.mubr.bf16.gmra.mrb[0].mxu0 %v8945
        %v9048 = vpop.f32.mrb[0].mxu0
        %v9049 = vadd.f32 0.0, %v9048
        %v9050 = vpop.f32.mrb[0].mxu0
        %v9051 = vpop.f32.mrb[0].mxu0
        %v9052 = vpop.f32.mrb[0].mxu0
        %9053 = vdwg.mxu0
        %v9054 = vadd.f32 %v8916, %v9033
        %v9055 = vadd.f32 %v8917, %v9036
        %v9056 = vadd.f32 %v8918, %v9041
        %v9057 = vadd.f32 %v8919, %v9044
        %v9058 = vadd.f32 %v8920, %v9049
        %v9059 = vld [vmem:[#allocation5] sm:$0xc0]
        %v9060 = vld [vmem:[#allocation5 + $0x8] sm:$0xff]
        %v9061 = vld [vmem:[#allocation5 + $0x10] sm:$0xff]
        %v9062 = vld [vmem:[#allocation5 + $0x18] sm:$0x1]
        %s9063 = scalar_lea.vmem %s7, 448
        %v9064 = vld [vmem:[%s9063] sm:$0xf]
        %v9065 = vld [vmem:[%s9063 + $0x4] sm:$0xf]
        %v9066 = vld [vmem:[%s9063 + $0x8] sm:$0xf]
        %v9067 = vld [vmem:[%s9063 + $0xc] sm:$0xf]
        %v9068 = vld [vmem:[%s9063 + $0x10] sm:$0xf]
        %v9069 = vld [vmem:[%s9063 + $0x14] sm:$0xf]
        %v9070 = vld [vmem:[%s9063 + $0x18] sm:$0xf]
        %v9071 = vld [vmem:[%s9063 + $0x1c] sm:$0xf]
        %v9072 = vld [vmem:[%s9063 + $0x20] sm:$0xf]
        %v9073 = vld [vmem:[%s9063 + $0x24] sm:$0xf]
        %v9074 = vld [vmem:[%s9063 + $0x28] sm:$0xf]
        %v9075 = vld [vmem:[%s9063 + $0x2c] sm:$0xf]
        %v9076 = vld [vmem:[%s9063 + $0x30] sm:$0xf]
        %v9077 = vld [vmem:[%s9063 + $0x34] sm:$0xf]
        %v9078 = vld [vmem:[%s9063 + $0x38] sm:$0xf]
        %v9079 = vld [vmem:[%s9063 + $0x3c] sm:$0xf]
        %v9081 = vshrl.u32 %v9059, 16
        %v9083 = vrot.slane %v9081, 6
        %v9084 = vshll.u32 %v9059, 16
        %v9086 = vrot.slane %v9084, 7
        %v9087 = vor.u32 %v9083, %v9086
        %v9089 = vshrl.u32 %v9060, 16
        %v9091 = vrot.slane %v9089, 6
        %v9092 = vshll.u32 %v9060, 16
        %v9094 = vrot.slane %v9092, 7
        %v9095 = vor.u32 %v9091, %v9094
        %v9096 = vsel %vm5906, %v9087, %v9095
        %v9098 = vshrl.u32 %v9061, 16
        %v9100 = vrot.slane %v9098, 6
        %v9101 = vshll.u32 %v9061, 16
        %v9103 = vrot.slane %v9101, 7
        %v9104 = vor.u32 %v9100, %v9103
        %v9105 = vsel %vm5906, %v9095, %v9104
        %v9107 = vshll.u32 %v9062, 16
        %v9109 = vrot.slane %v9107, 7
        %v9110 = vsel %vm5906, %v9104, %v9109
        %v9130 = vunpack.c.l.b16 %v9064
        %v9131 = vunpack.c.l.b16 %v9065
        %v9132 = vunpack.c.l.b16 %v9066
        %v9133 = vunpack.c.l.b16 %v9067
        %v9134 = vunpack.c.l.b16 %v9068
        %v9135 = vunpack.c.l.b16 %v9069
        %v9136 = vunpack.c.l.b16 %v9070
        %v9137 = vunpack.c.l.b16 %v9071
        %v9138 = vunpack.c.l.b16 %v9072
        %v9139 = vunpack.c.l.b16 %v9073
        %v9140 = vunpack.c.l.b16 %v9074
        %v9141 = vunpack.c.l.b16 %v9075
        %v9142 = vunpack.c.l.b16 %v9076
        %v9143 = vunpack.c.l.b16 %v9077
        %v9144 = vunpack.c.l.b16 %v9078
        %v9145 = vunpack.c.l.b16 %v9079
        %v9146 = vpack.c.b16 %v9131, %v9130
        %v9147 = vpack.c.b16 %v9133, %v9132
        %v9148 = vpack.c.b16 %v9135, %v9134
        %v9149 = vpack.c.b16 %v9137, %v9136
        %v9150 = vpack.c.b16 %v9139, %v9138
        %v9151 = vpack.c.b16 %v9141, %v9140
        %v9152 = vpack.c.b16 %v9143, %v9142
        %v9153 = vpack.c.b16 %v9145, %v9144
        %9162 = vmatprep.subr.bf16.mxu0 0
        %9163 = vmatpush1.bf16.msra.mxu0 %v9146
        %9164 = vmatprep.subr.bf16.mxu0 0
        %9165 = vmatpush1.bf16.msra.mxu0 %v9147
        %9166 = vmatprep.subr.bf16.mxu0 0
        %9167 = vmatpush1.bf16.msra.mxu0 %v9148
        %9168 = vmatprep.subr.bf16.mxu0 0
        %9169 = vmatpush1.bf16.msra.mxu0 %v9149
        %9170 = vmatprep.subr.bf16.mxu0 0
        %9171 = vmatpush1.bf16.msra.mxu0 %v9150
        %9172 = vmatprep.subr.bf16.mxu0 0
        %9173 = vmatpush1.bf16.msra.mxu0 %v9151
        %9174 = vmatprep.subr.bf16.mxu0 0
        %9175 = vmatpush1.bf16.msra.mxu0 %v9152
        %9176 = vmatprep.subr.bf16.mxu0 0
        %9177 = vmatpush1.bf16.msra.mxu0 %v9153
        %9178 = vmatprep.subr.bf16.mxu0 0
        %9179 = vmatpush1.bf16.msra.mxu0 0
        %9180 = vmatprep.subr.bf16.mxu0 0
        %9181 = vmatpush1.bf16.msra.mxu0 0
        %9182 = vmatprep.subr.bf16.mxu0 0
        %9183 = vmatpush1.bf16.msra.mxu0 0
        %9184 = vmatprep.subr.bf16.mxu0 0
        %9185 = vmatpush1.bf16.msra.mxu0 0
        %9186 = vmatprep.subr.bf16.mxu0 0
        %9187 = vmatpush1.bf16.msra.mxu0 0
        %9188 = vmatprep.subr.bf16.mxu0 0
        %9189 = vmatpush1.bf16.msra.mxu0 0
        %9190 = vmatprep.subr.bf16.mxu0 0
        %9191 = vmatpush1.bf16.msra.mxu0 0
        %9192 = vmatprep.subr.bf16.mxu0 0
        %9193 = vmatpush1.bf16.msra.mxu0 0
        %9194 = vmatprep.mubr.bf16.mxu0 0
        %9195 = vmatmul.mubr.bf16.gmra.mrb[0].mxu0 %v9096
        %v9196 = vpop.f32.mrb[0].mxu0
        %v9197 = vadd.f32 0.0, %v9196
        %v9198 = vpop.f32.mrb[0].mxu0
        %v9199 = vpop.f32.mrb[0].mxu0
        %v9200 = vadd.f32 0.0, %v9199
        %v9201 = vpop.f32.mrb[0].mxu0
        %9202 = vmatprep.mubr.bf16.mxu0 0
        %9203 = vmatmul.mubr.bf16.gmra.mrb[0].mxu0 %v9105
        %v9204 = vpop.f32.mrb[0].mxu0
        %v9205 = vadd.f32 0.0, %v9204
        %v9206 = vpop.f32.mrb[0].mxu0
        %v9207 = vpop.f32.mrb[0].mxu0
        %v9208 = vadd.f32 0.0, %v9207
        %v9209 = vpop.f32.mrb[0].mxu0
        %9210 = vmatprep.mubr.bf16.mxu0 0
        %9211 = vmatmul.mubr.bf16.gmra.mrb[0].mxu0 %v9110
        %v9212 = vpop.f32.mrb[0].mxu0
        %v9213 = vadd.f32 0.0, %v9212
        %v9214 = vpop.f32.mrb[0].mxu0
        %v9215 = vpop.f32.mrb[0].mxu0
        %v9216 = vpop.f32.mrb[0].mxu0
        %9217 = vdwg.mxu0
        %v9218 = vadd.f32 %v9054, %v9197
        %v9219 = vadd.f32 %v9055, %v9200
        %v9220 = vadd.f32 %v9056, %v9205
        %v9221 = vadd.f32 %v9057, %v9208
        %v9222 = vadd.f32 %v9058, %v9213
        %v9223 = vld [vmem:[#allocation5] sm:$0x80]
        %s9224 = scalar_lea.vmem %s7, 512
        %v9225 = vld [vmem:[%s9224] sm:$0xf]
        %v9226 = vld [vmem:[%s9224 + $0x4] sm:$0xf]
        %v9227 = vld [vmem:[%s9224 + $0x8] sm:$0xf]
        %v9228 = vld [vmem:[%s9224 + $0xc] sm:$0xf]
        %v9229 = vld [vmem:[%s9224 + $0x10] sm:$0xf]
        %v9230 = vld [vmem:[%s9224 + $0x14] sm:$0xf]
        %v9231 = vld [vmem:[%s9224 + $0x18] sm:$0xf]
        %v9232 = vld [vmem:[%s9224 + $0x1c] sm:$0xf]
        %v9233 = vld [vmem:[%s9224 + $0x20] sm:$0xf]
        %v9234 = vld [vmem:[%s9224 + $0x24] sm:$0xf]
        %v9235 = vld [vmem:[%s9224 + $0x28] sm:$0xf]
        %v9236 = vld [vmem:[%s9224 + $0x2c] sm:$0xf]
        %v9237 = vld [vmem:[%s9224 + $0x30] sm:$0xf]
        %v9238 = vld [vmem:[%s9224 + $0x34] sm:$0xf]
        %v9239 = vld [vmem:[%s9224 + $0x38] sm:$0xf]
        %v9240 = vld [vmem:[%s9224 + $0x3c] sm:$0xf]
        %v9245 = vrot.slane %v9223, 7
        %v9246 = vrot.slane %v9060, 7
        %v9247 = vsel %vm5865, %v9245, %v9246
        %v9248 = vrot.slane %v9061, 7
        %v9249 = vsel %vm5865, %v9246, %v9248
        %v9250 = vrot.slane %v9062, 7
        %v9251 = vsel %vm5865, %v9248, %v9250
        %v9271 = vunpack.c.l.b16 %v9225
        %v9272 = vunpack.c.l.b16 %v9226
        %v9273 = vunpack.c.l.b16 %v9227
        %v9274 = vunpack.c.l.b16 %v9228
        %v9275 = vunpack.c.l.b16 %v9229
        %v9276 = vunpack.c.l.b16 %v9230
        %v9277 = vunpack.c.l.b16 %v9231
        %v9278 = vunpack.c.l.b16 %v9232
        %v9279 = vunpack.c.l.b16 %v9233
        %v9280 = vunpack.c.l.b16 %v9234
        %v9281 = vunpack.c.l.b16 %v9235
        %v9282 = vunpack.c.l.b16 %v9236
        %v9283 = vunpack.c.l.b16 %v9237
        %v9284 = vunpack.c.l.b16 %v9238
        %v9285 = vunpack.c.l.b16 %v9239
        %v9286 = vunpack.c.l.b16 %v9240
        %v9287 = vpack.c.b16 %v9272, %v9271
        %v9288 = vpack.c.b16 %v9274, %v9273
        %v9289 = vpack.c.b16 %v9276, %v9275
        %v9290 = vpack.c.b16 %v9278, %v9277
        %v9291 = vpack.c.b16 %v9280, %v9279
        %v9292 = vpack.c.b16 %v9282, %v9281
        %v9293 = vpack.c.b16 %v9284, %v9283
        %v9294 = vpack.c.b16 %v9286, %v9285
        %9303 = vmatprep.subr.bf16.mxu0 0
        %9304 = vmatpush1.bf16.msra.mxu0 %v9287
        %9305 = vmatprep.subr.bf16.mxu0 0
        %9306 = vmatpush1.bf16.msra.mxu0 %v9288
        %9307 = vmatprep.subr.bf16.mxu0 0
        %9308 = vmatpush1.bf16.msra.mxu0 %v9289
        %9309 = vmatprep.subr.bf16.mxu0 0
        %9310 = vmatpush1.bf16.msra.mxu0 %v9290
        %9311 = vmatprep.subr.bf16.mxu0 0
        %9312 = vmatpush1.bf16.msra.mxu0 %v9291
        %9313 = vmatprep.subr.bf16.mxu0 0
        %9314 = vmatpush1.bf16.msra.mxu0 %v9292
        %9315 = vmatprep.subr.bf16.mxu0 0
        %9316 = vmatpush1.bf16.msra.mxu0 %v9293
        %9317 = vmatprep.subr.bf16.mxu0 0
        %9318 = vmatpush1.bf16.msra.mxu0 %v9294
        %9319 = vmatprep.subr.bf16.mxu0 0
        %9320 = vmatpush1.bf16.msra.mxu0 0
        %9321 = vmatprep.subr.bf16.mxu0 0
        %9322 = vmatpush1.bf16.msra.mxu0 0
        %9323 = vmatprep.subr.bf16.mxu0 0
        %9324 = vmatpush1.bf16.msra.mxu0 0
        %9325 = vmatprep.subr.bf16.mxu0 0
        %9326 = vmatpush1.bf16.msra.mxu0 0
        %9327 = vmatprep.subr.bf16.mxu0 0
        %9328 = vmatpush1.bf16.msra.mxu0 0
        %9329 = vmatprep.subr.bf16.mxu0 0
        %9330 = vmatpush1.bf16.msra.mxu0 0
        %9331 = vmatprep.subr.bf16.mxu0 0
        %9332 = vmatpush1.bf16.msra.mxu0 0
        %9333 = vmatprep.subr.bf16.mxu0 0
        %9334 = vmatpush1.bf16.msra.mxu0 0
        %9335 = vmatprep.mubr.bf16.mxu0 0
        %9336 = vmatmul.mubr.bf16.gmra.mrb[0].mxu0 %v9247
        %v9337 = vpop.f32.mrb[0].mxu0
        %v9338 = vadd.f32 0.0, %v9337
        %v9339 = vpop.f32.mrb[0].mxu0
        %v9340 = vpop.f32.mrb[0].mxu0
        %v9341 = vadd.f32 0.0, %v9340
        %v9342 = vpop.f32.mrb[0].mxu0
        %9343 = vmatprep.mubr.bf16.mxu0 0
        %9344 = vmatmul.mubr.bf16.gmra.mrb[0].mxu0 %v9249
        %v9345 = vpop.f32.mrb[0].mxu0
        %v9346 = vadd.f32 0.0, %v9345
        %v9347 = vpop.f32.mrb[0].mxu0
        %v9348 = vpop.f32.mrb[0].mxu0
        %v9349 = vadd.f32 0.0, %v9348
        %v9350 = vpop.f32.mrb[0].mxu0
        %9351 = vmatprep.mubr.bf16.mxu0 0
        %9352 = vmatmul.mubr.bf16.gmra.mrb[0].mxu0 %v9251
        %v9353 = vpop.f32.mrb[0].mxu0
        %v9354 = vadd.f32 0.0, %v9353
        %v9355 = vpop.f32.mrb[0].mxu0
        %v9356 = vpop.f32.mrb[0].mxu0
        %v9357 = vpop.f32.mrb[0].mxu0
        %9358 = vdwg.mxu0
        %v9359 = vadd.f32 %v9218, %v9338
        %v9360 = vadd.f32 %v9219, %v9341
        %v9361 = vadd.f32 %v9220, %v9346
        %v9362 = vadd.f32 %v9221, %v9349
        %v9363 = vadd.f32 %v9222, %v9354
        %v9365 = vlaneseq
        %v9366 = vshrl.u32 %v9365, 7
        %v9367 = vsub.s32 0, %v9366
        %v9368 = vrot.slane %v8083, %v9367
        %v9370 = vmul.f32 %v9359, %v9368
        %v9371 = vmul.f32 %v9360, %v9368
        %v9372 = vmul.f32 %v9361, %v9368
        %v9373 = vmul.f32 %v9362, %v9368
        %v9374 = vmul.f32 %v9363, %v9368
        %v9376 = vlaneseq
        %v9377 = vshrl.u32 %v9376, 7
        %v9378 = vsub.s32 0, %v9377
        %v9379 = vrot.slane %v8084, %v9378
        %v9381 = vadd.f32 %v9370, %v9379
        %v9382 = vadd.f32 %v9371, %v9379
        %v9383 = vadd.f32 %v9372, %v9379
        %v9384 = vadd.f32 %v9373, %v9379
        %v9385 = vadd.f32 %v9374, %v9379
        %v9386 = vmax.f32 %v9381, 0.0
        %v9387 = vmax.f32 %v9382, 0.0
        %v9388 = vmax.f32 %v9383, 0.0
        %v9389 = vmax.f32 %v9384, 0.0
        %v9390 = vmax.f32 %v9385, 0.0
        %9391 = vst [vmem:[#allocation6] sm:$0xff] %v9386
        %9392 = vst [vmem:[#allocation6 + $0x8] sm:$0xff] %v9387
        %9393 = vst [vmem:[#allocation6 + $0x10] sm:$0xff] %v9388
        %9394 = vst [vmem:[#allocation6 + $0x18] sm:$0xff] %v9389
        %9395 = vst [vmem:[#allocation6 + $0x20] sm:$0xf] %v9390
        %v9396 = vld [vmem:[#allocation6] ss:$2 sm:$0x3]
        %s9397 = scalar_lea.vmem [#allocation6], 1
        %v9398 = vld [vmem:[%s9397] ss:$2 sm:$0x3]
        %s9399 = scalar_lea.vmem [#allocation6], 6
        %v9400 = vld [vmem:[%s9399] ss:$2 sm:$0x3]
        %s9401 = scalar_lea.vmem [#allocation6], 7
        %v9402 = vld [vmem:[%s9401] ss:$2 sm:$0x3]
        %v9403 = vmax.f32 %v9396, %v9398
        %v9404 = vmax.f32 %v9400, %v9402
        %v9405 = vmax.f32 %v9403, %v9404
        %v9406 = vpack.c.bf16 %v9405, %v9405
        %9407 = vst [vmem:[#allocation7] sm:$0x1] %v9406
        %s9408 = scalar_lea.vmem [#allocation6], 12
        %v9409 = vld [vmem:[%s9408] ss:$2 sm:$0x3]
        %s9410 = scalar_lea.vmem [#allocation6], 13
        %v9411 = vld [vmem:[%s9410] ss:$2 sm:$0x3]
        %s9412 = scalar_lea.vmem [#allocation6], 18
        %v9413 = vld [vmem:[%s9412] ss:$2 sm:$0x3]
        %s9414 = scalar_lea.vmem [#allocation6], 19
        %v9415 = vld [vmem:[%s9414] ss:$2 sm:$0x3]
        %v9416 = vmax.f32 %v9409, %v9411
        %v9417 = vmax.f32 %v9413, %v9415
        %v9418 = vmax.f32 %v9416, %v9417
        %v9419 = vpack.c.bf16 %v9418, %v9418
        %v9422 = vunpack.c.l.s4 1983009808
        %v9423 = vunpack.c.0.s8 %v9422
        %v9424 = vlaneseq
        %v9425 = vshrl.u32 %v9424, 7
        %v9426 = vsub.s32 %v9423, %v9425
        %v9427 = vrot.slane %v9419, %v9426
        %v9428 = vrot.slane %v9427, 7
        %9430 = vst [vmem:[#allocation7] sm:$0x2] %v9428
        %v9431 = vld [vmem:[#allocation7] sm:$0x1]
        %v9432 = vld [vmem:[%s10] sm:$0xf]
        %v9433 = vld [vmem:[%s10 + $0x4] sm:$0xf]
        %v9434 = vld [vmem:[%s10 + $0x8] sm:$0xf]
        %v9435 = vld [vmem:[%s10 + $0xc] sm:$0xf]
        %v9436 = vld [vmem:[%s10 + $0x10] sm:$0xf]
        %v9437 = vld [vmem:[%s10 + $0x14] sm:$0xf]
        %v9438 = vld [vmem:[%s10 + $0x18] sm:$0xf]
        %v9439 = vld [vmem:[%s10 + $0x1c] sm:$0xf]
        %v9440 = vld [vmem:[%s10 + $0x20] sm:$0xf]
        %v9441 = vld [vmem:[%s10 + $0x24] sm:$0xf]
        %v9442 = vld [vmem:[%s10 + $0x28] sm:$0xf]
        %v9443 = vld [vmem:[%s10 + $0x2c] sm:$0xf]
        %v9444 = vld [vmem:[%s10 + $0x30] sm:$0xf]
        %v9445 = vld [vmem:[%s10 + $0x34] sm:$0xf]
        %v9446 = vld [vmem:[%s10 + $0x38] sm:$0xf]
        %v9447 = vld [vmem:[%s10 + $0x3c] sm:$0xf]
        %s9448 = scalar_lea.vmem %s10, 64
        %v9449 = vld [vmem:[%s9448] sm:$0xf]
        %v9450 = vld [vmem:[%s9448 + $0x4] sm:$0xf]
        %v9451 = vld [vmem:[%s9448 + $0x8] sm:$0xf]
        %v9452 = vld [vmem:[%s9448 + $0xc] sm:$0xf]
        %v9453 = vld [vmem:[%s9448 + $0x10] sm:$0xf]
        %v9454 = vld [vmem:[%s9448 + $0x14] sm:$0xf]
        %v9455 = vld [vmem:[%s9448 + $0x18] sm:$0xf]
        %v9456 = vld [vmem:[%s9448 + $0x1c] sm:$0xf]
        %v9457 = vld [vmem:[%s9448 + $0x20] sm:$0xf]
        %v9458 = vld [vmem:[%s9448 + $0x24] sm:$0xf]
        %v9459 = vld [vmem:[%s9448 + $0x28] sm:$0xf]
        %v9460 = vld [vmem:[%s9448 + $0x2c] sm:$0xf]
        %v9461 = vld [vmem:[%s9448 + $0x30] sm:$0xf]
        %v9462 = vld [vmem:[%s9448 + $0x34] sm:$0xf]
        %v9463 = vld [vmem:[%s9448 + $0x38] sm:$0xf]
        %v9464 = vld [vmem:[%s9448 + $0x3c] sm:$0xf]
        %v9467 = vunpack.c.l.s4 1983009808
        %v9468 = vunpack.c.0.s8 %v9467
        %v9469 = vlaneseq
        %v9470 = vshrl.u32 %v9469, 7
        %v9471 = vsub.s32 %v9468, %v9470
        %v9472 = vrot.slane %v9431, %v9471
        %v9474 = vshrl.u32 %v9472, 16
        %v9493 = vunpack.c.l.b16 %v9449
        %v9494 = vunpack.c.l.b16 %v9450
        %v9495 = vunpack.c.l.b16 %v9451
        %v9496 = vunpack.c.l.b16 %v9452
        %v9497 = vunpack.c.l.b16 %v9453
        %v9498 = vunpack.c.l.b16 %v9454
        %v9499 = vunpack.c.l.b16 %v9455
        %v9500 = vunpack.c.l.b16 %v9456
        %v9501 = vunpack.c.l.b16 %v9457
        %v9502 = vunpack.c.l.b16 %v9458
        %v9503 = vunpack.c.l.b16 %v9459
        %v9504 = vunpack.c.l.b16 %v9460
        %v9505 = vunpack.c.l.b16 %v9461
        %v9506 = vunpack.c.l.b16 %v9462
        %v9507 = vunpack.c.l.b16 %v9463
        %v9508 = vunpack.c.l.b16 %v9464
        %v9509 = vpack.c.b16 %v9494, %v9493
        %v9510 = vpack.c.b16 %v9496, %v9495
        %v9511 = vpack.c.b16 %v9498, %v9497
        %v9512 = vpack.c.b16 %v9500, %v9499
        %v9513 = vpack.c.b16 %v9502, %v9501
        %v9514 = vpack.c.b16 %v9504, %v9503
        %v9515 = vpack.c.b16 %v9506, %v9505
        %v9516 = vpack.c.b16 %v9508, %v9507
        %9525 = vmatprep.subr.bf16.mxu0 0
        %9526 = vmatpush1.bf16.msra.mxu0 %v9509
        %9527 = vmatprep.subr.bf16.mxu0 0
        %9528 = vmatpush1.bf16.msra.mxu0 %v9510
        %9529 = vmatprep.subr.bf16.mxu0 0
        %9530 = vmatpush1.bf16.msra.mxu0 %v9511
        %9531 = vmatprep.subr.bf16.mxu0 0
        %9532 = vmatpush1.bf16.msra.mxu0 %v9512
        %9533 = vmatprep.subr.bf16.mxu0 0
        %9534 = vmatpush1.bf16.msra.mxu0 %v9513
        %9535 = vmatprep.subr.bf16.mxu0 0
        %9536 = vmatpush1.bf16.msra.mxu0 %v9514
        %9537 = vmatprep.subr.bf16.mxu0 0
        %9538 = vmatpush1.bf16.msra.mxu0 %v9515
        %9539 = vmatprep.subr.bf16.mxu0 0
        %9540 = vmatpush1.bf16.msra.mxu0 %v9516
        %9541 = vmatprep.subr.bf16.mxu0 0
        %9542 = vmatpush1.bf16.msra.mxu0 0
        %9543 = vmatprep.subr.bf16.mxu0 0
        %9544 = vmatpush1.bf16.msra.mxu0 0
        %9545 = vmatprep.subr.bf16.mxu0 0
        %9546 = vmatpush1.bf16.msra.mxu0 0
        %9547 = vmatprep.subr.bf16.mxu0 0
        %9548 = vmatpush1.bf16.msra.mxu0 0
        %9549 = vmatprep.subr.bf16.mxu0 0
        %9550 = vmatpush1.bf16.msra.mxu0 0
        %9551 = vmatprep.subr.bf16.mxu0 0
        %9552 = vmatpush1.bf16.msra.mxu0 0
        %9553 = vmatprep.subr.bf16.mxu0 0
        %9554 = vmatpush1.bf16.msra.mxu0 0
        %9555 = vmatprep.subr.bf16.mxu0 0
        %9556 = vmatpush1.bf16.msra.mxu0 0
        %9557 = vmatprep.mubr.bf16.mxu0 0
        %9558 = vmatmul.mubr.bf16.gmra.mrb[0].mxu0 %v9474
        %v9559 = vpop.f32.mrb[0].mxu0
        %v9560 = vadd.f32 0.0, %v9559
        %v9561 = vpop.f32.mrb[0].mxu0
        %v9562 = vpop.f32.mrb[0].mxu0
        %v9563 = vpop.f32.mrb[0].mxu0
        %9564 = vdwg.mxu0
        %v9581 = vunpack.c.l.b16 %v9432
        %v9582 = vunpack.c.l.b16 %v9433
        %v9583 = vunpack.c.l.b16 %v9434
        %v9584 = vunpack.c.l.b16 %v9435
        %v9585 = vunpack.c.l.b16 %v9436
        %v9586 = vunpack.c.l.b16 %v9437
        %v9587 = vunpack.c.l.b16 %v9438
        %v9588 = vunpack.c.l.b16 %v9439
        %v9589 = vunpack.c.l.b16 %v9440
        %v9590 = vunpack.c.l.b16 %v9441
        %v9591 = vunpack.c.l.b16 %v9442
        %v9592 = vunpack.c.l.b16 %v9443
        %v9593 = vunpack.c.l.b16 %v9444
        %v9594 = vunpack.c.l.b16 %v9445
        %v9595 = vunpack.c.l.b16 %v9446
        %v9596 = vunpack.c.l.b16 %v9447
        %v9597 = vpack.c.b16 %v9582, %v9581
        %v9598 = vpack.c.b16 %v9584, %v9583
        %v9599 = vpack.c.b16 %v9586, %v9585
        %v9600 = vpack.c.b16 %v9588, %v9587
        %v9601 = vpack.c.b16 %v9590, %v9589
        %v9602 = vpack.c.b16 %v9592, %v9591
        %v9603 = vpack.c.b16 %v9594, %v9593
        %v9604 = vpack.c.b16 %v9596, %v9595
        %9613 = vmatprep.subr.bf16.mxu0 0
        %9614 = vmatpush1.bf16.msra.mxu0 %v9597
        %9615 = vmatprep.subr.bf16.mxu0 0
        %9616 = vmatpush1.bf16.msra.mxu0 %v9598
        %9617 = vmatprep.subr.bf16.mxu0 0
        %9618 = vmatpush1.bf16.msra.mxu0 %v9599
        %9619 = vmatprep.subr.bf16.mxu0 0
        %9620 = vmatpush1.bf16.msra.mxu0 %v9600
        %9621 = vmatprep.subr.bf16.mxu0 0
        %9622 = vmatpush1.bf16.msra.mxu0 %v9601
        %9623 = vmatprep.subr.bf16.mxu0 0
        %9624 = vmatpush1.bf16.msra.mxu0 %v9602
        %9625 = vmatprep.subr.bf16.mxu0 0
        %9626 = vmatpush1.bf16.msra.mxu0 %v9603
        %9627 = vmatprep.subr.bf16.mxu0 0
        %9628 = vmatpush1.bf16.msra.mxu0 %v9604
        %9629 = vmatprep.subr.bf16.mxu0 0
        %9630 = vmatpush1.bf16.msra.mxu0 0
        %9631 = vmatprep.subr.bf16.mxu0 0
        %9632 = vmatpush1.bf16.msra.mxu0 0
        %9633 = vmatprep.subr.bf16.mxu0 0
        %9634 = vmatpush1.bf16.msra.mxu0 0
        %9635 = vmatprep.subr.bf16.mxu0 0
        %9636 = vmatpush1.bf16.msra.mxu0 0
        %9637 = vmatprep.subr.bf16.mxu0 0
        %9638 = vmatpush1.bf16.msra.mxu0 0
        %9639 = vmatprep.subr.bf16.mxu0 0
        %9640 = vmatpush1.bf16.msra.mxu0 0
        %9641 = vmatprep.subr.bf16.mxu0 0
        %9642 = vmatpush1.bf16.msra.mxu0 0
        %9643 = vmatprep.subr.bf16.mxu0 0
        %9644 = vmatpush1.bf16.msra.mxu0 0
        %9645 = vmatprep.mubr.bf16.mxu0 0
        %9646 = vmatmul.mubr.bf16.gmra.mrb[0].mxu0 %v9431
        %v9647 = vpop.f32.mrb[0].mxu0
        %v9648 = vadd.f32 %v9560, %v9647
        %v9649 = vpop.f32.mrb[0].mxu0
        %v9650 = vpop.f32.mrb[0].mxu0
        %v9651 = vpop.f32.mrb[0].mxu0
        %9652 = vdwg.mxu0
        %v9653 = vld [vmem:[#allocation7] sm:$0x2]
        %s9654 = scalar_lea.vmem %s10, 128
        %v9655 = vld [vmem:[%s9654] sm:$0xf]
        %v9656 = vld [vmem:[%s9654 + $0x4] sm:$0xf]
        %v9657 = vld [vmem:[%s9654 + $0x8] sm:$0xf]
        %v9658 = vld [vmem:[%s9654 + $0xc] sm:$0xf]
        %v9659 = vld [vmem:[%s9654 + $0x10] sm:$0xf]
        %v9660 = vld [vmem:[%s9654 + $0x14] sm:$0xf]
        %v9661 = vld [vmem:[%s9654 + $0x18] sm:$0xf]
        %v9662 = vld [vmem:[%s9654 + $0x1c] sm:$0xf]
        %v9663 = vld [vmem:[%s9654 + $0x20] sm:$0xf]
        %v9664 = vld [vmem:[%s9654 + $0x24] sm:$0xf]
        %v9665 = vld [vmem:[%s9654 + $0x28] sm:$0xf]
        %v9666 = vld [vmem:[%s9654 + $0x2c] sm:$0xf]
        %v9667 = vld [vmem:[%s9654 + $0x30] sm:$0xf]
        %v9668 = vld [vmem:[%s9654 + $0x34] sm:$0xf]
        %v9669 = vld [vmem:[%s9654 + $0x38] sm:$0xf]
        %v9670 = vld [vmem:[%s9654 + $0x3c] sm:$0xf]
        %v9673 = vunpack.c.l.s4 1983009808
        %v9674 = vunpack.c.0.s8 %v9673
        %v9675 = vlaneseq
        %v9676 = vshrl.u32 %v9675, 7
        %v9677 = vsub.s32 %v9674, %v9676
        %v9678 = vrot.slane %v9653, %v9677
        %v9679 = vrot.slane %v9678, 1
        %v9697 = vunpack.c.l.b16 %v9655
        %v9698 = vunpack.c.l.b16 %v9656
        %v9699 = vunpack.c.l.b16 %v9657
        %v9700 = vunpack.c.l.b16 %v9658
        %v9701 = vunpack.c.l.b16 %v9659
        %v9702 = vunpack.c.l.b16 %v9660
        %v9703 = vunpack.c.l.b16 %v9661
        %v9704 = vunpack.c.l.b16 %v9662
        %v9705 = vunpack.c.l.b16 %v9663
        %v9706 = vunpack.c.l.b16 %v9664
        %v9707 = vunpack.c.l.b16 %v9665
        %v9708 = vunpack.c.l.b16 %v9666
        %v9709 = vunpack.c.l.b16 %v9667
        %v9710 = vunpack.c.l.b16 %v9668
        %v9711 = vunpack.c.l.b16 %v9669
        %v9712 = vunpack.c.l.b16 %v9670
        %v9713 = vpack.c.b16 %v9698, %v9697
        %v9714 = vpack.c.b16 %v9700, %v9699
        %v9715 = vpack.c.b16 %v9702, %v9701
        %v9716 = vpack.c.b16 %v9704, %v9703
        %v9717 = vpack.c.b16 %v9706, %v9705
        %v9718 = vpack.c.b16 %v9708, %v9707
        %v9719 = vpack.c.b16 %v9710, %v9709
        %v9720 = vpack.c.b16 %v9712, %v9711
        %9729 = vmatprep.subr.bf16.mxu0 0
        %9730 = vmatpush1.bf16.msra.mxu0 %v9713
        %9731 = vmatprep.subr.bf16.mxu0 0
        %9732 = vmatpush1.bf16.msra.mxu0 %v9714
        %9733 = vmatprep.subr.bf16.mxu0 0
        %9734 = vmatpush1.bf16.msra.mxu0 %v9715
        %9735 = vmatprep.subr.bf16.mxu0 0
        %9736 = vmatpush1.bf16.msra.mxu0 %v9716
        %9737 = vmatprep.subr.bf16.mxu0 0
        %9738 = vmatpush1.bf16.msra.mxu0 %v9717
        %9739 = vmatprep.subr.bf16.mxu0 0
        %9740 = vmatpush1.bf16.msra.mxu0 %v9718
        %9741 = vmatprep.subr.bf16.mxu0 0
        %9742 = vmatpush1.bf16.msra.mxu0 %v9719
        %9743 = vmatprep.subr.bf16.mxu0 0
        %9744 = vmatpush1.bf16.msra.mxu0 %v9720
        %9745 = vmatprep.subr.bf16.mxu0 0
        %9746 = vmatpush1.bf16.msra.mxu0 0
        %9747 = vmatprep.subr.bf16.mxu0 0
        %9748 = vmatpush1.bf16.msra.mxu0 0
        %9749 = vmatprep.subr.bf16.mxu0 0
        %9750 = vmatpush1.bf16.msra.mxu0 0
        %9751 = vmatprep.subr.bf16.mxu0 0
        %9752 = vmatpush1.bf16.msra.mxu0 0
        %9753 = vmatprep.subr.bf16.mxu0 0
        %9754 = vmatpush1.bf16.msra.mxu0 0
        %9755 = vmatprep.subr.bf16.mxu0 0
        %9756 = vmatpush1.bf16.msra.mxu0 0
        %9757 = vmatprep.subr.bf16.mxu0 0
        %9758 = vmatpush1.bf16.msra.mxu0 0
        %9759 = vmatprep.subr.bf16.mxu0 0
        %9760 = vmatpush1.bf16.msra.mxu0 0
        %9761 = vmatprep.mubr.bf16.mxu0 0
        %9762 = vmatmul.mubr.bf16.gmra.mrb[0].mxu0 %v9679
        %v9763 = vpop.f32.mrb[0].mxu0
        %v9764 = vadd.f32 0.0, %v9763
        %v9765 = vpop.f32.mrb[0].mxu0
        %v9766 = vpop.f32.mrb[0].mxu0
        %v9767 = vpop.f32.mrb[0].mxu0
        %9768 = vdwg.mxu0
        %v9769 = vadd.f32 %v9648, %v9764
        %v9770 = vld [vmem:[#allocation7] sm:$0x2]
        %s9771 = scalar_lea.vmem %s10, 192
        %v9772 = vld [vmem:[%s9771] sm:$0xf]
        %v9773 = vld [vmem:[%s9771 + $0x4] sm:$0xf]
        %v9774 = vld [vmem:[%s9771 + $0x8] sm:$0xf]
        %v9775 = vld [vmem:[%s9771 + $0xc] sm:$0xf]
        %v9776 = vld [vmem:[%s9771 + $0x10] sm:$0xf]
        %v9777 = vld [vmem:[%s9771 + $0x14] sm:$0xf]
        %v9778 = vld [vmem:[%s9771 + $0x18] sm:$0xf]
        %v9779 = vld [vmem:[%s9771 + $0x1c] sm:$0xf]
        %v9780 = vld [vmem:[%s9771 + $0x20] sm:$0xf]
        %v9781 = vld [vmem:[%s9771 + $0x24] sm:$0xf]
        %v9782 = vld [vmem:[%s9771 + $0x28] sm:$0xf]
        %v9783 = vld [vmem:[%s9771 + $0x2c] sm:$0xf]
        %v9784 = vld [vmem:[%s9771 + $0x30] sm:$0xf]
        %v9785 = vld [vmem:[%s9771 + $0x34] sm:$0xf]
        %v9786 = vld [vmem:[%s9771 + $0x38] sm:$0xf]
        %v9787 = vld [vmem:[%s9771 + $0x3c] sm:$0xf]
        %v9790 = vunpack.c.l.s4 1983009808
        %v9791 = vunpack.c.0.s8 %v9790
        %v9792 = vlaneseq
        %v9793 = vshrl.u32 %v9792, 7
        %v9794 = vsub.s32 %v9791, %v9793
        %v9795 = vrot.slane %v9770, %v9794
        %v9797 = vshrl.u32 %v9795, 16
        %v9799 = vrot.slane %v9797, 1
        %v9817 = vunpack.c.l.b16 %v9772
        %v9818 = vunpack.c.l.b16 %v9773
        %v9819 = vunpack.c.l.b16 %v9774
        %v9820 = vunpack.c.l.b16 %v9775
        %v9821 = vunpack.c.l.b16 %v9776
        %v9822 = vunpack.c.l.b16 %v9777
        %v9823 = vunpack.c.l.b16 %v9778
        %v9824 = vunpack.c.l.b16 %v9779
        %v9825 = vunpack.c.l.b16 %v9780
        %v9826 = vunpack.c.l.b16 %v9781
        %v9827 = vunpack.c.l.b16 %v9782
        %v9828 = vunpack.c.l.b16 %v9783
        %v9829 = vunpack.c.l.b16 %v9784
        %v9830 = vunpack.c.l.b16 %v9785
        %v9831 = vunpack.c.l.b16 %v9786
        %v9832 = vunpack.c.l.b16 %v9787
        %v9833 = vpack.c.b16 %v9818, %v9817
        %v9834 = vpack.c.b16 %v9820, %v9819
        %v9835 = vpack.c.b16 %v9822, %v9821
        %v9836 = vpack.c.b16 %v9824, %v9823
        %v9837 = vpack.c.b16 %v9826, %v9825
        %v9838 = vpack.c.b16 %v9828, %v9827
        %v9839 = vpack.c.b16 %v9830, %v9829
        %v9840 = vpack.c.b16 %v9832, %v9831
        %9849 = vmatprep.subr.bf16.mxu0 0
        %9850 = vmatpush1.bf16.msra.mxu0 %v9833
        %9851 = vmatprep.subr.bf16.mxu0 0
        %9852 = vmatpush1.bf16.msra.mxu0 %v9834
        %9853 = vmatprep.subr.bf16.mxu0 0
        %9854 = vmatpush1.bf16.msra.mxu0 %v9835
        %9855 = vmatprep.subr.bf16.mxu0 0
        %9856 = vmatpush1.bf16.msra.mxu0 %v9836
        %9857 = vmatprep.subr.bf16.mxu0 0
        %9858 = vmatpush1.bf16.msra.mxu0 %v9837
        %9859 = vmatprep.subr.bf16.mxu0 0
        %9860 = vmatpush1.bf16.msra.mxu0 %v9838
        %9861 = vmatprep.subr.bf16.mxu0 0
        %9862 = vmatpush1.bf16.msra.mxu0 %v9839
        %9863 = vmatprep.subr.bf16.mxu0 0
        %9864 = vmatpush1.bf16.msra.mxu0 %v9840
        %9865 = vmatprep.subr.bf16.mxu0 0
        %9866 = vmatpush1.bf16.msra.mxu0 0
        %9867 = vmatprep.subr.bf16.mxu0 0
        %9868 = vmatpush1.bf16.msra.mxu0 0
        %9869 = vmatprep.subr.bf16.mxu0 0
        %9870 = vmatpush1.bf16.msra.mxu0 0
        %9871 = vmatprep.subr.bf16.mxu0 0
        %9872 = vmatpush1.bf16.msra.mxu0 0
        %9873 = vmatprep.subr.bf16.mxu0 0
        %9874 = vmatpush1.bf16.msra.mxu0 0
        %9875 = vmatprep.subr.bf16.mxu0 0
        %9876 = vmatpush1.bf16.msra.mxu0 0
        %9877 = vmatprep.subr.bf16.mxu0 0
        %9878 = vmatpush1.bf16.msra.mxu0 0
        %9879 = vmatprep.subr.bf16.mxu0 0
        %9880 = vmatpush1.bf16.msra.mxu0 0
        %9881 = vmatprep.mubr.bf16.mxu0 0
        %9882 = vmatmul.mubr.bf16.gmra.mrb[0].mxu0 %v9799
        %v9883 = vpop.f32.mrb[0].mxu0
        %v9884 = vadd.f32 0.0, %v9883
        %v9885 = vpop.f32.mrb[0].mxu0
        %v9886 = vpop.f32.mrb[0].mxu0
        %v9887 = vpop.f32.mrb[0].mxu0
        %9888 = vdwg.mxu0
        %v9889 = vadd.f32 %v9769, %v9884
        %v9890 = vld [vmem:[%s11] sm:$0x1]
        %v9891 = vadd.f32 %v9889, %v9890
        %v9892 = vmax.f32 %v9891, 0.0
        %v9893 = vpack.c.bf16 %v9892, %v9892
        %v9894 = vld [vmem:[%s12] sm:$0xf]
        %v9895 = vld [vmem:[%s12 + $0x4] sm:$0xf]
        %v9896 = vld [vmem:[%s12 + $0x8] sm:$0xf]
        %v9897 = vld [vmem:[%s12 + $0xc] sm:$0xf]
        %v9898 = vld [vmem:[%s12 + $0x10] sm:$0xf]
        %v9899 = vld [vmem:[%s12 + $0x14] sm:$0xf]
        %v9900 = vld [vmem:[%s12 + $0x18] sm:$0xf]
        %v9901 = vld [vmem:[%s12 + $0x1c] sm:$0xf]
        %v9902 = vld [vmem:[%s12 + $0x20] sm:$0xf]
        %v9903 = vld [vmem:[%s12 + $0x24] sm:$0xf]
        %v9904 = vld [vmem:[%s12 + $0x28] sm:$0xf]
        %v9905 = vld [vmem:[%s12 + $0x2c] sm:$0xf]
        %v9906 = vld [vmem:[%s12 + $0x30] sm:$0xf]
        %v9907 = vld [vmem:[%s12 + $0x34] sm:$0xf]
        %v9908 = vld [vmem:[%s12 + $0x38] sm:$0xf]
        %v9909 = vld [vmem:[%s12 + $0x3c] sm:$0xf]
        %v9910 = vld [vmem:[%s13] sm:$0x1]
        %v9927 = vunpack.c.l.b16 %v9894
        %v9928 = vunpack.c.l.b16 %v9895
        %v9929 = vunpack.c.l.b16 %v9896
        %v9930 = vunpack.c.l.b16 %v9897
        %v9931 = vunpack.c.l.b16 %v9898
        %v9932 = vunpack.c.l.b16 %v9899
        %v9933 = vunpack.c.l.b16 %v9900
        %v9934 = vunpack.c.l.b16 %v9901
        %v9935 = vunpack.c.l.b16 %v9902
        %v9936 = vunpack.c.l.b16 %v9903
        %v9937 = vunpack.c.l.b16 %v9904
        %v9938 = vunpack.c.l.b16 %v9905
        %v9939 = vunpack.c.l.b16 %v9906
        %v9940 = vunpack.c.l.b16 %v9907
        %v9941 = vunpack.c.l.b16 %v9908
        %v9942 = vunpack.c.l.b16 %v9909
        %v9943 = vpack.c.b16 %v9928, %v9927
        %v9944 = vpack.c.b16 %v9930, %v9929
        %v9945 = vpack.c.b16 %v9932, %v9931
        %v9946 = vpack.c.b16 %v9934, %v9933
        %v9947 = vpack.c.b16 %v9936, %v9935
        %v9948 = vpack.c.b16 %v9938, %v9937
        %v9949 = vpack.c.b16 %v9940, %v9939
        %v9950 = vpack.c.b16 %v9942, %v9941
        %9959 = vmatprep.subr.bf16.mxu0 0
        %9960 = vmatpush1.bf16.msra.mxu0 %v9943
        %9961 = vmatprep.subr.bf16.mxu0 0
        %9962 = vmatpush1.bf16.msra.mxu0 %v9944
        %9963 = vmatprep.subr.bf16.mxu0 0
        %9964 = vmatpush1.bf16.msra.mxu0 %v9945
        %9965 = vmatprep.subr.bf16.mxu0 0
        %9966 = vmatpush1.bf16.msra.mxu0 %v9946
        %9967 = vmatprep.subr.bf16.mxu0 0
        %9968 = vmatpush1.bf16.msra.mxu0 %v9947
        %9969 = vmatprep.subr.bf16.mxu0 0
        %9970 = vmatpush1.bf16.msra.mxu0 %v9948
        %9971 = vmatprep.subr.bf16.mxu0 0
        %9972 = vmatpush1.bf16.msra.mxu0 %v9949
        %9973 = vmatprep.subr.bf16.mxu0 0
        %9974 = vmatpush1.bf16.msra.mxu0 %v9950
        %9975 = vmatprep.subr.bf16.mxu0 0
        %9976 = vmatpush1.bf16.msra.mxu0 0
        %9977 = vmatprep.subr.bf16.mxu0 0
        %9978 = vmatpush1.bf16.msra.mxu0 0
        %9979 = vmatprep.subr.bf16.mxu0 0
        %9980 = vmatpush1.bf16.msra.mxu0 0
        %9981 = vmatprep.subr.bf16.mxu0 0
        %9982 = vmatpush1.bf16.msra.mxu0 0
        %9983 = vmatprep.subr.bf16.mxu0 0
        %9984 = vmatpush1.bf16.msra.mxu0 0
        %9985 = vmatprep.subr.bf16.mxu0 0
        %9986 = vmatpush1.bf16.msra.mxu0 0
        %9987 = vmatprep.subr.bf16.mxu0 0
        %9988 = vmatpush1.bf16.msra.mxu0 0
        %9989 = vmatprep.subr.bf16.mxu0 0
        %9990 = vmatpush1.bf16.msra.mxu0 0
        %9991 = vmatprep.mubr.bf16.mxu0 0
        %9992 = vmatmul.mubr.bf16.gmra.mrb[0].mxu0 %v9893
        %v9993 = vpop.f32.mrb[0].mxu0
        %v9994 = vadd.f32 %v9910, %v9993
        %v9995 = vpop.f32.mrb[0].mxu0
        %v9996 = vpop.f32.mrb[0].mxu0
        %v9997 = vpop.f32.mrb[0].mxu0
        %9998 = vdwg.mxu0
        %v9999 = vmax.f32 %v9994, 0.0
        %v10000 = vpack.c.bf16 %v9999, %v9999
        %v10001 = vld [vmem:[%s14] sm:$0xf]
        %v10002 = vld [vmem:[%s14 + $0x4] sm:$0xf]
        %v10003 = vld [vmem:[%s14 + $0x8] sm:$0xf]
        %v10004 = vld [vmem:[%s14 + $0xc] sm:$0xf]
        %v10005 = vld [vmem:[%s14 + $0x10] sm:$0xf]
        %v10006 = vld [vmem:[%s14 + $0x14] sm:$0xf]
        %v10007 = vld [vmem:[%s14 + $0x18] sm:$0xf]
        %v10008 = vld [vmem:[%s14 + $0x1c] sm:$0xf]
        %v10009 = vld [vmem:[%s14 + $0x20] sm:$0xf]
        %v10010 = vld [vmem:[%s14 + $0x24] sm:$0xf]
        %v10011 = vld [vmem:[%s14 + $0x28] sm:$0xf]
        %v10012 = vld [vmem:[%s14 + $0x2c] sm:$0xf]
        %v10013 = vld [vmem:[%s14 + $0x30] sm:$0xf]
        %v10014 = vld [vmem:[%s14 + $0x34] sm:$0xf]
        %v10015 = vld [vmem:[%s14 + $0x38] sm:$0xf]
        %v10016 = vld [vmem:[%s14 + $0x3c] sm:$0xf]
        %v10017 = vld [vmem:[%s15] sm:$0x1]
        %v10034 = vunpack.c.l.b16 %v10001
        %v10035 = vunpack.c.l.b16 %v10002
        %v10036 = vunpack.c.l.b16 %v10003
        %v10037 = vunpack.c.l.b16 %v10004
        %v10038 = vunpack.c.l.b16 %v10005
        %v10039 = vunpack.c.l.b16 %v10006
        %v10040 = vunpack.c.l.b16 %v10007
        %v10041 = vunpack.c.l.b16 %v10008
        %v10042 = vunpack.c.l.b16 %v10009
        %v10043 = vunpack.c.l.b16 %v10010
        %v10044 = vunpack.c.l.b16 %v10011
        %v10045 = vunpack.c.l.b16 %v10012
        %v10046 = vunpack.c.l.b16 %v10013
        %v10047 = vunpack.c.l.b16 %v10014
        %v10048 = vunpack.c.l.b16 %v10015
        %v10049 = vunpack.c.l.b16 %v10016
        %v10050 = vpack.c.b16 %v10035, %v10034
        %v10051 = vpack.c.b16 %v10037, %v10036
        %v10052 = vpack.c.b16 %v10039, %v10038
        %v10053 = vpack.c.b16 %v10041, %v10040
        %v10054 = vpack.c.b16 %v10043, %v10042
        %v10055 = vpack.c.b16 %v10045, %v10044
        %v10056 = vpack.c.b16 %v10047, %v10046
        %v10057 = vpack.c.b16 %v10049, %v10048
        %10066 = vmatprep.subr.bf16.mxu0 0
        %10067 = vmatpush1.bf16.msra.mxu0 %v10050
        %10068 = vmatprep.subr.bf16.mxu0 0
        %10069 = vmatpush1.bf16.msra.mxu0 %v10051
        %10070 = vmatprep.subr.bf16.mxu0 0
        %10071 = vmatpush1.bf16.msra.mxu0 %v10052
        %10072 = vmatprep.subr.bf16.mxu0 0
        %10073 = vmatpush1.bf16.msra.mxu0 %v10053
        %10074 = vmatprep.subr.bf16.mxu0 0
        %10075 = vmatpush1.bf16.msra.mxu0 %v10054
        %10076 = vmatprep.subr.bf16.mxu0 0
        %10077 = vmatpush1.bf16.msra.mxu0 %v10055
        %10078 = vmatprep.subr.bf16.mxu0 0
        %10079 = vmatpush1.bf16.msra.mxu0 %v10056
        %10080 = vmatprep.subr.bf16.mxu0 0
        %10081 = vmatpush1.bf16.msra.mxu0 %v10057
        %10082 = vmatprep.subr.bf16.mxu0 0
        %10083 = vmatpush1.bf16.msra.mxu0 0
        %10084 = vmatprep.subr.bf16.mxu0 0
        %10085 = vmatpush1.bf16.msra.mxu0 0
        %10086 = vmatprep.subr.bf16.mxu0 0
        %10087 = vmatpush1.bf16.msra.mxu0 0
        %10088 = vmatprep.subr.bf16.mxu0 0
        %10089 = vmatpush1.bf16.msra.mxu0 0
        %10090 = vmatprep.subr.bf16.mxu0 0
        %10091 = vmatpush1.bf16.msra.mxu0 0
        %10092 = vmatprep.subr.bf16.mxu0 0
        %10093 = vmatpush1.bf16.msra.mxu0 0
        %10094 = vmatprep.subr.bf16.mxu0 0
        %10095 = vmatpush1.bf16.msra.mxu0 0
        %10096 = vmatprep.subr.bf16.mxu0 0
        %10097 = vmatpush1.bf16.msra.mxu0 0
        %10098 = vmatprep.mubr.bf16.mxu0 0
        %10099 = vmatmul.mubr.bf16.gmra.mrb[0].mxu0 %v10000
        %v10100 = vpop.f32.mrb[0].mxu0
        %v10101 = vadd.f32 %v10017, %v10100
        %v10102 = vpop.f32.mrb[0].mxu0
        %v10103 = vpop.f32.mrb[0].mxu0
        %v10104 = vpop.f32.mrb[0].mxu0
        %10105 = vdwg.mxu0
        %v10106 = vpack.c.bf16 %v10101, %v10101
        %v10107 = vld [vmem:[%s16] sm:$0xf]
        %v10108 = vld [vmem:[%s16 + $0x4] sm:$0xf]
        %v10109 = vld [vmem:[%s16 + $0x8] sm:$0xf]
        %v10110 = vld [vmem:[%s16 + $0xc] sm:$0xf]
        %v10111 = vld [vmem:[%s16 + $0x10] sm:$0xf]
        %v10112 = vld [vmem:[%s16 + $0x14] sm:$0xf]
        %v10113 = vld [vmem:[%s16 + $0x18] sm:$0xf]
        %v10114 = vld [vmem:[%s16 + $0x1c] sm:$0xf]
        %v10115 = vld [vmem:[%s16 + $0x20] sm:$0xf]
        %v10116 = vld [vmem:[%s16 + $0x24] sm:$0xf]
        %v10117 = vld [vmem:[%s16 + $0x28] sm:$0xf]
        %v10118 = vld [vmem:[%s16 + $0x2c] sm:$0xf]
        %v10119 = vld [vmem:[%s16 + $0x30] sm:$0xf]
        %v10120 = vld [vmem:[%s16 + $0x34] sm:$0xf]
        %v10121 = vld [vmem:[%s16 + $0x38] sm:$0xf]
        %v10122 = vld [vmem:[%s16 + $0x3c] sm:$0xf]
        %v10123 = vld [vmem:[%s17] sm:$0x1]
        %v10140 = vunpack.c.l.b16 %v10107
        %v10141 = vunpack.c.l.b16 %v10108
        %v10142 = vunpack.c.l.b16 %v10109
        %v10143 = vunpack.c.l.b16 %v10110
        %v10144 = vunpack.c.l.b16 %v10111
        %v10145 = vunpack.c.l.b16 %v10112
        %v10146 = vunpack.c.l.b16 %v10113
        %v10147 = vunpack.c.l.b16 %v10114
        %v10148 = vunpack.c.l.b16 %v10115
        %v10149 = vunpack.c.l.b16 %v10116
        %v10150 = vunpack.c.l.b16 %v10117
        %v10151 = vunpack.c.l.b16 %v10118
        %v10152 = vunpack.c.l.b16 %v10119
        %v10153 = vunpack.c.l.b16 %v10120
        %v10154 = vunpack.c.l.b16 %v10121
        %v10155 = vunpack.c.l.b16 %v10122
        %v10156 = vpack.c.b16 %v10141, %v10140
        %v10157 = vpack.c.b16 %v10143, %v10142
        %v10158 = vpack.c.b16 %v10145, %v10144
        %v10159 = vpack.c.b16 %v10147, %v10146
        %v10160 = vpack.c.b16 %v10149, %v10148
        %v10161 = vpack.c.b16 %v10151, %v10150
        %v10162 = vpack.c.b16 %v10153, %v10152
        %v10163 = vpack.c.b16 %v10155, %v10154
        %10172 = vmatprep.subr.bf16.mxu0 0
        %10173 = vmatpush1.bf16.msra.mxu0 %v10156
        %10174 = vmatprep.subr.bf16.mxu0 0
        %10175 = vmatpush1.bf16.msra.mxu0 %v10157
        %10176 = vmatprep.subr.bf16.mxu0 0
        %10177 = vmatpush1.bf16.msra.mxu0 %v10158
        %10178 = vmatprep.subr.bf16.mxu0 0
        %10179 = vmatpush1.bf16.msra.mxu0 %v10159
        %10180 = vmatprep.subr.bf16.mxu0 0
        %10181 = vmatpush1.bf16.msra.mxu0 %v10160
        %10182 = vmatprep.subr.bf16.mxu0 0
        %10183 = vmatpush1.bf16.msra.mxu0 %v10161
        %10184 = vmatprep.subr.bf16.mxu0 0
        %10185 = vmatpush1.bf16.msra.mxu0 %v10162
        %10186 = vmatprep.subr.bf16.mxu0 0
        %10187 = vmatpush1.bf16.msra.mxu0 %v10163
        %10188 = vmatprep.subr.bf16.mxu0 0
        %10189 = vmatpush1.bf16.msra.mxu0 0
        %10190 = vmatprep.subr.bf16.mxu0 0
        %10191 = vmatpush1.bf16.msra.mxu0 0
        %10192 = vmatprep.subr.bf16.mxu0 0
        %10193 = vmatpush1.bf16.msra.mxu0 0
        %10194 = vmatprep.subr.bf16.mxu0 0
        %10195 = vmatpush1.bf16.msra.mxu0 0
        %10196 = vmatprep.subr.bf16.mxu0 0
        %10197 = vmatpush1.bf16.msra.mxu0 0
        %10198 = vmatprep.subr.bf16.mxu0 0
        %10199 = vmatpush1.bf16.msra.mxu0 0
        %10200 = vmatprep.subr.bf16.mxu0 0
        %10201 = vmatpush1.bf16.msra.mxu0 0
        %10202 = vmatprep.subr.bf16.mxu0 0
        %10203 = vmatpush1.bf16.msra.mxu0 0
        %10204 = vmatprep.mubr.bf16.mxu0 0
        %10205 = vmatmul.mubr.bf16.gmra.mrb[0].mxu0 %v10106
        %v10206 = vpop.f32.mrb[0].mxu0
        %v10207 = vadd.f32 %v10123, %v10206
        %v10208 = vpop.f32.mrb[0].mxu0
        %v10209 = vpop.f32.mrb[0].mxu0
        %v10210 = vpop.f32.mrb[0].mxu0
        %10211 = vdwg.mxu0
        %10212 = vst [vmem:[%s595] sm:$0x1] %v10101
        %10213 = vst [vmem:[%s608] sm:$0x1] %v10207
        %s10214 = sand.u32 %s425, 1
        %s10215 = scalar_lea.sflag [#allocation9], %s10214
        %s10216 = sand.u32 %s425, 1
        %s10217 = scalar_lea.vmem [#allocation8], %s10216
        %p10218 = scmp.lt.s32.totalorder %s34, 1
        %s10219 = scalar_select %p10218, %s34, 1
        %s10220 = scalar_lea.vmem %s19, %s10219
        // Predicated region
        $region93: #{classifier_forward.1} parent=91 // pred_check
          %p10221 = pneg %p435
        $region94: #{classifier_forward.1} parent=91 // pred_check_branch
          %10223 = sbr.rel (%p10221) target = $region96
        $region95: #{classifier_forward.1} parent=91 // pred_region
          %s10225 = ssub.s32 16, 16
          %10226 = vsyncadd %s10215, %s10225
          %s10227 = smul.addr %s34, 16
          %s10228 = scalar_lea.hbm %s18, %s10227
          %s10230 = sshll.u32 %s10217, 4
          %s10231 = int_to_ptr.vmem [resolvable:$true] %s10230
          %10233 = dma.vmem_to_hbm [thread:$0]  %s10231, 16, %s10228, %s10215
        $region96: #{classifier_forward.1} parent=91 // pred_fallthru
          _
        // Predicated region
        $region97: #{classifier_forward.1} parent=91 // pred_check
          %p10234 = pneg %p461
        $region98: #{classifier_forward.1} parent=91 // pred_check_branch
          %10236 = sbr.rel (%p10234) target = $region100
        $region99: #{classifier_forward.1} parent=91 // pred_region
          _
        $region100: #{classifier_forward.1} parent=91 // pred_fallthru
          _
      $region92: #{classifier_forward.1} parent=5 // pred_fallthru
        _
      %p10237 = scmp.le.s32.totalorder 2, %s29
      // Predicated region
      $region101: #{classifier_forward.1} parent=5 // pred_check
        %p10238 = pneg %p10237
      $region102: #{classifier_forward.1} parent=5 // pred_check_branch
        %10240 = sbr.rel (%p10238) target = $region104
      $region103: #{classifier_forward.1} parent=5 // pred_region
        %s10241 = ssub.s32 %s29, 2
        // Predicated region
        $region105: #{classifier_forward.1} parent=103 // pred_check
          %p10242 = pneg %p441
        $region106: #{classifier_forward.1} parent=103 // pred_check_branch
          %10244 = sbr.rel (%p10242) target = $region108
        $region107: #{classifier_forward.1} parent=103 // pred_region
          %s10245 = sand.u32 %s426, 1
          %s10246 = scalar_lea.sflag [#allocation9], %s10245
          %s10247 = sand.u32 %s426, 1
          %s10248 = scalar_lea.vmem [#allocation8], %s10247
          %10249 = dma.done %s10246, 16
        $region108: #{classifier_forward.1} parent=103 // pred_fallthru
          _
        // Predicated region
        $region109: #{classifier_forward.1} parent=103 // pred_check
          %p10250 = pneg %p467
        $region110: #{classifier_forward.1} parent=103 // pred_check_branch
          %10252 = sbr.rel (%p10250) target = $region112
        $region111: #{classifier_forward.1} parent=103 // pred_region
          %p10253 = scmp.lt.s32.totalorder %s35, 1
          %s10254 = scalar_select %p10253, %s35, 1
          %s10255 = scalar_lea.vmem %s19, %s10254
        $region112: #{classifier_forward.1} parent=103 // pred_fallthru
          _
      $region104: #{classifier_forward.1} parent=5 // pred_fallthru
        _
    $region6: #{classifier_forward.1} parent=1 // loop_footer
      %s33 = sadd.s32 1, %s29
    $region7: #{classifier_forward.1} parent=1 // loop_footer_branch
      %28 = sbr.rel target = $region3
    $region8: #{classifier_forward.1} parent=1 // loop_exit
      _
    %10256 = vsyncpa [#allocation9], 1
    %s10257 = scalar_lea.sflag [#allocation9], 1
    %10258 = vsyncpa %s10257, 1

</llo_original>
